<compile_context>
chip_gen: v6e
topology: v6e:2x2x1
jax: 0.10.0
libtpu: 0.0.40
codegen_flags: <defaults>
</compile_context>

<pallas_src>
import math

import jax
import jax.numpy as jnp
from jax.experimental import pallas as pl
from jax.experimental.pallas import tpu as pltpu


CP = 16          # padded channel count (real channels are 1..14)
FRAME0 = 28      # row stride of the flattened frame for convblocks 1..4
FRAME1 = 10      # row stride of the flattened frame for convblocks 5..7
HM_LEN = 523     # lanes of the 2x2-corner-max intermediate fed to the pool dot


# ----------------------------------------------------------------------------
# Fused forward kernel (one grid step == one image)
# ----------------------------------------------------------------------------
def fused_forward_kernel(x_ref, w_ref, scale_ref, shift_ref, w8_ref, spool_ref,
                         o_ref, buf_a, buf_b):
    # x_ref     : (1, 1, 784)  flattened 28x28 single-channel image (f32)
    # w_ref     : (7, 9, CP, CP) bf16, [layer, tap=3*ky+kx, cout, cin]
    # scale_ref : (7, CP, 1)   folded BatchNorm scale  (0 in padded channels)
    # shift_ref : (7, CP, 1)   folded BatchNorm shift  (0 in padded channels)
    # w8_ref    : (CP, CP)     1x1 conv weight [cout, cin], zero-padded
    # spool_ref : (HM_LEN,128) bf16 one-hot gather matrix for the 2x2 maxpool
    # o_ref     : (1, CP, 1)   log-softmax output (rows >= 10 are unused)
    # buf_a/b   : (CP, 784)    f32 VMEM ping-pong activation buffers
    #                          layout = (padded channels, flattened spatial)

    # ---- place the 1-channel image into channel row 0 of a zeroed frame ----
    buf_a[...] = jnp.zeros((CP, 784), jnp.float32)
    buf_a[0:1, :] = x_ref[0]

    def conv_block(src, layer, stride, h_in):
        # 3x3 valid conv + ReLU + folded BN, computed over the flattened frame.
        ho = h_in - 2
        p_len = stride * (ho - 1) + ho          # last needed flat output index + 1
        acc = jnp.zeros((CP, p_len), jnp.float32)
        for ky in range(3):
            for kx in range(3):
                tap = 3 * ky + kx
                off = stride * ky + kx
                a = src[:, off:off + p_len].astype(jnp.bfloat16)   # (CP, p_len)
                wt = w_ref[layer, tap]                             # (CP, CP) bf16
                acc = acc + jnp.dot(wt, a, preferred_element_type=jnp.float32)
        y = jnp.maximum(acc, 0.0)                                  # Conv -> ReLU
        y = y * scale_ref[layer] + shift_ref[layer]                # -> BatchNorm
        return y, p_len

    # ---- convblock1..convblock4 (28-stride frames) --------------------------
    src, dst = buf_a, buf_b
    h = 28
    for layer in range(4):
        y, p_len = conv_block(src, layer, FRAME0, h)
        if layer == 3:
            # fused MaxPool2d(2, 2): max of the 4 window corners, then a
            # one-hot gather matmul that rewrites the map into a 10-stride
            # frame (valid 10x10 region in lanes 0..99).
            hm = jnp.maximum(
                jnp.maximum(y[:, 0:HM_LEN], y[:, 1:HM_LEN + 1]),
                jnp.maximum(y[:, FRAME0:FRAME0 + HM_LEN],
                            y[:, FRAME0 + 1:FRAME0 + 1 + HM_LEN]))
            pooled = jnp.dot(hm.astype(jnp.bfloat16), spool_ref[...],
                             preferred_element_type=jnp.float32)   # (CP, 128)
            dst[:, 0:128] = pooled
        else:
            dst[:, 0:p_len] = y
        src, dst = dst, src
        h -= 2

    # ---- convblock5..convblock7 (10-stride frames) ---------------------------
    h = 10
    for layer in range(4, 7):
        y, p_len = conv_block(src, layer, FRAME1, h)
        dst[:, 0:p_len] = y
        src, dst = dst, src
        h -= 2

    # ---- head: AvgPool2d(4) + 1x1 conv + log_softmax -------------------------
    x7 = src[:, 0:34]                                   # valid 4x4 @ stride 10
    gp = jnp.sum(x7[:, 0:4] + x7[:, 10:14] + x7[:, 20:24] + x7[:, 30:34],
                 axis=1, keepdims=True) * (1.0 / 16.0)  # (CP, 1) GAP per channel
    logits = jnp.dot(w8_ref[...], gp,
                     preferred_element_type=jnp.float32)           # (CP, 1)

    row = jax.lax.broadcasted_iota(jnp.int32, (CP, 1), 0)
    valid = row < 10
    lm = jnp.where(valid, logits, jnp.float32(-1e30))

    def tree_max(v):                                    # max over 16 sublanes
        v = jnp.maximum(v[0:8], v[8:16])
        v = jnp.maximum(v[0:4], v[4:8])
        v = jnp.maximum(v[0:2], v[2:4])
        return jnp.maximum(v[0:1], v[1:2])

    def tree_sum(v):                                    # sum over 16 sublanes
        v = v[0:8] + v[8:16]
        v = v[0:4] + v[4:8]
        v = v[0:2] + v[2:4]
        return v[0:1] + v[1:2]

    m = tree_max(lm)                                    # (1, 1)
    s = lm - m
    es = jnp.where(valid, jnp.exp(s), 0.0)
    lse = jnp.log(tree_sum(es))                         # (1, 1)
    o_ref[0] = s - lse                                  # log_softmax, rows 0..9 valid


# ----------------------------------------------------------------------------
# Wrapper: one pallas_call for the whole forward pass
# ----------------------------------------------------------------------------
def model3_forward(x_nchw, params):
    wconv, scale_all, shift_all, w8p, spool = params
    N = x_nchw.shape[0]
    # Cin == 1, so NCHW -> (N, 1, 784) is a pure reshape (no transpose).
    x = x_nchw.reshape(N, 1, 28 * 28).astype(jnp.float32)

    out = pl.pallas_call(
        fused_forward_kernel,
        out_shape=jax.ShapeDtypeStruct((N, CP, 1), jnp.float32),
        grid=(N,),
        in_specs=[
            pl.BlockSpec((1, 1, 784), lambda i: (i, 0, 0)),          # image
            pl.BlockSpec((7, 9, CP, CP), lambda i: (0, 0, 0, 0)),    # conv weights
            pl.BlockSpec((7, CP, 1), lambda i: (0, 0, 0)),           # BN scale
            pl.BlockSpec((7, CP, 1), lambda i: (0, 0, 0)),           # BN shift
            pl.BlockSpec((CP, CP), lambda i: (0, 0)),                # 1x1 conv
            pl.BlockSpec((HM_LEN, 128), lambda i: (0, 0)),           # pool gather
        ],
        out_specs=pl.BlockSpec((1, CP, 1), lambda i: (i, 0, 0)),
        scratch_shapes=[
            pltpu.VMEM((CP, 784), jnp.float32),
            pltpu.VMEM((CP, 784), jnp.float32),
        ],
        compiler_params=pltpu.CompilerParams(
            dimension_semantics=("parallel",)),
    )(x, wconv, scale_all, shift_all, w8p, spool)

    return out[:, :10, 0]                                # (N, 10)


# ----------------------------------------------------------------------------
# Parameter construction (deterministic synthetic weights, folded BatchNorm)
# ----------------------------------------------------------------------------
def init_params(key):
    # (Cin, Cout) of convblock1..convblock7
    specs = [(1, 10), (10, 10), (10, 12), (12, 14), (14, 12), (12, 10), (10, 10)]
    eps = 1e-5  # PyTorch BatchNorm2d default
    wk_list, sc_list, sh_list = [], [], []
    for cin, cout in specs:
        key, kw, kg, kb, km, kv = jax.random.split(key, 6)
        w = jax.random.normal(kw, (cout, cin, 3, 3), jnp.float32) * (
            1.0 / (3.0 * math.sqrt(cin)))
        gamma = 1.0 + 0.1 * jax.random.normal(kg, (cout,), jnp.float32)
        beta = 0.1 * jax.random.normal(kb, (cout,), jnp.float32)
        run_mean = 0.1 * jax.random.normal(km, (cout,), jnp.float32)
        run_var = jnp.abs(jax.random.normal(kv, (cout,), jnp.float32)) * 0.1 + 1.0
        scale = gamma / jnp.sqrt(run_var + eps)
        shift = beta - run_mean * scale
        # (cout, cin, 3, 3) -> (9, cout, cin), zero-padded to (9, CP, CP)
        wt = jnp.transpose(w, (2, 3, 0, 1)).reshape(9, cout, cin)
        wt = jnp.pad(wt, ((0, 0), (0, CP - cout), (0, CP - cin)))
        wk_list.append(wt)
        sc_list.append(jnp.pad(scale, (0, CP - cout)))   # padded channels -> 0
        sh_list.append(jnp.pad(shift, (0, CP - cout)))   # padded channels -> 0
    wconv = jnp.stack(wk_list).astype(jnp.bfloat16)      # (7, 9, CP, CP)
    scale_all = jnp.stack(sc_list).reshape(7, CP, 1)
    shift_all = jnp.stack(sh_list).reshape(7, CP, 1)

    key, k8 = jax.random.split(key)
    w8 = jax.random.normal(k8, (10, 10), jnp.float32) * (1.0 / math.sqrt(10.0))
    w8p = jnp.pad(w8, ((0, CP - 10), (0, CP - 10)))      # (CP, CP) [cout, cin]

    # One-hot gather matrix for the fused maxpool: column p = 10*y + x (y,x<10)
    # selects flat source index 56*y + 2*x of the 2x2-corner-max intermediate.
    f = jnp.arange(HM_LEN)[:, None]
    p = jnp.arange(128)[None, :]
    spool = ((p < 100) & (f == 56 * (p // 10) + 2 * (p % 10))).astype(jnp.bfloat16)

    return wconv, scale_all, shift_all, w8p, spool


if __name__ == "__main__":
    key = jax.random.PRNGKey(0)
    pkey, xkey = jax.random.split(key)
    params = init_params(pkey)

    # Input matching the module's intended use: (N=2, C=1, H=28, W=28), NCHW.
    x = jax.random.normal(xkey, (2, 1, 28, 28), jnp.float32)

    fwd = jax.jit(lambda inp: model3_forward(inp, params))
    out = jax.block_until_ready(fwd(x))

    assert out.shape == (2, 10), out.shape
    # log_softmax rows must exponentiate-sum to 1
    row_sums = jnp.exp(out).sum(axis=1)
    assert bool(jnp.all(jnp.abs(row_sums - 1.0) < 1e-3)), row_sums
    print("KERNEL_OK")
</pallas_src>

<mosaic_0001>
module attributes {stable_mosaic.version = 11 : i64} {
  func.func @fused_forward_kernel(%arg0: i32, %arg1: memref<1x1x784xf32, #tpu.memory_space<vmem>>, %arg2: memref<7x9x16x16xbf16, #tpu.memory_space<vmem>>, %arg3: memref<7x16x1xf32, #tpu.memory_space<vmem>>, %arg4: memref<7x16x1xf32, #tpu.memory_space<vmem>>, %arg5: memref<16x16xf32, #tpu.memory_space<vmem>>, %arg6: memref<523x128xbf16, #tpu.memory_space<vmem>>, %arg7: memref<1x16x1xf32, #tpu.memory_space<vmem>>, %arg8: memref<16x784xf32, #tpu.memory_space<vmem>>, %arg9: memref<16x784xf32, #tpu.memory_space<vmem>>) attributes {dimension_semantics = [#tpu.dimension_semantics<parallel>], iteration_bounds = array<i64: 2>, scalar_prefetch = 0 : i64, scratch_operands = 2 : i64, tpu.core_type = #tpu.core_type<tc>, window_params = [{transform_indices = @transform_0, window_bounds = array<i64: 1, 1, 784>}, {pipeline_mode = #tpu.pipeline_mode<synchronous>, transform_indices = @transform_1, window_bounds = array<i64: 7, 9, 16, 16>}, {pipeline_mode = #tpu.pipeline_mode<synchronous>, transform_indices = @transform_2, window_bounds = array<i64: 7, 16, 1>}, {pipeline_mode = #tpu.pipeline_mode<synchronous>, transform_indices = @transform_3, window_bounds = array<i64: 7, 16, 1>}, {pipeline_mode = #tpu.pipeline_mode<synchronous>, transform_indices = @transform_4, window_bounds = array<i64: 16, 16>}, {pipeline_mode = #tpu.pipeline_mode<synchronous>, transform_indices = @transform_5, window_bounds = array<i64: 523, 128>}, {transform_indices = @transform_6, window_bounds = array<i64: 1, 16, 1>}]} {
    %cst = arith.constant 0.000000e+00 : f32
    %0 = vector.broadcast %cst : f32 to vector<16x784xf32>
    %c0 = arith.constant 0 : index
    %c0_0 = arith.constant 0 : index
    %1 = vector.load %arg8[%c0, %c0_0] : memref<16x784xf32, #tpu.memory_space<vmem>>, vector<16x784xf32>
    tpu.vector_store %arg8[%c0, %c0_0], %0 {strides = array<i32>} : memref<16x784xf32, #tpu.memory_space<vmem>>, vector<16x784xf32>,
    %c0_1 = arith.constant 0 : index
    %c0_2 = arith.constant 0 : index
    %c0_3 = arith.constant 0 : index
    %2 = vector.load %arg1[%c0_1, %c0_2, %c0_3] : memref<1x1x784xf32, #tpu.memory_space<vmem>>, vector<1x1x784xf32>
    %3 = vector.shape_cast %2 : vector<1x1x784xf32> to vector<1x784xf32>
    %c0_4 = arith.constant 0 : index
    %c0_5 = arith.constant 0 : index
    %4 = vector.load %arg8[%c0_4, %c0_5] : memref<16x784xf32, #tpu.memory_space<vmem>>, vector<1x784xf32>
    tpu.vector_store %arg8[%c0_4, %c0_5], %3 {strides = array<i32>} : memref<16x784xf32, #tpu.memory_space<vmem>>, vector<1x784xf32>,
    %cst_6 = arith.constant 0.000000e+00 : f32
    %5 = vector.broadcast %cst_6 : f32 to vector<16x726xf32>
    %c0_7 = arith.constant 0 : index
    %c0_8 = arith.constant 0 : index
    %6 = vector.load %arg8[%c0_7, %c0_8] : memref<16x784xf32, #tpu.memory_space<vmem>>, vector<16x726xf32>
    %7 = arith.truncf %6 : vector<16x726xf32> to vector<16x726xbf16>
    %c0_9 = arith.constant 0 : index
    %c0_10 = arith.constant 0 : index
    %c0_11 = arith.constant 0 : index
    %c0_12 = arith.constant 0 : index
    %8 = vector.load %arg2[%c0_9, %c0_10, %c0_11, %c0_12] : memref<7x9x16x16xbf16, #tpu.memory_space<vmem>>, vector<1x1x16x16xbf16>
    %9 = vector.shape_cast %8 : vector<1x1x16x16xbf16> to vector<16x16xbf16>
    %cst_13 = arith.constant dense<0.000000e+00> : vector<16x726xf32>
    %10 = tpu.matmul %9, %7, %cst_13 {dimension_numbers = #tpu.dot_dimension_numbers<[1], [0], [0], [1], [0, 0, 1, 1], [], []>} : vector<16x16xbf16>, vector<16x726xbf16>, vector<16x726xf32> -> vector<16x726xf32>
    %11 = arith.addf %5, %10 : vector<16x726xf32>
    %c0_14 = arith.constant 0 : index
    %c1 = arith.constant 1 : index
    %12 = vector.load %arg8[%c0_14, %c1] : memref<16x784xf32, #tpu.memory_space<vmem>>, vector<16x726xf32>
    %13 = arith.truncf %12 : vector<16x726xf32> to vector<16x726xbf16>
    %c0_15 = arith.constant 0 : index
    %c1_16 = arith.constant 1 : index
    %c0_17 = arith.constant 0 : index
    %c0_18 = arith.constant 0 : index
    %14 = vector.load %arg2[%c0_15, %c1_16, %c0_17, %c0_18] : memref<7x9x16x16xbf16, #tpu.memory_space<vmem>>, vector<1x1x16x16xbf16>
    %15 = vector.shape_cast %14 : vector<1x1x16x16xbf16> to vector<16x16xbf16>
    %cst_19 = arith.constant dense<0.000000e+00> : vector<16x726xf32>
    %16 = tpu.matmul %15, %13, %cst_19 {dimension_numbers = #tpu.dot_dimension_numbers<[1], [0], [0], [1], [0, 0, 1, 1], [], []>} : vector<16x16xbf16>, vector<16x726xbf16>, vector<16x726xf32> -> vector<16x726xf32>
    %17 = arith.addf %11, %16 : vector<16x726xf32>
    %c0_20 = arith.constant 0 : index
    %c2 = arith.constant 2 : index
    %18 = vector.load %arg8[%c0_20, %c2] : memref<16x784xf32, #tpu.memory_space<vmem>>, vector<16x726xf32>
    %19 = arith.truncf %18 : vector<16x726xf32> to vector<16x726xbf16>
    %c0_21 = arith.constant 0 : index
    %c2_22 = arith.constant 2 : index
    %c0_23 = arith.constant 0 : index
    %c0_24 = arith.constant 0 : index
    %20 = vector.load %arg2[%c0_21, %c2_22, %c0_23, %c0_24] : memref<7x9x16x16xbf16, #tpu.memory_space<vmem>>, vector<1x1x16x16xbf16>
    %21 = vector.shape_cast %20 : vector<1x1x16x16xbf16> to vector<16x16xbf16>
    %cst_25 = arith.constant dense<0.000000e+00> : vector<16x726xf32>
    %22 = tpu.matmul %21, %19, %cst_25 {dimension_numbers = #tpu.dot_dimension_numbers<[1], [0], [0], [1], [0, 0, 1, 1], [], []>} : vector<16x16xbf16>, vector<16x726xbf16>, vector<16x726xf32> -> vector<16x726xf32>
    %23 = arith.addf %17, %22 : vector<16x726xf32>
    %c0_26 = arith.constant 0 : index
    %c28 = arith.constant 28 : index
    %24 = vector.load %arg8[%c0_26, %c28] : memref<16x784xf32, #tpu.memory_space<vmem>>, vector<16x726xf32>
    %25 = arith.truncf %24 : vector<16x726xf32> to vector<16x726xbf16>
    %c0_27 = arith.constant 0 : index
    %c3 = arith.constant 3 : index
    %c0_28 = arith.constant 0 : index
    %c0_29 = arith.constant 0 : index
    %26 = vector.load %arg2[%c0_27, %c3, %c0_28, %c0_29] : memref<7x9x16x16xbf16, #tpu.memory_space<vmem>>, vector<1x1x16x16xbf16>
    %27 = vector.shape_cast %26 : vector<1x1x16x16xbf16> to vector<16x16xbf16>
    %cst_30 = arith.constant dense<0.000000e+00> : vector<16x726xf32>
    %28 = tpu.matmul %27, %25, %cst_30 {dimension_numbers = #tpu.dot_dimension_numbers<[1], [0], [0], [1], [0, 0, 1, 1], [], []>} : vector<16x16xbf16>, vector<16x726xbf16>, vector<16x726xf32> -> vector<16x726xf32>
    %29 = arith.addf %23, %28 : vector<16x726xf32>
    %c0_31 = arith.constant 0 : index
    %c29 = arith.constant 29 : index
    %30 = vector.load %arg8[%c0_31, %c29] : memref<16x784xf32, #tpu.memory_space<vmem>>, vector<16x726xf32>
    %31 = arith.truncf %30 : vector<16x726xf32> to vector<16x726xbf16>
    %c0_32 = arith.constant 0 : index
    %c4 = arith.constant 4 : index
    %c0_33 = arith.constant 0 : index
    %c0_34 = arith.constant 0 : index
    %32 = vector.load %arg2[%c0_32, %c4, %c0_33, %c0_34] : memref<7x9x16x16xbf16, #tpu.memory_space<vmem>>, vector<1x1x16x16xbf16>
    %33 = vector.shape_cast %32 : vector<1x1x16x16xbf16> to vector<16x16xbf16>
    %cst_35 = arith.constant dense<0.000000e+00> : vector<16x726xf32>
    %34 = tpu.matmul %33, %31, %cst_35 {dimension_numbers = #tpu.dot_dimension_numbers<[1], [0], [0], [1], [0, 0, 1, 1], [], []>} : vector<16x16xbf16>, vector<16x726xbf16>, vector<16x726xf32> -> vector<16x726xf32>
    %35 = arith.addf %29, %34 : vector<16x726xf32>
    %c0_36 = arith.constant 0 : index
    %c30 = arith.constant 30 : index
    %36 = vector.load %arg8[%c0_36, %c30] : memref<16x784xf32, #tpu.memory_space<vmem>>, vector<16x726xf32>
    %37 = arith.truncf %36 : vector<16x726xf32> to vector<16x726xbf16>
    %c0_37 = arith.constant 0 : index
    %c5 = arith.constant 5 : index
    %c0_38 = arith.constant 0 : index
    %c0_39 = arith.constant 0 : index
    %38 = vector.load %arg2[%c0_37, %c5, %c0_38, %c0_39] : memref<7x9x16x16xbf16, #tpu.memory_space<vmem>>, vector<1x1x16x16xbf16>
    %39 = vector.shape_cast %38 : vector<1x1x16x16xbf16> to vector<16x16xbf16>
    %cst_40 = arith.constant dense<0.000000e+00> : vector<16x726xf32>
    %40 = tpu.matmul %39, %37, %cst_40 {dimension_numbers = #tpu.dot_dimension_numbers<[1], [0], [0], [1], [0, 0, 1, 1], [], []>} : vector<16x16xbf16>, vector<16x726xbf16>, vector<16x726xf32> -> vector<16x726xf32>
    %41 = arith.addf %35, %40 : vector<16x726xf32>
    %c0_41 = arith.constant 0 : index
    %c56 = arith.constant 56 : index
    %42 = vector.load %arg8[%c0_41, %c56] : memref<16x784xf32, #tpu.memory_space<vmem>>, vector<16x726xf32>
    %43 = arith.truncf %42 : vector<16x726xf32> to vector<16x726xbf16>
    %c0_42 = arith.constant 0 : index
    %c6 = arith.constant 6 : index
    %c0_43 = arith.constant 0 : index
    %c0_44 = arith.constant 0 : index
    %44 = vector.load %arg2[%c0_42, %c6, %c0_43, %c0_44] : memref<7x9x16x16xbf16, #tpu.memory_space<vmem>>, vector<1x1x16x16xbf16>
    %45 = vector.shape_cast %44 : vector<1x1x16x16xbf16> to vector<16x16xbf16>
    %cst_45 = arith.constant dense<0.000000e+00> : vector<16x726xf32>
    %46 = tpu.matmul %45, %43, %cst_45 {dimension_numbers = #tpu.dot_dimension_numbers<[1], [0], [0], [1], [0, 0, 1, 1], [], []>} : vector<16x16xbf16>, vector<16x726xbf16>, vector<16x726xf32> -> vector<16x726xf32>
    %47 = arith.addf %41, %46 : vector<16x726xf32>
    %c0_46 = arith.constant 0 : index
    %c57 = arith.constant 57 : index
    %48 = vector.load %arg8[%c0_46, %c57] : memref<16x784xf32, #tpu.memory_space<vmem>>, vector<16x726xf32>
    %49 = arith.truncf %48 : vector<16x726xf32> to vector<16x726xbf16>
    %c0_47 = arith.constant 0 : index
    %c7 = arith.constant 7 : index
    %c0_48 = arith.constant 0 : index
    %c0_49 = arith.constant 0 : index
    %50 = vector.load %arg2[%c0_47, %c7, %c0_48, %c0_49] : memref<7x9x16x16xbf16, #tpu.memory_space<vmem>>, vector<1x1x16x16xbf16>
    %51 = vector.shape_cast %50 : vector<1x1x16x16xbf16> to vector<16x16xbf16>
    %cst_50 = arith.constant dense<0.000000e+00> : vector<16x726xf32>
    %52 = tpu.matmul %51, %49, %cst_50 {dimension_numbers = #tpu.dot_dimension_numbers<[1], [0], [0], [1], [0, 0, 1, 1], [], []>} : vector<16x16xbf16>, vector<16x726xbf16>, vector<16x726xf32> -> vector<16x726xf32>
    %53 = arith.addf %47, %52 : vector<16x726xf32>
    %c0_51 = arith.constant 0 : index
    %c58 = arith.constant 58 : index
    %54 = vector.load %arg8[%c0_51, %c58] : memref<16x784xf32, #tpu.memory_space<vmem>>, vector<16x726xf32>
    %55 = arith.truncf %54 : vector<16x726xf32> to vector<16x726xbf16>
    %c0_52 = arith.constant 0 : index
    %c8 = arith.constant 8 : index
    %c0_53 = arith.constant 0 : index
    %c0_54 = arith.constant 0 : index
    %56 = vector.load %arg2[%c0_52, %c8, %c0_53, %c0_54] : memref<7x9x16x16xbf16, #tpu.memory_space<vmem>>, vector<1x1x16x16xbf16>
    %57 = vector.shape_cast %56 : vector<1x1x16x16xbf16> to vector<16x16xbf16>
    %cst_55 = arith.constant dense<0.000000e+00> : vector<16x726xf32>
    %58 = tpu.matmul %57, %55, %cst_55 {dimension_numbers = #tpu.dot_dimension_numbers<[1], [0], [0], [1], [0, 0, 1, 1], [], []>} : vector<16x16xbf16>, vector<16x726xbf16>, vector<16x726xf32> -> vector<16x726xf32>
    %59 = arith.addf %53, %58 : vector<16x726xf32>
    %cst_56 = arith.constant 0.000000e+00 : f32
    %60 = vector.broadcast %cst_56 : f32 to vector<16x726xf32>
    %61 = arith.maximumf %59, %60 : vector<16x726xf32>
    %c0_57 = arith.constant 0 : index
    %c0_58 = arith.constant 0 : index
    %c0_59 = arith.constant 0 : index
    %62 = vector.load %arg3[%c0_57, %c0_58, %c0_59] : memref<7x16x1xf32, #tpu.memory_space<vmem>>, vector<1x16x1xf32>
    %63 = vector.shape_cast %62 : vector<1x16x1xf32> to vector<16x1xf32>
    %64 = vector.broadcast %63 : vector<16x1xf32> to vector<16x726xf32>
    %65 = arith.mulf %61, %64 : vector<16x726xf32>
    %c0_60 = arith.constant 0 : index
    %c0_61 = arith.constant 0 : index
    %c0_62 = arith.constant 0 : index
    %66 = vector.load %arg4[%c0_60, %c0_61, %c0_62] : memref<7x16x1xf32, #tpu.memory_space<vmem>>, vector<1x16x1xf32>
    %67 = vector.shape_cast %66 : vector<1x16x1xf32> to vector<16x1xf32>
    %68 = vector.broadcast %67 : vector<16x1xf32> to vector<16x726xf32>
    %69 = arith.addf %65, %68 : vector<16x726xf32>
    %c0_63 = arith.constant 0 : index
    %c0_64 = arith.constant 0 : index
    %70 = vector.load %arg9[%c0_63, %c0_64] : memref<16x784xf32, #tpu.memory_space<vmem>>, vector<16x726xf32>
    tpu.vector_store %arg9[%c0_63, %c0_64], %69 {strides = array<i32>} : memref<16x784xf32, #tpu.memory_space<vmem>>, vector<16x726xf32>,
    %cst_65 = arith.constant 0.000000e+00 : f32
    %71 = vector.broadcast %cst_65 : f32 to vector<16x668xf32>
    %c0_66 = arith.constant 0 : index
    %c0_67 = arith.constant 0 : index
    %72 = vector.load %arg9[%c0_66, %c0_67] : memref<16x784xf32, #tpu.memory_space<vmem>>, vector<16x668xf32>
    %73 = arith.truncf %72 : vector<16x668xf32> to vector<16x668xbf16>
    %c1_68 = arith.constant 1 : index
    %c0_69 = arith.constant 0 : index
    %c0_70 = arith.constant 0 : index
    %c0_71 = arith.constant 0 : index
    %74 = vector.load %arg2[%c1_68, %c0_69, %c0_70, %c0_71] : memref<7x9x16x16xbf16, #tpu.memory_space<vmem>>, vector<1x1x16x16xbf16>
    %75 = vector.shape_cast %74 : vector<1x1x16x16xbf16> to vector<16x16xbf16>
    %cst_72 = arith.constant dense<0.000000e+00> : vector<16x668xf32>
    %76 = tpu.matmul %75, %73, %cst_72 {dimension_numbers = #tpu.dot_dimension_numbers<[1], [0], [0], [1], [0, 0, 1, 1], [], []>} : vector<16x16xbf16>, vector<16x668xbf16>, vector<16x668xf32> -> vector<16x668xf32>
    %77 = arith.addf %71, %76 : vector<16x668xf32>
    %c0_73 = arith.constant 0 : index
    %c1_74 = arith.constant 1 : index
    %78 = vector.load %arg9[%c0_73, %c1_74] : memref<16x784xf32, #tpu.memory_space<vmem>>, vector<16x668xf32>
    %79 = arith.truncf %78 : vector<16x668xf32> to vector<16x668xbf16>
    %c1_75 = arith.constant 1 : index
    %c1_76 = arith.constant 1 : index
    %c0_77 = arith.constant 0 : index
    %c0_78 = arith.constant 0 : index
    %80 = vector.load %arg2[%c1_75, %c1_76, %c0_77, %c0_78] : memref<7x9x16x16xbf16, #tpu.memory_space<vmem>>, vector<1x1x16x16xbf16>
    %81 = vector.shape_cast %80 : vector<1x1x16x16xbf16> to vector<16x16xbf16>
    %cst_79 = arith.constant dense<0.000000e+00> : vector<16x668xf32>
    %82 = tpu.matmul %81, %79, %cst_79 {dimension_numbers = #tpu.dot_dimension_numbers<[1], [0], [0], [1], [0, 0, 1, 1], [], []>} : vector<16x16xbf16>, vector<16x668xbf16>, vector<16x668xf32> -> vector<16x668xf32>
    %83 = arith.addf %77, %82 : vector<16x668xf32>
    %c0_80 = arith.constant 0 : index
    %c2_81 = arith.constant 2 : index
    %84 = vector.load %arg9[%c0_80, %c2_81] : memref<16x784xf32, #tpu.memory_space<vmem>>, vector<16x668xf32>
    %85 = arith.truncf %84 : vector<16x668xf32> to vector<16x668xbf16>
    %c1_82 = arith.constant 1 : index
    %c2_83 = arith.constant 2 : index
    %c0_84 = arith.constant 0 : index
    %c0_85 = arith.constant 0 : index
    %86 = vector.load %arg2[%c1_82, %c2_83, %c0_84, %c0_85] : memref<7x9x16x16xbf16, #tpu.memory_space<vmem>>, vector<1x1x16x16xbf16>
    %87 = vector.shape_cast %86 : vector<1x1x16x16xbf16> to vector<16x16xbf16>
    %cst_86 = arith.constant dense<0.000000e+00> : vector<16x668xf32>
    %88 = tpu.matmul %87, %85, %cst_86 {dimension_numbers = #tpu.dot_dimension_numbers<[1], [0], [0], [1], [0, 0, 1, 1], [], []>} : vector<16x16xbf16>, vector<16x668xbf16>, vector<16x668xf32> -> vector<16x668xf32>
    %89 = arith.addf %83, %88 : vector<16x668xf32>
    %c0_87 = arith.constant 0 : index
    %c28_88 = arith.constant 28 : index
    %90 = vector.load %arg9[%c0_87, %c28_88] : memref<16x784xf32, #tpu.memory_space<vmem>>, vector<16x668xf32>
    %91 = arith.truncf %90 : vector<16x668xf32> to vector<16x668xbf16>
    %c1_89 = arith.constant 1 : index
    %c3_90 = arith.constant 3 : index
    %c0_91 = arith.constant 0 : index
    %c0_92 = arith.constant 0 : index
    %92 = vector.load %arg2[%c1_89, %c3_90, %c0_91, %c0_92] : memref<7x9x16x16xbf16, #tpu.memory_space<vmem>>, vector<1x1x16x16xbf16>
    %93 = vector.shape_cast %92 : vector<1x1x16x16xbf16> to vector<16x16xbf16>
    %cst_93 = arith.constant dense<0.000000e+00> : vector<16x668xf32>
    %94 = tpu.matmul %93, %91, %cst_93 {dimension_numbers = #tpu.dot_dimension_numbers<[1], [0], [0], [1], [0, 0, 1, 1], [], []>} : vector<16x16xbf16>, vector<16x668xbf16>, vector<16x668xf32> -> vector<16x668xf32>
    %95 = arith.addf %89, %94 : vector<16x668xf32>
    %c0_94 = arith.constant 0 : index
    %c29_95 = arith.constant 29 : index
    %96 = vector.load %arg9[%c0_94, %c29_95] : memref<16x784xf32, #tpu.memory_space<vmem>>, vector<16x668xf32>
    %97 = arith.truncf %96 : vector<16x668xf32> to vector<16x668xbf16>
    %c1_96 = arith.constant 1 : index
    %c4_97 = arith.constant 4 : index
    %c0_98 = arith.constant 0 : index
    %c0_99 = arith.constant 0 : index
    %98 = vector.load %arg2[%c1_96, %c4_97, %c0_98, %c0_99] : memref<7x9x16x16xbf16, #tpu.memory_space<vmem>>, vector<1x1x16x16xbf16>
    %99 = vector.shape_cast %98 : vector<1x1x16x16xbf16> to vector<16x16xbf16>
    %cst_100 = arith.constant dense<0.000000e+00> : vector<16x668xf32>
    %100 = tpu.matmul %99, %97, %cst_100 {dimension_numbers = #tpu.dot_dimension_numbers<[1], [0], [0], [1], [0, 0, 1, 1], [], []>} : vector<16x16xbf16>, vector<16x668xbf16>, vector<16x668xf32> -> vector<16x668xf32>
    %101 = arith.addf %95, %100 : vector<16x668xf32>
    %c0_101 = arith.constant 0 : index
    %c30_102 = arith.constant 30 : index
    %102 = vector.load %arg9[%c0_101, %c30_102] : memref<16x784xf32, #tpu.memory_space<vmem>>, vector<16x668xf32>
    %103 = arith.truncf %102 : vector<16x668xf32> to vector<16x668xbf16>
    %c1_103 = arith.constant 1 : index
    %c5_104 = arith.constant 5 : index
    %c0_105 = arith.constant 0 : index
    %c0_106 = arith.constant 0 : index
    %104 = vector.load %arg2[%c1_103, %c5_104, %c0_105, %c0_106] : memref<7x9x16x16xbf16, #tpu.memory_space<vmem>>, vector<1x1x16x16xbf16>
    %105 = vector.shape_cast %104 : vector<1x1x16x16xbf16> to vector<16x16xbf16>
    %cst_107 = arith.constant dense<0.000000e+00> : vector<16x668xf32>
    %106 = tpu.matmul %105, %103, %cst_107 {dimension_numbers = #tpu.dot_dimension_numbers<[1], [0], [0], [1], [0, 0, 1, 1], [], []>} : vector<16x16xbf16>, vector<16x668xbf16>, vector<16x668xf32> -> vector<16x668xf32>
    %107 = arith.addf %101, %106 : vector<16x668xf32>
    %c0_108 = arith.constant 0 : index
    %c56_109 = arith.constant 56 : index
    %108 = vector.load %arg9[%c0_108, %c56_109] : memref<16x784xf32, #tpu.memory_space<vmem>>, vector<16x668xf32>
    %109 = arith.truncf %108 : vector<16x668xf32> to vector<16x668xbf16>
    %c1_110 = arith.constant 1 : index
    %c6_111 = arith.constant 6 : index
    %c0_112 = arith.constant 0 : index
    %c0_113 = arith.constant 0 : index
    %110 = vector.load %arg2[%c1_110, %c6_111, %c0_112, %c0_113] : memref<7x9x16x16xbf16, #tpu.memory_space<vmem>>, vector<1x1x16x16xbf16>
    %111 = vector.shape_cast %110 : vector<1x1x16x16xbf16> to vector<16x16xbf16>
    %cst_114 = arith.constant dense<0.000000e+00> : vector<16x668xf32>
    %112 = tpu.matmul %111, %109, %cst_114 {dimension_numbers = #tpu.dot_dimension_numbers<[1], [0], [0], [1], [0, 0, 1, 1], [], []>} : vector<16x16xbf16>, vector<16x668xbf16>, vector<16x668xf32> -> vector<16x668xf32>
    %113 = arith.addf %107, %112 : vector<16x668xf32>
    %c0_115 = arith.constant 0 : index
    %c57_116 = arith.constant 57 : index
    %114 = vector.load %arg9[%c0_115, %c57_116] : memref<16x784xf32, #tpu.memory_space<vmem>>, vector<16x668xf32>
    %115 = arith.truncf %114 : vector<16x668xf32> to vector<16x668xbf16>
    %c1_117 = arith.constant 1 : index
    %c7_118 = arith.constant 7 : index
    %c0_119 = arith.constant 0 : index
    %c0_120 = arith.constant 0 : index
    %116 = vector.load %arg2[%c1_117, %c7_118, %c0_119, %c0_120] : memref<7x9x16x16xbf16, #tpu.memory_space<vmem>>, vector<1x1x16x16xbf16>
    %117 = vector.shape_cast %116 : vector<1x1x16x16xbf16> to vector<16x16xbf16>
    %cst_121 = arith.constant dense<0.000000e+00> : vector<16x668xf32>
    %118 = tpu.matmul %117, %115, %cst_121 {dimension_numbers = #tpu.dot_dimension_numbers<[1], [0], [0], [1], [0, 0, 1, 1], [], []>} : vector<16x16xbf16>, vector<16x668xbf16>, vector<16x668xf32> -> vector<16x668xf32>
    %119 = arith.addf %113, %118 : vector<16x668xf32>
    %c0_122 = arith.constant 0 : index
    %c58_123 = arith.constant 58 : index
    %120 = vector.load %arg9[%c0_122, %c58_123] : memref<16x784xf32, #tpu.memory_space<vmem>>, vector<16x668xf32>
    %121 = arith.truncf %120 : vector<16x668xf32> to vector<16x668xbf16>
    %c1_124 = arith.constant 1 : index
    %c8_125 = arith.constant 8 : index
    %c0_126 = arith.constant 0 : index
    %c0_127 = arith.constant 0 : index
    %122 = vector.load %arg2[%c1_124, %c8_125, %c0_126, %c0_127] : memref<7x9x16x16xbf16, #tpu.memory_space<vmem>>, vector<1x1x16x16xbf16>
    %123 = vector.shape_cast %122 : vector<1x1x16x16xbf16> to vector<16x16xbf16>
    %cst_128 = arith.constant dense<0.000000e+00> : vector<16x668xf32>
    %124 = tpu.matmul %123, %121, %cst_128 {dimension_numbers = #tpu.dot_dimension_numbers<[1], [0], [0], [1], [0, 0, 1, 1], [], []>} : vector<16x16xbf16>, vector<16x668xbf16>, vector<16x668xf32> -> vector<16x668xf32>
    %125 = arith.addf %119, %124 : vector<16x668xf32>
    %cst_129 = arith.constant 0.000000e+00 : f32
    %126 = vector.broadcast %cst_129 : f32 to vector<16x668xf32>
    %127 = arith.maximumf %125, %126 : vector<16x668xf32>
    %c1_130 = arith.constant 1 : index
    %c0_131 = arith.constant 0 : index
    %c0_132 = arith.constant 0 : index
    %128 = vector.load %arg3[%c1_130, %c0_131, %c0_132] : memref<7x16x1xf32, #tpu.memory_space<vmem>>, vector<1x16x1xf32>
    %129 = vector.shape_cast %128 : vector<1x16x1xf32> to vector<16x1xf32>
    %130 = vector.broadcast %129 : vector<16x1xf32> to vector<16x668xf32>
    %131 = arith.mulf %127, %130 : vector<16x668xf32>
    %c1_133 = arith.constant 1 : index
    %c0_134 = arith.constant 0 : index
    %c0_135 = arith.constant 0 : index
    %132 = vector.load %arg4[%c1_133, %c0_134, %c0_135] : memref<7x16x1xf32, #tpu.memory_space<vmem>>, vector<1x16x1xf32>
    %133 = vector.shape_cast %132 : vector<1x16x1xf32> to vector<16x1xf32>
    %134 = vector.broadcast %133 : vector<16x1xf32> to vector<16x668xf32>
    %135 = arith.addf %131, %134 : vector<16x668xf32>
    %c0_136 = arith.constant 0 : index
    %c0_137 = arith.constant 0 : index
    %136 = vector.load %arg8[%c0_136, %c0_137] : memref<16x784xf32, #tpu.memory_space<vmem>>, vector<16x668xf32>
    tpu.vector_store %arg8[%c0_136, %c0_137], %135 {strides = array<i32>} : memref<16x784xf32, #tpu.memory_space<vmem>>, vector<16x668xf32>,
    %cst_138 = arith.constant 0.000000e+00 : f32
    %137 = vector.broadcast %cst_138 : f32 to vector<16x610xf32>
    %c0_139 = arith.constant 0 : index
    %c0_140 = arith.constant 0 : index
    %138 = vector.load %arg8[%c0_139, %c0_140] : memref<16x784xf32, #tpu.memory_space<vmem>>, vector<16x610xf32>
    %139 = arith.truncf %138 : vector<16x610xf32> to vector<16x610xbf16>
    %c2_141 = arith.constant 2 : index
    %c0_142 = arith.constant 0 : index
    %c0_143 = arith.constant 0 : index
    %c0_144 = arith.constant 0 : index
    %140 = vector.load %arg2[%c2_141, %c0_142, %c0_143, %c0_144] : memref<7x9x16x16xbf16, #tpu.memory_space<vmem>>, vector<1x1x16x16xbf16>
    %141 = vector.shape_cast %140 : vector<1x1x16x16xbf16> to vector<16x16xbf16>
    %cst_145 = arith.constant dense<0.000000e+00> : vector<16x610xf32>
    %142 = tpu.matmul %141, %139, %cst_145 {dimension_numbers = #tpu.dot_dimension_numbers<[1], [0], [0], [1], [0, 0, 1, 1], [], []>} : vector<16x16xbf16>, vector<16x610xbf16>, vector<16x610xf32> -> vector<16x610xf32>
    %143 = arith.addf %137, %142 : vector<16x610xf32>
    %c0_146 = arith.constant 0 : index
    %c1_147 = arith.constant 1 : index
    %144 = vector.load %arg8[%c0_146, %c1_147] : memref<16x784xf32, #tpu.memory_space<vmem>>, vector<16x610xf32>
    %145 = arith.truncf %144 : vector<16x610xf32> to vector<16x610xbf16>
    %c2_148 = arith.constant 2 : index
    %c1_149 = arith.constant 1 : index
    %c0_150 = arith.constant 0 : index
    %c0_151 = arith.constant 0 : index
    %146 = vector.load %arg2[%c2_148, %c1_149, %c0_150, %c0_151] : memref<7x9x16x16xbf16, #tpu.memory_space<vmem>>, vector<1x1x16x16xbf16>
    %147 = vector.shape_cast %146 : vector<1x1x16x16xbf16> to vector<16x16xbf16>
    %cst_152 = arith.constant dense<0.000000e+00> : vector<16x610xf32>
    %148 = tpu.matmul %147, %145, %cst_152 {dimension_numbers = #tpu.dot_dimension_numbers<[1], [0], [0], [1], [0, 0, 1, 1], [], []>} : vector<16x16xbf16>, vector<16x610xbf16>, vector<16x610xf32> -> vector<16x610xf32>
    %149 = arith.addf %143, %148 : vector<16x610xf32>
    %c0_153 = arith.constant 0 : index
    %c2_154 = arith.constant 2 : index
    %150 = vector.load %arg8[%c0_153, %c2_154] : memref<16x784xf32, #tpu.memory_space<vmem>>, vector<16x610xf32>
    %151 = arith.truncf %150 : vector<16x610xf32> to vector<16x610xbf16>
    %c2_155 = arith.constant 2 : index
    %c2_156 = arith.constant 2 : index
    %c0_157 = arith.constant 0 : index
    %c0_158 = arith.constant 0 : index
    %152 = vector.load %arg2[%c2_155, %c2_156, %c0_157, %c0_158] : memref<7x9x16x16xbf16, #tpu.memory_space<vmem>>, vector<1x1x16x16xbf16>
    %153 = vector.shape_cast %152 : vector<1x1x16x16xbf16> to vector<16x16xbf16>
    %cst_159 = arith.constant dense<0.000000e+00> : vector<16x610xf32>
    %154 = tpu.matmul %153, %151, %cst_159 {dimension_numbers = #tpu.dot_dimension_numbers<[1], [0], [0], [1], [0, 0, 1, 1], [], []>} : vector<16x16xbf16>, vector<16x610xbf16>, vector<16x610xf32> -> vector<16x610xf32>
    %155 = arith.addf %149, %154 : vector<16x610xf32>
    %c0_160 = arith.constant 0 : index
    %c28_161 = arith.constant 28 : index
    %156 = vector.load %arg8[%c0_160, %c28_161] : memref<16x784xf32, #tpu.memory_space<vmem>>, vector<16x610xf32>
    %157 = arith.truncf %156 : vector<16x610xf32> to vector<16x610xbf16>
    %c2_162 = arith.constant 2 : index
    %c3_163 = arith.constant 3 : index
    %c0_164 = arith.constant 0 : index
    %c0_165 = arith.constant 0 : index
    %158 = vector.load %arg2[%c2_162, %c3_163, %c0_164, %c0_165] : memref<7x9x16x16xbf16, #tpu.memory_space<vmem>>, vector<1x1x16x16xbf16>
    %159 = vector.shape_cast %158 : vector<1x1x16x16xbf16> to vector<16x16xbf16>
    %cst_166 = arith.constant dense<0.000000e+00> : vector<16x610xf32>
    %160 = tpu.matmul %159, %157, %cst_166 {dimension_numbers = #tpu.dot_dimension_numbers<[1], [0], [0], [1], [0, 0, 1, 1], [], []>} : vector<16x16xbf16>, vector<16x610xbf16>, vector<16x610xf32> -> vector<16x610xf32>
    %161 = arith.addf %155, %160 : vector<16x610xf32>
    %c0_167 = arith.constant 0 : index
    %c29_168 = arith.constant 29 : index
    %162 = vector.load %arg8[%c0_167, %c29_168] : memref<16x784xf32, #tpu.memory_space<vmem>>, vector<16x610xf32>
    %163 = arith.truncf %162 : vector<16x610xf32> to vector<16x610xbf16>
    %c2_169 = arith.constant 2 : index
    %c4_170 = arith.constant 4 : index
    %c0_171 = arith.constant 0 : index
    %c0_172 = arith.constant 0 : index
    %164 = vector.load %arg2[%c2_169, %c4_170, %c0_171, %c0_172] : memref<7x9x16x16xbf16, #tpu.memory_space<vmem>>, vector<1x1x16x16xbf16>
    %165 = vector.shape_cast %164 : vector<1x1x16x16xbf16> to vector<16x16xbf16>
    %cst_173 = arith.constant dense<0.000000e+00> : vector<16x610xf32>
    %166 = tpu.matmul %165, %163, %cst_173 {dimension_numbers = #tpu.dot_dimension_numbers<[1], [0], [0], [1], [0, 0, 1, 1], [], []>} : vector<16x16xbf16>, vector<16x610xbf16>, vector<16x610xf32> -> vector<16x610xf32>
    %167 = arith.addf %161, %166 : vector<16x610xf32>
    %c0_174 = arith.constant 0 : index
    %c30_175 = arith.constant 30 : index
    %168 = vector.load %arg8[%c0_174, %c30_175] : memref<16x784xf32, #tpu.memory_space<vmem>>, vector<16x610xf32>
    %169 = arith.truncf %168 : vector<16x610xf32> to vector<16x610xbf16>
    %c2_176 = arith.constant 2 : index
    %c5_177 = arith.constant 5 : index
    %c0_178 = arith.constant 0 : index
    %c0_179 = arith.constant 0 : index
    %170 = vector.load %arg2[%c2_176, %c5_177, %c0_178, %c0_179] : memref<7x9x16x16xbf16, #tpu.memory_space<vmem>>, vector<1x1x16x16xbf16>
    %171 = vector.shape_cast %170 : vector<1x1x16x16xbf16> to vector<16x16xbf16>
    %cst_180 = arith.constant dense<0.000000e+00> : vector<16x610xf32>
    %172 = tpu.matmul %171, %169, %cst_180 {dimension_numbers = #tpu.dot_dimension_numbers<[1], [0], [0], [1], [0, 0, 1, 1], [], []>} : vector<16x16xbf16>, vector<16x610xbf16>, vector<16x610xf32> -> vector<16x610xf32>
    %173 = arith.addf %167, %172 : vector<16x610xf32>
    %c0_181 = arith.constant 0 : index
    %c56_182 = arith.constant 56 : index
    %174 = vector.load %arg8[%c0_181, %c56_182] : memref<16x784xf32, #tpu.memory_space<vmem>>, vector<16x610xf32>
    %175 = arith.truncf %174 : vector<16x610xf32> to vector<16x610xbf16>
    %c2_183 = arith.constant 2 : index
    %c6_184 = arith.constant 6 : index
    %c0_185 = arith.constant 0 : index
    %c0_186 = arith.constant 0 : index
    %176 = vector.load %arg2[%c2_183, %c6_184, %c0_185, %c0_186] : memref<7x9x16x16xbf16, #tpu.memory_space<vmem>>, vector<1x1x16x16xbf16>
    %177 = vector.shape_cast %176 : vector<1x1x16x16xbf16> to vector<16x16xbf16>
    %cst_187 = arith.constant dense<0.000000e+00> : vector<16x610xf32>
    %178 = tpu.matmul %177, %175, %cst_187 {dimension_numbers = #tpu.dot_dimension_numbers<[1], [0], [0], [1], [0, 0, 1, 1], [], []>} : vector<16x16xbf16>, vector<16x610xbf16>, vector<16x610xf32> -> vector<16x610xf32>
    %179 = arith.addf %173, %178 : vector<16x610xf32>
    %c0_188 = arith.constant 0 : index
    %c57_189 = arith.constant 57 : index
    %180 = vector.load %arg8[%c0_188, %c57_189] : memref<16x784xf32, #tpu.memory_space<vmem>>, vector<16x610xf32>
    %181 = arith.truncf %180 : vector<16x610xf32> to vector<16x610xbf16>
    %c2_190 = arith.constant 2 : index
    %c7_191 = arith.constant 7 : index
    %c0_192 = arith.constant 0 : index
    %c0_193 = arith.constant 0 : index
    %182 = vector.load %arg2[%c2_190, %c7_191, %c0_192, %c0_193] : memref<7x9x16x16xbf16, #tpu.memory_space<vmem>>, vector<1x1x16x16xbf16>
    %183 = vector.shape_cast %182 : vector<1x1x16x16xbf16> to vector<16x16xbf16>
    %cst_194 = arith.constant dense<0.000000e+00> : vector<16x610xf32>
    %184 = tpu.matmul %183, %181, %cst_194 {dimension_numbers = #tpu.dot_dimension_numbers<[1], [0], [0], [1], [0, 0, 1, 1], [], []>} : vector<16x16xbf16>, vector<16x610xbf16>, vector<16x610xf32> -> vector<16x610xf32>
    %185 = arith.addf %179, %184 : vector<16x610xf32>
    %c0_195 = arith.constant 0 : index
    %c58_196 = arith.constant 58 : index
    %186 = vector.load %arg8[%c0_195, %c58_196] : memref<16x784xf32, #tpu.memory_space<vmem>>, vector<16x610xf32>
    %187 = arith.truncf %186 : vector<16x610xf32> to vector<16x610xbf16>
    %c2_197 = arith.constant 2 : index
    %c8_198 = arith.constant 8 : index
    %c0_199 = arith.constant 0 : index
    %c0_200 = arith.constant 0 : index
    %188 = vector.load %arg2[%c2_197, %c8_198, %c0_199, %c0_200] : memref<7x9x16x16xbf16, #tpu.memory_space<vmem>>, vector<1x1x16x16xbf16>
    %189 = vector.shape_cast %188 : vector<1x1x16x16xbf16> to vector<16x16xbf16>
    %cst_201 = arith.constant dense<0.000000e+00> : vector<16x610xf32>
    %190 = tpu.matmul %189, %187, %cst_201 {dimension_numbers = #tpu.dot_dimension_numbers<[1], [0], [0], [1], [0, 0, 1, 1], [], []>} : vector<16x16xbf16>, vector<16x610xbf16>, vector<16x610xf32> -> vector<16x610xf32>
    %191 = arith.addf %185, %190 : vector<16x610xf32>
    %cst_202 = arith.constant 0.000000e+00 : f32
    %192 = vector.broadcast %cst_202 : f32 to vector<16x610xf32>
    %193 = arith.maximumf %191, %192 : vector<16x610xf32>
    %c2_203 = arith.constant 2 : index
    %c0_204 = arith.constant 0 : index
    %c0_205 = arith.constant 0 : index
    %194 = vector.load %arg3[%c2_203, %c0_204, %c0_205] : memref<7x16x1xf32, #tpu.memory_space<vmem>>, vector<1x16x1xf32>
    %195 = vector.shape_cast %194 : vector<1x16x1xf32> to vector<16x1xf32>
    %196 = vector.broadcast %195 : vector<16x1xf32> to vector<16x610xf32>
    %197 = arith.mulf %193, %196 : vector<16x610xf32>
    %c2_206 = arith.constant 2 : index
    %c0_207 = arith.constant 0 : index
    %c0_208 = arith.constant 0 : index
    %198 = vector.load %arg4[%c2_206, %c0_207, %c0_208] : memref<7x16x1xf32, #tpu.memory_space<vmem>>, vector<1x16x1xf32>
    %199 = vector.shape_cast %198 : vector<1x16x1xf32> to vector<16x1xf32>
    %200 = vector.broadcast %199 : vector<16x1xf32> to vector<16x610xf32>
    %201 = arith.addf %197, %200 : vector<16x610xf32>
    %c0_209 = arith.constant 0 : index
    %c0_210 = arith.constant 0 : index
    %202 = vector.load %arg9[%c0_209, %c0_210] : memref<16x784xf32, #tpu.memory_space<vmem>>, vector<16x610xf32>
    tpu.vector_store %arg9[%c0_209, %c0_210], %201 {strides = array<i32>} : memref<16x784xf32, #tpu.memory_space<vmem>>, vector<16x610xf32>,
    %cst_211 = arith.constant 0.000000e+00 : f32
    %203 = vector.broadcast %cst_211 : f32 to vector<16x552xf32>
    %c0_212 = arith.constant 0 : index
    %c0_213 = arith.constant 0 : index
    %204 = vector.load %arg9[%c0_212, %c0_213] : memref<16x784xf32, #tpu.memory_space<vmem>>, vector<16x552xf32>
    %205 = arith.truncf %204 : vector<16x552xf32> to vector<16x552xbf16>
    %c3_214 = arith.constant 3 : index
    %c0_215 = arith.constant 0 : index
    %c0_216 = arith.constant 0 : index
    %c0_217 = arith.constant 0 : index
    %206 = vector.load %arg2[%c3_214, %c0_215, %c0_216, %c0_217] : memref<7x9x16x16xbf16, #tpu.memory_space<vmem>>, vector<1x1x16x16xbf16>
    %207 = vector.shape_cast %206 : vector<1x1x16x16xbf16> to vector<16x16xbf16>
    %cst_218 = arith.constant dense<0.000000e+00> : vector<16x552xf32>
    %208 = tpu.matmul %207, %205, %cst_218 {dimension_numbers = #tpu.dot_dimension_numbers<[1], [0], [0], [1], [0, 0, 1, 1], [], []>} : vector<16x16xbf16>, vector<16x552xbf16>, vector<16x552xf32> -> vector<16x552xf32>
    %209 = arith.addf %203, %208 : vector<16x552xf32>
    %c0_219 = arith.constant 0 : index
    %c1_220 = arith.constant 1 : index
    %210 = vector.load %arg9[%c0_219, %c1_220] : memref<16x784xf32, #tpu.memory_space<vmem>>, vector<16x552xf32>
    %211 = arith.truncf %210 : vector<16x552xf32> to vector<16x552xbf16>
    %c3_221 = arith.constant 3 : index
    %c1_222 = arith.constant 1 : index
    %c0_223 = arith.constant 0 : index
    %c0_224 = arith.constant 0 : index
    %212 = vector.load %arg2[%c3_221, %c1_222, %c0_223, %c0_224] : memref<7x9x16x16xbf16, #tpu.memory_space<vmem>>, vector<1x1x16x16xbf16>
    %213 = vector.shape_cast %212 : vector<1x1x16x16xbf16> to vector<16x16xbf16>
    %cst_225 = arith.constant dense<0.000000e+00> : vector<16x552xf32>
    %214 = tpu.matmul %213, %211, %cst_225 {dimension_numbers = #tpu.dot_dimension_numbers<[1], [0], [0], [1], [0, 0, 1, 1], [], []>} : vector<16x16xbf16>, vector<16x552xbf16>, vector<16x552xf32> -> vector<16x552xf32>
    %215 = arith.addf %209, %214 : vector<16x552xf32>
    %c0_226 = arith.constant 0 : index
    %c2_227 = arith.constant 2 : index
    %216 = vector.load %arg9[%c0_226, %c2_227] : memref<16x784xf32, #tpu.memory_space<vmem>>, vector<16x552xf32>
    %217 = arith.truncf %216 : vector<16x552xf32> to vector<16x552xbf16>
    %c3_228 = arith.constant 3 : index
    %c2_229 = arith.constant 2 : index
    %c0_230 = arith.constant 0 : index
    %c0_231 = arith.constant 0 : index
    %218 = vector.load %arg2[%c3_228, %c2_229, %c0_230, %c0_231] : memref<7x9x16x16xbf16, #tpu.memory_space<vmem>>, vector<1x1x16x16xbf16>
    %219 = vector.shape_cast %218 : vector<1x1x16x16xbf16> to vector<16x16xbf16>
    %cst_232 = arith.constant dense<0.000000e+00> : vector<16x552xf32>
    %220 = tpu.matmul %219, %217, %cst_232 {dimension_numbers = #tpu.dot_dimension_numbers<[1], [0], [0], [1], [0, 0, 1, 1], [], []>} : vector<16x16xbf16>, vector<16x552xbf16>, vector<16x552xf32> -> vector<16x552xf32>
    %221 = arith.addf %215, %220 : vector<16x552xf32>
    %c0_233 = arith.constant 0 : index
    %c28_234 = arith.constant 28 : index
    %222 = vector.load %arg9[%c0_233, %c28_234] : memref<16x784xf32, #tpu.memory_space<vmem>>, vector<16x552xf32>
    %223 = arith.truncf %222 : vector<16x552xf32> to vector<16x552xbf16>
    %c3_235 = arith.constant 3 : index
    %c3_236 = arith.constant 3 : index
    %c0_237 = arith.constant 0 : index
    %c0_238 = arith.constant 0 : index
    %224 = vector.load %arg2[%c3_235, %c3_236, %c0_237, %c0_238] : memref<7x9x16x16xbf16, #tpu.memory_space<vmem>>, vector<1x1x16x16xbf16>
    %225 = vector.shape_cast %224 : vector<1x1x16x16xbf16> to vector<16x16xbf16>
    %cst_239 = arith.constant dense<0.000000e+00> : vector<16x552xf32>
    %226 = tpu.matmul %225, %223, %cst_239 {dimension_numbers = #tpu.dot_dimension_numbers<[1], [0], [0], [1], [0, 0, 1, 1], [], []>} : vector<16x16xbf16>, vector<16x552xbf16>, vector<16x552xf32> -> vector<16x552xf32>
    %227 = arith.addf %221, %226 : vector<16x552xf32>
    %c0_240 = arith.constant 0 : index
    %c29_241 = arith.constant 29 : index
    %228 = vector.load %arg9[%c0_240, %c29_241] : memref<16x784xf32, #tpu.memory_space<vmem>>, vector<16x552xf32>
    %229 = arith.truncf %228 : vector<16x552xf32> to vector<16x552xbf16>
    %c3_242 = arith.constant 3 : index
    %c4_243 = arith.constant 4 : index
    %c0_244 = arith.constant 0 : index
    %c0_245 = arith.constant 0 : index
    %230 = vector.load %arg2[%c3_242, %c4_243, %c0_244, %c0_245] : memref<7x9x16x16xbf16, #tpu.memory_space<vmem>>, vector<1x1x16x16xbf16>
    %231 = vector.shape_cast %230 : vector<1x1x16x16xbf16> to vector<16x16xbf16>
    %cst_246 = arith.constant dense<0.000000e+00> : vector<16x552xf32>
    %232 = tpu.matmul %231, %229, %cst_246 {dimension_numbers = #tpu.dot_dimension_numbers<[1], [0], [0], [1], [0, 0, 1, 1], [], []>} : vector<16x16xbf16>, vector<16x552xbf16>, vector<16x552xf32> -> vector<16x552xf32>
    %233 = arith.addf %227, %232 : vector<16x552xf32>
    %c0_247 = arith.constant 0 : index
    %c30_248 = arith.constant 30 : index
    %234 = vector.load %arg9[%c0_247, %c30_248] : memref<16x784xf32, #tpu.memory_space<vmem>>, vector<16x552xf32>
    %235 = arith.truncf %234 : vector<16x552xf32> to vector<16x552xbf16>
    %c3_249 = arith.constant 3 : index
    %c5_250 = arith.constant 5 : index
    %c0_251 = arith.constant 0 : index
    %c0_252 = arith.constant 0 : index
    %236 = vector.load %arg2[%c3_249, %c5_250, %c0_251, %c0_252] : memref<7x9x16x16xbf16, #tpu.memory_space<vmem>>, vector<1x1x16x16xbf16>
    %237 = vector.shape_cast %236 : vector<1x1x16x16xbf16> to vector<16x16xbf16>
    %cst_253 = arith.constant dense<0.000000e+00> : vector<16x552xf32>
    %238 = tpu.matmul %237, %235, %cst_253 {dimension_numbers = #tpu.dot_dimension_numbers<[1], [0], [0], [1], [0, 0, 1, 1], [], []>} : vector<16x16xbf16>, vector<16x552xbf16>, vector<16x552xf32> -> vector<16x552xf32>
    %239 = arith.addf %233, %238 : vector<16x552xf32>
    %c0_254 = arith.constant 0 : index
    %c56_255 = arith.constant 56 : index
    %240 = vector.load %arg9[%c0_254, %c56_255] : memref<16x784xf32, #tpu.memory_space<vmem>>, vector<16x552xf32>
    %241 = arith.truncf %240 : vector<16x552xf32> to vector<16x552xbf16>
    %c3_256 = arith.constant 3 : index
    %c6_257 = arith.constant 6 : index
    %c0_258 = arith.constant 0 : index
    %c0_259 = arith.constant 0 : index
    %242 = vector.load %arg2[%c3_256, %c6_257, %c0_258, %c0_259] : memref<7x9x16x16xbf16, #tpu.memory_space<vmem>>, vector<1x1x16x16xbf16>
    %243 = vector.shape_cast %242 : vector<1x1x16x16xbf16> to vector<16x16xbf16>
    %cst_260 = arith.constant dense<0.000000e+00> : vector<16x552xf32>
    %244 = tpu.matmul %243, %241, %cst_260 {dimension_numbers = #tpu.dot_dimension_numbers<[1], [0], [0], [1], [0, 0, 1, 1], [], []>} : vector<16x16xbf16>, vector<16x552xbf16>, vector<16x552xf32> -> vector<16x552xf32>
    %245 = arith.addf %239, %244 : vector<16x552xf32>
    %c0_261 = arith.constant 0 : index
    %c57_262 = arith.constant 57 : index
    %246 = vector.load %arg9[%c0_261, %c57_262] : memref<16x784xf32, #tpu.memory_space<vmem>>, vector<16x552xf32>
    %247 = arith.truncf %246 : vector<16x552xf32> to vector<16x552xbf16>
    %c3_263 = arith.constant 3 : index
    %c7_264 = arith.constant 7 : index
    %c0_265 = arith.constant 0 : index
    %c0_266 = arith.constant 0 : index
    %248 = vector.load %arg2[%c3_263, %c7_264, %c0_265, %c0_266] : memref<7x9x16x16xbf16, #tpu.memory_space<vmem>>, vector<1x1x16x16xbf16>
    %249 = vector.shape_cast %248 : vector<1x1x16x16xbf16> to vector<16x16xbf16>
    %cst_267 = arith.constant dense<0.000000e+00> : vector<16x552xf32>
    %250 = tpu.matmul %249, %247, %cst_267 {dimension_numbers = #tpu.dot_dimension_numbers<[1], [0], [0], [1], [0, 0, 1, 1], [], []>} : vector<16x16xbf16>, vector<16x552xbf16>, vector<16x552xf32> -> vector<16x552xf32>
    %251 = arith.addf %245, %250 : vector<16x552xf32>
    %c0_268 = arith.constant 0 : index
    %c58_269 = arith.constant 58 : index
    %252 = vector.load %arg9[%c0_268, %c58_269] : memref<16x784xf32, #tpu.memory_space<vmem>>, vector<16x552xf32>
    %253 = arith.truncf %252 : vector<16x552xf32> to vector<16x552xbf16>
    %c3_270 = arith.constant 3 : index
    %c8_271 = arith.constant 8 : index
    %c0_272 = arith.constant 0 : index
    %c0_273 = arith.constant 0 : index
    %254 = vector.load %arg2[%c3_270, %c8_271, %c0_272, %c0_273] : memref<7x9x16x16xbf16, #tpu.memory_space<vmem>>, vector<1x1x16x16xbf16>
    %255 = vector.shape_cast %254 : vector<1x1x16x16xbf16> to vector<16x16xbf16>
    %cst_274 = arith.constant dense<0.000000e+00> : vector<16x552xf32>
    %256 = tpu.matmul %255, %253, %cst_274 {dimension_numbers = #tpu.dot_dimension_numbers<[1], [0], [0], [1], [0, 0, 1, 1], [], []>} : vector<16x16xbf16>, vector<16x552xbf16>, vector<16x552xf32> -> vector<16x552xf32>
    %257 = arith.addf %251, %256 : vector<16x552xf32>
    %cst_275 = arith.constant 0.000000e+00 : f32
    %258 = vector.broadcast %cst_275 : f32 to vector<16x552xf32>
    %259 = arith.maximumf %257, %258 : vector<16x552xf32>
    %c3_276 = arith.constant 3 : index
    %c0_277 = arith.constant 0 : index
    %c0_278 = arith.constant 0 : index
    %260 = vector.load %arg3[%c3_276, %c0_277, %c0_278] : memref<7x16x1xf32, #tpu.memory_space<vmem>>, vector<1x16x1xf32>
    %261 = vector.shape_cast %260 : vector<1x16x1xf32> to vector<16x1xf32>
    %262 = vector.broadcast %261 : vector<16x1xf32> to vector<16x552xf32>
    %263 = arith.mulf %259, %262 : vector<16x552xf32>
    %c3_279 = arith.constant 3 : index
    %c0_280 = arith.constant 0 : index
    %c0_281 = arith.constant 0 : index
    %264 = vector.load %arg4[%c3_279, %c0_280, %c0_281] : memref<7x16x1xf32, #tpu.memory_space<vmem>>, vector<1x16x1xf32>
    %265 = vector.shape_cast %264 : vector<1x16x1xf32> to vector<16x1xf32>
    %266 = vector.broadcast %265 : vector<16x1xf32> to vector<16x552xf32>
    %267 = arith.addf %263, %266 : vector<16x552xf32>
    %268 = vector.extract_strided_slice %267 {offsets = [0, 0], sizes = [16, 523], strides = [1, 1]} : vector<16x552xf32> to vector<16x523xf32>
    %269 = vector.extract_strided_slice %267 {offsets = [0, 1], sizes = [16, 523], strides = [1, 1]} : vector<16x552xf32> to vector<16x523xf32>
    %270 = arith.maximumf %268, %269 : vector<16x523xf32>
    %271 = vector.extract_strided_slice %267 {offsets = [0, 28], sizes = [16, 523], strides = [1, 1]} : vector<16x552xf32> to vector<16x523xf32>
    %272 = vector.extract_strided_slice %267 {offsets = [0, 29], sizes = [16, 523], strides = [1, 1]} : vector<16x552xf32> to vector<16x523xf32>
    %273 = arith.maximumf %271, %272 : vector<16x523xf32>
    %274 = arith.maximumf %270, %273 : vector<16x523xf32>
    %275 = arith.truncf %274 : vector<16x523xf32> to vector<16x523xbf16>
    %c0_282 = arith.constant 0 : index
    %c0_283 = arith.constant 0 : index
    %276 = vector.load %arg6[%c0_282, %c0_283] : memref<523x128xbf16, #tpu.memory_space<vmem>>, vector<523x128xbf16>
    %cst_284 = arith.constant dense<0.000000e+00> : vector<16x128xf32>
    %277 = tpu.matmul %275, %276, %cst_284 {dimension_numbers = #tpu.dot_dimension_numbers<[1], [0], [0], [1], [0, 0, 1, 1], [], []>} : vector<16x523xbf16>, vector<523x128xbf16>, vector<16x128xf32> -> vector<16x128xf32>
    %c0_285 = arith.constant 0 : index
    %c0_286 = arith.constant 0 : index
    %278 = vector.load %arg8[%c0_285, %c0_286] : memref<16x784xf32, #tpu.memory_space<vmem>>, vector<16x128xf32>
    tpu.vector_store %arg8[%c0_285, %c0_286], %277 {strides = array<i32>} : memref<16x784xf32, #tpu.memory_space<vmem>>, vector<16x128xf32>,
    %cst_287 = arith.constant 0.000000e+00 : f32
    %279 = vector.broadcast %cst_287 : f32 to vector<16x78xf32>
    %c0_288 = arith.constant 0 : index
    %c0_289 = arith.constant 0 : index
    %280 = vector.load %arg8[%c0_288, %c0_289] : memref<16x784xf32, #tpu.memory_space<vmem>>, vector<16x78xf32>
    %281 = arith.truncf %280 : vector<16x78xf32> to vector<16x78xbf16>
    %c4_290 = arith.constant 4 : index
    %c0_291 = arith.constant 0 : index
    %c0_292 = arith.constant 0 : index
    %c0_293 = arith.constant 0 : index
    %282 = vector.load %arg2[%c4_290, %c0_291, %c0_292, %c0_293] : memref<7x9x16x16xbf16, #tpu.memory_space<vmem>>, vector<1x1x16x16xbf16>
    %283 = vector.shape_cast %282 : vector<1x1x16x16xbf16> to vector<16x16xbf16>
    %cst_294 = arith.constant dense<0.000000e+00> : vector<16x78xf32>
    %284 = tpu.matmul %283, %281, %cst_294 {dimension_numbers = #tpu.dot_dimension_numbers<[1], [0], [0], [1], [0, 0, 1, 1], [], []>} : vector<16x16xbf16>, vector<16x78xbf16>, vector<16x78xf32> -> vector<16x78xf32>
    %285 = arith.addf %279, %284 : vector<16x78xf32>
    %c0_295 = arith.constant 0 : index
    %c1_296 = arith.constant 1 : index
    %286 = vector.load %arg8[%c0_295, %c1_296] : memref<16x784xf32, #tpu.memory_space<vmem>>, vector<16x78xf32>
    %287 = arith.truncf %286 : vector<16x78xf32> to vector<16x78xbf16>
    %c4_297 = arith.constant 4 : index
    %c1_298 = arith.constant 1 : index
    %c0_299 = arith.constant 0 : index
    %c0_300 = arith.constant 0 : index
    %288 = vector.load %arg2[%c4_297, %c1_298, %c0_299, %c0_300] : memref<7x9x16x16xbf16, #tpu.memory_space<vmem>>, vector<1x1x16x16xbf16>
    %289 = vector.shape_cast %288 : vector<1x1x16x16xbf16> to vector<16x16xbf16>
    %cst_301 = arith.constant dense<0.000000e+00> : vector<16x78xf32>
    %290 = tpu.matmul %289, %287, %cst_301 {dimension_numbers = #tpu.dot_dimension_numbers<[1], [0], [0], [1], [0, 0, 1, 1], [], []>} : vector<16x16xbf16>, vector<16x78xbf16>, vector<16x78xf32> -> vector<16x78xf32>
    %291 = arith.addf %285, %290 : vector<16x78xf32>
    %c0_302 = arith.constant 0 : index
    %c2_303 = arith.constant 2 : index
    %292 = vector.load %arg8[%c0_302, %c2_303] : memref<16x784xf32, #tpu.memory_space<vmem>>, vector<16x78xf32>
    %293 = arith.truncf %292 : vector<16x78xf32> to vector<16x78xbf16>
    %c4_304 = arith.constant 4 : index
    %c2_305 = arith.constant 2 : index
    %c0_306 = arith.constant 0 : index
    %c0_307 = arith.constant 0 : index
    %294 = vector.load %arg2[%c4_304, %c2_305, %c0_306, %c0_307] : memref<7x9x16x16xbf16, #tpu.memory_space<vmem>>, vector<1x1x16x16xbf16>
    %295 = vector.shape_cast %294 : vector<1x1x16x16xbf16> to vector<16x16xbf16>
    %cst_308 = arith.constant dense<0.000000e+00> : vector<16x78xf32>
    %296 = tpu.matmul %295, %293, %cst_308 {dimension_numbers = #tpu.dot_dimension_numbers<[1], [0], [0], [1], [0, 0, 1, 1], [], []>} : vector<16x16xbf16>, vector<16x78xbf16>, vector<16x78xf32> -> vector<16x78xf32>
    %297 = arith.addf %291, %296 : vector<16x78xf32>
    %c0_309 = arith.constant 0 : index
    %c10 = arith.constant 10 : index
    %298 = vector.load %arg8[%c0_309, %c10] : memref<16x784xf32, #tpu.memory_space<vmem>>, vector<16x78xf32>
    %299 = arith.truncf %298 : vector<16x78xf32> to vector<16x78xbf16>
    %c4_310 = arith.constant 4 : index
    %c3_311 = arith.constant 3 : index
    %c0_312 = arith.constant 0 : index
    %c0_313 = arith.constant 0 : index
    %300 = vector.load %arg2[%c4_310, %c3_311, %c0_312, %c0_313] : memref<7x9x16x16xbf16, #tpu.memory_space<vmem>>, vector<1x1x16x16xbf16>
    %301 = vector.shape_cast %300 : vector<1x1x16x16xbf16> to vector<16x16xbf16>
    %cst_314 = arith.constant dense<0.000000e+00> : vector<16x78xf32>
    %302 = tpu.matmul %301, %299, %cst_314 {dimension_numbers = #tpu.dot_dimension_numbers<[1], [0], [0], [1], [0, 0, 1, 1], [], []>} : vector<16x16xbf16>, vector<16x78xbf16>, vector<16x78xf32> -> vector<16x78xf32>
    %303 = arith.addf %297, %302 : vector<16x78xf32>
    %c0_315 = arith.constant 0 : index
    %c11 = arith.constant 11 : index
    %304 = vector.load %arg8[%c0_315, %c11] : memref<16x784xf32, #tpu.memory_space<vmem>>, vector<16x78xf32>
    %305 = arith.truncf %304 : vector<16x78xf32> to vector<16x78xbf16>
    %c4_316 = arith.constant 4 : index
    %c4_317 = arith.constant 4 : index
    %c0_318 = arith.constant 0 : index
    %c0_319 = arith.constant 0 : index
    %306 = vector.load %arg2[%c4_316, %c4_317, %c0_318, %c0_319] : memref<7x9x16x16xbf16, #tpu.memory_space<vmem>>, vector<1x1x16x16xbf16>
    %307 = vector.shape_cast %306 : vector<1x1x16x16xbf16> to vector<16x16xbf16>
    %cst_320 = arith.constant dense<0.000000e+00> : vector<16x78xf32>
    %308 = tpu.matmul %307, %305, %cst_320 {dimension_numbers = #tpu.dot_dimension_numbers<[1], [0], [0], [1], [0, 0, 1, 1], [], []>} : vector<16x16xbf16>, vector<16x78xbf16>, vector<16x78xf32> -> vector<16x78xf32>
    %309 = arith.addf %303, %308 : vector<16x78xf32>
    %c0_321 = arith.constant 0 : index
    %c12 = arith.constant 12 : index
    %310 = vector.load %arg8[%c0_321, %c12] : memref<16x784xf32, #tpu.memory_space<vmem>>, vector<16x78xf32>
    %311 = arith.truncf %310 : vector<16x78xf32> to vector<16x78xbf16>
    %c4_322 = arith.constant 4 : index
    %c5_323 = arith.constant 5 : index
    %c0_324 = arith.constant 0 : index
    %c0_325 = arith.constant 0 : index
    %312 = vector.load %arg2[%c4_322, %c5_323, %c0_324, %c0_325] : memref<7x9x16x16xbf16, #tpu.memory_space<vmem>>, vector<1x1x16x16xbf16>
    %313 = vector.shape_cast %312 : vector<1x1x16x16xbf16> to vector<16x16xbf16>
    %cst_326 = arith.constant dense<0.000000e+00> : vector<16x78xf32>
    %314 = tpu.matmul %313, %311, %cst_326 {dimension_numbers = #tpu.dot_dimension_numbers<[1], [0], [0], [1], [0, 0, 1, 1], [], []>} : vector<16x16xbf16>, vector<16x78xbf16>, vector<16x78xf32> -> vector<16x78xf32>
    %315 = arith.addf %309, %314 : vector<16x78xf32>
    %c0_327 = arith.constant 0 : index
    %c20 = arith.constant 20 : index
    %316 = vector.load %arg8[%c0_327, %c20] : memref<16x784xf32, #tpu.memory_space<vmem>>, vector<16x78xf32>
    %317 = arith.truncf %316 : vector<16x78xf32> to vector<16x78xbf16>
    %c4_328 = arith.constant 4 : index
    %c6_329 = arith.constant 6 : index
    %c0_330 = arith.constant 0 : index
    %c0_331 = arith.constant 0 : index
    %318 = vector.load %arg2[%c4_328, %c6_329, %c0_330, %c0_331] : memref<7x9x16x16xbf16, #tpu.memory_space<vmem>>, vector<1x1x16x16xbf16>
    %319 = vector.shape_cast %318 : vector<1x1x16x16xbf16> to vector<16x16xbf16>
    %cst_332 = arith.constant dense<0.000000e+00> : vector<16x78xf32>
    %320 = tpu.matmul %319, %317, %cst_332 {dimension_numbers = #tpu.dot_dimension_numbers<[1], [0], [0], [1], [0, 0, 1, 1], [], []>} : vector<16x16xbf16>, vector<16x78xbf16>, vector<16x78xf32> -> vector<16x78xf32>
    %321 = arith.addf %315, %320 : vector<16x78xf32>
    %c0_333 = arith.constant 0 : index
    %c21 = arith.constant 21 : index
    %322 = vector.load %arg8[%c0_333, %c21] : memref<16x784xf32, #tpu.memory_space<vmem>>, vector<16x78xf32>
    %323 = arith.truncf %322 : vector<16x78xf32> to vector<16x78xbf16>
    %c4_334 = arith.constant 4 : index
    %c7_335 = arith.constant 7 : index
    %c0_336 = arith.constant 0 : index
    %c0_337 = arith.constant 0 : index
    %324 = vector.load %arg2[%c4_334, %c7_335, %c0_336, %c0_337] : memref<7x9x16x16xbf16, #tpu.memory_space<vmem>>, vector<1x1x16x16xbf16>
    %325 = vector.shape_cast %324 : vector<1x1x16x16xbf16> to vector<16x16xbf16>
    %cst_338 = arith.constant dense<0.000000e+00> : vector<16x78xf32>
    %326 = tpu.matmul %325, %323, %cst_338 {dimension_numbers = #tpu.dot_dimension_numbers<[1], [0], [0], [1], [0, 0, 1, 1], [], []>} : vector<16x16xbf16>, vector<16x78xbf16>, vector<16x78xf32> -> vector<16x78xf32>
    %327 = arith.addf %321, %326 : vector<16x78xf32>
    %c0_339 = arith.constant 0 : index
    %c22 = arith.constant 22 : index
    %328 = vector.load %arg8[%c0_339, %c22] : memref<16x784xf32, #tpu.memory_space<vmem>>, vector<16x78xf32>
    %329 = arith.truncf %328 : vector<16x78xf32> to vector<16x78xbf16>
    %c4_340 = arith.constant 4 : index
    %c8_341 = arith.constant 8 : index
    %c0_342 = arith.constant 0 : index
    %c0_343 = arith.constant 0 : index
    %330 = vector.load %arg2[%c4_340, %c8_341, %c0_342, %c0_343] : memref<7x9x16x16xbf16, #tpu.memory_space<vmem>>, vector<1x1x16x16xbf16>
    %331 = vector.shape_cast %330 : vector<1x1x16x16xbf16> to vector<16x16xbf16>
    %cst_344 = arith.constant dense<0.000000e+00> : vector<16x78xf32>
    %332 = tpu.matmul %331, %329, %cst_344 {dimension_numbers = #tpu.dot_dimension_numbers<[1], [0], [0], [1], [0, 0, 1, 1], [], []>} : vector<16x16xbf16>, vector<16x78xbf16>, vector<16x78xf32> -> vector<16x78xf32>
    %333 = arith.addf %327, %332 : vector<16x78xf32>
    %cst_345 = arith.constant 0.000000e+00 : f32
    %334 = vector.broadcast %cst_345 : f32 to vector<16x78xf32>
    %335 = arith.maximumf %333, %334 : vector<16x78xf32>
    %c4_346 = arith.constant 4 : index
    %c0_347 = arith.constant 0 : index
    %c0_348 = arith.constant 0 : index
    %336 = vector.load %arg3[%c4_346, %c0_347, %c0_348] : memref<7x16x1xf32, #tpu.memory_space<vmem>>, vector<1x16x1xf32>
    %337 = vector.shape_cast %336 : vector<1x16x1xf32> to vector<16x1xf32>
    %338 = vector.broadcast %337 : vector<16x1xf32> to vector<16x78xf32>
    %339 = arith.mulf %335, %338 : vector<16x78xf32>
    %c4_349 = arith.constant 4 : index
    %c0_350 = arith.constant 0 : index
    %c0_351 = arith.constant 0 : index
    %340 = vector.load %arg4[%c4_349, %c0_350, %c0_351] : memref<7x16x1xf32, #tpu.memory_space<vmem>>, vector<1x16x1xf32>
    %341 = vector.shape_cast %340 : vector<1x16x1xf32> to vector<16x1xf32>
    %342 = vector.broadcast %341 : vector<16x1xf32> to vector<16x78xf32>
    %343 = arith.addf %339, %342 : vector<16x78xf32>
    %c0_352 = arith.constant 0 : index
    %c0_353 = arith.constant 0 : index
    %344 = vector.load %arg9[%c0_352, %c0_353] : memref<16x784xf32, #tpu.memory_space<vmem>>, vector<16x78xf32>
    tpu.vector_store %arg9[%c0_352, %c0_353], %343 {strides = array<i32>} : memref<16x784xf32, #tpu.memory_space<vmem>>, vector<16x78xf32>,
    %cst_354 = arith.constant 0.000000e+00 : f32
    %345 = vector.broadcast %cst_354 : f32 to vector<16x56xf32>
    %c0_355 = arith.constant 0 : index
    %c0_356 = arith.constant 0 : index
    %346 = vector.load %arg9[%c0_355, %c0_356] : memref<16x784xf32, #tpu.memory_space<vmem>>, vector<16x56xf32>
    %347 = arith.truncf %346 : vector<16x56xf32> to vector<16x56xbf16>
    %c5_357 = arith.constant 5 : index
    %c0_358 = arith.constant 0 : index
    %c0_359 = arith.constant 0 : index
    %c0_360 = arith.constant 0 : index
    %348 = vector.load %arg2[%c5_357, %c0_358, %c0_359, %c0_360] : memref<7x9x16x16xbf16, #tpu.memory_space<vmem>>, vector<1x1x16x16xbf16>
    %349 = vector.shape_cast %348 : vector<1x1x16x16xbf16> to vector<16x16xbf16>
    %cst_361 = arith.constant dense<0.000000e+00> : vector<16x56xf32>
    %350 = tpu.matmul %349, %347, %cst_361 {dimension_numbers = #tpu.dot_dimension_numbers<[1], [0], [0], [1], [0, 0, 1, 1], [], []>} : vector<16x16xbf16>, vector<16x56xbf16>, vector<16x56xf32> -> vector<16x56xf32>
    %351 = arith.addf %345, %350 : vector<16x56xf32>
    %c0_362 = arith.constant 0 : index
    %c1_363 = arith.constant 1 : index
    %352 = vector.load %arg9[%c0_362, %c1_363] : memref<16x784xf32, #tpu.memory_space<vmem>>, vector<16x56xf32>
    %353 = arith.truncf %352 : vector<16x56xf32> to vector<16x56xbf16>
    %c5_364 = arith.constant 5 : index
    %c1_365 = arith.constant 1 : index
    %c0_366 = arith.constant 0 : index
    %c0_367 = arith.constant 0 : index
    %354 = vector.load %arg2[%c5_364, %c1_365, %c0_366, %c0_367] : memref<7x9x16x16xbf16, #tpu.memory_space<vmem>>, vector<1x1x16x16xbf16>
    %355 = vector.shape_cast %354 : vector<1x1x16x16xbf16> to vector<16x16xbf16>
    %cst_368 = arith.constant dense<0.000000e+00> : vector<16x56xf32>
    %356 = tpu.matmul %355, %353, %cst_368 {dimension_numbers = #tpu.dot_dimension_numbers<[1], [0], [0], [1], [0, 0, 1, 1], [], []>} : vector<16x16xbf16>, vector<16x56xbf16>, vector<16x56xf32> -> vector<16x56xf32>
    %357 = arith.addf %351, %356 : vector<16x56xf32>
    %c0_369 = arith.constant 0 : index
    %c2_370 = arith.constant 2 : index
    %358 = vector.load %arg9[%c0_369, %c2_370] : memref<16x784xf32, #tpu.memory_space<vmem>>, vector<16x56xf32>
    %359 = arith.truncf %358 : vector<16x56xf32> to vector<16x56xbf16>
    %c5_371 = arith.constant 5 : index
    %c2_372 = arith.constant 2 : index
    %c0_373 = arith.constant 0 : index
    %c0_374 = arith.constant 0 : index
    %360 = vector.load %arg2[%c5_371, %c2_372, %c0_373, %c0_374] : memref<7x9x16x16xbf16, #tpu.memory_space<vmem>>, vector<1x1x16x16xbf16>
    %361 = vector.shape_cast %360 : vector<1x1x16x16xbf16> to vector<16x16xbf16>
    %cst_375 = arith.constant dense<0.000000e+00> : vector<16x56xf32>
    %362 = tpu.matmul %361, %359, %cst_375 {dimension_numbers = #tpu.dot_dimension_numbers<[1], [0], [0], [1], [0, 0, 1, 1], [], []>} : vector<16x16xbf16>, vector<16x56xbf16>, vector<16x56xf32> -> vector<16x56xf32>
    %363 = arith.addf %357, %362 : vector<16x56xf32>
    %c0_376 = arith.constant 0 : index
    %c10_377 = arith.constant 10 : index
    %364 = vector.load %arg9[%c0_376, %c10_377] : memref<16x784xf32, #tpu.memory_space<vmem>>, vector<16x56xf32>
    %365 = arith.truncf %364 : vector<16x56xf32> to vector<16x56xbf16>
    %c5_378 = arith.constant 5 : index
    %c3_379 = arith.constant 3 : index
    %c0_380 = arith.constant 0 : index
    %c0_381 = arith.constant 0 : index
    %366 = vector.load %arg2[%c5_378, %c3_379, %c0_380, %c0_381] : memref<7x9x16x16xbf16, #tpu.memory_space<vmem>>, vector<1x1x16x16xbf16>
    %367 = vector.shape_cast %366 : vector<1x1x16x16xbf16> to vector<16x16xbf16>
    %cst_382 = arith.constant dense<0.000000e+00> : vector<16x56xf32>
    %368 = tpu.matmul %367, %365, %cst_382 {dimension_numbers = #tpu.dot_dimension_numbers<[1], [0], [0], [1], [0, 0, 1, 1], [], []>} : vector<16x16xbf16>, vector<16x56xbf16>, vector<16x56xf32> -> vector<16x56xf32>
    %369 = arith.addf %363, %368 : vector<16x56xf32>
    %c0_383 = arith.constant 0 : index
    %c11_384 = arith.constant 11 : index
    %370 = vector.load %arg9[%c0_383, %c11_384] : memref<16x784xf32, #tpu.memory_space<vmem>>, vector<16x56xf32>
    %371 = arith.truncf %370 : vector<16x56xf32> to vector<16x56xbf16>
    %c5_385 = arith.constant 5 : index
    %c4_386 = arith.constant 4 : index
    %c0_387 = arith.constant 0 : index
    %c0_388 = arith.constant 0 : index
    %372 = vector.load %arg2[%c5_385, %c4_386, %c0_387, %c0_388] : memref<7x9x16x16xbf16, #tpu.memory_space<vmem>>, vector<1x1x16x16xbf16>
    %373 = vector.shape_cast %372 : vector<1x1x16x16xbf16> to vector<16x16xbf16>
    %cst_389 = arith.constant dense<0.000000e+00> : vector<16x56xf32>
    %374 = tpu.matmul %373, %371, %cst_389 {dimension_numbers = #tpu.dot_dimension_numbers<[1], [0], [0], [1], [0, 0, 1, 1], [], []>} : vector<16x16xbf16>, vector<16x56xbf16>, vector<16x56xf32> -> vector<16x56xf32>
    %375 = arith.addf %369, %374 : vector<16x56xf32>
    %c0_390 = arith.constant 0 : index
    %c12_391 = arith.constant 12 : index
    %376 = vector.load %arg9[%c0_390, %c12_391] : memref<16x784xf32, #tpu.memory_space<vmem>>, vector<16x56xf32>
    %377 = arith.truncf %376 : vector<16x56xf32> to vector<16x56xbf16>
    %c5_392 = arith.constant 5 : index
    %c5_393 = arith.constant 5 : index
    %c0_394 = arith.constant 0 : index
    %c0_395 = arith.constant 0 : index
    %378 = vector.load %arg2[%c5_392, %c5_393, %c0_394, %c0_395] : memref<7x9x16x16xbf16, #tpu.memory_space<vmem>>, vector<1x1x16x16xbf16>
    %379 = vector.shape_cast %378 : vector<1x1x16x16xbf16> to vector<16x16xbf16>
    %cst_396 = arith.constant dense<0.000000e+00> : vector<16x56xf32>
    %380 = tpu.matmul %379, %377, %cst_396 {dimension_numbers = #tpu.dot_dimension_numbers<[1], [0], [0], [1], [0, 0, 1, 1], [], []>} : vector<16x16xbf16>, vector<16x56xbf16>, vector<16x56xf32> -> vector<16x56xf32>
    %381 = arith.addf %375, %380 : vector<16x56xf32>
    %c0_397 = arith.constant 0 : index
    %c20_398 = arith.constant 20 : index
    %382 = vector.load %arg9[%c0_397, %c20_398] : memref<16x784xf32, #tpu.memory_space<vmem>>, vector<16x56xf32>
    %383 = arith.truncf %382 : vector<16x56xf32> to vector<16x56xbf16>
    %c5_399 = arith.constant 5 : index
    %c6_400 = arith.constant 6 : index
    %c0_401 = arith.constant 0 : index
    %c0_402 = arith.constant 0 : index
    %384 = vector.load %arg2[%c5_399, %c6_400, %c0_401, %c0_402] : memref<7x9x16x16xbf16, #tpu.memory_space<vmem>>, vector<1x1x16x16xbf16>
    %385 = vector.shape_cast %384 : vector<1x1x16x16xbf16> to vector<16x16xbf16>
    %cst_403 = arith.constant dense<0.000000e+00> : vector<16x56xf32>
    %386 = tpu.matmul %385, %383, %cst_403 {dimension_numbers = #tpu.dot_dimension_numbers<[1], [0], [0], [1], [0, 0, 1, 1], [], []>} : vector<16x16xbf16>, vector<16x56xbf16>, vector<16x56xf32> -> vector<16x56xf32>
    %387 = arith.addf %381, %386 : vector<16x56xf32>
    %c0_404 = arith.constant 0 : index
    %c21_405 = arith.constant 21 : index
    %388 = vector.load %arg9[%c0_404, %c21_405] : memref<16x784xf32, #tpu.memory_space<vmem>>, vector<16x56xf32>
    %389 = arith.truncf %388 : vector<16x56xf32> to vector<16x56xbf16>
    %c5_406 = arith.constant 5 : index
    %c7_407 = arith.constant 7 : index
    %c0_408 = arith.constant 0 : index
    %c0_409 = arith.constant 0 : index
    %390 = vector.load %arg2[%c5_406, %c7_407, %c0_408, %c0_409] : memref<7x9x16x16xbf16, #tpu.memory_space<vmem>>, vector<1x1x16x16xbf16>
    %391 = vector.shape_cast %390 : vector<1x1x16x16xbf16> to vector<16x16xbf16>
    %cst_410 = arith.constant dense<0.000000e+00> : vector<16x56xf32>
    %392 = tpu.matmul %391, %389, %cst_410 {dimension_numbers = #tpu.dot_dimension_numbers<[1], [0], [0], [1], [0, 0, 1, 1], [], []>} : vector<16x16xbf16>, vector<16x56xbf16>, vector<16x56xf32> -> vector<16x56xf32>
    %393 = arith.addf %387, %392 : vector<16x56xf32>
    %c0_411 = arith.constant 0 : index
    %c22_412 = arith.constant 22 : index
    %394 = vector.load %arg9[%c0_411, %c22_412] : memref<16x784xf32, #tpu.memory_space<vmem>>, vector<16x56xf32>
    %395 = arith.truncf %394 : vector<16x56xf32> to vector<16x56xbf16>
    %c5_413 = arith.constant 5 : index
    %c8_414 = arith.constant 8 : index
    %c0_415 = arith.constant 0 : index
    %c0_416 = arith.constant 0 : index
    %396 = vector.load %arg2[%c5_413, %c8_414, %c0_415, %c0_416] : memref<7x9x16x16xbf16, #tpu.memory_space<vmem>>, vector<1x1x16x16xbf16>
    %397 = vector.shape_cast %396 : vector<1x1x16x16xbf16> to vector<16x16xbf16>
    %cst_417 = arith.constant dense<0.000000e+00> : vector<16x56xf32>
    %398 = tpu.matmul %397, %395, %cst_417 {dimension_numbers = #tpu.dot_dimension_numbers<[1], [0], [0], [1], [0, 0, 1, 1], [], []>} : vector<16x16xbf16>, vector<16x56xbf16>, vector<16x56xf32> -> vector<16x56xf32>
    %399 = arith.addf %393, %398 : vector<16x56xf32>
    %cst_418 = arith.constant 0.000000e+00 : f32
    %400 = vector.broadcast %cst_418 : f32 to vector<16x56xf32>
    %401 = arith.maximumf %399, %400 : vector<16x56xf32>
    %c5_419 = arith.constant 5 : index
    %c0_420 = arith.constant 0 : index
    %c0_421 = arith.constant 0 : index
    %402 = vector.load %arg3[%c5_419, %c0_420, %c0_421] : memref<7x16x1xf32, #tpu.memory_space<vmem>>, vector<1x16x1xf32>
    %403 = vector.shape_cast %402 : vector<1x16x1xf32> to vector<16x1xf32>
    %404 = vector.broadcast %403 : vector<16x1xf32> to vector<16x56xf32>
    %405 = arith.mulf %401, %404 : vector<16x56xf32>
    %c5_422 = arith.constant 5 : index
    %c0_423 = arith.constant 0 : index
    %c0_424 = arith.constant 0 : index
    %406 = vector.load %arg4[%c5_422, %c0_423, %c0_424] : memref<7x16x1xf32, #tpu.memory_space<vmem>>, vector<1x16x1xf32>
    %407 = vector.shape_cast %406 : vector<1x16x1xf32> to vector<16x1xf32>
    %408 = vector.broadcast %407 : vector<16x1xf32> to vector<16x56xf32>
    %409 = arith.addf %405, %408 : vector<16x56xf32>
    %c0_425 = arith.constant 0 : index
    %c0_426 = arith.constant 0 : index
    %410 = vector.load %arg8[%c0_425, %c0_426] : memref<16x784xf32, #tpu.memory_space<vmem>>, vector<16x56xf32>
    tpu.vector_store %arg8[%c0_425, %c0_426], %409 {strides = array<i32>} : memref<16x784xf32, #tpu.memory_space<vmem>>, vector<16x56xf32>,
    %cst_427 = arith.constant 0.000000e+00 : f32
    %411 = vector.broadcast %cst_427 : f32 to vector<16x34xf32>
    %c0_428 = arith.constant 0 : index
    %c0_429 = arith.constant 0 : index
    %412 = vector.load %arg8[%c0_428, %c0_429] : memref<16x784xf32, #tpu.memory_space<vmem>>, vector<16x34xf32>
    %413 = arith.truncf %412 : vector<16x34xf32> to vector<16x34xbf16>
    %c6_430 = arith.constant 6 : index
    %c0_431 = arith.constant 0 : index
    %c0_432 = arith.constant 0 : index
    %c0_433 = arith.constant 0 : index
    %414 = vector.load %arg2[%c6_430, %c0_431, %c0_432, %c0_433] : memref<7x9x16x16xbf16, #tpu.memory_space<vmem>>, vector<1x1x16x16xbf16>
    %415 = vector.shape_cast %414 : vector<1x1x16x16xbf16> to vector<16x16xbf16>
    %cst_434 = arith.constant dense<0.000000e+00> : vector<16x34xf32>
    %416 = tpu.matmul %415, %413, %cst_434 {dimension_numbers = #tpu.dot_dimension_numbers<[1], [0], [0], [1], [0, 0, 1, 1], [], []>} : vector<16x16xbf16>, vector<16x34xbf16>, vector<16x34xf32> -> vector<16x34xf32>
    %417 = arith.addf %411, %416 : vector<16x34xf32>
    %c0_435 = arith.constant 0 : index
    %c1_436 = arith.constant 1 : index
    %418 = vector.load %arg8[%c0_435, %c1_436] : memref<16x784xf32, #tpu.memory_space<vmem>>, vector<16x34xf32>
    %419 = arith.truncf %418 : vector<16x34xf32> to vector<16x34xbf16>
    %c6_437 = arith.constant 6 : index
    %c1_438 = arith.constant 1 : index
    %c0_439 = arith.constant 0 : index
    %c0_440 = arith.constant 0 : index
    %420 = vector.load %arg2[%c6_437, %c1_438, %c0_439, %c0_440] : memref<7x9x16x16xbf16, #tpu.memory_space<vmem>>, vector<1x1x16x16xbf16>
    %421 = vector.shape_cast %420 : vector<1x1x16x16xbf16> to vector<16x16xbf16>
    %cst_441 = arith.constant dense<0.000000e+00> : vector<16x34xf32>
    %422 = tpu.matmul %421, %419, %cst_441 {dimension_numbers = #tpu.dot_dimension_numbers<[1], [0], [0], [1], [0, 0, 1, 1], [], []>} : vector<16x16xbf16>, vector<16x34xbf16>, vector<16x34xf32> -> vector<16x34xf32>
    %423 = arith.addf %417, %422 : vector<16x34xf32>
    %c0_442 = arith.constant 0 : index
    %c2_443 = arith.constant 2 : index
    %424 = vector.load %arg8[%c0_442, %c2_443] : memref<16x784xf32, #tpu.memory_space<vmem>>, vector<16x34xf32>
    %425 = arith.truncf %424 : vector<16x34xf32> to vector<16x34xbf16>
    %c6_444 = arith.constant 6 : index
    %c2_445 = arith.constant 2 : index
    %c0_446 = arith.constant 0 : index
    %c0_447 = arith.constant 0 : index
    %426 = vector.load %arg2[%c6_444, %c2_445, %c0_446, %c0_447] : memref<7x9x16x16xbf16, #tpu.memory_space<vmem>>, vector<1x1x16x16xbf16>
    %427 = vector.shape_cast %426 : vector<1x1x16x16xbf16> to vector<16x16xbf16>
    %cst_448 = arith.constant dense<0.000000e+00> : vector<16x34xf32>
    %428 = tpu.matmul %427, %425, %cst_448 {dimension_numbers = #tpu.dot_dimension_numbers<[1], [0], [0], [1], [0, 0, 1, 1], [], []>} : vector<16x16xbf16>, vector<16x34xbf16>, vector<16x34xf32> -> vector<16x34xf32>
    %429 = arith.addf %423, %428 : vector<16x34xf32>
    %c0_449 = arith.constant 0 : index
    %c10_450 = arith.constant 10 : index
    %430 = vector.load %arg8[%c0_449, %c10_450] : memref<16x784xf32, #tpu.memory_space<vmem>>, vector<16x34xf32>
    %431 = arith.truncf %430 : vector<16x34xf32> to vector<16x34xbf16>
    %c6_451 = arith.constant 6 : index
    %c3_452 = arith.constant 3 : index
    %c0_453 = arith.constant 0 : index
    %c0_454 = arith.constant 0 : index
    %432 = vector.load %arg2[%c6_451, %c3_452, %c0_453, %c0_454] : memref<7x9x16x16xbf16, #tpu.memory_space<vmem>>, vector<1x1x16x16xbf16>
    %433 = vector.shape_cast %432 : vector<1x1x16x16xbf16> to vector<16x16xbf16>
    %cst_455 = arith.constant dense<0.000000e+00> : vector<16x34xf32>
    %434 = tpu.matmul %433, %431, %cst_455 {dimension_numbers = #tpu.dot_dimension_numbers<[1], [0], [0], [1], [0, 0, 1, 1], [], []>} : vector<16x16xbf16>, vector<16x34xbf16>, vector<16x34xf32> -> vector<16x34xf32>
    %435 = arith.addf %429, %434 : vector<16x34xf32>
    %c0_456 = arith.constant 0 : index
    %c11_457 = arith.constant 11 : index
    %436 = vector.load %arg8[%c0_456, %c11_457] : memref<16x784xf32, #tpu.memory_space<vmem>>, vector<16x34xf32>
    %437 = arith.truncf %436 : vector<16x34xf32> to vector<16x34xbf16>
    %c6_458 = arith.constant 6 : index
    %c4_459 = arith.constant 4 : index
    %c0_460 = arith.constant 0 : index
    %c0_461 = arith.constant 0 : index
    %438 = vector.load %arg2[%c6_458, %c4_459, %c0_460, %c0_461] : memref<7x9x16x16xbf16, #tpu.memory_space<vmem>>, vector<1x1x16x16xbf16>
    %439 = vector.shape_cast %438 : vector<1x1x16x16xbf16> to vector<16x16xbf16>
    %cst_462 = arith.constant dense<0.000000e+00> : vector<16x34xf32>
    %440 = tpu.matmul %439, %437, %cst_462 {dimension_numbers = #tpu.dot_dimension_numbers<[1], [0], [0], [1], [0, 0, 1, 1], [], []>} : vector<16x16xbf16>, vector<16x34xbf16>, vector<16x34xf32> -> vector<16x34xf32>
    %441 = arith.addf %435, %440 : vector<16x34xf32>
    %c0_463 = arith.constant 0 : index
    %c12_464 = arith.constant 12 : index
    %442 = vector.load %arg8[%c0_463, %c12_464] : memref<16x784xf32, #tpu.memory_space<vmem>>, vector<16x34xf32>
    %443 = arith.truncf %442 : vector<16x34xf32> to vector<16x34xbf16>
    %c6_465 = arith.constant 6 : index
    %c5_466 = arith.constant 5 : index
    %c0_467 = arith.constant 0 : index
    %c0_468 = arith.constant 0 : index
    %444 = vector.load %arg2[%c6_465, %c5_466, %c0_467, %c0_468] : memref<7x9x16x16xbf16, #tpu.memory_space<vmem>>, vector<1x1x16x16xbf16>
    %445 = vector.shape_cast %444 : vector<1x1x16x16xbf16> to vector<16x16xbf16>
    %cst_469 = arith.constant dense<0.000000e+00> : vector<16x34xf32>
    %446 = tpu.matmul %445, %443, %cst_469 {dimension_numbers = #tpu.dot_dimension_numbers<[1], [0], [0], [1], [0, 0, 1, 1], [], []>} : vector<16x16xbf16>, vector<16x34xbf16>, vector<16x34xf32> -> vector<16x34xf32>
    %447 = arith.addf %441, %446 : vector<16x34xf32>
    %c0_470 = arith.constant 0 : index
    %c20_471 = arith.constant 20 : index
    %448 = vector.load %arg8[%c0_470, %c20_471] : memref<16x784xf32, #tpu.memory_space<vmem>>, vector<16x34xf32>
    %449 = arith.truncf %448 : vector<16x34xf32> to vector<16x34xbf16>
    %c6_472 = arith.constant 6 : index
    %c6_473 = arith.constant 6 : index
    %c0_474 = arith.constant 0 : index
    %c0_475 = arith.constant 0 : index
    %450 = vector.load %arg2[%c6_472, %c6_473, %c0_474, %c0_475] : memref<7x9x16x16xbf16, #tpu.memory_space<vmem>>, vector<1x1x16x16xbf16>
    %451 = vector.shape_cast %450 : vector<1x1x16x16xbf16> to vector<16x16xbf16>
    %cst_476 = arith.constant dense<0.000000e+00> : vector<16x34xf32>
    %452 = tpu.matmul %451, %449, %cst_476 {dimension_numbers = #tpu.dot_dimension_numbers<[1], [0], [0], [1], [0, 0, 1, 1], [], []>} : vector<16x16xbf16>, vector<16x34xbf16>, vector<16x34xf32> -> vector<16x34xf32>
    %453 = arith.addf %447, %452 : vector<16x34xf32>
    %c0_477 = arith.constant 0 : index
    %c21_478 = arith.constant 21 : index
    %454 = vector.load %arg8[%c0_477, %c21_478] : memref<16x784xf32, #tpu.memory_space<vmem>>, vector<16x34xf32>
    %455 = arith.truncf %454 : vector<16x34xf32> to vector<16x34xbf16>
    %c6_479 = arith.constant 6 : index
    %c7_480 = arith.constant 7 : index
    %c0_481 = arith.constant 0 : index
    %c0_482 = arith.constant 0 : index
    %456 = vector.load %arg2[%c6_479, %c7_480, %c0_481, %c0_482] : memref<7x9x16x16xbf16, #tpu.memory_space<vmem>>, vector<1x1x16x16xbf16>
    %457 = vector.shape_cast %456 : vector<1x1x16x16xbf16> to vector<16x16xbf16>
    %cst_483 = arith.constant dense<0.000000e+00> : vector<16x34xf32>
    %458 = tpu.matmul %457, %455, %cst_483 {dimension_numbers = #tpu.dot_dimension_numbers<[1], [0], [0], [1], [0, 0, 1, 1], [], []>} : vector<16x16xbf16>, vector<16x34xbf16>, vector<16x34xf32> -> vector<16x34xf32>
    %459 = arith.addf %453, %458 : vector<16x34xf32>
    %c0_484 = arith.constant 0 : index
    %c22_485 = arith.constant 22 : index
    %460 = vector.load %arg8[%c0_484, %c22_485] : memref<16x784xf32, #tpu.memory_space<vmem>>, vector<16x34xf32>
    %461 = arith.truncf %460 : vector<16x34xf32> to vector<16x34xbf16>
    %c6_486 = arith.constant 6 : index
    %c8_487 = arith.constant 8 : index
    %c0_488 = arith.constant 0 : index
    %c0_489 = arith.constant 0 : index
    %462 = vector.load %arg2[%c6_486, %c8_487, %c0_488, %c0_489] : memref<7x9x16x16xbf16, #tpu.memory_space<vmem>>, vector<1x1x16x16xbf16>
    %463 = vector.shape_cast %462 : vector<1x1x16x16xbf16> to vector<16x16xbf16>
    %cst_490 = arith.constant dense<0.000000e+00> : vector<16x34xf32>
    %464 = tpu.matmul %463, %461, %cst_490 {dimension_numbers = #tpu.dot_dimension_numbers<[1], [0], [0], [1], [0, 0, 1, 1], [], []>} : vector<16x16xbf16>, vector<16x34xbf16>, vector<16x34xf32> -> vector<16x34xf32>
    %465 = arith.addf %459, %464 : vector<16x34xf32>
    %cst_491 = arith.constant 0.000000e+00 : f32
    %466 = vector.broadcast %cst_491 : f32 to vector<16x34xf32>
    %467 = arith.maximumf %465, %466 : vector<16x34xf32>
    %c6_492 = arith.constant 6 : index
    %c0_493 = arith.constant 0 : index
    %c0_494 = arith.constant 0 : index
    %468 = vector.load %arg3[%c6_492, %c0_493, %c0_494] : memref<7x16x1xf32, #tpu.memory_space<vmem>>, vector<1x16x1xf32>
    %469 = vector.shape_cast %468 : vector<1x16x1xf32> to vector<16x1xf32>
    %470 = vector.broadcast %469 : vector<16x1xf32> to vector<16x34xf32>
    %471 = arith.mulf %467, %470 : vector<16x34xf32>
    %c6_495 = arith.constant 6 : index
    %c0_496 = arith.constant 0 : index
    %c0_497 = arith.constant 0 : index
    %472 = vector.load %arg4[%c6_495, %c0_496, %c0_497] : memref<7x16x1xf32, #tpu.memory_space<vmem>>, vector<1x16x1xf32>
    %473 = vector.shape_cast %472 : vector<1x16x1xf32> to vector<16x1xf32>
    %474 = vector.broadcast %473 : vector<16x1xf32> to vector<16x34xf32>
    %475 = arith.addf %471, %474 : vector<16x34xf32>
    %c0_498 = arith.constant 0 : index
    %c0_499 = arith.constant 0 : index
    %476 = vector.load %arg9[%c0_498, %c0_499] : memref<16x784xf32, #tpu.memory_space<vmem>>, vector<16x34xf32>
    tpu.vector_store %arg9[%c0_498, %c0_499], %475 {strides = array<i32>} : memref<16x784xf32, #tpu.memory_space<vmem>>, vector<16x34xf32>,
    %c0_500 = arith.constant 0 : index
    %c0_501 = arith.constant 0 : index
    %477 = vector.load %arg9[%c0_500, %c0_501] : memref<16x784xf32, #tpu.memory_space<vmem>>, vector<16x34xf32>
    %478 = vector.extract_strided_slice %477 {offsets = [0, 0], sizes = [16, 4], strides = [1, 1]} : vector<16x34xf32> to vector<16x4xf32>
    %479 = vector.extract_strided_slice %477 {offsets = [0, 10], sizes = [16, 4], strides = [1, 1]} : vector<16x34xf32> to vector<16x4xf32>
    %480 = arith.addf %478, %479 : vector<16x4xf32>
    %481 = vector.extract_strided_slice %477 {offsets = [0, 20], sizes = [16, 4], strides = [1, 1]} : vector<16x34xf32> to vector<16x4xf32>
    %482 = arith.addf %480, %481 : vector<16x4xf32>
    %483 = vector.extract_strided_slice %477 {offsets = [0, 30], sizes = [16, 4], strides = [1, 1]} : vector<16x34xf32> to vector<16x4xf32>
    %484 = arith.addf %482, %483 : vector<16x4xf32>
    %cst_502 = arith.constant dense<0.000000e+00> : vector<16xf32>
    %485 = vector.multi_reduction <add>, %484, %cst_502 [1] : vector<16x4xf32> to vector<16xf32>
    %486 = vector.shape_cast %485 : vector<16xf32> to vector<16x1xf32>
    %cst_503 = arith.constant 6.250000e-02 : f32
    %487 = vector.broadcast %cst_503 : f32 to vector<16x1xf32>
    %488 = arith.mulf %486, %487 : vector<16x1xf32>
    %c0_504 = arith.constant 0 : index
    %c0_505 = arith.constant 0 : index
    %489 = vector.load %arg5[%c0_504, %c0_505] : memref<16x16xf32, #tpu.memory_space<vmem>>, vector<16x16xf32>
    %cst_506 = arith.constant dense<0.000000e+00> : vector<16x1xf32>
    %490 = tpu.matmul %489, %488, %cst_506 {dimension_numbers = #tpu.dot_dimension_numbers<[1], [0], [0], [1], [0, 0, 1, 1], [], []>} : vector<16x16xf32>, vector<16x1xf32>, vector<16x1xf32> -> vector<16x1xf32>
    %491 = tpu.iota {dimensions = array<i32: 0>} : vector<16x1xi32>
    %c10_i32 = arith.constant 10 : i32
    %492 = vector.broadcast %c10_i32 : i32 to vector<16x1xi32>
    %493 = arith.cmpi slt, %491, %492 : vector<16x1xi32>
    %cst_507 = arith.constant -1.000000e+30 : f32
    %494 = vector.broadcast %cst_507 : f32 to vector<16x1xf32>
    %495 = arith.select %493, %490, %494 : vector<16x1xi1>, vector<16x1xf32>
    %496 = vector.extract_strided_slice %495 {offsets = [0, 0], sizes = [8, 1], strides = [1, 1]} : vector<16x1xf32> to vector<8x1xf32>
    %497 = vector.extract_strided_slice %495 {offsets = [8, 0], sizes = [8, 1], strides = [1, 1]} : vector<16x1xf32> to vector<8x1xf32>
    %498 = arith.maximumf %496, %497 : vector<8x1xf32>
    %499 = vector.extract_strided_slice %498 {offsets = [0, 0], sizes = [4, 1], strides = [1, 1]} : vector<8x1xf32> to vector<4x1xf32>
    %500 = vector.extract_strided_slice %498 {offsets = [4, 0], sizes = [4, 1], strides = [1, 1]} : vector<8x1xf32> to vector<4x1xf32>
    %501 = arith.maximumf %499, %500 : vector<4x1xf32>
    %502 = vector.extract_strided_slice %501 {offsets = [0, 0], sizes = [2, 1], strides = [1, 1]} : vector<4x1xf32> to vector<2x1xf32>
    %503 = vector.extract_strided_slice %501 {offsets = [2, 0], sizes = [2, 1], strides = [1, 1]} : vector<4x1xf32> to vector<2x1xf32>
    %504 = arith.maximumf %502, %503 : vector<2x1xf32>
    %505 = vector.extract_strided_slice %504 {offsets = [0, 0], sizes = [1, 1], strides = [1, 1]} : vector<2x1xf32> to vector<1x1xf32>
    %506 = vector.extract_strided_slice %504 {offsets = [1, 0], sizes = [1, 1], strides = [1, 1]} : vector<2x1xf32> to vector<1x1xf32>
    %507 = arith.maximumf %505, %506 : vector<1x1xf32>
    %508 = vector.broadcast %507 : vector<1x1xf32> to vector<16x1xf32>
    %509 = arith.subf %495, %508 : vector<16x1xf32>
    %510 = math.exp %509 : vector<16x1xf32>
    %cst_508 = arith.constant 0.000000e+00 : f32
    %511 = vector.broadcast %cst_508 : f32 to vector<16x1xf32>
    %512 = arith.select %493, %510, %511 : vector<16x1xi1>, vector<16x1xf32>
    %513 = vector.extract_strided_slice %512 {offsets = [0, 0], sizes = [8, 1], strides = [1, 1]} : vector<16x1xf32> to vector<8x1xf32>
    %514 = vector.extract_strided_slice %512 {offsets = [8, 0], sizes = [8, 1], strides = [1, 1]} : vector<16x1xf32> to vector<8x1xf32>
    %515 = arith.addf %513, %514 : vector<8x1xf32>
    %516 = vector.extract_strided_slice %515 {offsets = [0, 0], sizes = [4, 1], strides = [1, 1]} : vector<8x1xf32> to vector<4x1xf32>
    %517 = vector.extract_strided_slice %515 {offsets = [4, 0], sizes = [4, 1], strides = [1, 1]} : vector<8x1xf32> to vector<4x1xf32>
    %518 = arith.addf %516, %517 : vector<4x1xf32>
    %519 = vector.extract_strided_slice %518 {offsets = [0, 0], sizes = [2, 1], strides = [1, 1]} : vector<4x1xf32> to vector<2x1xf32>
    %520 = vector.extract_strided_slice %518 {offsets = [2, 0], sizes = [2, 1], strides = [1, 1]} : vector<4x1xf32> to vector<2x1xf32>
    %521 = arith.addf %519, %520 : vector<2x1xf32>
    %522 = vector.extract_strided_slice %521 {offsets = [0, 0], sizes = [1, 1], strides = [1, 1]} : vector<2x1xf32> to vector<1x1xf32>
    %523 = vector.extract_strided_slice %521 {offsets = [1, 0], sizes = [1, 1], strides = [1, 1]} : vector<2x1xf32> to vector<1x1xf32>
    %524 = arith.addf %522, %523 : vector<1x1xf32>
    %525 = math.log %524 : vector<1x1xf32>
    %526 = vector.broadcast %525 : vector<1x1xf32> to vector<16x1xf32>
    %527 = arith.subf %509, %526 : vector<16x1xf32>
    %c0_509 = arith.constant 0 : index
    %c0_510 = arith.constant 0 : index
    %c0_511 = arith.constant 0 : index
    %528 = vector.load %arg7[%c0_509, %c0_510, %c0_511] : memref<1x16x1xf32, #tpu.memory_space<vmem>>, vector<1x16x1xf32>
    %529 = vector.shape_cast %528 : vector<1x16x1xf32> to vector<16x1xf32>
    %530 = vector.shape_cast %527 : vector<16x1xf32> to vector<1x16x1xf32>
    tpu.vector_store %arg7[%c0_509, %c0_510, %c0_511], %530 {strides = array<i32>} : memref<1x16x1xf32, #tpu.memory_space<vmem>>, vector<1x16x1xf32>,
    return
  }
  func.func @transform_0(%arg0: i32) -> (i32, i32, i32) {
    %c0_i32 = arith.constant 0 : i32
    %c0_i32_0 = arith.constant 0 : i32
    %c0_i32_1 = arith.constant 0 : i32
    return %arg0, %c0_i32, %c0_i32_0 : i32, i32, i32
  }
  func.func @transform_1(%arg0: i32) -> (i32, i32, i32, i32) {
    %c0_i32 = arith.constant 0 : i32
    %c0_i32_0 = arith.constant 0 : i32
    %c0_i32_1 = arith.constant 0 : i32
    %c0_i32_2 = arith.constant 0 : i32
    %c0_i32_3 = arith.constant 0 : i32
    return %c0_i32, %c0_i32_0, %c0_i32_1, %c0_i32_2 : i32, i32, i32, i32
  }
  func.func @transform_2(%arg0: i32) -> (i32, i32, i32) {
    %c0_i32 = arith.constant 0 : i32
    %c0_i32_0 = arith.constant 0 : i32
    %c0_i32_1 = arith.constant 0 : i32
    %c0_i32_2 = arith.constant 0 : i32
    return %c0_i32, %c0_i32_0, %c0_i32_1 : i32, i32, i32
  }
  func.func @transform_3(%arg0: i32) -> (i32, i32, i32) {
    %c0_i32 = arith.constant 0 : i32
    %c0_i32_0 = arith.constant 0 : i32
    %c0_i32_1 = arith.constant 0 : i32
    %c0_i32_2 = arith.constant 0 : i32
    return %c0_i32, %c0_i32_0, %c0_i32_1 : i32, i32, i32
  }
  func.func @transform_4(%arg0: i32) -> (i32, i32) {
    %c0_i32 = arith.constant 0 : i32
    %c0_i32_0 = arith.constant 0 : i32
    %c0_i32_1 = arith.constant 0 : i32
    return %c0_i32, %c0_i32_0 : i32, i32
  }
  func.func @transform_5(%arg0: i32) -> (i32, i32) {
    %c0_i32 = arith.constant 0 : i32
    %c0_i32_0 = arith.constant 0 : i32
    %c0_i32_1 = arith.constant 0 : i32
    return %c0_i32, %c0_i32_0 : i32, i32
  }
  func.func @transform_6(%arg0: i32) -> (i32, i32, i32) {
    %c0_i32 = arith.constant 0 : i32
    %c0_i32_0 = arith.constant 0 : i32
    %c0_i32_1 = arith.constant 0 : i32
    return %arg0, %c0_i32, %c0_i32_0 : i32, i32, i32
  }
}

</mosaic_0001>

<llo_original>
// kernel: _lambda_.1
$region0: #{_lambda_.1}
  #allocation0 [shape = 'u32[]', space=smem, size = 0x4, offset = 0x4, fixed_abs, tag = 'smem constant byte address 0x4 - core index']
  #allocation1 [shape = 'u32[144,128]{1,0:T(1,128)}', space=vmem, size = 0x12000, scoped, tag = 'internal scratch']
  #allocation2 [shape = 'f32[16,784]{1,0:T(8,128)}', space=vmem, size = 0xe000, scoped, tag = 'scratch operand']
  #allocation3 [shape = 'f32[16,784]{1,0:T(8,128)}', space=vmem, size = 0xe000, scoped, tag = 'scratch operand']
  %s0 = inlined_call_operand.vmem [shape: f32[2,1,784], index: 0, kind: input, shape index: {}]
  %s1 = inlined_call_operand.hbm [shape: bf16[7,9,16,16], index: 1, kind: input, shape index: {}]
  %s2 = inlined_call_operand.hbm [shape: f32[7,16,1], index: 2, kind: input, shape index: {}]
  %s3 = inlined_call_operand.vmem [shape: f32[7,16,1], index: 3, kind: input, shape index: {}]
  %s4 = inlined_call_operand.vmem [shape: f32[16,16], index: 4, kind: input, shape index: {}]
  %s5 = inlined_call_operand.hbm [shape: bf16[523,128], index: 5, kind: input, shape index: {}]
  %s6 = inlined_call_operand.vmem [shape: f32[2,16,1], index: 6, kind: output, shape index: {}]
  %s7 = sld [smem:[#allocation0]]
  $region69: #{_lambda_.1} parent=0
    _
  %s9 = ssub.s32 1, %s7
  %s10 = scalar_select 0, %s9, %s7
  $region1: #{_lambda_.1} parent=0
    #allocation4 [shape = 'u8[258048]{0}', space=vmem, size = 0x3f000, scoped, tag = 'input window, operand 1, single buffered']
    #allocation5 [shape = 's32[2]{0}', space=sflag, size = 0x8, scoped, tag = 'scoped memory for _lambda_.1']
    #allocation6 [shape = 'u8[57344]{0}', space=vmem, size = 0xe000, scoped, tag = 'input window, operand 2, single buffered']
    #allocation7 [shape = 's32[1]{0}', space=sflag, size = 0x4, scoped, tag = 'scoped memory for _lambda_.1']
    #allocation8 [shape = 'u8[135168]{0}', space=vmem, size = 0x21000, scoped, tag = 'input window, operand 5, single buffered']
    %11 = vsyncpa [#allocation5], 0
    %12 = vsyncpa [#allocation7], 0
    loop: start=0, step=1, limit=4
    $region2: #{_lambda_.1} parent=1 // loop_pre_header
      _
    $region3: #{_lambda_.1} parent=1 // loop_header
      %s14 = sphi 0, %s18
      %p15 = scmp.ge.s32.totalorder %s14, 4
      %s24 = sphi 0, %s26
      %s27 = sphi 0, %s24
      %s28 = sphi 0, %s27
      %s44 = sphi 0, %s28
      %s48 = sphi 0, %s48
      %s50 = sphi 0, %s48
      %s51 = sphi 0, %s50
      %s65 = sphi 0, %s51
      %s69 = sphi 0, %s69
      %s71 = sphi 0, %s69
      %s72 = sphi 0, %s71
      %s86 = sphi 0, %s72
      %s90 = sphi 0, %s90
      %s92 = sphi 0, %s90
      %s93 = sphi 0, %s92
      %s107 = sphi 0, %s93
      %s111 = sphi 0, %s111
      %s113 = sphi 0, %s111
      %s114 = sphi 0, %s113
      %s128 = sphi 0, %s114
      %s132 = sphi 0, %s132
      %s134 = sphi 0, %s132
      %s135 = sphi 0, %s134
      %s149 = sphi 0, %s135
      %s155 = sphi 0, %s157
      %s158 = sphi 0, %s155
      %s159 = sphi 0, %s158
      %s175 = sphi 0, %s159
    $region4: #{_lambda_.1} parent=1 // loop_header_branch
      %17 = sbr.rel (%p15) target = $region8
    $region5: #{_lambda_.1} parent=1 // loop_body
      %s19 = ssub.s32 %s14, 1
      %s20 = ssub.s32 %s14, 2
      %s21 = sadd.s32 %s14, 1
      %s22 = ssub.s32 %s14, %s21
      %p23 = scmp.eq.s32.totalorder %s22, 0
      %s25 = sadd.s32 %s24, 1
      %s26 = scalar_select %p23, %s24, %s25
      %p29 = pneg %p23
      %p30 = scmp.eq.s32.totalorder %s14, 1
      %p31 = por %p29, %p30
      %p32 = scmp.ne.s32.totalorder %s24, %s27
      %p33 = scmp.eq.s32.totalorder %s14, 0
      %p34 = por %p32, %p33
      %p35 = scmp.ne.s32.totalorder %s24, %s27
      %p36 = scmp.eq.s32.totalorder %s19, 1
      %p37 = por %p35, %p36
      %p38 = scmp.ne.s32.totalorder %s27, %s28
      %p39 = scmp.eq.s32.totalorder %s19, 0
      %p40 = por %p38, %p39
      %p41 = scmp.ne.s32.totalorder %s27, %s28
      %p42 = scmp.eq.s32.totalorder %s20, 1
      %p43 = por %p41, %p42
      %p45 = scmp.ne.s32.totalorder %s28, %s44
      %p46 = scmp.eq.s32.totalorder %s20, 0
      %p47 = por %p45, %p46
      %s49 = sadd.s32 %s48, 1
      %p52 = scmp.eq.s32.totalorder %s14, 1
      %p53 = scmp.ne.s32.totalorder %s48, %s50
      %p54 = scmp.eq.s32.totalorder %s14, 0
      %p55 = por %p53, %p54
      %p56 = scmp.ne.s32.totalorder %s48, %s50
      %p57 = scmp.eq.s32.totalorder %s19, 1
      %p58 = por %p56, %p57
      %p59 = scmp.ne.s32.totalorder %s50, %s51
      %p60 = scmp.eq.s32.totalorder %s19, 0
      %p61 = por %p59, %p60
      %p62 = scmp.ne.s32.totalorder %s50, %s51
      %p63 = scmp.eq.s32.totalorder %s20, 1
      %p64 = por %p62, %p63
      %p66 = scmp.ne.s32.totalorder %s51, %s65
      %p67 = scmp.eq.s32.totalorder %s20, 0
      %p68 = por %p66, %p67
      %s70 = sadd.s32 %s69, 1
      %p73 = scmp.eq.s32.totalorder %s14, 1
      %p74 = scmp.ne.s32.totalorder %s69, %s71
      %p75 = scmp.eq.s32.totalorder %s14, 0
      %p76 = por %p74, %p75
      %p77 = scmp.ne.s32.totalorder %s69, %s71
      %p78 = scmp.eq.s32.totalorder %s19, 1
      %p79 = por %p77, %p78
      %p80 = scmp.ne.s32.totalorder %s71, %s72
      %p81 = scmp.eq.s32.totalorder %s19, 0
      %p82 = por %p80, %p81
      %p83 = scmp.ne.s32.totalorder %s71, %s72
      %p84 = scmp.eq.s32.totalorder %s20, 1
      %p85 = por %p83, %p84
      %p87 = scmp.ne.s32.totalorder %s72, %s86
      %p88 = scmp.eq.s32.totalorder %s20, 0
      %p89 = por %p87, %p88
      %s91 = sadd.s32 %s90, 1
      %p94 = scmp.eq.s32.totalorder %s14, 1
      %p95 = scmp.ne.s32.totalorder %s90, %s92
      %p96 = scmp.eq.s32.totalorder %s14, 0
      %p97 = por %p95, %p96
      %p98 = scmp.ne.s32.totalorder %s90, %s92
      %p99 = scmp.eq.s32.totalorder %s19, 1
      %p100 = por %p98, %p99
      %p101 = scmp.ne.s32.totalorder %s92, %s93
      %p102 = scmp.eq.s32.totalorder %s19, 0
      %p103 = por %p101, %p102
      %p104 = scmp.ne.s32.totalorder %s92, %s93
      %p105 = scmp.eq.s32.totalorder %s20, 1
      %p106 = por %p104, %p105
      %p108 = scmp.ne.s32.totalorder %s93, %s107
      %p109 = scmp.eq.s32.totalorder %s20, 0
      %p110 = por %p108, %p109
      %s112 = sadd.s32 %s111, 1
      %p115 = scmp.eq.s32.totalorder %s14, 1
      %p116 = scmp.ne.s32.totalorder %s111, %s113
      %p117 = scmp.eq.s32.totalorder %s14, 0
      %p118 = por %p116, %p117
      %p119 = scmp.ne.s32.totalorder %s111, %s113
      %p120 = scmp.eq.s32.totalorder %s19, 1
      %p121 = por %p119, %p120
      %p122 = scmp.ne.s32.totalorder %s113, %s114
      %p123 = scmp.eq.s32.totalorder %s19, 0
      %p124 = por %p122, %p123
      %p125 = scmp.ne.s32.totalorder %s113, %s114
      %p126 = scmp.eq.s32.totalorder %s20, 1
      %p127 = por %p125, %p126
      %p129 = scmp.ne.s32.totalorder %s114, %s128
      %p130 = scmp.eq.s32.totalorder %s20, 0
      %p131 = por %p129, %p130
      %s133 = sadd.s32 %s132, 1
      %p136 = scmp.eq.s32.totalorder %s14, 1
      %p137 = scmp.ne.s32.totalorder %s132, %s134
      %p138 = scmp.eq.s32.totalorder %s14, 0
      %p139 = por %p137, %p138
      %p140 = scmp.ne.s32.totalorder %s132, %s134
      %p141 = scmp.eq.s32.totalorder %s19, 1
      %p142 = por %p140, %p141
      %p143 = scmp.ne.s32.totalorder %s134, %s135
      %p144 = scmp.eq.s32.totalorder %s19, 0
      %p145 = por %p143, %p144
      %p146 = scmp.ne.s32.totalorder %s134, %s135
      %p147 = scmp.eq.s32.totalorder %s20, 1
      %p148 = por %p146, %p147
      %p150 = scmp.ne.s32.totalorder %s135, %s149
      %p151 = scmp.eq.s32.totalorder %s20, 0
      %p152 = por %p150, %p151
      %s153 = ssub.s32 %s14, %s21
      %p154 = scmp.eq.s32.totalorder %s153, 0
      %s156 = sadd.s32 %s155, 1
      %s157 = scalar_select %p154, %s155, %s156
      %p160 = pneg %p154
      %p161 = scmp.eq.s32.totalorder %s14, 1
      %p162 = por %p160, %p161
      %p163 = scmp.ne.s32.totalorder %s155, %s158
      %p164 = scmp.eq.s32.totalorder %s14, 0
      %p165 = por %p163, %p164
      %p166 = scmp.ne.s32.totalorder %s155, %s158
      %p167 = scmp.eq.s32.totalorder %s19, 1
      %p168 = por %p166, %p167
      %p169 = scmp.ne.s32.totalorder %s158, %s159
      %p170 = scmp.eq.s32.totalorder %s19, 0
      %p171 = por %p169, %p170
      %p172 = scmp.ne.s32.totalorder %s158, %s159
      %p173 = scmp.eq.s32.totalorder %s20, 1
      %p174 = por %p172, %p173
      %p176 = scmp.ne.s32.totalorder %s159, %s175
      %p177 = scmp.eq.s32.totalorder %s20, 0
      %p178 = por %p176, %p177
      %p179 = scmp.le.s32.totalorder 1, %s14
      %p180 = scmp.lt.s32.totalorder %s14, 3
      %p181 = pnand %p179, %p180
      %p182 = pneg %p181
      // Predicated region
      $region9: #{_lambda_.1} parent=5 // pred_check
        _
      $region10: #{_lambda_.1} parent=5 // pred_check_branch
        %184 = sbr.rel (%p181) target = $region12
      $region11: #{_lambda_.1} parent=5 // pred_region
        %s185 = ssub.s32 %s14, 1
        // Predicated region
        $region13: #{_lambda_.1} parent=11 // pred_check
          %p186 = pneg %p61
        $region14: #{_lambda_.1} parent=11 // pred_check_branch
          %188 = sbr.rel (%p186) target = $region16
        $region15: #{_lambda_.1} parent=11 // pred_region
          %s190 = ssub.s32 8064, 8064
          %191 = vsyncadd [#allocation5], %s190
          %s192 = sshll.u32 [#allocation4], 4
          %s193 = int_to_ptr.vmem [resolvable:$true] %s192
          %198 = dma.hbm_to_vmem [thread:$0]  %s1, 8064, %s193, [#allocation5], 64, 64, 4
        $region16: #{_lambda_.1} parent=11 // pred_fallthru
          _
        // Predicated region
        $region17: #{_lambda_.1} parent=11 // pred_check
          %p199 = pneg %p82
        $region18: #{_lambda_.1} parent=11 // pred_check_branch
          %201 = sbr.rel (%p199) target = $region20
        $region19: #{_lambda_.1} parent=11 // pred_region
          %s203 = ssub.s32 1792, 1792
          %204 = vsyncadd [#allocation7], %s203
          %s205 = sshll.u32 [#allocation6], 4
          %s206 = int_to_ptr.vmem [resolvable:$true] %s205
          %211 = dma.hbm_to_vmem [thread:$0]  %s2, 1792, %s206, [#allocation7], 128, 128, 8
        $region20: #{_lambda_.1} parent=11 // pred_fallthru
          _
        // Predicated region
        $region21: #{_lambda_.1} parent=11 // pred_check
          %p212 = pneg %p103
        $region22: #{_lambda_.1} parent=11 // pred_check_branch
          %214 = sbr.rel (%p212) target = $region24
        $region23: #{_lambda_.1} parent=11 // pred_region
          _
        $region24: #{_lambda_.1} parent=11 // pred_fallthru
          _
        // Predicated region
        $region25: #{_lambda_.1} parent=11 // pred_check
          %p215 = pneg %p124
        $region26: #{_lambda_.1} parent=11 // pred_check_branch
          %217 = sbr.rel (%p215) target = $region28
        $region27: #{_lambda_.1} parent=11 // pred_region
          _
        $region28: #{_lambda_.1} parent=11 // pred_fallthru
          _
        // Predicated region
        $region29: #{_lambda_.1} parent=11 // pred_check
          %p218 = pneg %p145
        $region30: #{_lambda_.1} parent=11 // pred_check_branch
          %220 = sbr.rel (%p218) target = $region32
        $region31: #{_lambda_.1} parent=11 // pred_region
          %s222 = ssub.s32 4224, 4224
          %223 = vsyncadd [#allocation7], %s222
          %s224 = sshll.u32 [#allocation8], 4
          %s225 = int_to_ptr.vmem [resolvable:$true] %s224
          %230 = dma.hbm_to_vmem [thread:$0]  %s5, 4224, %s225, [#allocation7], 64, 64, 4
        $region32: #{_lambda_.1} parent=11 // pred_fallthru
          _
      $region12: #{_lambda_.1} parent=5 // pred_fallthru
        _
      %p231 = scmp.lt.s32.totalorder %s14, 2
      // Predicated region
      $region33: #{_lambda_.1} parent=5 // pred_check
        %p232 = pneg %p231
      $region34: #{_lambda_.1} parent=5 // pred_check_branch
        %234 = sbr.rel (%p232) target = $region36
      $region35: #{_lambda_.1} parent=5 // pred_region
        // Predicated region
        $region37: #{_lambda_.1} parent=35 // pred_check
          %p235 = pneg %p34
        $region38: #{_lambda_.1} parent=35 // pred_check_branch
          %237 = sbr.rel (%p235) target = $region40
        $region39: #{_lambda_.1} parent=35 // pred_region
          %p238 = scmp.lt.s32.totalorder %s14, 1
          %s239 = scalar_select %p238, %s14, 1
          %s240 = smul.addr %s239, 7
          %s241 = scalar_lea.vmem %s0, %s240
        $region40: #{_lambda_.1} parent=35 // pred_fallthru
          _
      $region36: #{_lambda_.1} parent=5 // pred_fallthru
        _
      %p242 = scmp.le.s32.totalorder 1, %s14
      %p243 = scmp.lt.s32.totalorder %s14, 3
      %p244 = pnand %p242, %p243
      %p245 = pneg %p244
      // Predicated region
      $region41: #{_lambda_.1} parent=5 // pred_check
        _
      $region42: #{_lambda_.1} parent=5 // pred_check_branch
        %247 = sbr.rel (%p244) target = $region44
      $region43: #{_lambda_.1} parent=5 // pred_region
        %s248 = ssub.s32 %s14, 1
        // Predicated region
        $region45: #{_lambda_.1} parent=43 // pred_check
          %p249 = pneg %p61
        $region46: #{_lambda_.1} parent=43 // pred_check_branch
          %251 = sbr.rel (%p249) target = $region48
        $region47: #{_lambda_.1} parent=43 // pred_region
          %252 = dma.done [#allocation5], 8064
        $region48: #{_lambda_.1} parent=43 // pred_fallthru
          _
        // Predicated region
        $region49: #{_lambda_.1} parent=43 // pred_check
          %p253 = pneg %p82
        $region50: #{_lambda_.1} parent=43 // pred_check_branch
          %255 = sbr.rel (%p253) target = $region52
        $region51: #{_lambda_.1} parent=43 // pred_region
          %256 = dma.done [#allocation7], 1792
        $region52: #{_lambda_.1} parent=43 // pred_fallthru
          _
        // Predicated region
        $region53: #{_lambda_.1} parent=43 // pred_check
          %p257 = pneg %p145
        $region54: #{_lambda_.1} parent=43 // pred_check_branch
          %259 = sbr.rel (%p257) target = $region56
        $region55: #{_lambda_.1} parent=43 // pred_region
          %260 = dma.done [#allocation7], 4224
        $region56: #{_lambda_.1} parent=43 // pred_fallthru
          _
        %p261 = scmp.lt.s32.totalorder %s19, 1
        %s262 = scalar_select %p261, %s19, 1
        %s263 = smul.addr %s262, 7
        %s264 = scalar_lea.vmem %s0, %s263
        %p265 = pneg %p40
        %p266 = pneg %p37
        %p267 = pneg %p61
        %p268 = pneg %p58
        %p269 = pneg %p82
        %p270 = pneg %p79
        %p271 = pneg %p103
        %p272 = pneg %p100
        %p273 = pneg %p124
        %p274 = pneg %p121
        %p275 = pneg %p145
        %p276 = pneg %p142
        %p277 = pneg %p171
        %p278 = pneg %p168
        %p279 = scmp.lt.s32.totalorder %s19, 1
        %s280 = scalar_select %p279, %s19, 1
        %s281 = smul.addr %s280, 2
        %s282 = smul.addr %s281, 8
        %s283 = scalar_lea.vmem %s6, %s282
        %p284 = scmp.lt.s32.totalorder %s19, 1
        %s285 = scalar_select %p284, %s19, 1
        %s286 = smul.addr %s285, 7
        %s287 = scalar_lea.vmem %s0, %s286
        %p288 = scmp.lt.s32.totalorder %s19, 1
        %s289 = scalar_select %p288, %s19, 1
        %s290 = smul.addr %s289, 2
        %s291 = smul.addr %s290, 8
        %s292 = scalar_lea.vmem %s6, %s291
        %294 = vst [vmem:[#allocation2] sm:$0xff] 0.0
        %295 = vst [vmem:[#allocation2 + $0x8] sm:$0xff] 0.0
        %296 = vst [vmem:[#allocation2 + $0x10] sm:$0xff] 0.0
        %297 = vst [vmem:[#allocation2 + $0x18] sm:$0xff] 0.0
        %298 = vst [vmem:[#allocation2 + $0x20] sm:$0xff] 0.0
        %299 = vst [vmem:[#allocation2 + $0x28] sm:$0xff] 0.0
        %vm300 = vcmask 130048
        %301 = vst.msk [vmem:[#allocation2 + $0x30] sm:$0xff] %vm300, 0.0
        %302 = vst [vmem:[#allocation2 + $0x38] sm:$0xff] 0.0
        %303 = vst [vmem:[#allocation2 + $0x40] sm:$0xff] 0.0
        %304 = vst [vmem:[#allocation2 + $0x48] sm:$0xff] 0.0
        %305 = vst [vmem:[#allocation2 + $0x50] sm:$0xff] 0.0
        %306 = vst [vmem:[#allocation2 + $0x58] sm:$0xff] 0.0
        %307 = vst [vmem:[#allocation2 + $0x60] sm:$0xff] 0.0
        %308 = vst.msk [vmem:[#allocation2 + $0x68] sm:$0xff] %vm300, 0.0
        %v309 = vld [vmem:[%s287] sm:$0x7f]
        %v310 = vlaneseq
        %vm311 = vcmp.ge.s32.totalorder %v310, 0
        %vm312 = vcmp.lt.s32.totalorder %v310, 784
        %vm313 = vmand %vm311, %vm312
        %314 = vst.msk [vmem:[#allocation2] ss:$8 sm:$0xf] %vm313, %v309
        %315 = vst.msk [vmem:[#allocation2] ss:$8 sm:$0x70] %vm313, %v309
        %v316 = vld [vmem:[#allocation2] sm:$0xff]
        %v317 = vld [vmem:[#allocation2 + $0x8] sm:$0xff]
        %v318 = vld [vmem:[#allocation2 + $0x10] sm:$0xff]
        %v319 = vld [vmem:[#allocation2 + $0x18] sm:$0xff]
        %v320 = vld [vmem:[#allocation2 + $0x20] sm:$0xff]
        %v321 = vld [vmem:[#allocation2 + $0x28] sm:$0xff]
        %v322 = vld [vmem:[#allocation2 + $0x38] sm:$0xff]
        %v323 = vld [vmem:[#allocation2 + $0x40] sm:$0xff]
        %v324 = vld [vmem:[#allocation2 + $0x48] sm:$0xff]
        %v325 = vld [vmem:[#allocation2 + $0x50] sm:$0xff]
        %v326 = vld [vmem:[#allocation2 + $0x58] sm:$0xff]
        %v327 = vld [vmem:[#allocation2 + $0x60] sm:$0xff]
        %v328 = vpack.c.bf16 %v322, %v316
        %v329 = vpack.c.bf16 %v323, %v317
        %v330 = vpack.c.bf16 %v324, %v318
        %v331 = vpack.c.bf16 %v325, %v319
        %v332 = vpack.c.bf16 %v326, %v320
        %v333 = vpack.c.bf16 %v327, %v321
        %v334 = vld [vmem:[#allocation4] sm:$0xf]
        %v335 = vld [vmem:[#allocation4 + $0x4] sm:$0xf]
        %s336 = scalar_lea.vmem [#allocation4], 8
        %v337 = vld [vmem:[%s336] sm:$0xf]
        %v338 = vld [vmem:[%s336 + $0x4] sm:$0xf]
        %v341 = vunpack.c.l.b16 %v337
        %v342 = vunpack.c.l.b16 %v338
        %v343 = vpack.c.b16 %v342, %v341
        %350 = vrot.lane.b32.xlu0 %v328, 127
        %v351 = vpop.permute.xlu0 %350
        %352 = vrot.lane.b32.xlu0 %v329, 127
        %v353 = vpop.permute.xlu0 %352
        %354 = vrot.lane.b32.xlu0 %v330, 127
        %v355 = vpop.permute.xlu0 %354
        %356 = vrot.lane.b32.xlu0 %v331, 127
        %v357 = vpop.permute.xlu0 %356
        %358 = vrot.lane.b32.xlu0 %v332, 127
        %v359 = vpop.permute.xlu0 %358
        %360 = vrot.lane.b32.xlu0 %v333, 127
        %v361 = vpop.permute.xlu0 %360
        %vm362 = vcmask 1039360
        %v363 = vsel %vm362, %v351, %v353
        %v364 = vsel %vm362, %v353, %v355
        %v365 = vsel %vm362, %v355, %v357
        %v366 = vsel %vm362, %v357, %v359
        %v367 = vsel %vm362, %v359, %v361
        %v375 = vsel %vm300, %v343, 0
        %377 = vmatprep.subr.bf16.mxu0 0
        %378 = vmatpush1.bf16.msra.mxu0 0
        %379 = vmatprep.subr.bf16.mxu0 0
        %380 = vmatpush1.bf16.msra.mxu0 0
        %381 = vmatprep.subr.bf16.mxu0 0
        %382 = vmatpush1.bf16.msra.mxu0 0
        %383 = vmatprep.subr.bf16.mxu0 0
        %384 = vmatpush1.bf16.msra.mxu0 0
        %385 = vmatprep.subr.bf16.mxu0 0
        %386 = vmatpush1.bf16.msra.mxu0 0
        %387 = vmatprep.subr.bf16.mxu0 0
        %388 = vmatpush1.bf16.msra.mxu0 0
        %389 = vmatprep.subr.bf16.mxu0 0
        %390 = vmatpush1.bf16.msra.mxu0 0
        %391 = vmatprep.subr.bf16.mxu0 %v364
        %392 = vmatpush1.bf16.msra.mxu0 %v363
        %393 = vmatprep.subr.bf16.mxu0 0
        %394 = vmatpush2.bf16.msra.mxu0 0
        %395 = vmatprep.subr.bf16.mxu0 0
        %396 = vmatpush2.bf16.msra.mxu0 0
        %397 = vmatprep.subr.bf16.mxu0 0
        %398 = vmatpush2.bf16.msra.mxu0 0
        %399 = vmatprep.subr.bf16.mxu0 0
        %400 = vmatpush2.bf16.msra.mxu0 0
        %401 = vmatprep.subr.bf16.mxu0 0
        %402 = vmatpush2.bf16.msra.mxu0 0
        %403 = vmatprep.subr.bf16.mxu0 0
        %404 = vmatpush2.bf16.msra.mxu0 0
        %405 = vmatprep.subr.bf16.mxu0 0
        %406 = vmatpush2.bf16.msra.mxu0 0
        %407 = vmatprep.subr.bf16.mxu0 0
        %408 = vmatpush2.bf16.msra.mxu0 0
        %409 = vmatprep.mubr.bf16.mxu0 0
        %410 = vmatmul.mubr.bf16.gmra.mxu0 %v375
        %v411 = vpop.f32.mrf.mxu0
        %v412 = vadd.f32 0.0, %v411
        %v413 = vpop.f32.mrf.mxu0
        %v414 = vadd.f32 0.0, %v413
        %v415 = vpop.f32.mrf.mxu0
        %v416 = vadd.f32 0.0, %v415
        %v417 = vpop.f32.mrf.mxu0
        %v418 = vadd.f32 0.0, %v417
        %419 = vdwg.mxu0
        %420 = vmatprep.subr.bf16.mxu0 0
        %421 = vmatpush1.bf16.msra.mxu0 0
        %422 = vmatprep.subr.bf16.mxu0 0
        %423 = vmatpush1.bf16.msra.mxu0 0
        %424 = vmatprep.subr.bf16.mxu0 0
        %425 = vmatpush1.bf16.msra.mxu0 0
        %426 = vmatprep.subr.bf16.mxu0 0
        %427 = vmatpush1.bf16.msra.mxu0 0
        %428 = vmatprep.subr.bf16.mxu0 0
        %429 = vmatpush1.bf16.msra.mxu0 0
        %430 = vmatprep.subr.bf16.mxu0 0
        %431 = vmatpush1.bf16.msra.mxu0 0
        %432 = vmatprep.subr.bf16.mxu0 0
        %433 = vmatpush1.bf16.msra.mxu0 0
        %434 = vmatprep.subr.bf16.mxu0 %v366
        %435 = vmatpush1.bf16.msra.mxu0 %v365
        %436 = vmatprep.subr.bf16.mxu0 0
        %437 = vmatpush2.bf16.msra.mxu0 0
        %438 = vmatprep.subr.bf16.mxu0 0
        %439 = vmatpush2.bf16.msra.mxu0 0
        %440 = vmatprep.subr.bf16.mxu0 0
        %441 = vmatpush2.bf16.msra.mxu0 0
        %442 = vmatprep.subr.bf16.mxu0 0
        %443 = vmatpush2.bf16.msra.mxu0 0
        %444 = vmatprep.subr.bf16.mxu0 0
        %445 = vmatpush2.bf16.msra.mxu0 0
        %446 = vmatprep.subr.bf16.mxu0 0
        %447 = vmatpush2.bf16.msra.mxu0 0
        %448 = vmatprep.subr.bf16.mxu0 0
        %449 = vmatpush2.bf16.msra.mxu0 0
        %450 = vmatprep.subr.bf16.mxu0 0
        %451 = vmatpush2.bf16.msra.mxu0 0
        %452 = vmatprep.mubr.bf16.mxu0 0
        %453 = vmatmul.mubr.bf16.gmra.mxu0 %v375
        %v454 = vpop.f32.mrf.mxu0
        %v455 = vadd.f32 0.0, %v454
        %v456 = vpop.f32.mrf.mxu0
        %v457 = vadd.f32 0.0, %v456
        %v458 = vpop.f32.mrf.mxu0
        %v459 = vadd.f32 0.0, %v458
        %v460 = vpop.f32.mrf.mxu0
        %v461 = vadd.f32 0.0, %v460
        %462 = vdwg.mxu0
        %463 = vmatprep.subr.bf16.mxu0 0
        %464 = vmatpush1.bf16.msra.mxu0 0
        %465 = vmatprep.subr.bf16.mxu0 0
        %466 = vmatpush1.bf16.msra.mxu0 0
        %467 = vmatprep.subr.bf16.mxu0 0
        %468 = vmatpush1.bf16.msra.mxu0 0
        %469 = vmatprep.subr.bf16.mxu0 0
        %470 = vmatpush1.bf16.msra.mxu0 0
        %471 = vmatprep.subr.bf16.mxu0 0
        %472 = vmatpush1.bf16.msra.mxu0 0
        %473 = vmatprep.subr.bf16.mxu0 0
        %474 = vmatpush1.bf16.msra.mxu0 0
        %475 = vmatprep.subr.bf16.mxu0 0
        %476 = vmatpush1.bf16.msra.mxu0 0
        %477 = vmatprep.subr.bf16.mxu0 %v361
        %478 = vmatpush1.bf16.msra.mxu0 %v367
        %479 = vmatprep.subr.bf16.mxu0 0
        %480 = vmatpush2.bf16.msra.mxu0 0
        %481 = vmatprep.subr.bf16.mxu0 0
        %482 = vmatpush2.bf16.msra.mxu0 0
        %483 = vmatprep.subr.bf16.mxu0 0
        %484 = vmatpush2.bf16.msra.mxu0 0
        %485 = vmatprep.subr.bf16.mxu0 0
        %486 = vmatpush2.bf16.msra.mxu0 0
        %487 = vmatprep.subr.bf16.mxu0 0
        %488 = vmatpush2.bf16.msra.mxu0 0
        %489 = vmatprep.subr.bf16.mxu0 0
        %490 = vmatpush2.bf16.msra.mxu0 0
        %491 = vmatprep.subr.bf16.mxu0 0
        %492 = vmatpush2.bf16.msra.mxu0 0
        %493 = vmatprep.subr.bf16.mxu0 0
        %494 = vmatpush2.bf16.msra.mxu0 0
        %495 = vmatprep.mubr.bf16.mxu0 0
        %496 = vmatmul.mubr.bf16.gmra.mxu0 %v375
        %v497 = vpop.f32.mrf.mxu0
        %v498 = vadd.f32 0.0, %v497
        %v499 = vpop.f32.mrf.mxu0
        %v500 = vadd.f32 0.0, %v499
        %v501 = vpop.f32.mrf.mxu0
        %v502 = vadd.f32 0.0, %v501
        %v503 = vpop.f32.mrf.mxu0
        %v504 = vadd.f32 0.0, %v503
        %505 = vdwg.mxu0
        %v508 = vunpack.c.l.b16 %v334
        %v509 = vunpack.c.l.b16 %v335
        %v510 = vpack.c.b16 %v509, %v508
        %v512 = vsel %vm300, %v510, 0
        %514 = vmatprep.subr.bf16.mxu0 0
        %515 = vmatpush1.bf16.msra.mxu0 0
        %516 = vmatprep.subr.bf16.mxu0 0
        %517 = vmatpush1.bf16.msra.mxu0 0
        %518 = vmatprep.subr.bf16.mxu0 0
        %519 = vmatpush1.bf16.msra.mxu0 0
        %520 = vmatprep.subr.bf16.mxu0 0
        %521 = vmatpush1.bf16.msra.mxu0 0
        %522 = vmatprep.subr.bf16.mxu0 0
        %523 = vmatpush1.bf16.msra.mxu0 0
        %524 = vmatprep.subr.bf16.mxu0 0
        %525 = vmatpush1.bf16.msra.mxu0 0
        %526 = vmatprep.subr.bf16.mxu0 0
        %527 = vmatpush1.bf16.msra.mxu0 0
        %528 = vmatprep.subr.bf16.mxu0 %v329
        %529 = vmatpush1.bf16.msra.mxu0 %v328
        %530 = vmatprep.subr.bf16.mxu0 0
        %531 = vmatpush2.bf16.msra.mxu0 0
        %532 = vmatprep.subr.bf16.mxu0 0
        %533 = vmatpush2.bf16.msra.mxu0 0
        %534 = vmatprep.subr.bf16.mxu0 0
        %535 = vmatpush2.bf16.msra.mxu0 0
        %536 = vmatprep.subr.bf16.mxu0 0
        %537 = vmatpush2.bf16.msra.mxu0 0
        %538 = vmatprep.subr.bf16.mxu0 0
        %539 = vmatpush2.bf16.msra.mxu0 0
        %540 = vmatprep.subr.bf16.mxu0 0
        %541 = vmatpush2.bf16.msra.mxu0 0
        %542 = vmatprep.subr.bf16.mxu0 0
        %543 = vmatpush2.bf16.msra.mxu0 0
        %544 = vmatprep.subr.bf16.mxu0 0
        %545 = vmatpush2.bf16.msra.mxu0 0
        %546 = vmatprep.mubr.bf16.mxu0 0
        %547 = vmatmul.mubr.bf16.gmra.mxu0 %v512
        %v548 = vpop.f32.mrf.mxu0
        %v549 = vadd.f32 %v412, %v548
        %v550 = vpop.f32.mrf.mxu0
        %v551 = vadd.f32 %v414, %v550
        %v552 = vpop.f32.mrf.mxu0
        %v553 = vadd.f32 %v416, %v552
        %v554 = vpop.f32.mrf.mxu0
        %v555 = vadd.f32 %v418, %v554
        %556 = vdwg.mxu0
        %557 = vmatprep.subr.bf16.mxu0 0
        %558 = vmatpush1.bf16.msra.mxu0 0
        %559 = vmatprep.subr.bf16.mxu0 0
        %560 = vmatpush1.bf16.msra.mxu0 0
        %561 = vmatprep.subr.bf16.mxu0 0
        %562 = vmatpush1.bf16.msra.mxu0 0
        %563 = vmatprep.subr.bf16.mxu0 0
        %564 = vmatpush1.bf16.msra.mxu0 0
        %565 = vmatprep.subr.bf16.mxu0 0
        %566 = vmatpush1.bf16.msra.mxu0 0
        %567 = vmatprep.subr.bf16.mxu0 0
        %568 = vmatpush1.bf16.msra.mxu0 0
        %569 = vmatprep.subr.bf16.mxu0 0
        %570 = vmatpush1.bf16.msra.mxu0 0
        %571 = vmatprep.subr.bf16.mxu0 %v331
        %572 = vmatpush1.bf16.msra.mxu0 %v330
        %573 = vmatprep.subr.bf16.mxu0 0
        %574 = vmatpush2.bf16.msra.mxu0 0
        %575 = vmatprep.subr.bf16.mxu0 0
        %576 = vmatpush2.bf16.msra.mxu0 0
        %577 = vmatprep.subr.bf16.mxu0 0
        %578 = vmatpush2.bf16.msra.mxu0 0
        %579 = vmatprep.subr.bf16.mxu0 0
        %580 = vmatpush2.bf16.msra.mxu0 0
        %581 = vmatprep.subr.bf16.mxu0 0
        %582 = vmatpush2.bf16.msra.mxu0 0
        %583 = vmatprep.subr.bf16.mxu0 0
        %584 = vmatpush2.bf16.msra.mxu0 0
        %585 = vmatprep.subr.bf16.mxu0 0
        %586 = vmatpush2.bf16.msra.mxu0 0
        %587 = vmatprep.subr.bf16.mxu0 0
        %588 = vmatpush2.bf16.msra.mxu0 0
        %589 = vmatprep.mubr.bf16.mxu0 0
        %590 = vmatmul.mubr.bf16.gmra.mxu0 %v512
        %v591 = vpop.f32.mrf.mxu0
        %v592 = vadd.f32 %v455, %v591
        %v593 = vpop.f32.mrf.mxu0
        %v594 = vadd.f32 %v457, %v593
        %v595 = vpop.f32.mrf.mxu0
        %v596 = vadd.f32 %v459, %v595
        %v597 = vpop.f32.mrf.mxu0
        %v598 = vadd.f32 %v461, %v597
        %599 = vdwg.mxu0
        %600 = vmatprep.subr.bf16.mxu0 0
        %601 = vmatpush1.bf16.msra.mxu0 0
        %602 = vmatprep.subr.bf16.mxu0 0
        %603 = vmatpush1.bf16.msra.mxu0 0
        %604 = vmatprep.subr.bf16.mxu0 0
        %605 = vmatpush1.bf16.msra.mxu0 0
        %606 = vmatprep.subr.bf16.mxu0 0
        %607 = vmatpush1.bf16.msra.mxu0 0
        %608 = vmatprep.subr.bf16.mxu0 0
        %609 = vmatpush1.bf16.msra.mxu0 0
        %610 = vmatprep.subr.bf16.mxu0 0
        %611 = vmatpush1.bf16.msra.mxu0 0
        %612 = vmatprep.subr.bf16.mxu0 0
        %613 = vmatpush1.bf16.msra.mxu0 0
        %614 = vmatprep.subr.bf16.mxu0 %v333
        %615 = vmatpush1.bf16.msra.mxu0 %v332
        %616 = vmatprep.subr.bf16.mxu0 0
        %617 = vmatpush2.bf16.msra.mxu0 0
        %618 = vmatprep.subr.bf16.mxu0 0
        %619 = vmatpush2.bf16.msra.mxu0 0
        %620 = vmatprep.subr.bf16.mxu0 0
        %621 = vmatpush2.bf16.msra.mxu0 0
        %622 = vmatprep.subr.bf16.mxu0 0
        %623 = vmatpush2.bf16.msra.mxu0 0
        %624 = vmatprep.subr.bf16.mxu0 0
        %625 = vmatpush2.bf16.msra.mxu0 0
        %626 = vmatprep.subr.bf16.mxu0 0
        %627 = vmatpush2.bf16.msra.mxu0 0
        %628 = vmatprep.subr.bf16.mxu0 0
        %629 = vmatpush2.bf16.msra.mxu0 0
        %630 = vmatprep.subr.bf16.mxu0 0
        %631 = vmatpush2.bf16.msra.mxu0 0
        %632 = vmatprep.mubr.bf16.mxu0 0
        %633 = vmatmul.mubr.bf16.gmra.mxu0 %v512
        %v634 = vpop.f32.mrf.mxu0
        %v635 = vadd.f32 %v498, %v634
        %v636 = vpop.f32.mrf.mxu0
        %v637 = vadd.f32 %v500, %v636
        %v638 = vpop.f32.mrf.mxu0
        %v639 = vadd.f32 %v502, %v638
        %v640 = vpop.f32.mrf.mxu0
        %v641 = vadd.f32 %v504, %v640
        %642 = vdwg.mxu0
        %s643 = scalar_lea.vmem [#allocation4], 16
        %v644 = vld [vmem:[%s643] sm:$0xf]
        %v645 = vld [vmem:[%s643 + $0x4] sm:$0xf]
        %v648 = vunpack.c.l.b16 %v644
        %v649 = vunpack.c.l.b16 %v645
        %v650 = vpack.c.b16 %v649, %v648
        %651 = vrot.lane.b32.xlu0 %v328, 126
        %v652 = vpop.permute.xlu0 %651
        %653 = vrot.lane.b32.xlu0 %v329, 126
        %v654 = vpop.permute.xlu0 %653
        %655 = vrot.lane.b32.xlu0 %v330, 126
        %v656 = vpop.permute.xlu0 %655
        %657 = vrot.lane.b32.xlu0 %v331, 126
        %v658 = vpop.permute.xlu0 %657
        %659 = vrot.lane.b32.xlu0 %v332, 126
        %v660 = vpop.permute.xlu0 %659
        %661 = vrot.lane.b32.xlu0 %v333, 126
        %v662 = vpop.permute.xlu0 %661
        %vm663 = vcmask 1031168
        %v664 = vsel %vm663, %v652, %v654
        %v665 = vsel %vm663, %v654, %v656
        %v666 = vsel %vm663, %v656, %v658
        %v667 = vsel %vm663, %v658, %v660
        %v668 = vsel %vm663, %v660, %v662
        %v676 = vsel %vm300, %v650, 0
        %678 = vmatprep.subr.bf16.mxu0 0
        %679 = vmatpush1.bf16.msra.mxu0 0
        %680 = vmatprep.subr.bf16.mxu0 0
        %681 = vmatpush1.bf16.msra.mxu0 0
        %682 = vmatprep.subr.bf16.mxu0 0
        %683 = vmatpush1.bf16.msra.mxu0 0
        %684 = vmatprep.subr.bf16.mxu0 0
        %685 = vmatpush1.bf16.msra.mxu0 0
        %686 = vmatprep.subr.bf16.mxu0 0
        %687 = vmatpush1.bf16.msra.mxu0 0
        %688 = vmatprep.subr.bf16.mxu0 0
        %689 = vmatpush1.bf16.msra.mxu0 0
        %690 = vmatprep.subr.bf16.mxu0 0
        %691 = vmatpush1.bf16.msra.mxu0 0
        %692 = vmatprep.subr.bf16.mxu0 %v665
        %693 = vmatpush1.bf16.msra.mxu0 %v664
        %694 = vmatprep.subr.bf16.mxu0 0
        %695 = vmatpush2.bf16.msra.mxu0 0
        %696 = vmatprep.subr.bf16.mxu0 0
        %697 = vmatpush2.bf16.msra.mxu0 0
        %698 = vmatprep.subr.bf16.mxu0 0
        %699 = vmatpush2.bf16.msra.mxu0 0
        %700 = vmatprep.subr.bf16.mxu0 0
        %701 = vmatpush2.bf16.msra.mxu0 0
        %702 = vmatprep.subr.bf16.mxu0 0
        %703 = vmatpush2.bf16.msra.mxu0 0
        %704 = vmatprep.subr.bf16.mxu0 0
        %705 = vmatpush2.bf16.msra.mxu0 0
        %706 = vmatprep.subr.bf16.mxu0 0
        %707 = vmatpush2.bf16.msra.mxu0 0
        %708 = vmatprep.subr.bf16.mxu0 0
        %709 = vmatpush2.bf16.msra.mxu0 0
        %710 = vmatprep.mubr.bf16.mxu0 0
        %711 = vmatmul.mubr.bf16.gmra.mxu0 %v676
        %v712 = vpop.f32.mrf.mxu0
        %v713 = vadd.f32 0.0, %v712
        %v714 = vpop.f32.mrf.mxu0
        %v715 = vadd.f32 0.0, %v714
        %v716 = vpop.f32.mrf.mxu0
        %v717 = vadd.f32 0.0, %v716
        %v718 = vpop.f32.mrf.mxu0
        %v719 = vadd.f32 0.0, %v718
        %720 = vdwg.mxu0
        %721 = vmatprep.subr.bf16.mxu0 0
        %722 = vmatpush1.bf16.msra.mxu0 0
        %723 = vmatprep.subr.bf16.mxu0 0
        %724 = vmatpush1.bf16.msra.mxu0 0
        %725 = vmatprep.subr.bf16.mxu0 0
        %726 = vmatpush1.bf16.msra.mxu0 0
        %727 = vmatprep.subr.bf16.mxu0 0
        %728 = vmatpush1.bf16.msra.mxu0 0
        %729 = vmatprep.subr.bf16.mxu0 0
        %730 = vmatpush1.bf16.msra.mxu0 0
        %731 = vmatprep.subr.bf16.mxu0 0
        %732 = vmatpush1.bf16.msra.mxu0 0
        %733 = vmatprep.subr.bf16.mxu0 0
        %734 = vmatpush1.bf16.msra.mxu0 0
        %735 = vmatprep.subr.bf16.mxu0 %v667
        %736 = vmatpush1.bf16.msra.mxu0 %v666
        %737 = vmatprep.subr.bf16.mxu0 0
        %738 = vmatpush2.bf16.msra.mxu0 0
        %739 = vmatprep.subr.bf16.mxu0 0
        %740 = vmatpush2.bf16.msra.mxu0 0
        %741 = vmatprep.subr.bf16.mxu0 0
        %742 = vmatpush2.bf16.msra.mxu0 0
        %743 = vmatprep.subr.bf16.mxu0 0
        %744 = vmatpush2.bf16.msra.mxu0 0
        %745 = vmatprep.subr.bf16.mxu0 0
        %746 = vmatpush2.bf16.msra.mxu0 0
        %747 = vmatprep.subr.bf16.mxu0 0
        %748 = vmatpush2.bf16.msra.mxu0 0
        %749 = vmatprep.subr.bf16.mxu0 0
        %750 = vmatpush2.bf16.msra.mxu0 0
        %751 = vmatprep.subr.bf16.mxu0 0
        %752 = vmatpush2.bf16.msra.mxu0 0
        %753 = vmatprep.mubr.bf16.mxu0 0
        %754 = vmatmul.mubr.bf16.gmra.mxu0 %v676
        %v755 = vpop.f32.mrf.mxu0
        %v756 = vadd.f32 0.0, %v755
        %v757 = vpop.f32.mrf.mxu0
        %v758 = vadd.f32 0.0, %v757
        %v759 = vpop.f32.mrf.mxu0
        %v760 = vadd.f32 0.0, %v759
        %v761 = vpop.f32.mrf.mxu0
        %v762 = vadd.f32 0.0, %v761
        %763 = vdwg.mxu0
        %764 = vmatprep.subr.bf16.mxu0 0
        %765 = vmatpush1.bf16.msra.mxu0 0
        %766 = vmatprep.subr.bf16.mxu0 0
        %767 = vmatpush1.bf16.msra.mxu0 0
        %768 = vmatprep.subr.bf16.mxu0 0
        %769 = vmatpush1.bf16.msra.mxu0 0
        %770 = vmatprep.subr.bf16.mxu0 0
        %771 = vmatpush1.bf16.msra.mxu0 0
        %772 = vmatprep.subr.bf16.mxu0 0
        %773 = vmatpush1.bf16.msra.mxu0 0
        %774 = vmatprep.subr.bf16.mxu0 0
        %775 = vmatpush1.bf16.msra.mxu0 0
        %776 = vmatprep.subr.bf16.mxu0 0
        %777 = vmatpush1.bf16.msra.mxu0 0
        %778 = vmatprep.subr.bf16.mxu0 %v662
        %779 = vmatpush1.bf16.msra.mxu0 %v668
        %780 = vmatprep.subr.bf16.mxu0 0
        %781 = vmatpush2.bf16.msra.mxu0 0
        %782 = vmatprep.subr.bf16.mxu0 0
        %783 = vmatpush2.bf16.msra.mxu0 0
        %784 = vmatprep.subr.bf16.mxu0 0
        %785 = vmatpush2.bf16.msra.mxu0 0
        %786 = vmatprep.subr.bf16.mxu0 0
        %787 = vmatpush2.bf16.msra.mxu0 0
        %788 = vmatprep.subr.bf16.mxu0 0
        %789 = vmatpush2.bf16.msra.mxu0 0
        %790 = vmatprep.subr.bf16.mxu0 0
        %791 = vmatpush2.bf16.msra.mxu0 0
        %792 = vmatprep.subr.bf16.mxu0 0
        %793 = vmatpush2.bf16.msra.mxu0 0
        %794 = vmatprep.subr.bf16.mxu0 0
        %795 = vmatpush2.bf16.msra.mxu0 0
        %796 = vmatprep.mubr.bf16.mxu0 0
        %797 = vmatmul.mubr.bf16.gmra.mxu0 %v676
        %v798 = vpop.f32.mrf.mxu0
        %v799 = vadd.f32 0.0, %v798
        %v800 = vpop.f32.mrf.mxu0
        %v801 = vadd.f32 0.0, %v800
        %v802 = vpop.f32.mrf.mxu0
        %v803 = vadd.f32 0.0, %v802
        %v804 = vpop.f32.mrf.mxu0
        %v805 = vadd.f32 0.0, %v804
        %806 = vdwg.mxu0
        %v807 = vadd.f32 %v549, %v713
        %v808 = vadd.f32 %v551, %v715
        %v809 = vadd.f32 %v592, %v756
        %v810 = vadd.f32 %v594, %v758
        %v811 = vadd.f32 %v635, %v799
        %v812 = vadd.f32 %v637, %v801
        %v813 = vadd.f32 %v553, %v717
        %v814 = vadd.f32 %v555, %v719
        %v815 = vadd.f32 %v596, %v760
        %v816 = vadd.f32 %v598, %v762
        %v817 = vadd.f32 %v639, %v803
        %v818 = vadd.f32 %v641, %v805
        %s819 = scalar_lea.vmem [#allocation4], 24
        %v820 = vld [vmem:[%s819] sm:$0xf]
        %v821 = vld [vmem:[%s819 + $0x4] sm:$0xf]
        %v824 = vunpack.c.l.b16 %v820
        %v825 = vunpack.c.l.b16 %v821
        %v826 = vpack.c.b16 %v825, %v824
        %827 = vrot.lane.b32.xlu0 %v328, 100
        %v828 = vpop.permute.xlu0 %827
        %829 = vrot.lane.b32.xlu0 %v329, 100
        %v830 = vpop.permute.xlu0 %829
        %831 = vrot.lane.b32.xlu0 %v330, 100
        %v832 = vpop.permute.xlu0 %831
        %833 = vrot.lane.b32.xlu0 %v331, 100
        %v834 = vpop.permute.xlu0 %833
        %835 = vrot.lane.b32.xlu0 %v332, 100
        %v836 = vpop.permute.xlu0 %835
        %837 = vrot.lane.b32.xlu0 %v333, 100
        %v838 = vpop.permute.xlu0 %837
        %vm839 = vcmask 818176
        %v840 = vsel %vm839, %v828, %v830
        %v841 = vsel %vm839, %v830, %v832
        %v842 = vsel %vm839, %v832, %v834
        %v843 = vsel %vm839, %v834, %v836
        %v844 = vsel %vm839, %v836, %v838
        %v852 = vsel %vm300, %v826, 0
        %854 = vmatprep.subr.bf16.mxu0 0
        %855 = vmatpush1.bf16.msra.mxu0 0
        %856 = vmatprep.subr.bf16.mxu0 0
        %857 = vmatpush1.bf16.msra.mxu0 0
        %858 = vmatprep.subr.bf16.mxu0 0
        %859 = vmatpush1.bf16.msra.mxu0 0
        %860 = vmatprep.subr.bf16.mxu0 0
        %861 = vmatpush1.bf16.msra.mxu0 0
        %862 = vmatprep.subr.bf16.mxu0 0
        %863 = vmatpush1.bf16.msra.mxu0 0
        %864 = vmatprep.subr.bf16.mxu0 0
        %865 = vmatpush1.bf16.msra.mxu0 0
        %866 = vmatprep.subr.bf16.mxu0 0
        %867 = vmatpush1.bf16.msra.mxu0 0
        %868 = vmatprep.subr.bf16.mxu0 %v841
        %869 = vmatpush1.bf16.msra.mxu0 %v840
        %870 = vmatprep.subr.bf16.mxu0 0
        %871 = vmatpush2.bf16.msra.mxu0 0
        %872 = vmatprep.subr.bf16.mxu0 0
        %873 = vmatpush2.bf16.msra.mxu0 0
        %874 = vmatprep.subr.bf16.mxu0 0
        %875 = vmatpush2.bf16.msra.mxu0 0
        %876 = vmatprep.subr.bf16.mxu0 0
        %877 = vmatpush2.bf16.msra.mxu0 0
        %878 = vmatprep.subr.bf16.mxu0 0
        %879 = vmatpush2.bf16.msra.mxu0 0
        %880 = vmatprep.subr.bf16.mxu0 0
        %881 = vmatpush2.bf16.msra.mxu0 0
        %882 = vmatprep.subr.bf16.mxu0 0
        %883 = vmatpush2.bf16.msra.mxu0 0
        %884 = vmatprep.subr.bf16.mxu0 0
        %885 = vmatpush2.bf16.msra.mxu0 0
        %886 = vmatprep.mubr.bf16.mxu0 0
        %887 = vmatmul.mubr.bf16.gmra.mxu0 %v852
        %v888 = vpop.f32.mrf.mxu0
        %v889 = vadd.f32 0.0, %v888
        %v890 = vpop.f32.mrf.mxu0
        %v891 = vadd.f32 0.0, %v890
        %v892 = vpop.f32.mrf.mxu0
        %v893 = vadd.f32 0.0, %v892
        %v894 = vpop.f32.mrf.mxu0
        %v895 = vadd.f32 0.0, %v894
        %896 = vdwg.mxu0
        %897 = vmatprep.subr.bf16.mxu0 0
        %898 = vmatpush1.bf16.msra.mxu0 0
        %899 = vmatprep.subr.bf16.mxu0 0
        %900 = vmatpush1.bf16.msra.mxu0 0
        %901 = vmatprep.subr.bf16.mxu0 0
        %902 = vmatpush1.bf16.msra.mxu0 0
        %903 = vmatprep.subr.bf16.mxu0 0
        %904 = vmatpush1.bf16.msra.mxu0 0
        %905 = vmatprep.subr.bf16.mxu0 0
        %906 = vmatpush1.bf16.msra.mxu0 0
        %907 = vmatprep.subr.bf16.mxu0 0
        %908 = vmatpush1.bf16.msra.mxu0 0
        %909 = vmatprep.subr.bf16.mxu0 0
        %910 = vmatpush1.bf16.msra.mxu0 0
        %911 = vmatprep.subr.bf16.mxu0 %v843
        %912 = vmatpush1.bf16.msra.mxu0 %v842
        %913 = vmatprep.subr.bf16.mxu0 0
        %914 = vmatpush2.bf16.msra.mxu0 0
        %915 = vmatprep.subr.bf16.mxu0 0
        %916 = vmatpush2.bf16.msra.mxu0 0
        %917 = vmatprep.subr.bf16.mxu0 0
        %918 = vmatpush2.bf16.msra.mxu0 0
        %919 = vmatprep.subr.bf16.mxu0 0
        %920 = vmatpush2.bf16.msra.mxu0 0
        %921 = vmatprep.subr.bf16.mxu0 0
        %922 = vmatpush2.bf16.msra.mxu0 0
        %923 = vmatprep.subr.bf16.mxu0 0
        %924 = vmatpush2.bf16.msra.mxu0 0
        %925 = vmatprep.subr.bf16.mxu0 0
        %926 = vmatpush2.bf16.msra.mxu0 0
        %927 = vmatprep.subr.bf16.mxu0 0
        %928 = vmatpush2.bf16.msra.mxu0 0
        %929 = vmatprep.mubr.bf16.mxu0 0
        %930 = vmatmul.mubr.bf16.gmra.mxu0 %v852
        %v931 = vpop.f32.mrf.mxu0
        %v932 = vadd.f32 0.0, %v931
        %v933 = vpop.f32.mrf.mxu0
        %v934 = vadd.f32 0.0, %v933
        %v935 = vpop.f32.mrf.mxu0
        %v936 = vadd.f32 0.0, %v935
        %v937 = vpop.f32.mrf.mxu0
        %v938 = vadd.f32 0.0, %v937
        %939 = vdwg.mxu0
        %940 = vmatprep.subr.bf16.mxu0 0
        %941 = vmatpush1.bf16.msra.mxu0 0
        %942 = vmatprep.subr.bf16.mxu0 0
        %943 = vmatpush1.bf16.msra.mxu0 0
        %944 = vmatprep.subr.bf16.mxu0 0
        %945 = vmatpush1.bf16.msra.mxu0 0
        %946 = vmatprep.subr.bf16.mxu0 0
        %947 = vmatpush1.bf16.msra.mxu0 0
        %948 = vmatprep.subr.bf16.mxu0 0
        %949 = vmatpush1.bf16.msra.mxu0 0
        %950 = vmatprep.subr.bf16.mxu0 0
        %951 = vmatpush1.bf16.msra.mxu0 0
        %952 = vmatprep.subr.bf16.mxu0 0
        %953 = vmatpush1.bf16.msra.mxu0 0
        %954 = vmatprep.subr.bf16.mxu0 %v838
        %955 = vmatpush1.bf16.msra.mxu0 %v844
        %956 = vmatprep.subr.bf16.mxu0 0
        %957 = vmatpush2.bf16.msra.mxu0 0
        %958 = vmatprep.subr.bf16.mxu0 0
        %959 = vmatpush2.bf16.msra.mxu0 0
        %960 = vmatprep.subr.bf16.mxu0 0
        %961 = vmatpush2.bf16.msra.mxu0 0
        %962 = vmatprep.subr.bf16.mxu0 0
        %963 = vmatpush2.bf16.msra.mxu0 0
        %964 = vmatprep.subr.bf16.mxu0 0
        %965 = vmatpush2.bf16.msra.mxu0 0
        %966 = vmatprep.subr.bf16.mxu0 0
        %967 = vmatpush2.bf16.msra.mxu0 0
        %968 = vmatprep.subr.bf16.mxu0 0
        %969 = vmatpush2.bf16.msra.mxu0 0
        %970 = vmatprep.subr.bf16.mxu0 0
        %971 = vmatpush2.bf16.msra.mxu0 0
        %972 = vmatprep.mubr.bf16.mxu0 0
        %973 = vmatmul.mubr.bf16.gmra.mxu0 %v852
        %v974 = vpop.f32.mrf.mxu0
        %v975 = vadd.f32 0.0, %v974
        %v976 = vpop.f32.mrf.mxu0
        %v977 = vadd.f32 0.0, %v976
        %v978 = vpop.f32.mrf.mxu0
        %v979 = vadd.f32 0.0, %v978
        %v980 = vpop.f32.mrf.mxu0
        %v981 = vadd.f32 0.0, %v980
        %982 = vdwg.mxu0
        %v983 = vadd.f32 %v807, %v889
        %v984 = vadd.f32 %v808, %v891
        %v985 = vadd.f32 %v809, %v932
        %v986 = vadd.f32 %v810, %v934
        %v987 = vadd.f32 %v811, %v975
        %v988 = vadd.f32 %v812, %v977
        %v989 = vadd.f32 %v813, %v893
        %v990 = vadd.f32 %v814, %v895
        %v991 = vadd.f32 %v815, %v936
        %v992 = vadd.f32 %v816, %v938
        %v993 = vadd.f32 %v817, %v979
        %v994 = vadd.f32 %v818, %v981
        %s995 = scalar_lea.vmem [#allocation4], 32
        %v996 = vld [vmem:[%s995] sm:$0xf]
        %v997 = vld [vmem:[%s995 + $0x4] sm:$0xf]
        %v1000 = vunpack.c.l.b16 %v996
        %v1001 = vunpack.c.l.b16 %v997
        %v1002 = vpack.c.b16 %v1001, %v1000
        %1003 = vrot.lane.b32.xlu0 %v328, 99
        %v1004 = vpop.permute.xlu0 %1003
        %1005 = vrot.lane.b32.xlu0 %v329, 99
        %v1006 = vpop.permute.xlu0 %1005
        %1007 = vrot.lane.b32.xlu0 %v330, 99
        %v1008 = vpop.permute.xlu0 %1007
        %1009 = vrot.lane.b32.xlu0 %v331, 99
        %v1010 = vpop.permute.xlu0 %1009
        %1011 = vrot.lane.b32.xlu0 %v332, 99
        %v1012 = vpop.permute.xlu0 %1011
        %1013 = vrot.lane.b32.xlu0 %v333, 99
        %v1014 = vpop.permute.xlu0 %1013
        %vm1015 = vcmask 809984
        %v1016 = vsel %vm1015, %v1004, %v1006
        %v1017 = vsel %vm1015, %v1006, %v1008
        %v1018 = vsel %vm1015, %v1008, %v1010
        %v1019 = vsel %vm1015, %v1010, %v1012
        %v1020 = vsel %vm1015, %v1012, %v1014
        %v1028 = vsel %vm300, %v1002, 0
        %1030 = vmatprep.subr.bf16.mxu0 0
        %1031 = vmatpush1.bf16.msra.mxu0 0
        %1032 = vmatprep.subr.bf16.mxu0 0
        %1033 = vmatpush1.bf16.msra.mxu0 0
        %1034 = vmatprep.subr.bf16.mxu0 0
        %1035 = vmatpush1.bf16.msra.mxu0 0
        %1036 = vmatprep.subr.bf16.mxu0 0
        %1037 = vmatpush1.bf16.msra.mxu0 0
        %1038 = vmatprep.subr.bf16.mxu0 0
        %1039 = vmatpush1.bf16.msra.mxu0 0
        %1040 = vmatprep.subr.bf16.mxu0 0
        %1041 = vmatpush1.bf16.msra.mxu0 0
        %1042 = vmatprep.subr.bf16.mxu0 0
        %1043 = vmatpush1.bf16.msra.mxu0 0
        %1044 = vmatprep.subr.bf16.mxu0 %v1017
        %1045 = vmatpush1.bf16.msra.mxu0 %v1016
        %1046 = vmatprep.subr.bf16.mxu0 0
        %1047 = vmatpush2.bf16.msra.mxu0 0
        %1048 = vmatprep.subr.bf16.mxu0 0
        %1049 = vmatpush2.bf16.msra.mxu0 0
        %1050 = vmatprep.subr.bf16.mxu0 0
        %1051 = vmatpush2.bf16.msra.mxu0 0
        %1052 = vmatprep.subr.bf16.mxu0 0
        %1053 = vmatpush2.bf16.msra.mxu0 0
        %1054 = vmatprep.subr.bf16.mxu0 0
        %1055 = vmatpush2.bf16.msra.mxu0 0
        %1056 = vmatprep.subr.bf16.mxu0 0
        %1057 = vmatpush2.bf16.msra.mxu0 0
        %1058 = vmatprep.subr.bf16.mxu0 0
        %1059 = vmatpush2.bf16.msra.mxu0 0
        %1060 = vmatprep.subr.bf16.mxu0 0
        %1061 = vmatpush2.bf16.msra.mxu0 0
        %1062 = vmatprep.mubr.bf16.mxu0 0
        %1063 = vmatmul.mubr.bf16.gmra.mxu0 %v1028
        %v1064 = vpop.f32.mrf.mxu0
        %v1065 = vadd.f32 0.0, %v1064
        %v1066 = vpop.f32.mrf.mxu0
        %v1067 = vadd.f32 0.0, %v1066
        %v1068 = vpop.f32.mrf.mxu0
        %v1069 = vadd.f32 0.0, %v1068
        %v1070 = vpop.f32.mrf.mxu0
        %v1071 = vadd.f32 0.0, %v1070
        %1072 = vdwg.mxu0
        %1073 = vmatprep.subr.bf16.mxu0 0
        %1074 = vmatpush1.bf16.msra.mxu0 0
        %1075 = vmatprep.subr.bf16.mxu0 0
        %1076 = vmatpush1.bf16.msra.mxu0 0
        %1077 = vmatprep.subr.bf16.mxu0 0
        %1078 = vmatpush1.bf16.msra.mxu0 0
        %1079 = vmatprep.subr.bf16.mxu0 0
        %1080 = vmatpush1.bf16.msra.mxu0 0
        %1081 = vmatprep.subr.bf16.mxu0 0
        %1082 = vmatpush1.bf16.msra.mxu0 0
        %1083 = vmatprep.subr.bf16.mxu0 0
        %1084 = vmatpush1.bf16.msra.mxu0 0
        %1085 = vmatprep.subr.bf16.mxu0 0
        %1086 = vmatpush1.bf16.msra.mxu0 0
        %1087 = vmatprep.subr.bf16.mxu0 %v1019
        %1088 = vmatpush1.bf16.msra.mxu0 %v1018
        %1089 = vmatprep.subr.bf16.mxu0 0
        %1090 = vmatpush2.bf16.msra.mxu0 0
        %1091 = vmatprep.subr.bf16.mxu0 0
        %1092 = vmatpush2.bf16.msra.mxu0 0
        %1093 = vmatprep.subr.bf16.mxu0 0
        %1094 = vmatpush2.bf16.msra.mxu0 0
        %1095 = vmatprep.subr.bf16.mxu0 0
        %1096 = vmatpush2.bf16.msra.mxu0 0
        %1097 = vmatprep.subr.bf16.mxu0 0
        %1098 = vmatpush2.bf16.msra.mxu0 0
        %1099 = vmatprep.subr.bf16.mxu0 0
        %1100 = vmatpush2.bf16.msra.mxu0 0
        %1101 = vmatprep.subr.bf16.mxu0 0
        %1102 = vmatpush2.bf16.msra.mxu0 0
        %1103 = vmatprep.subr.bf16.mxu0 0
        %1104 = vmatpush2.bf16.msra.mxu0 0
        %1105 = vmatprep.mubr.bf16.mxu0 0
        %1106 = vmatmul.mubr.bf16.gmra.mxu0 %v1028
        %v1107 = vpop.f32.mrf.mxu0
        %v1108 = vadd.f32 0.0, %v1107
        %v1109 = vpop.f32.mrf.mxu0
        %v1110 = vadd.f32 0.0, %v1109
        %v1111 = vpop.f32.mrf.mxu0
        %v1112 = vadd.f32 0.0, %v1111
        %v1113 = vpop.f32.mrf.mxu0
        %v1114 = vadd.f32 0.0, %v1113
        %1115 = vdwg.mxu0
        %1116 = vmatprep.subr.bf16.mxu0 0
        %1117 = vmatpush1.bf16.msra.mxu0 0
        %1118 = vmatprep.subr.bf16.mxu0 0
        %1119 = vmatpush1.bf16.msra.mxu0 0
        %1120 = vmatprep.subr.bf16.mxu0 0
        %1121 = vmatpush1.bf16.msra.mxu0 0
        %1122 = vmatprep.subr.bf16.mxu0 0
        %1123 = vmatpush1.bf16.msra.mxu0 0
        %1124 = vmatprep.subr.bf16.mxu0 0
        %1125 = vmatpush1.bf16.msra.mxu0 0
        %1126 = vmatprep.subr.bf16.mxu0 0
        %1127 = vmatpush1.bf16.msra.mxu0 0
        %1128 = vmatprep.subr.bf16.mxu0 0
        %1129 = vmatpush1.bf16.msra.mxu0 0
        %1130 = vmatprep.subr.bf16.mxu0 %v1014
        %1131 = vmatpush1.bf16.msra.mxu0 %v1020
        %1132 = vmatprep.subr.bf16.mxu0 0
        %1133 = vmatpush2.bf16.msra.mxu0 0
        %1134 = vmatprep.subr.bf16.mxu0 0
        %1135 = vmatpush2.bf16.msra.mxu0 0
        %1136 = vmatprep.subr.bf16.mxu0 0
        %1137 = vmatpush2.bf16.msra.mxu0 0
        %1138 = vmatprep.subr.bf16.mxu0 0
        %1139 = vmatpush2.bf16.msra.mxu0 0
        %1140 = vmatprep.subr.bf16.mxu0 0
        %1141 = vmatpush2.bf16.msra.mxu0 0
        %1142 = vmatprep.subr.bf16.mxu0 0
        %1143 = vmatpush2.bf16.msra.mxu0 0
        %1144 = vmatprep.subr.bf16.mxu0 0
        %1145 = vmatpush2.bf16.msra.mxu0 0
        %1146 = vmatprep.subr.bf16.mxu0 0
        %1147 = vmatpush2.bf16.msra.mxu0 0
        %1148 = vmatprep.mubr.bf16.mxu0 0
        %1149 = vmatmul.mubr.bf16.gmra.mxu0 %v1028
        %v1150 = vpop.f32.mrf.mxu0
        %v1151 = vadd.f32 0.0, %v1150
        %v1152 = vpop.f32.mrf.mxu0
        %v1153 = vadd.f32 0.0, %v1152
        %v1154 = vpop.f32.mrf.mxu0
        %v1155 = vadd.f32 0.0, %v1154
        %v1156 = vpop.f32.mrf.mxu0
        %v1157 = vadd.f32 0.0, %v1156
        %1158 = vdwg.mxu0
        %v1159 = vadd.f32 %v983, %v1065
        %v1160 = vadd.f32 %v984, %v1067
        %v1161 = vadd.f32 %v985, %v1108
        %v1162 = vadd.f32 %v986, %v1110
        %v1163 = vadd.f32 %v987, %v1151
        %v1164 = vadd.f32 %v988, %v1153
        %v1165 = vadd.f32 %v989, %v1069
        %v1166 = vadd.f32 %v990, %v1071
        %v1167 = vadd.f32 %v991, %v1112
        %v1168 = vadd.f32 %v992, %v1114
        %v1169 = vadd.f32 %v993, %v1155
        %v1170 = vadd.f32 %v994, %v1157
        %s1171 = scalar_lea.vmem [#allocation4], 40
        %v1172 = vld [vmem:[%s1171] sm:$0xf]
        %v1173 = vld [vmem:[%s1171 + $0x4] sm:$0xf]
        %v1176 = vunpack.c.l.b16 %v1172
        %v1177 = vunpack.c.l.b16 %v1173
        %v1178 = vpack.c.b16 %v1177, %v1176
        %1179 = vrot.lane.b32.xlu0 %v328, 98
        %v1180 = vpop.permute.xlu0 %1179
        %1181 = vrot.lane.b32.xlu0 %v329, 98
        %v1182 = vpop.permute.xlu0 %1181
        %1183 = vrot.lane.b32.xlu0 %v330, 98
        %v1184 = vpop.permute.xlu0 %1183
        %1185 = vrot.lane.b32.xlu0 %v331, 98
        %v1186 = vpop.permute.xlu0 %1185
        %1187 = vrot.lane.b32.xlu0 %v332, 98
        %v1188 = vpop.permute.xlu0 %1187
        %1189 = vrot.lane.b32.xlu0 %v333, 98
        %v1190 = vpop.permute.xlu0 %1189
        %vm1191 = vcmask 801792
        %v1192 = vsel %vm1191, %v1180, %v1182
        %v1193 = vsel %vm1191, %v1182, %v1184
        %v1194 = vsel %vm1191, %v1184, %v1186
        %v1195 = vsel %vm1191, %v1186, %v1188
        %v1196 = vsel %vm1191, %v1188, %v1190
        %v1204 = vsel %vm300, %v1178, 0
        %1206 = vmatprep.subr.bf16.mxu0 0
        %1207 = vmatpush1.bf16.msra.mxu0 0
        %1208 = vmatprep.subr.bf16.mxu0 0
        %1209 = vmatpush1.bf16.msra.mxu0 0
        %1210 = vmatprep.subr.bf16.mxu0 0
        %1211 = vmatpush1.bf16.msra.mxu0 0
        %1212 = vmatprep.subr.bf16.mxu0 0
        %1213 = vmatpush1.bf16.msra.mxu0 0
        %1214 = vmatprep.subr.bf16.mxu0 0
        %1215 = vmatpush1.bf16.msra.mxu0 0
        %1216 = vmatprep.subr.bf16.mxu0 0
        %1217 = vmatpush1.bf16.msra.mxu0 0
        %1218 = vmatprep.subr.bf16.mxu0 0
        %1219 = vmatpush1.bf16.msra.mxu0 0
        %1220 = vmatprep.subr.bf16.mxu0 %v1193
        %1221 = vmatpush1.bf16.msra.mxu0 %v1192
        %1222 = vmatprep.subr.bf16.mxu0 0
        %1223 = vmatpush2.bf16.msra.mxu0 0
        %1224 = vmatprep.subr.bf16.mxu0 0
        %1225 = vmatpush2.bf16.msra.mxu0 0
        %1226 = vmatprep.subr.bf16.mxu0 0
        %1227 = vmatpush2.bf16.msra.mxu0 0
        %1228 = vmatprep.subr.bf16.mxu0 0
        %1229 = vmatpush2.bf16.msra.mxu0 0
        %1230 = vmatprep.subr.bf16.mxu0 0
        %1231 = vmatpush2.bf16.msra.mxu0 0
        %1232 = vmatprep.subr.bf16.mxu0 0
        %1233 = vmatpush2.bf16.msra.mxu0 0
        %1234 = vmatprep.subr.bf16.mxu0 0
        %1235 = vmatpush2.bf16.msra.mxu0 0
        %1236 = vmatprep.subr.bf16.mxu0 0
        %1237 = vmatpush2.bf16.msra.mxu0 0
        %1238 = vmatprep.mubr.bf16.mxu0 0
        %1239 = vmatmul.mubr.bf16.gmra.mxu0 %v1204
        %v1240 = vpop.f32.mrf.mxu0
        %v1241 = vadd.f32 0.0, %v1240
        %v1242 = vpop.f32.mrf.mxu0
        %v1243 = vadd.f32 0.0, %v1242
        %v1244 = vpop.f32.mrf.mxu0
        %v1245 = vadd.f32 0.0, %v1244
        %v1246 = vpop.f32.mrf.mxu0
        %v1247 = vadd.f32 0.0, %v1246
        %1248 = vdwg.mxu0
        %1249 = vmatprep.subr.bf16.mxu0 0
        %1250 = vmatpush1.bf16.msra.mxu0 0
        %1251 = vmatprep.subr.bf16.mxu0 0
        %1252 = vmatpush1.bf16.msra.mxu0 0
        %1253 = vmatprep.subr.bf16.mxu0 0
        %1254 = vmatpush1.bf16.msra.mxu0 0
        %1255 = vmatprep.subr.bf16.mxu0 0
        %1256 = vmatpush1.bf16.msra.mxu0 0
        %1257 = vmatprep.subr.bf16.mxu0 0
        %1258 = vmatpush1.bf16.msra.mxu0 0
        %1259 = vmatprep.subr.bf16.mxu0 0
        %1260 = vmatpush1.bf16.msra.mxu0 0
        %1261 = vmatprep.subr.bf16.mxu0 0
        %1262 = vmatpush1.bf16.msra.mxu0 0
        %1263 = vmatprep.subr.bf16.mxu0 %v1195
        %1264 = vmatpush1.bf16.msra.mxu0 %v1194
        %1265 = vmatprep.subr.bf16.mxu0 0
        %1266 = vmatpush2.bf16.msra.mxu0 0
        %1267 = vmatprep.subr.bf16.mxu0 0
        %1268 = vmatpush2.bf16.msra.mxu0 0
        %1269 = vmatprep.subr.bf16.mxu0 0
        %1270 = vmatpush2.bf16.msra.mxu0 0
        %1271 = vmatprep.subr.bf16.mxu0 0
        %1272 = vmatpush2.bf16.msra.mxu0 0
        %1273 = vmatprep.subr.bf16.mxu0 0
        %1274 = vmatpush2.bf16.msra.mxu0 0
        %1275 = vmatprep.subr.bf16.mxu0 0
        %1276 = vmatpush2.bf16.msra.mxu0 0
        %1277 = vmatprep.subr.bf16.mxu0 0
        %1278 = vmatpush2.bf16.msra.mxu0 0
        %1279 = vmatprep.subr.bf16.mxu0 0
        %1280 = vmatpush2.bf16.msra.mxu0 0
        %1281 = vmatprep.mubr.bf16.mxu0 0
        %1282 = vmatmul.mubr.bf16.gmra.mxu0 %v1204
        %v1283 = vpop.f32.mrf.mxu0
        %v1284 = vadd.f32 0.0, %v1283
        %v1285 = vpop.f32.mrf.mxu0
        %v1286 = vadd.f32 0.0, %v1285
        %v1287 = vpop.f32.mrf.mxu0
        %v1288 = vadd.f32 0.0, %v1287
        %v1289 = vpop.f32.mrf.mxu0
        %v1290 = vadd.f32 0.0, %v1289
        %1291 = vdwg.mxu0
        %1292 = vmatprep.subr.bf16.mxu0 0
        %1293 = vmatpush1.bf16.msra.mxu0 0
        %1294 = vmatprep.subr.bf16.mxu0 0
        %1295 = vmatpush1.bf16.msra.mxu0 0
        %1296 = vmatprep.subr.bf16.mxu0 0
        %1297 = vmatpush1.bf16.msra.mxu0 0
        %1298 = vmatprep.subr.bf16.mxu0 0
        %1299 = vmatpush1.bf16.msra.mxu0 0
        %1300 = vmatprep.subr.bf16.mxu0 0
        %1301 = vmatpush1.bf16.msra.mxu0 0
        %1302 = vmatprep.subr.bf16.mxu0 0
        %1303 = vmatpush1.bf16.msra.mxu0 0
        %1304 = vmatprep.subr.bf16.mxu0 0
        %1305 = vmatpush1.bf16.msra.mxu0 0
        %1306 = vmatprep.subr.bf16.mxu0 %v1190
        %1307 = vmatpush1.bf16.msra.mxu0 %v1196
        %1308 = vmatprep.subr.bf16.mxu0 0
        %1309 = vmatpush2.bf16.msra.mxu0 0
        %1310 = vmatprep.subr.bf16.mxu0 0
        %1311 = vmatpush2.bf16.msra.mxu0 0
        %1312 = vmatprep.subr.bf16.mxu0 0
        %1313 = vmatpush2.bf16.msra.mxu0 0
        %1314 = vmatprep.subr.bf16.mxu0 0
        %1315 = vmatpush2.bf16.msra.mxu0 0
        %1316 = vmatprep.subr.bf16.mxu0 0
        %1317 = vmatpush2.bf16.msra.mxu0 0
        %1318 = vmatprep.subr.bf16.mxu0 0
        %1319 = vmatpush2.bf16.msra.mxu0 0
        %1320 = vmatprep.subr.bf16.mxu0 0
        %1321 = vmatpush2.bf16.msra.mxu0 0
        %1322 = vmatprep.subr.bf16.mxu0 0
        %1323 = vmatpush2.bf16.msra.mxu0 0
        %1324 = vmatprep.mubr.bf16.mxu0 0
        %1325 = vmatmul.mubr.bf16.gmra.mxu0 %v1204
        %v1326 = vpop.f32.mrf.mxu0
        %v1327 = vadd.f32 0.0, %v1326
        %v1328 = vpop.f32.mrf.mxu0
        %v1329 = vadd.f32 0.0, %v1328
        %v1330 = vpop.f32.mrf.mxu0
        %v1331 = vadd.f32 0.0, %v1330
        %v1332 = vpop.f32.mrf.mxu0
        %v1333 = vadd.f32 0.0, %v1332
        %1334 = vdwg.mxu0
        %v1335 = vadd.f32 %v1159, %v1241
        %v1336 = vadd.f32 %v1160, %v1243
        %v1337 = vadd.f32 %v1161, %v1284
        %v1338 = vadd.f32 %v1162, %v1286
        %v1339 = vadd.f32 %v1163, %v1327
        %v1340 = vadd.f32 %v1164, %v1329
        %v1341 = vadd.f32 %v1165, %v1245
        %v1342 = vadd.f32 %v1166, %v1247
        %v1343 = vadd.f32 %v1167, %v1288
        %v1344 = vadd.f32 %v1168, %v1290
        %v1345 = vadd.f32 %v1169, %v1331
        %v1346 = vadd.f32 %v1170, %v1333
        %v1347 = vld [vmem:[#allocation2] sm:$0xff]
        %v1348 = vld [vmem:[#allocation2 + $0x8] sm:$0xff]
        %v1349 = vld [vmem:[#allocation2 + $0x10] sm:$0xff]
        %v1350 = vld [vmem:[#allocation2 + $0x18] sm:$0xff]
        %v1351 = vld [vmem:[#allocation2 + $0x20] sm:$0xff]
        %v1352 = vld [vmem:[#allocation2 + $0x28] sm:$0xff]
        %v1353 = vld [vmem:[#allocation2 + $0x30] sm:$0xff]
        %v1354 = vld [vmem:[#allocation2 + $0x38] sm:$0xff]
        %v1355 = vld [vmem:[#allocation2 + $0x40] sm:$0xff]
        %v1356 = vld [vmem:[#allocation2 + $0x48] sm:$0xff]
        %v1357 = vld [vmem:[#allocation2 + $0x50] sm:$0xff]
        %v1358 = vld [vmem:[#allocation2 + $0x58] sm:$0xff]
        %v1359 = vld [vmem:[#allocation2 + $0x60] sm:$0xff]
        %v1360 = vld [vmem:[#allocation2 + $0x68] sm:$0xff]
        %v1361 = vpack.c.bf16 %v1354, %v1347
        %v1362 = vpack.c.bf16 %v1355, %v1348
        %v1363 = vpack.c.bf16 %v1356, %v1349
        %v1364 = vpack.c.bf16 %v1357, %v1350
        %v1365 = vpack.c.bf16 %v1358, %v1351
        %v1366 = vpack.c.bf16 %v1359, %v1352
        %v1367 = vpack.c.bf16 %v1360, %v1353
        %s1368 = scalar_lea.vmem [#allocation4], 48
        %v1369 = vld [vmem:[%s1368] sm:$0xf]
        %v1370 = vld [vmem:[%s1368 + $0x4] sm:$0xf]
        %v1373 = vunpack.c.l.b16 %v1369
        %v1374 = vunpack.c.l.b16 %v1370
        %v1375 = vpack.c.b16 %v1374, %v1373
        %1383 = vrot.lane.b32.xlu0 %v1361, 72
        %v1384 = vpop.permute.xlu0 %1383
        %1385 = vrot.lane.b32.xlu0 %v1362, 72
        %v1386 = vpop.permute.xlu0 %1385
        %1387 = vrot.lane.b32.xlu0 %v1363, 72
        %v1388 = vpop.permute.xlu0 %1387
        %1389 = vrot.lane.b32.xlu0 %v1364, 72
        %v1390 = vpop.permute.xlu0 %1389
        %1391 = vrot.lane.b32.xlu0 %v1365, 72
        %v1392 = vpop.permute.xlu0 %1391
        %1393 = vrot.lane.b32.xlu0 %v1366, 72
        %v1394 = vpop.permute.xlu0 %1393
        %1395 = vrot.lane.b32.xlu0 %v1367, 72
        %v1396 = vpop.permute.xlu0 %1395
        %vm1397 = vcmask 588800
        %v1398 = vsel %vm1397, %v1384, %v1386
        %v1399 = vsel %vm1397, %v1386, %v1388
        %v1400 = vsel %vm1397, %v1388, %v1390
        %v1401 = vsel %vm1397, %v1390, %v1392
        %v1402 = vsel %vm1397, %v1392, %v1394
        %v1403 = vsel %vm1397, %v1394, %v1396
        %v1411 = vsel %vm300, %v1375, 0
        %1413 = vmatprep.subr.bf16.mxu0 0
        %1414 = vmatpush1.bf16.msra.mxu0 0
        %1415 = vmatprep.subr.bf16.mxu0 0
        %1416 = vmatpush1.bf16.msra.mxu0 0
        %1417 = vmatprep.subr.bf16.mxu0 0
        %1418 = vmatpush1.bf16.msra.mxu0 0
        %1419 = vmatprep.subr.bf16.mxu0 0
        %1420 = vmatpush1.bf16.msra.mxu0 0
        %1421 = vmatprep.subr.bf16.mxu0 0
        %1422 = vmatpush1.bf16.msra.mxu0 0
        %1423 = vmatprep.subr.bf16.mxu0 0
        %1424 = vmatpush1.bf16.msra.mxu0 0
        %1425 = vmatprep.subr.bf16.mxu0 0
        %1426 = vmatpush1.bf16.msra.mxu0 0
        %1427 = vmatprep.subr.bf16.mxu0 %v1399
        %1428 = vmatpush1.bf16.msra.mxu0 %v1398
        %1429 = vmatprep.subr.bf16.mxu0 0
        %1430 = vmatpush2.bf16.msra.mxu0 0
        %1431 = vmatprep.subr.bf16.mxu0 0
        %1432 = vmatpush2.bf16.msra.mxu0 0
        %1433 = vmatprep.subr.bf16.mxu0 0
        %1434 = vmatpush2.bf16.msra.mxu0 0
        %1435 = vmatprep.subr.bf16.mxu0 0
        %1436 = vmatpush2.bf16.msra.mxu0 0
        %1437 = vmatprep.subr.bf16.mxu0 0
        %1438 = vmatpush2.bf16.msra.mxu0 0
        %1439 = vmatprep.subr.bf16.mxu0 0
        %1440 = vmatpush2.bf16.msra.mxu0 0
        %1441 = vmatprep.subr.bf16.mxu0 0
        %1442 = vmatpush2.bf16.msra.mxu0 0
        %1443 = vmatprep.subr.bf16.mxu0 0
        %1444 = vmatpush2.bf16.msra.mxu0 0
        %1445 = vmatprep.mubr.bf16.mxu0 0
        %1446 = vmatmul.mubr.bf16.gmra.mxu0 %v1411
        %v1447 = vpop.f32.mrf.mxu0
        %v1448 = vadd.f32 0.0, %v1447
        %v1449 = vpop.f32.mrf.mxu0
        %v1450 = vadd.f32 0.0, %v1449
        %v1451 = vpop.f32.mrf.mxu0
        %v1452 = vadd.f32 0.0, %v1451
        %v1453 = vpop.f32.mrf.mxu0
        %v1454 = vadd.f32 0.0, %v1453
        %1455 = vdwg.mxu0
        %1456 = vmatprep.subr.bf16.mxu0 0
        %1457 = vmatpush1.bf16.msra.mxu0 0
        %1458 = vmatprep.subr.bf16.mxu0 0
        %1459 = vmatpush1.bf16.msra.mxu0 0
        %1460 = vmatprep.subr.bf16.mxu0 0
        %1461 = vmatpush1.bf16.msra.mxu0 0
        %1462 = vmatprep.subr.bf16.mxu0 0
        %1463 = vmatpush1.bf16.msra.mxu0 0
        %1464 = vmatprep.subr.bf16.mxu0 0
        %1465 = vmatpush1.bf16.msra.mxu0 0
        %1466 = vmatprep.subr.bf16.mxu0 0
        %1467 = vmatpush1.bf16.msra.mxu0 0
        %1468 = vmatprep.subr.bf16.mxu0 0
        %1469 = vmatpush1.bf16.msra.mxu0 0
        %1470 = vmatprep.subr.bf16.mxu0 %v1401
        %1471 = vmatpush1.bf16.msra.mxu0 %v1400
        %1472 = vmatprep.subr.bf16.mxu0 0
        %1473 = vmatpush2.bf16.msra.mxu0 0
        %1474 = vmatprep.subr.bf16.mxu0 0
        %1475 = vmatpush2.bf16.msra.mxu0 0
        %1476 = vmatprep.subr.bf16.mxu0 0
        %1477 = vmatpush2.bf16.msra.mxu0 0
        %1478 = vmatprep.subr.bf16.mxu0 0
        %1479 = vmatpush2.bf16.msra.mxu0 0
        %1480 = vmatprep.subr.bf16.mxu0 0
        %1481 = vmatpush2.bf16.msra.mxu0 0
        %1482 = vmatprep.subr.bf16.mxu0 0
        %1483 = vmatpush2.bf16.msra.mxu0 0
        %1484 = vmatprep.subr.bf16.mxu0 0
        %1485 = vmatpush2.bf16.msra.mxu0 0
        %1486 = vmatprep.subr.bf16.mxu0 0
        %1487 = vmatpush2.bf16.msra.mxu0 0
        %1488 = vmatprep.mubr.bf16.mxu0 0
        %1489 = vmatmul.mubr.bf16.gmra.mxu0 %v1411
        %v1490 = vpop.f32.mrf.mxu0
        %v1491 = vadd.f32 0.0, %v1490
        %v1492 = vpop.f32.mrf.mxu0
        %v1493 = vadd.f32 0.0, %v1492
        %v1494 = vpop.f32.mrf.mxu0
        %v1495 = vadd.f32 0.0, %v1494
        %v1496 = vpop.f32.mrf.mxu0
        %v1497 = vadd.f32 0.0, %v1496
        %1498 = vdwg.mxu0
        %1499 = vmatprep.subr.bf16.mxu0 0
        %1500 = vmatpush1.bf16.msra.mxu0 0
        %1501 = vmatprep.subr.bf16.mxu0 0
        %1502 = vmatpush1.bf16.msra.mxu0 0
        %1503 = vmatprep.subr.bf16.mxu0 0
        %1504 = vmatpush1.bf16.msra.mxu0 0
        %1505 = vmatprep.subr.bf16.mxu0 0
        %1506 = vmatpush1.bf16.msra.mxu0 0
        %1507 = vmatprep.subr.bf16.mxu0 0
        %1508 = vmatpush1.bf16.msra.mxu0 0
        %1509 = vmatprep.subr.bf16.mxu0 0
        %1510 = vmatpush1.bf16.msra.mxu0 0
        %1511 = vmatprep.subr.bf16.mxu0 0
        %1512 = vmatpush1.bf16.msra.mxu0 0
        %1513 = vmatprep.subr.bf16.mxu0 %v1403
        %1514 = vmatpush1.bf16.msra.mxu0 %v1402
        %1515 = vmatprep.subr.bf16.mxu0 0
        %1516 = vmatpush2.bf16.msra.mxu0 0
        %1517 = vmatprep.subr.bf16.mxu0 0
        %1518 = vmatpush2.bf16.msra.mxu0 0
        %1519 = vmatprep.subr.bf16.mxu0 0
        %1520 = vmatpush2.bf16.msra.mxu0 0
        %1521 = vmatprep.subr.bf16.mxu0 0
        %1522 = vmatpush2.bf16.msra.mxu0 0
        %1523 = vmatprep.subr.bf16.mxu0 0
        %1524 = vmatpush2.bf16.msra.mxu0 0
        %1525 = vmatprep.subr.bf16.mxu0 0
        %1526 = vmatpush2.bf16.msra.mxu0 0
        %1527 = vmatprep.subr.bf16.mxu0 0
        %1528 = vmatpush2.bf16.msra.mxu0 0
        %1529 = vmatprep.subr.bf16.mxu0 0
        %1530 = vmatpush2.bf16.msra.mxu0 0
        %1531 = vmatprep.mubr.bf16.mxu0 0
        %1532 = vmatmul.mubr.bf16.gmra.mxu0 %v1411
        %v1533 = vpop.f32.mrf.mxu0
        %v1534 = vadd.f32 0.0, %v1533
        %v1535 = vpop.f32.mrf.mxu0
        %v1536 = vadd.f32 0.0, %v1535
        %v1537 = vpop.f32.mrf.mxu0
        %v1538 = vadd.f32 0.0, %v1537
        %v1539 = vpop.f32.mrf.mxu0
        %v1540 = vadd.f32 0.0, %v1539
        %1541 = vdwg.mxu0
        %v1542 = vadd.f32 %v1335, %v1448
        %v1543 = vadd.f32 %v1336, %v1450
        %v1544 = vadd.f32 %v1337, %v1491
        %v1545 = vadd.f32 %v1338, %v1493
        %v1546 = vadd.f32 %v1339, %v1534
        %v1547 = vadd.f32 %v1340, %v1536
        %v1548 = vadd.f32 %v1341, %v1452
        %v1549 = vadd.f32 %v1342, %v1454
        %v1550 = vadd.f32 %v1343, %v1495
        %v1551 = vadd.f32 %v1344, %v1497
        %v1552 = vadd.f32 %v1345, %v1538
        %v1553 = vadd.f32 %v1346, %v1540
        %s1554 = scalar_lea.vmem [#allocation4], 56
        %v1555 = vld [vmem:[%s1554] sm:$0xf]
        %v1556 = vld [vmem:[%s1554 + $0x4] sm:$0xf]
        %v1559 = vunpack.c.l.b16 %v1555
        %v1560 = vunpack.c.l.b16 %v1556
        %v1561 = vpack.c.b16 %v1560, %v1559
        %1562 = vrot.lane.b32.xlu0 %v1361, 71
        %v1563 = vpop.permute.xlu0 %1562
        %1564 = vrot.lane.b32.xlu0 %v1362, 71
        %v1565 = vpop.permute.xlu0 %1564
        %1566 = vrot.lane.b32.xlu0 %v1363, 71
        %v1567 = vpop.permute.xlu0 %1566
        %1568 = vrot.lane.b32.xlu0 %v1364, 71
        %v1569 = vpop.permute.xlu0 %1568
        %1570 = vrot.lane.b32.xlu0 %v1365, 71
        %v1571 = vpop.permute.xlu0 %1570
        %1572 = vrot.lane.b32.xlu0 %v1366, 71
        %v1573 = vpop.permute.xlu0 %1572
        %1574 = vrot.lane.b32.xlu0 %v1367, 71
        %v1575 = vpop.permute.xlu0 %1574
        %vm1576 = vcmask 580608
        %v1577 = vsel %vm1576, %v1563, %v1565
        %v1578 = vsel %vm1576, %v1565, %v1567
        %v1579 = vsel %vm1576, %v1567, %v1569
        %v1580 = vsel %vm1576, %v1569, %v1571
        %v1581 = vsel %vm1576, %v1571, %v1573
        %v1582 = vsel %vm1576, %v1573, %v1575
        %v1590 = vsel %vm300, %v1561, 0
        %1592 = vmatprep.subr.bf16.mxu0 0
        %1593 = vmatpush1.bf16.msra.mxu0 0
        %1594 = vmatprep.subr.bf16.mxu0 0
        %1595 = vmatpush1.bf16.msra.mxu0 0
        %1596 = vmatprep.subr.bf16.mxu0 0
        %1597 = vmatpush1.bf16.msra.mxu0 0
        %1598 = vmatprep.subr.bf16.mxu0 0
        %1599 = vmatpush1.bf16.msra.mxu0 0
        %1600 = vmatprep.subr.bf16.mxu0 0
        %1601 = vmatpush1.bf16.msra.mxu0 0
        %1602 = vmatprep.subr.bf16.mxu0 0
        %1603 = vmatpush1.bf16.msra.mxu0 0
        %1604 = vmatprep.subr.bf16.mxu0 0
        %1605 = vmatpush1.bf16.msra.mxu0 0
        %1606 = vmatprep.subr.bf16.mxu0 %v1578
        %1607 = vmatpush1.bf16.msra.mxu0 %v1577
        %1608 = vmatprep.subr.bf16.mxu0 0
        %1609 = vmatpush2.bf16.msra.mxu0 0
        %1610 = vmatprep.subr.bf16.mxu0 0
        %1611 = vmatpush2.bf16.msra.mxu0 0
        %1612 = vmatprep.subr.bf16.mxu0 0
        %1613 = vmatpush2.bf16.msra.mxu0 0
        %1614 = vmatprep.subr.bf16.mxu0 0
        %1615 = vmatpush2.bf16.msra.mxu0 0
        %1616 = vmatprep.subr.bf16.mxu0 0
        %1617 = vmatpush2.bf16.msra.mxu0 0
        %1618 = vmatprep.subr.bf16.mxu0 0
        %1619 = vmatpush2.bf16.msra.mxu0 0
        %1620 = vmatprep.subr.bf16.mxu0 0
        %1621 = vmatpush2.bf16.msra.mxu0 0
        %1622 = vmatprep.subr.bf16.mxu0 0
        %1623 = vmatpush2.bf16.msra.mxu0 0
        %1624 = vmatprep.mubr.bf16.mxu0 0
        %1625 = vmatmul.mubr.bf16.gmra.mxu0 %v1590
        %v1626 = vpop.f32.mrf.mxu0
        %v1627 = vadd.f32 0.0, %v1626
        %v1628 = vpop.f32.mrf.mxu0
        %v1629 = vadd.f32 0.0, %v1628
        %v1630 = vpop.f32.mrf.mxu0
        %v1631 = vadd.f32 0.0, %v1630
        %v1632 = vpop.f32.mrf.mxu0
        %v1633 = vadd.f32 0.0, %v1632
        %1634 = vdwg.mxu0
        %1635 = vmatprep.subr.bf16.mxu0 0
        %1636 = vmatpush1.bf16.msra.mxu0 0
        %1637 = vmatprep.subr.bf16.mxu0 0
        %1638 = vmatpush1.bf16.msra.mxu0 0
        %1639 = vmatprep.subr.bf16.mxu0 0
        %1640 = vmatpush1.bf16.msra.mxu0 0
        %1641 = vmatprep.subr.bf16.mxu0 0
        %1642 = vmatpush1.bf16.msra.mxu0 0
        %1643 = vmatprep.subr.bf16.mxu0 0
        %1644 = vmatpush1.bf16.msra.mxu0 0
        %1645 = vmatprep.subr.bf16.mxu0 0
        %1646 = vmatpush1.bf16.msra.mxu0 0
        %1647 = vmatprep.subr.bf16.mxu0 0
        %1648 = vmatpush1.bf16.msra.mxu0 0
        %1649 = vmatprep.subr.bf16.mxu0 %v1580
        %1650 = vmatpush1.bf16.msra.mxu0 %v1579
        %1651 = vmatprep.subr.bf16.mxu0 0
        %1652 = vmatpush2.bf16.msra.mxu0 0
        %1653 = vmatprep.subr.bf16.mxu0 0
        %1654 = vmatpush2.bf16.msra.mxu0 0
        %1655 = vmatprep.subr.bf16.mxu0 0
        %1656 = vmatpush2.bf16.msra.mxu0 0
        %1657 = vmatprep.subr.bf16.mxu0 0
        %1658 = vmatpush2.bf16.msra.mxu0 0
        %1659 = vmatprep.subr.bf16.mxu0 0
        %1660 = vmatpush2.bf16.msra.mxu0 0
        %1661 = vmatprep.subr.bf16.mxu0 0
        %1662 = vmatpush2.bf16.msra.mxu0 0
        %1663 = vmatprep.subr.bf16.mxu0 0
        %1664 = vmatpush2.bf16.msra.mxu0 0
        %1665 = vmatprep.subr.bf16.mxu0 0
        %1666 = vmatpush2.bf16.msra.mxu0 0
        %1667 = vmatprep.mubr.bf16.mxu0 0
        %1668 = vmatmul.mubr.bf16.gmra.mxu0 %v1590
        %v1669 = vpop.f32.mrf.mxu0
        %v1670 = vadd.f32 0.0, %v1669
        %v1671 = vpop.f32.mrf.mxu0
        %v1672 = vadd.f32 0.0, %v1671
        %v1673 = vpop.f32.mrf.mxu0
        %v1674 = vadd.f32 0.0, %v1673
        %v1675 = vpop.f32.mrf.mxu0
        %v1676 = vadd.f32 0.0, %v1675
        %1677 = vdwg.mxu0
        %1678 = vmatprep.subr.bf16.mxu0 0
        %1679 = vmatpush1.bf16.msra.mxu0 0
        %1680 = vmatprep.subr.bf16.mxu0 0
        %1681 = vmatpush1.bf16.msra.mxu0 0
        %1682 = vmatprep.subr.bf16.mxu0 0
        %1683 = vmatpush1.bf16.msra.mxu0 0
        %1684 = vmatprep.subr.bf16.mxu0 0
        %1685 = vmatpush1.bf16.msra.mxu0 0
        %1686 = vmatprep.subr.bf16.mxu0 0
        %1687 = vmatpush1.bf16.msra.mxu0 0
        %1688 = vmatprep.subr.bf16.mxu0 0
        %1689 = vmatpush1.bf16.msra.mxu0 0
        %1690 = vmatprep.subr.bf16.mxu0 0
        %1691 = vmatpush1.bf16.msra.mxu0 0
        %1692 = vmatprep.subr.bf16.mxu0 %v1582
        %1693 = vmatpush1.bf16.msra.mxu0 %v1581
        %1694 = vmatprep.subr.bf16.mxu0 0
        %1695 = vmatpush2.bf16.msra.mxu0 0
        %1696 = vmatprep.subr.bf16.mxu0 0
        %1697 = vmatpush2.bf16.msra.mxu0 0
        %1698 = vmatprep.subr.bf16.mxu0 0
        %1699 = vmatpush2.bf16.msra.mxu0 0
        %1700 = vmatprep.subr.bf16.mxu0 0
        %1701 = vmatpush2.bf16.msra.mxu0 0
        %1702 = vmatprep.subr.bf16.mxu0 0
        %1703 = vmatpush2.bf16.msra.mxu0 0
        %1704 = vmatprep.subr.bf16.mxu0 0
        %1705 = vmatpush2.bf16.msra.mxu0 0
        %1706 = vmatprep.subr.bf16.mxu0 0
        %1707 = vmatpush2.bf16.msra.mxu0 0
        %1708 = vmatprep.subr.bf16.mxu0 0
        %1709 = vmatpush2.bf16.msra.mxu0 0
        %1710 = vmatprep.mubr.bf16.mxu0 0
        %1711 = vmatmul.mubr.bf16.gmra.mxu0 %v1590
        %v1712 = vpop.f32.mrf.mxu0
        %v1713 = vadd.f32 0.0, %v1712
        %v1714 = vpop.f32.mrf.mxu0
        %v1715 = vadd.f32 0.0, %v1714
        %v1716 = vpop.f32.mrf.mxu0
        %v1717 = vadd.f32 0.0, %v1716
        %v1718 = vpop.f32.mrf.mxu0
        %v1719 = vadd.f32 0.0, %v1718
        %1720 = vdwg.mxu0
        %v1721 = vadd.f32 %v1542, %v1627
        %v1722 = vadd.f32 %v1543, %v1629
        %v1723 = vadd.f32 %v1544, %v1670
        %v1724 = vadd.f32 %v1545, %v1672
        %v1725 = vadd.f32 %v1546, %v1713
        %v1726 = vadd.f32 %v1547, %v1715
        %v1727 = vadd.f32 %v1548, %v1631
        %v1728 = vadd.f32 %v1549, %v1633
        %v1729 = vadd.f32 %v1550, %v1674
        %v1730 = vadd.f32 %v1551, %v1676
        %v1731 = vadd.f32 %v1552, %v1717
        %v1732 = vadd.f32 %v1553, %v1719
        %s1733 = scalar_lea.vmem [#allocation4], 64
        %v1734 = vld [vmem:[%s1733] sm:$0xf]
        %v1735 = vld [vmem:[%s1733 + $0x4] sm:$0xf]
        %v1738 = vunpack.c.l.b16 %v1734
        %v1739 = vunpack.c.l.b16 %v1735
        %v1740 = vpack.c.b16 %v1739, %v1738
        %1741 = vrot.lane.b32.xlu0 %v1361, 70
        %v1742 = vpop.permute.xlu0 %1741
        %1743 = vrot.lane.b32.xlu0 %v1362, 70
        %v1744 = vpop.permute.xlu0 %1743
        %1745 = vrot.lane.b32.xlu0 %v1363, 70
        %v1746 = vpop.permute.xlu0 %1745
        %1747 = vrot.lane.b32.xlu0 %v1364, 70
        %v1748 = vpop.permute.xlu0 %1747
        %1749 = vrot.lane.b32.xlu0 %v1365, 70
        %v1750 = vpop.permute.xlu0 %1749
        %1751 = vrot.lane.b32.xlu0 %v1366, 70
        %v1752 = vpop.permute.xlu0 %1751
        %1753 = vrot.lane.b32.xlu0 %v1367, 70
        %v1754 = vpop.permute.xlu0 %1753
        %vm1755 = vcmask 572416
        %v1756 = vsel %vm1755, %v1742, %v1744
        %v1757 = vsel %vm1755, %v1744, %v1746
        %v1758 = vsel %vm1755, %v1746, %v1748
        %v1759 = vsel %vm1755, %v1748, %v1750
        %v1760 = vsel %vm1755, %v1750, %v1752
        %v1761 = vsel %vm1755, %v1752, %v1754
        %v1769 = vsel %vm300, %v1740, 0
        %1771 = vmatprep.subr.bf16.mxu0 0
        %1772 = vmatpush1.bf16.msra.mxu0 0
        %1773 = vmatprep.subr.bf16.mxu0 0
        %1774 = vmatpush1.bf16.msra.mxu0 0
        %1775 = vmatprep.subr.bf16.mxu0 0
        %1776 = vmatpush1.bf16.msra.mxu0 0
        %1777 = vmatprep.subr.bf16.mxu0 0
        %1778 = vmatpush1.bf16.msra.mxu0 0
        %1779 = vmatprep.subr.bf16.mxu0 0
        %1780 = vmatpush1.bf16.msra.mxu0 0
        %1781 = vmatprep.subr.bf16.mxu0 0
        %1782 = vmatpush1.bf16.msra.mxu0 0
        %1783 = vmatprep.subr.bf16.mxu0 0
        %1784 = vmatpush1.bf16.msra.mxu0 0
        %1785 = vmatprep.subr.bf16.mxu0 %v1757
        %1786 = vmatpush1.bf16.msra.mxu0 %v1756
        %1787 = vmatprep.subr.bf16.mxu0 0
        %1788 = vmatpush2.bf16.msra.mxu0 0
        %1789 = vmatprep.subr.bf16.mxu0 0
        %1790 = vmatpush2.bf16.msra.mxu0 0
        %1791 = vmatprep.subr.bf16.mxu0 0
        %1792 = vmatpush2.bf16.msra.mxu0 0
        %1793 = vmatprep.subr.bf16.mxu0 0
        %1794 = vmatpush2.bf16.msra.mxu0 0
        %1795 = vmatprep.subr.bf16.mxu0 0
        %1796 = vmatpush2.bf16.msra.mxu0 0
        %1797 = vmatprep.subr.bf16.mxu0 0
        %1798 = vmatpush2.bf16.msra.mxu0 0
        %1799 = vmatprep.subr.bf16.mxu0 0
        %1800 = vmatpush2.bf16.msra.mxu0 0
        %1801 = vmatprep.subr.bf16.mxu0 0
        %1802 = vmatpush2.bf16.msra.mxu0 0
        %1803 = vmatprep.mubr.bf16.mxu0 0
        %1804 = vmatmul.mubr.bf16.gmra.mxu0 %v1769
        %v1805 = vpop.f32.mrf.mxu0
        %v1806 = vadd.f32 0.0, %v1805
        %v1807 = vpop.f32.mrf.mxu0
        %v1808 = vadd.f32 0.0, %v1807
        %v1809 = vpop.f32.mrf.mxu0
        %v1810 = vadd.f32 0.0, %v1809
        %v1811 = vpop.f32.mrf.mxu0
        %v1812 = vadd.f32 0.0, %v1811
        %1813 = vdwg.mxu0
        %1814 = vmatprep.subr.bf16.mxu0 0
        %1815 = vmatpush1.bf16.msra.mxu0 0
        %1816 = vmatprep.subr.bf16.mxu0 0
        %1817 = vmatpush1.bf16.msra.mxu0 0
        %1818 = vmatprep.subr.bf16.mxu0 0
        %1819 = vmatpush1.bf16.msra.mxu0 0
        %1820 = vmatprep.subr.bf16.mxu0 0
        %1821 = vmatpush1.bf16.msra.mxu0 0
        %1822 = vmatprep.subr.bf16.mxu0 0
        %1823 = vmatpush1.bf16.msra.mxu0 0
        %1824 = vmatprep.subr.bf16.mxu0 0
        %1825 = vmatpush1.bf16.msra.mxu0 0
        %1826 = vmatprep.subr.bf16.mxu0 0
        %1827 = vmatpush1.bf16.msra.mxu0 0
        %1828 = vmatprep.subr.bf16.mxu0 %v1759
        %1829 = vmatpush1.bf16.msra.mxu0 %v1758
        %1830 = vmatprep.subr.bf16.mxu0 0
        %1831 = vmatpush2.bf16.msra.mxu0 0
        %1832 = vmatprep.subr.bf16.mxu0 0
        %1833 = vmatpush2.bf16.msra.mxu0 0
        %1834 = vmatprep.subr.bf16.mxu0 0
        %1835 = vmatpush2.bf16.msra.mxu0 0
        %1836 = vmatprep.subr.bf16.mxu0 0
        %1837 = vmatpush2.bf16.msra.mxu0 0
        %1838 = vmatprep.subr.bf16.mxu0 0
        %1839 = vmatpush2.bf16.msra.mxu0 0
        %1840 = vmatprep.subr.bf16.mxu0 0
        %1841 = vmatpush2.bf16.msra.mxu0 0
        %1842 = vmatprep.subr.bf16.mxu0 0
        %1843 = vmatpush2.bf16.msra.mxu0 0
        %1844 = vmatprep.subr.bf16.mxu0 0
        %1845 = vmatpush2.bf16.msra.mxu0 0
        %1846 = vmatprep.mubr.bf16.mxu0 0
        %1847 = vmatmul.mubr.bf16.gmra.mxu0 %v1769
        %v1848 = vpop.f32.mrf.mxu0
        %v1849 = vadd.f32 0.0, %v1848
        %v1850 = vpop.f32.mrf.mxu0
        %v1851 = vadd.f32 0.0, %v1850
        %v1852 = vpop.f32.mrf.mxu0
        %v1853 = vadd.f32 0.0, %v1852
        %v1854 = vpop.f32.mrf.mxu0
        %v1855 = vadd.f32 0.0, %v1854
        %1856 = vdwg.mxu0
        %1857 = vmatprep.subr.bf16.mxu0 0
        %1858 = vmatpush1.bf16.msra.mxu0 0
        %1859 = vmatprep.subr.bf16.mxu0 0
        %1860 = vmatpush1.bf16.msra.mxu0 0
        %1861 = vmatprep.subr.bf16.mxu0 0
        %1862 = vmatpush1.bf16.msra.mxu0 0
        %1863 = vmatprep.subr.bf16.mxu0 0
        %1864 = vmatpush1.bf16.msra.mxu0 0
        %1865 = vmatprep.subr.bf16.mxu0 0
        %1866 = vmatpush1.bf16.msra.mxu0 0
        %1867 = vmatprep.subr.bf16.mxu0 0
        %1868 = vmatpush1.bf16.msra.mxu0 0
        %1869 = vmatprep.subr.bf16.mxu0 0
        %1870 = vmatpush1.bf16.msra.mxu0 0
        %1871 = vmatprep.subr.bf16.mxu0 %v1761
        %1872 = vmatpush1.bf16.msra.mxu0 %v1760
        %1873 = vmatprep.subr.bf16.mxu0 0
        %1874 = vmatpush2.bf16.msra.mxu0 0
        %1875 = vmatprep.subr.bf16.mxu0 0
        %1876 = vmatpush2.bf16.msra.mxu0 0
        %1877 = vmatprep.subr.bf16.mxu0 0
        %1878 = vmatpush2.bf16.msra.mxu0 0
        %1879 = vmatprep.subr.bf16.mxu0 0
        %1880 = vmatpush2.bf16.msra.mxu0 0
        %1881 = vmatprep.subr.bf16.mxu0 0
        %1882 = vmatpush2.bf16.msra.mxu0 0
        %1883 = vmatprep.subr.bf16.mxu0 0
        %1884 = vmatpush2.bf16.msra.mxu0 0
        %1885 = vmatprep.subr.bf16.mxu0 0
        %1886 = vmatpush2.bf16.msra.mxu0 0
        %1887 = vmatprep.subr.bf16.mxu0 0
        %1888 = vmatpush2.bf16.msra.mxu0 0
        %1889 = vmatprep.mubr.bf16.mxu0 0
        %1890 = vmatmul.mubr.bf16.gmra.mxu0 %v1769
        %v1891 = vpop.f32.mrf.mxu0
        %v1892 = vadd.f32 0.0, %v1891
        %v1893 = vpop.f32.mrf.mxu0
        %v1894 = vadd.f32 0.0, %v1893
        %v1895 = vpop.f32.mrf.mxu0
        %v1896 = vadd.f32 0.0, %v1895
        %v1897 = vpop.f32.mrf.mxu0
        %v1898 = vadd.f32 0.0, %v1897
        %1899 = vdwg.mxu0
        %v1900 = vadd.f32 %v1721, %v1806
        %v1901 = vadd.f32 %v1722, %v1808
        %v1902 = vadd.f32 %v1723, %v1849
        %v1903 = vadd.f32 %v1724, %v1851
        %v1904 = vadd.f32 %v1725, %v1892
        %v1905 = vadd.f32 %v1726, %v1894
        %v1906 = vadd.f32 %v1727, %v1810
        %v1907 = vadd.f32 %v1728, %v1812
        %v1908 = vadd.f32 %v1729, %v1853
        %v1909 = vadd.f32 %v1730, %v1855
        %v1910 = vadd.f32 %v1731, %v1896
        %v1911 = vadd.f32 %v1732, %v1898
        %v1912 = vmax.f32 %v1900, 0.0
        %v1913 = vmax.f32 %v1901, 0.0
        %v1914 = vmax.f32 %v1902, 0.0
        %v1915 = vmax.f32 %v1903, 0.0
        %v1916 = vmax.f32 %v1904, 0.0
        %v1917 = vmax.f32 %v1905, 0.0
        %v1918 = vmax.f32 %v1906, 0.0
        %v1919 = vmax.f32 %v1907, 0.0
        %v1920 = vmax.f32 %v1908, 0.0
        %v1921 = vmax.f32 %v1909, 0.0
        %v1922 = vmax.f32 %v1910, 0.0
        %v1923 = vmax.f32 %v1911, 0.0
        %v1924 = vld [vmem:[#allocation6] sm:$0xff]
        %v1925 = vld [vmem:[#allocation6 + $0x8] sm:$0xff]
        %1927 = vset.pattern.permute.xlu0 0
        %1928 = vperm.xlu0 %1927, %v1924
        %v1929 = vpop.permute.xlu0 %1928
        %1932 = vset.pattern.permute.xlu0 0
        %1933 = vperm.xlu0 %1932, %v1925
        %v1934 = vpop.permute.xlu0 %1933
        %v1936 = vmul.f32 %v1912, %v1929
        %v1937 = vmul.f32 %v1913, %v1929
        %v1938 = vmul.f32 %v1914, %v1929
        %v1939 = vmul.f32 %v1915, %v1929
        %v1940 = vmul.f32 %v1916, %v1929
        %v1941 = vmul.f32 %v1917, %v1929
        %v1942 = vmul.f32 %v1918, %v1934
        %v1943 = vmul.f32 %v1919, %v1934
        %v1944 = vmul.f32 %v1920, %v1934
        %v1945 = vmul.f32 %v1921, %v1934
        %v1946 = vmul.f32 %v1922, %v1934
        %v1947 = vmul.f32 %v1923, %v1934
        %v1948 = vld [vmem:[%s3] sm:$0xff]
        %v1949 = vld [vmem:[%s3 + $0x8] sm:$0xff]
        %1951 = vset.pattern.permute.xlu0 0
        %1952 = vperm.xlu0 %1951, %v1948
        %v1953 = vpop.permute.xlu0 %1952
        %1956 = vset.pattern.permute.xlu0 0
        %1957 = vperm.xlu0 %1956, %v1949
        %v1958 = vpop.permute.xlu0 %1957
        %v1960 = vadd.f32 %v1936, %v1953
        %v1961 = vadd.f32 %v1937, %v1953
        %v1962 = vadd.f32 %v1938, %v1953
        %v1963 = vadd.f32 %v1939, %v1953
        %v1964 = vadd.f32 %v1940, %v1953
        %v1965 = vadd.f32 %v1941, %v1953
        %v1966 = vadd.f32 %v1942, %v1958
        %v1967 = vadd.f32 %v1943, %v1958
        %v1968 = vadd.f32 %v1944, %v1958
        %v1969 = vadd.f32 %v1945, %v1958
        %v1970 = vadd.f32 %v1946, %v1958
        %v1971 = vadd.f32 %v1947, %v1958
        %1972 = vst [vmem:[#allocation3] sm:$0xff] %v1960
        %1973 = vst [vmem:[#allocation3 + $0x8] sm:$0xff] %v1961
        %1974 = vst [vmem:[#allocation3 + $0x10] sm:$0xff] %v1962
        %1975 = vst [vmem:[#allocation3 + $0x18] sm:$0xff] %v1963
        %1976 = vst [vmem:[#allocation3 + $0x20] sm:$0xff] %v1964
        %vm1977 = vcmask 703488
        %1978 = vst.msk [vmem:[#allocation3 + $0x28] sm:$0xff] %vm1977, %v1965
        %1979 = vst [vmem:[#allocation3 + $0x38] sm:$0xff] %v1966
        %1980 = vst [vmem:[#allocation3 + $0x40] sm:$0xff] %v1967
        %1981 = vst [vmem:[#allocation3 + $0x48] sm:$0xff] %v1968
        %1982 = vst [vmem:[#allocation3 + $0x50] sm:$0xff] %v1969
        %1983 = vst [vmem:[#allocation3 + $0x58] sm:$0xff] %v1970
        %1984 = vst.msk [vmem:[#allocation3 + $0x60] sm:$0xff] %vm1977, %v1971
        %v1985 = vld [vmem:[#allocation3] sm:$0xff]
        %v1986 = vld [vmem:[#allocation3 + $0x8] sm:$0xff]
        %v1987 = vld [vmem:[#allocation3 + $0x10] sm:$0xff]
        %v1988 = vld [vmem:[#allocation3 + $0x18] sm:$0xff]
        %v1989 = vld [vmem:[#allocation3 + $0x20] sm:$0xff]
        %v1990 = vld [vmem:[#allocation3 + $0x28] sm:$0xff]
        %v1991 = vld [vmem:[#allocation3 + $0x38] sm:$0xff]
        %v1992 = vld [vmem:[#allocation3 + $0x40] sm:$0xff]
        %v1993 = vld [vmem:[#allocation3 + $0x48] sm:$0xff]
        %v1994 = vld [vmem:[#allocation3 + $0x50] sm:$0xff]
        %v1995 = vld [vmem:[#allocation3 + $0x58] sm:$0xff]
        %v1996 = vld [vmem:[#allocation3 + $0x60] sm:$0xff]
        %v1997 = vpack.c.bf16 %v1991, %v1985
        %v1998 = vpack.c.bf16 %v1992, %v1986
        %v1999 = vpack.c.bf16 %v1993, %v1987
        %v2000 = vpack.c.bf16 %v1994, %v1988
        %v2001 = vpack.c.bf16 %v1995, %v1989
        %v2002 = vpack.c.bf16 %v1996, %v1990
        %s2003 = scalar_lea.vmem [#allocation4], 72
        %v2004 = vld [vmem:[%s2003] sm:$0xf]
        %v2005 = vld [vmem:[%s2003 + $0x4] sm:$0xf]
        %s2006 = scalar_lea.vmem [#allocation4], 80
        %v2007 = vld [vmem:[%s2006] sm:$0xf]
        %v2008 = vld [vmem:[%s2006 + $0x4] sm:$0xf]
        %v2011 = vunpack.c.l.b16 %v2007
        %v2012 = vunpack.c.l.b16 %v2008
        %v2013 = vpack.c.b16 %v2012, %v2011
        %2020 = vrot.lane.b32.xlu0 %v1997, 127
        %v2021 = vpop.permute.xlu0 %2020
        %2022 = vrot.lane.b32.xlu0 %v1998, 127
        %v2023 = vpop.permute.xlu0 %2022
        %2024 = vrot.lane.b32.xlu0 %v1999, 127
        %v2025 = vpop.permute.xlu0 %2024
        %2026 = vrot.lane.b32.xlu0 %v2000, 127
        %v2027 = vpop.permute.xlu0 %2026
        %2028 = vrot.lane.b32.xlu0 %v2001, 127
        %v2029 = vpop.permute.xlu0 %2028
        %2030 = vrot.lane.b32.xlu0 %v2002, 127
        %v2031 = vpop.permute.xlu0 %2030
        %v2032 = vsel %vm362, %v2021, %v2023
        %v2033 = vsel %vm362, %v2023, %v2025
        %v2034 = vsel %vm362, %v2025, %v2027
        %v2035 = vsel %vm362, %v2027, %v2029
        %v2036 = vsel %vm362, %v2029, %v2031
        %v2044 = vsel %vm300, %v2013, 0
        %2046 = vmatprep.subr.bf16.mxu0 0
        %2047 = vmatpush1.bf16.msra.mxu0 0
        %2048 = vmatprep.subr.bf16.mxu0 0
        %2049 = vmatpush1.bf16.msra.mxu0 0
        %2050 = vmatprep.subr.bf16.mxu0 0
        %2051 = vmatpush1.bf16.msra.mxu0 0
        %2052 = vmatprep.subr.bf16.mxu0 0
        %2053 = vmatpush1.bf16.msra.mxu0 0
        %2054 = vmatprep.subr.bf16.mxu0 0
        %2055 = vmatpush1.bf16.msra.mxu0 0
        %2056 = vmatprep.subr.bf16.mxu0 0
        %2057 = vmatpush1.bf16.msra.mxu0 0
        %2058 = vmatprep.subr.bf16.mxu0 0
        %2059 = vmatpush1.bf16.msra.mxu0 0
        %2060 = vmatprep.subr.bf16.mxu0 %v2033
        %2061 = vmatpush1.bf16.msra.mxu0 %v2032
        %2062 = vmatprep.subr.bf16.mxu0 0
        %2063 = vmatpush2.bf16.msra.mxu0 0
        %2064 = vmatprep.subr.bf16.mxu0 0
        %2065 = vmatpush2.bf16.msra.mxu0 0
        %2066 = vmatprep.subr.bf16.mxu0 0
        %2067 = vmatpush2.bf16.msra.mxu0 0
        %2068 = vmatprep.subr.bf16.mxu0 0
        %2069 = vmatpush2.bf16.msra.mxu0 0
        %2070 = vmatprep.subr.bf16.mxu0 0
        %2071 = vmatpush2.bf16.msra.mxu0 0
        %2072 = vmatprep.subr.bf16.mxu0 0
        %2073 = vmatpush2.bf16.msra.mxu0 0
        %2074 = vmatprep.subr.bf16.mxu0 0
        %2075 = vmatpush2.bf16.msra.mxu0 0
        %2076 = vmatprep.subr.bf16.mxu0 0
        %2077 = vmatpush2.bf16.msra.mxu0 0
        %2078 = vmatprep.mubr.bf16.mxu0 0
        %2079 = vmatmul.mubr.bf16.gmra.mxu0 %v2044
        %v2080 = vpop.f32.mrf.mxu0
        %v2081 = vadd.f32 0.0, %v2080
        %v2082 = vpop.f32.mrf.mxu0
        %v2083 = vadd.f32 0.0, %v2082
        %v2084 = vpop.f32.mrf.mxu0
        %v2085 = vadd.f32 0.0, %v2084
        %v2086 = vpop.f32.mrf.mxu0
        %v2087 = vadd.f32 0.0, %v2086
        %2088 = vdwg.mxu0
        %2089 = vmatprep.subr.bf16.mxu0 0
        %2090 = vmatpush1.bf16.msra.mxu0 0
        %2091 = vmatprep.subr.bf16.mxu0 0
        %2092 = vmatpush1.bf16.msra.mxu0 0
        %2093 = vmatprep.subr.bf16.mxu0 0
        %2094 = vmatpush1.bf16.msra.mxu0 0
        %2095 = vmatprep.subr.bf16.mxu0 0
        %2096 = vmatpush1.bf16.msra.mxu0 0
        %2097 = vmatprep.subr.bf16.mxu0 0
        %2098 = vmatpush1.bf16.msra.mxu0 0
        %2099 = vmatprep.subr.bf16.mxu0 0
        %2100 = vmatpush1.bf16.msra.mxu0 0
        %2101 = vmatprep.subr.bf16.mxu0 0
        %2102 = vmatpush1.bf16.msra.mxu0 0
        %2103 = vmatprep.subr.bf16.mxu0 %v2035
        %2104 = vmatpush1.bf16.msra.mxu0 %v2034
        %2105 = vmatprep.subr.bf16.mxu0 0
        %2106 = vmatpush2.bf16.msra.mxu0 0
        %2107 = vmatprep.subr.bf16.mxu0 0
        %2108 = vmatpush2.bf16.msra.mxu0 0
        %2109 = vmatprep.subr.bf16.mxu0 0
        %2110 = vmatpush2.bf16.msra.mxu0 0
        %2111 = vmatprep.subr.bf16.mxu0 0
        %2112 = vmatpush2.bf16.msra.mxu0 0
        %2113 = vmatprep.subr.bf16.mxu0 0
        %2114 = vmatpush2.bf16.msra.mxu0 0
        %2115 = vmatprep.subr.bf16.mxu0 0
        %2116 = vmatpush2.bf16.msra.mxu0 0
        %2117 = vmatprep.subr.bf16.mxu0 0
        %2118 = vmatpush2.bf16.msra.mxu0 0
        %2119 = vmatprep.subr.bf16.mxu0 0
        %2120 = vmatpush2.bf16.msra.mxu0 0
        %2121 = vmatprep.mubr.bf16.mxu0 0
        %2122 = vmatmul.mubr.bf16.gmra.mxu0 %v2044
        %v2123 = vpop.f32.mrf.mxu0
        %v2124 = vadd.f32 0.0, %v2123
        %v2125 = vpop.f32.mrf.mxu0
        %v2126 = vadd.f32 0.0, %v2125
        %v2127 = vpop.f32.mrf.mxu0
        %v2128 = vadd.f32 0.0, %v2127
        %v2129 = vpop.f32.mrf.mxu0
        %v2130 = vadd.f32 0.0, %v2129
        %2131 = vdwg.mxu0
        %2132 = vmatprep.subr.bf16.mxu0 0
        %2133 = vmatpush1.bf16.msra.mxu0 0
        %2134 = vmatprep.subr.bf16.mxu0 0
        %2135 = vmatpush1.bf16.msra.mxu0 0
        %2136 = vmatprep.subr.bf16.mxu0 0
        %2137 = vmatpush1.bf16.msra.mxu0 0
        %2138 = vmatprep.subr.bf16.mxu0 0
        %2139 = vmatpush1.bf16.msra.mxu0 0
        %2140 = vmatprep.subr.bf16.mxu0 0
        %2141 = vmatpush1.bf16.msra.mxu0 0
        %2142 = vmatprep.subr.bf16.mxu0 0
        %2143 = vmatpush1.bf16.msra.mxu0 0
        %2144 = vmatprep.subr.bf16.mxu0 0
        %2145 = vmatpush1.bf16.msra.mxu0 0
        %2146 = vmatprep.subr.bf16.mxu0 %v2031
        %2147 = vmatpush1.bf16.msra.mxu0 %v2036
        %2148 = vmatprep.subr.bf16.mxu0 0
        %2149 = vmatpush2.bf16.msra.mxu0 0
        %2150 = vmatprep.subr.bf16.mxu0 0
        %2151 = vmatpush2.bf16.msra.mxu0 0
        %2152 = vmatprep.subr.bf16.mxu0 0
        %2153 = vmatpush2.bf16.msra.mxu0 0
        %2154 = vmatprep.subr.bf16.mxu0 0
        %2155 = vmatpush2.bf16.msra.mxu0 0
        %2156 = vmatprep.subr.bf16.mxu0 0
        %2157 = vmatpush2.bf16.msra.mxu0 0
        %2158 = vmatprep.subr.bf16.mxu0 0
        %2159 = vmatpush2.bf16.msra.mxu0 0
        %2160 = vmatprep.subr.bf16.mxu0 0
        %2161 = vmatpush2.bf16.msra.mxu0 0
        %2162 = vmatprep.subr.bf16.mxu0 0
        %2163 = vmatpush2.bf16.msra.mxu0 0
        %2164 = vmatprep.mubr.bf16.mxu0 0
        %2165 = vmatmul.mubr.bf16.gmra.mxu0 %v2044
        %v2166 = vpop.f32.mrf.mxu0
        %v2167 = vadd.f32 0.0, %v2166
        %v2168 = vpop.f32.mrf.mxu0
        %v2169 = vadd.f32 0.0, %v2168
        %v2170 = vpop.f32.mrf.mxu0
        %v2171 = vadd.f32 0.0, %v2170
        %v2172 = vpop.f32.mrf.mxu0
        %v2173 = vadd.f32 0.0, %v2172
        %2174 = vdwg.mxu0
        %v2177 = vunpack.c.l.b16 %v2004
        %v2178 = vunpack.c.l.b16 %v2005
        %v2179 = vpack.c.b16 %v2178, %v2177
        %v2181 = vsel %vm300, %v2179, 0
        %2183 = vmatprep.subr.bf16.mxu0 0
        %2184 = vmatpush1.bf16.msra.mxu0 0
        %2185 = vmatprep.subr.bf16.mxu0 0
        %2186 = vmatpush1.bf16.msra.mxu0 0
        %2187 = vmatprep.subr.bf16.mxu0 0
        %2188 = vmatpush1.bf16.msra.mxu0 0
        %2189 = vmatprep.subr.bf16.mxu0 0
        %2190 = vmatpush1.bf16.msra.mxu0 0
        %2191 = vmatprep.subr.bf16.mxu0 0
        %2192 = vmatpush1.bf16.msra.mxu0 0
        %2193 = vmatprep.subr.bf16.mxu0 0
        %2194 = vmatpush1.bf16.msra.mxu0 0
        %2195 = vmatprep.subr.bf16.mxu0 0
        %2196 = vmatpush1.bf16.msra.mxu0 0
        %2197 = vmatprep.subr.bf16.mxu0 %v1998
        %2198 = vmatpush1.bf16.msra.mxu0 %v1997
        %2199 = vmatprep.subr.bf16.mxu0 0
        %2200 = vmatpush2.bf16.msra.mxu0 0
        %2201 = vmatprep.subr.bf16.mxu0 0
        %2202 = vmatpush2.bf16.msra.mxu0 0
        %2203 = vmatprep.subr.bf16.mxu0 0
        %2204 = vmatpush2.bf16.msra.mxu0 0
        %2205 = vmatprep.subr.bf16.mxu0 0
        %2206 = vmatpush2.bf16.msra.mxu0 0
        %2207 = vmatprep.subr.bf16.mxu0 0
        %2208 = vmatpush2.bf16.msra.mxu0 0
        %2209 = vmatprep.subr.bf16.mxu0 0
        %2210 = vmatpush2.bf16.msra.mxu0 0
        %2211 = vmatprep.subr.bf16.mxu0 0
        %2212 = vmatpush2.bf16.msra.mxu0 0
        %2213 = vmatprep.subr.bf16.mxu0 0
        %2214 = vmatpush2.bf16.msra.mxu0 0
        %2215 = vmatprep.mubr.bf16.mxu0 0
        %2216 = vmatmul.mubr.bf16.gmra.mxu0 %v2181
        %v2217 = vpop.f32.mrf.mxu0
        %v2218 = vadd.f32 %v2081, %v2217
        %v2219 = vpop.f32.mrf.mxu0
        %v2220 = vadd.f32 %v2083, %v2219
        %v2221 = vpop.f32.mrf.mxu0
        %v2222 = vadd.f32 %v2085, %v2221
        %v2223 = vpop.f32.mrf.mxu0
        %v2224 = vadd.f32 %v2087, %v2223
        %2225 = vdwg.mxu0
        %2226 = vmatprep.subr.bf16.mxu0 0
        %2227 = vmatpush1.bf16.msra.mxu0 0
        %2228 = vmatprep.subr.bf16.mxu0 0
        %2229 = vmatpush1.bf16.msra.mxu0 0
        %2230 = vmatprep.subr.bf16.mxu0 0
        %2231 = vmatpush1.bf16.msra.mxu0 0
        %2232 = vmatprep.subr.bf16.mxu0 0
        %2233 = vmatpush1.bf16.msra.mxu0 0
        %2234 = vmatprep.subr.bf16.mxu0 0
        %2235 = vmatpush1.bf16.msra.mxu0 0
        %2236 = vmatprep.subr.bf16.mxu0 0
        %2237 = vmatpush1.bf16.msra.mxu0 0
        %2238 = vmatprep.subr.bf16.mxu0 0
        %2239 = vmatpush1.bf16.msra.mxu0 0
        %2240 = vmatprep.subr.bf16.mxu0 %v2000
        %2241 = vmatpush1.bf16.msra.mxu0 %v1999
        %2242 = vmatprep.subr.bf16.mxu0 0
        %2243 = vmatpush2.bf16.msra.mxu0 0
        %2244 = vmatprep.subr.bf16.mxu0 0
        %2245 = vmatpush2.bf16.msra.mxu0 0
        %2246 = vmatprep.subr.bf16.mxu0 0
        %2247 = vmatpush2.bf16.msra.mxu0 0
        %2248 = vmatprep.subr.bf16.mxu0 0
        %2249 = vmatpush2.bf16.msra.mxu0 0
        %2250 = vmatprep.subr.bf16.mxu0 0
        %2251 = vmatpush2.bf16.msra.mxu0 0
        %2252 = vmatprep.subr.bf16.mxu0 0
        %2253 = vmatpush2.bf16.msra.mxu0 0
        %2254 = vmatprep.subr.bf16.mxu0 0
        %2255 = vmatpush2.bf16.msra.mxu0 0
        %2256 = vmatprep.subr.bf16.mxu0 0
        %2257 = vmatpush2.bf16.msra.mxu0 0
        %2258 = vmatprep.mubr.bf16.mxu0 0
        %2259 = vmatmul.mubr.bf16.gmra.mxu0 %v2181
        %v2260 = vpop.f32.mrf.mxu0
        %v2261 = vadd.f32 %v2124, %v2260
        %v2262 = vpop.f32.mrf.mxu0
        %v2263 = vadd.f32 %v2126, %v2262
        %v2264 = vpop.f32.mrf.mxu0
        %v2265 = vadd.f32 %v2128, %v2264
        %v2266 = vpop.f32.mrf.mxu0
        %v2267 = vadd.f32 %v2130, %v2266
        %2268 = vdwg.mxu0
        %2269 = vmatprep.subr.bf16.mxu0 0
        %2270 = vmatpush1.bf16.msra.mxu0 0
        %2271 = vmatprep.subr.bf16.mxu0 0
        %2272 = vmatpush1.bf16.msra.mxu0 0
        %2273 = vmatprep.subr.bf16.mxu0 0
        %2274 = vmatpush1.bf16.msra.mxu0 0
        %2275 = vmatprep.subr.bf16.mxu0 0
        %2276 = vmatpush1.bf16.msra.mxu0 0
        %2277 = vmatprep.subr.bf16.mxu0 0
        %2278 = vmatpush1.bf16.msra.mxu0 0
        %2279 = vmatprep.subr.bf16.mxu0 0
        %2280 = vmatpush1.bf16.msra.mxu0 0
        %2281 = vmatprep.subr.bf16.mxu0 0
        %2282 = vmatpush1.bf16.msra.mxu0 0
        %2283 = vmatprep.subr.bf16.mxu0 %v2002
        %2284 = vmatpush1.bf16.msra.mxu0 %v2001
        %2285 = vmatprep.subr.bf16.mxu0 0
        %2286 = vmatpush2.bf16.msra.mxu0 0
        %2287 = vmatprep.subr.bf16.mxu0 0
        %2288 = vmatpush2.bf16.msra.mxu0 0
        %2289 = vmatprep.subr.bf16.mxu0 0
        %2290 = vmatpush2.bf16.msra.mxu0 0
        %2291 = vmatprep.subr.bf16.mxu0 0
        %2292 = vmatpush2.bf16.msra.mxu0 0
        %2293 = vmatprep.subr.bf16.mxu0 0
        %2294 = vmatpush2.bf16.msra.mxu0 0
        %2295 = vmatprep.subr.bf16.mxu0 0
        %2296 = vmatpush2.bf16.msra.mxu0 0
        %2297 = vmatprep.subr.bf16.mxu0 0
        %2298 = vmatpush2.bf16.msra.mxu0 0
        %2299 = vmatprep.subr.bf16.mxu0 0
        %2300 = vmatpush2.bf16.msra.mxu0 0
        %2301 = vmatprep.mubr.bf16.mxu0 0
        %2302 = vmatmul.mubr.bf16.gmra.mxu0 %v2181
        %v2303 = vpop.f32.mrf.mxu0
        %v2304 = vadd.f32 %v2167, %v2303
        %v2305 = vpop.f32.mrf.mxu0
        %v2306 = vadd.f32 %v2169, %v2305
        %v2307 = vpop.f32.mrf.mxu0
        %v2308 = vadd.f32 %v2171, %v2307
        %v2309 = vpop.f32.mrf.mxu0
        %v2310 = vadd.f32 %v2173, %v2309
        %2311 = vdwg.mxu0
        %s2312 = scalar_lea.vmem [#allocation4], 88
        %v2313 = vld [vmem:[%s2312] sm:$0xf]
        %v2314 = vld [vmem:[%s2312 + $0x4] sm:$0xf]
        %v2317 = vunpack.c.l.b16 %v2313
        %v2318 = vunpack.c.l.b16 %v2314
        %v2319 = vpack.c.b16 %v2318, %v2317
        %2320 = vrot.lane.b32.xlu0 %v1997, 126
        %v2321 = vpop.permute.xlu0 %2320
        %2322 = vrot.lane.b32.xlu0 %v1998, 126
        %v2323 = vpop.permute.xlu0 %2322
        %2324 = vrot.lane.b32.xlu0 %v1999, 126
        %v2325 = vpop.permute.xlu0 %2324
        %2326 = vrot.lane.b32.xlu0 %v2000, 126
        %v2327 = vpop.permute.xlu0 %2326
        %2328 = vrot.lane.b32.xlu0 %v2001, 126
        %v2329 = vpop.permute.xlu0 %2328
        %2330 = vrot.lane.b32.xlu0 %v2002, 126
        %v2331 = vpop.permute.xlu0 %2330
        %v2332 = vsel %vm663, %v2321, %v2323
        %v2333 = vsel %vm663, %v2323, %v2325
        %v2334 = vsel %vm663, %v2325, %v2327
        %v2335 = vsel %vm663, %v2327, %v2329
        %v2336 = vsel %vm663, %v2329, %v2331
        %v2344 = vsel %vm300, %v2319, 0
        %2346 = vmatprep.subr.bf16.mxu0 0
        %2347 = vmatpush1.bf16.msra.mxu0 0
        %2348 = vmatprep.subr.bf16.mxu0 0
        %2349 = vmatpush1.bf16.msra.mxu0 0
        %2350 = vmatprep.subr.bf16.mxu0 0
        %2351 = vmatpush1.bf16.msra.mxu0 0
        %2352 = vmatprep.subr.bf16.mxu0 0
        %2353 = vmatpush1.bf16.msra.mxu0 0
        %2354 = vmatprep.subr.bf16.mxu0 0
        %2355 = vmatpush1.bf16.msra.mxu0 0
        %2356 = vmatprep.subr.bf16.mxu0 0
        %2357 = vmatpush1.bf16.msra.mxu0 0
        %2358 = vmatprep.subr.bf16.mxu0 0
        %2359 = vmatpush1.bf16.msra.mxu0 0
        %2360 = vmatprep.subr.bf16.mxu0 %v2333
        %2361 = vmatpush1.bf16.msra.mxu0 %v2332
        %2362 = vmatprep.subr.bf16.mxu0 0
        %2363 = vmatpush2.bf16.msra.mxu0 0
        %2364 = vmatprep.subr.bf16.mxu0 0
        %2365 = vmatpush2.bf16.msra.mxu0 0
        %2366 = vmatprep.subr.bf16.mxu0 0
        %2367 = vmatpush2.bf16.msra.mxu0 0
        %2368 = vmatprep.subr.bf16.mxu0 0
        %2369 = vmatpush2.bf16.msra.mxu0 0
        %2370 = vmatprep.subr.bf16.mxu0 0
        %2371 = vmatpush2.bf16.msra.mxu0 0
        %2372 = vmatprep.subr.bf16.mxu0 0
        %2373 = vmatpush2.bf16.msra.mxu0 0
        %2374 = vmatprep.subr.bf16.mxu0 0
        %2375 = vmatpush2.bf16.msra.mxu0 0
        %2376 = vmatprep.subr.bf16.mxu0 0
        %2377 = vmatpush2.bf16.msra.mxu0 0
        %2378 = vmatprep.mubr.bf16.mxu0 0
        %2379 = vmatmul.mubr.bf16.gmra.mxu0 %v2344
        %v2380 = vpop.f32.mrf.mxu0
        %v2381 = vadd.f32 0.0, %v2380
        %v2382 = vpop.f32.mrf.mxu0
        %v2383 = vadd.f32 0.0, %v2382
        %v2384 = vpop.f32.mrf.mxu0
        %v2385 = vadd.f32 0.0, %v2384
        %v2386 = vpop.f32.mrf.mxu0
        %v2387 = vadd.f32 0.0, %v2386
        %2388 = vdwg.mxu0
        %2389 = vmatprep.subr.bf16.mxu0 0
        %2390 = vmatpush1.bf16.msra.mxu0 0
        %2391 = vmatprep.subr.bf16.mxu0 0
        %2392 = vmatpush1.bf16.msra.mxu0 0
        %2393 = vmatprep.subr.bf16.mxu0 0
        %2394 = vmatpush1.bf16.msra.mxu0 0
        %2395 = vmatprep.subr.bf16.mxu0 0
        %2396 = vmatpush1.bf16.msra.mxu0 0
        %2397 = vmatprep.subr.bf16.mxu0 0
        %2398 = vmatpush1.bf16.msra.mxu0 0
        %2399 = vmatprep.subr.bf16.mxu0 0
        %2400 = vmatpush1.bf16.msra.mxu0 0
        %2401 = vmatprep.subr.bf16.mxu0 0
        %2402 = vmatpush1.bf16.msra.mxu0 0
        %2403 = vmatprep.subr.bf16.mxu0 %v2335
        %2404 = vmatpush1.bf16.msra.mxu0 %v2334
        %2405 = vmatprep.subr.bf16.mxu0 0
        %2406 = vmatpush2.bf16.msra.mxu0 0
        %2407 = vmatprep.subr.bf16.mxu0 0
        %2408 = vmatpush2.bf16.msra.mxu0 0
        %2409 = vmatprep.subr.bf16.mxu0 0
        %2410 = vmatpush2.bf16.msra.mxu0 0
        %2411 = vmatprep.subr.bf16.mxu0 0
        %2412 = vmatpush2.bf16.msra.mxu0 0
        %2413 = vmatprep.subr.bf16.mxu0 0
        %2414 = vmatpush2.bf16.msra.mxu0 0
        %2415 = vmatprep.subr.bf16.mxu0 0
        %2416 = vmatpush2.bf16.msra.mxu0 0
        %2417 = vmatprep.subr.bf16.mxu0 0
        %2418 = vmatpush2.bf16.msra.mxu0 0
        %2419 = vmatprep.subr.bf16.mxu0 0
        %2420 = vmatpush2.bf16.msra.mxu0 0
        %2421 = vmatprep.mubr.bf16.mxu0 0
        %2422 = vmatmul.mubr.bf16.gmra.mxu0 %v2344
        %v2423 = vpop.f32.mrf.mxu0
        %v2424 = vadd.f32 0.0, %v2423
        %v2425 = vpop.f32.mrf.mxu0
        %v2426 = vadd.f32 0.0, %v2425
        %v2427 = vpop.f32.mrf.mxu0
        %v2428 = vadd.f32 0.0, %v2427
        %v2429 = vpop.f32.mrf.mxu0
        %v2430 = vadd.f32 0.0, %v2429
        %2431 = vdwg.mxu0
        %2432 = vmatprep.subr.bf16.mxu0 0
        %2433 = vmatpush1.bf16.msra.mxu0 0
        %2434 = vmatprep.subr.bf16.mxu0 0
        %2435 = vmatpush1.bf16.msra.mxu0 0
        %2436 = vmatprep.subr.bf16.mxu0 0
        %2437 = vmatpush1.bf16.msra.mxu0 0
        %2438 = vmatprep.subr.bf16.mxu0 0
        %2439 = vmatpush1.bf16.msra.mxu0 0
        %2440 = vmatprep.subr.bf16.mxu0 0
        %2441 = vmatpush1.bf16.msra.mxu0 0
        %2442 = vmatprep.subr.bf16.mxu0 0
        %2443 = vmatpush1.bf16.msra.mxu0 0
        %2444 = vmatprep.subr.bf16.mxu0 0
        %2445 = vmatpush1.bf16.msra.mxu0 0
        %2446 = vmatprep.subr.bf16.mxu0 %v2331
        %2447 = vmatpush1.bf16.msra.mxu0 %v2336
        %2448 = vmatprep.subr.bf16.mxu0 0
        %2449 = vmatpush2.bf16.msra.mxu0 0
        %2450 = vmatprep.subr.bf16.mxu0 0
        %2451 = vmatpush2.bf16.msra.mxu0 0
        %2452 = vmatprep.subr.bf16.mxu0 0
        %2453 = vmatpush2.bf16.msra.mxu0 0
        %2454 = vmatprep.subr.bf16.mxu0 0
        %2455 = vmatpush2.bf16.msra.mxu0 0
        %2456 = vmatprep.subr.bf16.mxu0 0
        %2457 = vmatpush2.bf16.msra.mxu0 0
        %2458 = vmatprep.subr.bf16.mxu0 0
        %2459 = vmatpush2.bf16.msra.mxu0 0
        %2460 = vmatprep.subr.bf16.mxu0 0
        %2461 = vmatpush2.bf16.msra.mxu0 0
        %2462 = vmatprep.subr.bf16.mxu0 0
        %2463 = vmatpush2.bf16.msra.mxu0 0
        %2464 = vmatprep.mubr.bf16.mxu0 0
        %2465 = vmatmul.mubr.bf16.gmra.mxu0 %v2344
        %v2466 = vpop.f32.mrf.mxu0
        %v2467 = vadd.f32 0.0, %v2466
        %v2468 = vpop.f32.mrf.mxu0
        %v2469 = vadd.f32 0.0, %v2468
        %v2470 = vpop.f32.mrf.mxu0
        %v2471 = vadd.f32 0.0, %v2470
        %v2472 = vpop.f32.mrf.mxu0
        %v2473 = vadd.f32 0.0, %v2472
        %2474 = vdwg.mxu0
        %v2475 = vadd.f32 %v2218, %v2381
        %v2476 = vadd.f32 %v2220, %v2383
        %v2477 = vadd.f32 %v2261, %v2424
        %v2478 = vadd.f32 %v2263, %v2426
        %v2479 = vadd.f32 %v2304, %v2467
        %v2480 = vadd.f32 %v2306, %v2469
        %v2481 = vadd.f32 %v2222, %v2385
        %v2482 = vadd.f32 %v2224, %v2387
        %v2483 = vadd.f32 %v2265, %v2428
        %v2484 = vadd.f32 %v2267, %v2430
        %v2485 = vadd.f32 %v2308, %v2471
        %v2486 = vadd.f32 %v2310, %v2473
        %s2487 = scalar_lea.vmem [#allocation4], 96
        %v2488 = vld [vmem:[%s2487] sm:$0xf]
        %v2489 = vld [vmem:[%s2487 + $0x4] sm:$0xf]
        %v2492 = vunpack.c.l.b16 %v2488
        %v2493 = vunpack.c.l.b16 %v2489
        %v2494 = vpack.c.b16 %v2493, %v2492
        %2495 = vrot.lane.b32.xlu0 %v1997, 100
        %v2496 = vpop.permute.xlu0 %2495
        %2497 = vrot.lane.b32.xlu0 %v1998, 100
        %v2498 = vpop.permute.xlu0 %2497
        %2499 = vrot.lane.b32.xlu0 %v1999, 100
        %v2500 = vpop.permute.xlu0 %2499
        %2501 = vrot.lane.b32.xlu0 %v2000, 100
        %v2502 = vpop.permute.xlu0 %2501
        %2503 = vrot.lane.b32.xlu0 %v2001, 100
        %v2504 = vpop.permute.xlu0 %2503
        %2505 = vrot.lane.b32.xlu0 %v2002, 100
        %v2506 = vpop.permute.xlu0 %2505
        %v2507 = vsel %vm839, %v2496, %v2498
        %v2508 = vsel %vm839, %v2498, %v2500
        %v2509 = vsel %vm839, %v2500, %v2502
        %v2510 = vsel %vm839, %v2502, %v2504
        %v2511 = vsel %vm839, %v2504, %v2506
        %v2519 = vsel %vm300, %v2494, 0
        %2521 = vmatprep.subr.bf16.mxu0 0
        %2522 = vmatpush1.bf16.msra.mxu0 0
        %2523 = vmatprep.subr.bf16.mxu0 0
        %2524 = vmatpush1.bf16.msra.mxu0 0
        %2525 = vmatprep.subr.bf16.mxu0 0
        %2526 = vmatpush1.bf16.msra.mxu0 0
        %2527 = vmatprep.subr.bf16.mxu0 0
        %2528 = vmatpush1.bf16.msra.mxu0 0
        %2529 = vmatprep.subr.bf16.mxu0 0
        %2530 = vmatpush1.bf16.msra.mxu0 0
        %2531 = vmatprep.subr.bf16.mxu0 0
        %2532 = vmatpush1.bf16.msra.mxu0 0
        %2533 = vmatprep.subr.bf16.mxu0 0
        %2534 = vmatpush1.bf16.msra.mxu0 0
        %2535 = vmatprep.subr.bf16.mxu0 %v2508
        %2536 = vmatpush1.bf16.msra.mxu0 %v2507
        %2537 = vmatprep.subr.bf16.mxu0 0
        %2538 = vmatpush2.bf16.msra.mxu0 0
        %2539 = vmatprep.subr.bf16.mxu0 0
        %2540 = vmatpush2.bf16.msra.mxu0 0
        %2541 = vmatprep.subr.bf16.mxu0 0
        %2542 = vmatpush2.bf16.msra.mxu0 0
        %2543 = vmatprep.subr.bf16.mxu0 0
        %2544 = vmatpush2.bf16.msra.mxu0 0
        %2545 = vmatprep.subr.bf16.mxu0 0
        %2546 = vmatpush2.bf16.msra.mxu0 0
        %2547 = vmatprep.subr.bf16.mxu0 0
        %2548 = vmatpush2.bf16.msra.mxu0 0
        %2549 = vmatprep.subr.bf16.mxu0 0
        %2550 = vmatpush2.bf16.msra.mxu0 0
        %2551 = vmatprep.subr.bf16.mxu0 0
        %2552 = vmatpush2.bf16.msra.mxu0 0
        %2553 = vmatprep.mubr.bf16.mxu0 0
        %2554 = vmatmul.mubr.bf16.gmra.mxu0 %v2519
        %v2555 = vpop.f32.mrf.mxu0
        %v2556 = vadd.f32 0.0, %v2555
        %v2557 = vpop.f32.mrf.mxu0
        %v2558 = vadd.f32 0.0, %v2557
        %v2559 = vpop.f32.mrf.mxu0
        %v2560 = vadd.f32 0.0, %v2559
        %v2561 = vpop.f32.mrf.mxu0
        %v2562 = vadd.f32 0.0, %v2561
        %2563 = vdwg.mxu0
        %2564 = vmatprep.subr.bf16.mxu0 0
        %2565 = vmatpush1.bf16.msra.mxu0 0
        %2566 = vmatprep.subr.bf16.mxu0 0
        %2567 = vmatpush1.bf16.msra.mxu0 0
        %2568 = vmatprep.subr.bf16.mxu0 0
        %2569 = vmatpush1.bf16.msra.mxu0 0
        %2570 = vmatprep.subr.bf16.mxu0 0
        %2571 = vmatpush1.bf16.msra.mxu0 0
        %2572 = vmatprep.subr.bf16.mxu0 0
        %2573 = vmatpush1.bf16.msra.mxu0 0
        %2574 = vmatprep.subr.bf16.mxu0 0
        %2575 = vmatpush1.bf16.msra.mxu0 0
        %2576 = vmatprep.subr.bf16.mxu0 0
        %2577 = vmatpush1.bf16.msra.mxu0 0
        %2578 = vmatprep.subr.bf16.mxu0 %v2510
        %2579 = vmatpush1.bf16.msra.mxu0 %v2509
        %2580 = vmatprep.subr.bf16.mxu0 0
        %2581 = vmatpush2.bf16.msra.mxu0 0
        %2582 = vmatprep.subr.bf16.mxu0 0
        %2583 = vmatpush2.bf16.msra.mxu0 0
        %2584 = vmatprep.subr.bf16.mxu0 0
        %2585 = vmatpush2.bf16.msra.mxu0 0
        %2586 = vmatprep.subr.bf16.mxu0 0
        %2587 = vmatpush2.bf16.msra.mxu0 0
        %2588 = vmatprep.subr.bf16.mxu0 0
        %2589 = vmatpush2.bf16.msra.mxu0 0
        %2590 = vmatprep.subr.bf16.mxu0 0
        %2591 = vmatpush2.bf16.msra.mxu0 0
        %2592 = vmatprep.subr.bf16.mxu0 0
        %2593 = vmatpush2.bf16.msra.mxu0 0
        %2594 = vmatprep.subr.bf16.mxu0 0
        %2595 = vmatpush2.bf16.msra.mxu0 0
        %2596 = vmatprep.mubr.bf16.mxu0 0
        %2597 = vmatmul.mubr.bf16.gmra.mxu0 %v2519
        %v2598 = vpop.f32.mrf.mxu0
        %v2599 = vadd.f32 0.0, %v2598
        %v2600 = vpop.f32.mrf.mxu0
        %v2601 = vadd.f32 0.0, %v2600
        %v2602 = vpop.f32.mrf.mxu0
        %v2603 = vadd.f32 0.0, %v2602
        %v2604 = vpop.f32.mrf.mxu0
        %v2605 = vadd.f32 0.0, %v2604
        %2606 = vdwg.mxu0
        %2607 = vmatprep.subr.bf16.mxu0 0
        %2608 = vmatpush1.bf16.msra.mxu0 0
        %2609 = vmatprep.subr.bf16.mxu0 0
        %2610 = vmatpush1.bf16.msra.mxu0 0
        %2611 = vmatprep.subr.bf16.mxu0 0
        %2612 = vmatpush1.bf16.msra.mxu0 0
        %2613 = vmatprep.subr.bf16.mxu0 0
        %2614 = vmatpush1.bf16.msra.mxu0 0
        %2615 = vmatprep.subr.bf16.mxu0 0
        %2616 = vmatpush1.bf16.msra.mxu0 0
        %2617 = vmatprep.subr.bf16.mxu0 0
        %2618 = vmatpush1.bf16.msra.mxu0 0
        %2619 = vmatprep.subr.bf16.mxu0 0
        %2620 = vmatpush1.bf16.msra.mxu0 0
        %2621 = vmatprep.subr.bf16.mxu0 %v2506
        %2622 = vmatpush1.bf16.msra.mxu0 %v2511
        %2623 = vmatprep.subr.bf16.mxu0 0
        %2624 = vmatpush2.bf16.msra.mxu0 0
        %2625 = vmatprep.subr.bf16.mxu0 0
        %2626 = vmatpush2.bf16.msra.mxu0 0
        %2627 = vmatprep.subr.bf16.mxu0 0
        %2628 = vmatpush2.bf16.msra.mxu0 0
        %2629 = vmatprep.subr.bf16.mxu0 0
        %2630 = vmatpush2.bf16.msra.mxu0 0
        %2631 = vmatprep.subr.bf16.mxu0 0
        %2632 = vmatpush2.bf16.msra.mxu0 0
        %2633 = vmatprep.subr.bf16.mxu0 0
        %2634 = vmatpush2.bf16.msra.mxu0 0
        %2635 = vmatprep.subr.bf16.mxu0 0
        %2636 = vmatpush2.bf16.msra.mxu0 0
        %2637 = vmatprep.subr.bf16.mxu0 0
        %2638 = vmatpush2.bf16.msra.mxu0 0
        %2639 = vmatprep.mubr.bf16.mxu0 0
        %2640 = vmatmul.mubr.bf16.gmra.mxu0 %v2519
        %v2641 = vpop.f32.mrf.mxu0
        %v2642 = vadd.f32 0.0, %v2641
        %v2643 = vpop.f32.mrf.mxu0
        %v2644 = vadd.f32 0.0, %v2643
        %v2645 = vpop.f32.mrf.mxu0
        %v2646 = vadd.f32 0.0, %v2645
        %v2647 = vpop.f32.mrf.mxu0
        %v2648 = vadd.f32 0.0, %v2647
        %2649 = vdwg.mxu0
        %v2650 = vadd.f32 %v2475, %v2556
        %v2651 = vadd.f32 %v2476, %v2558
        %v2652 = vadd.f32 %v2477, %v2599
        %v2653 = vadd.f32 %v2478, %v2601
        %v2654 = vadd.f32 %v2479, %v2642
        %v2655 = vadd.f32 %v2480, %v2644
        %v2656 = vadd.f32 %v2481, %v2560
        %v2657 = vadd.f32 %v2482, %v2562
        %v2658 = vadd.f32 %v2483, %v2603
        %v2659 = vadd.f32 %v2484, %v2605
        %v2660 = vadd.f32 %v2485, %v2646
        %v2661 = vadd.f32 %v2486, %v2648
        %s2662 = scalar_lea.vmem [#allocation4], 104
        %v2663 = vld [vmem:[%s2662] sm:$0xf]
        %v2664 = vld [vmem:[%s2662 + $0x4] sm:$0xf]
        %v2667 = vunpack.c.l.b16 %v2663
        %v2668 = vunpack.c.l.b16 %v2664
        %v2669 = vpack.c.b16 %v2668, %v2667
        %2670 = vrot.lane.b32.xlu0 %v1997, 99
        %v2671 = vpop.permute.xlu0 %2670
        %2672 = vrot.lane.b32.xlu0 %v1998, 99
        %v2673 = vpop.permute.xlu0 %2672
        %2674 = vrot.lane.b32.xlu0 %v1999, 99
        %v2675 = vpop.permute.xlu0 %2674
        %2676 = vrot.lane.b32.xlu0 %v2000, 99
        %v2677 = vpop.permute.xlu0 %2676
        %2678 = vrot.lane.b32.xlu0 %v2001, 99
        %v2679 = vpop.permute.xlu0 %2678
        %2680 = vrot.lane.b32.xlu0 %v2002, 99
        %v2681 = vpop.permute.xlu0 %2680
        %v2682 = vsel %vm1015, %v2671, %v2673
        %v2683 = vsel %vm1015, %v2673, %v2675
        %v2684 = vsel %vm1015, %v2675, %v2677
        %v2685 = vsel %vm1015, %v2677, %v2679
        %v2686 = vsel %vm1015, %v2679, %v2681
        %v2694 = vsel %vm300, %v2669, 0
        %2696 = vmatprep.subr.bf16.mxu0 0
        %2697 = vmatpush1.bf16.msra.mxu0 0
        %2698 = vmatprep.subr.bf16.mxu0 0
        %2699 = vmatpush1.bf16.msra.mxu0 0
        %2700 = vmatprep.subr.bf16.mxu0 0
        %2701 = vmatpush1.bf16.msra.mxu0 0
        %2702 = vmatprep.subr.bf16.mxu0 0
        %2703 = vmatpush1.bf16.msra.mxu0 0
        %2704 = vmatprep.subr.bf16.mxu0 0
        %2705 = vmatpush1.bf16.msra.mxu0 0
        %2706 = vmatprep.subr.bf16.mxu0 0
        %2707 = vmatpush1.bf16.msra.mxu0 0
        %2708 = vmatprep.subr.bf16.mxu0 0
        %2709 = vmatpush1.bf16.msra.mxu0 0
        %2710 = vmatprep.subr.bf16.mxu0 %v2683
        %2711 = vmatpush1.bf16.msra.mxu0 %v2682
        %2712 = vmatprep.subr.bf16.mxu0 0
        %2713 = vmatpush2.bf16.msra.mxu0 0
        %2714 = vmatprep.subr.bf16.mxu0 0
        %2715 = vmatpush2.bf16.msra.mxu0 0
        %2716 = vmatprep.subr.bf16.mxu0 0
        %2717 = vmatpush2.bf16.msra.mxu0 0
        %2718 = vmatprep.subr.bf16.mxu0 0
        %2719 = vmatpush2.bf16.msra.mxu0 0
        %2720 = vmatprep.subr.bf16.mxu0 0
        %2721 = vmatpush2.bf16.msra.mxu0 0
        %2722 = vmatprep.subr.bf16.mxu0 0
        %2723 = vmatpush2.bf16.msra.mxu0 0
        %2724 = vmatprep.subr.bf16.mxu0 0
        %2725 = vmatpush2.bf16.msra.mxu0 0
        %2726 = vmatprep.subr.bf16.mxu0 0
        %2727 = vmatpush2.bf16.msra.mxu0 0
        %2728 = vmatprep.mubr.bf16.mxu0 0
        %2729 = vmatmul.mubr.bf16.gmra.mxu0 %v2694
        %v2730 = vpop.f32.mrf.mxu0
        %v2731 = vadd.f32 0.0, %v2730
        %v2732 = vpop.f32.mrf.mxu0
        %v2733 = vadd.f32 0.0, %v2732
        %v2734 = vpop.f32.mrf.mxu0
        %v2735 = vadd.f32 0.0, %v2734
        %v2736 = vpop.f32.mrf.mxu0
        %v2737 = vadd.f32 0.0, %v2736
        %2738 = vdwg.mxu0
        %2739 = vmatprep.subr.bf16.mxu0 0
        %2740 = vmatpush1.bf16.msra.mxu0 0
        %2741 = vmatprep.subr.bf16.mxu0 0
        %2742 = vmatpush1.bf16.msra.mxu0 0
        %2743 = vmatprep.subr.bf16.mxu0 0
        %2744 = vmatpush1.bf16.msra.mxu0 0
        %2745 = vmatprep.subr.bf16.mxu0 0
        %2746 = vmatpush1.bf16.msra.mxu0 0
        %2747 = vmatprep.subr.bf16.mxu0 0
        %2748 = vmatpush1.bf16.msra.mxu0 0
        %2749 = vmatprep.subr.bf16.mxu0 0
        %2750 = vmatpush1.bf16.msra.mxu0 0
        %2751 = vmatprep.subr.bf16.mxu0 0
        %2752 = vmatpush1.bf16.msra.mxu0 0
        %2753 = vmatprep.subr.bf16.mxu0 %v2685
        %2754 = vmatpush1.bf16.msra.mxu0 %v2684
        %2755 = vmatprep.subr.bf16.mxu0 0
        %2756 = vmatpush2.bf16.msra.mxu0 0
        %2757 = vmatprep.subr.bf16.mxu0 0
        %2758 = vmatpush2.bf16.msra.mxu0 0
        %2759 = vmatprep.subr.bf16.mxu0 0
        %2760 = vmatpush2.bf16.msra.mxu0 0
        %2761 = vmatprep.subr.bf16.mxu0 0
        %2762 = vmatpush2.bf16.msra.mxu0 0
        %2763 = vmatprep.subr.bf16.mxu0 0
        %2764 = vmatpush2.bf16.msra.mxu0 0
        %2765 = vmatprep.subr.bf16.mxu0 0
        %2766 = vmatpush2.bf16.msra.mxu0 0
        %2767 = vmatprep.subr.bf16.mxu0 0
        %2768 = vmatpush2.bf16.msra.mxu0 0
        %2769 = vmatprep.subr.bf16.mxu0 0
        %2770 = vmatpush2.bf16.msra.mxu0 0
        %2771 = vmatprep.mubr.bf16.mxu0 0
        %2772 = vmatmul.mubr.bf16.gmra.mxu0 %v2694
        %v2773 = vpop.f32.mrf.mxu0
        %v2774 = vadd.f32 0.0, %v2773
        %v2775 = vpop.f32.mrf.mxu0
        %v2776 = vadd.f32 0.0, %v2775
        %v2777 = vpop.f32.mrf.mxu0
        %v2778 = vadd.f32 0.0, %v2777
        %v2779 = vpop.f32.mrf.mxu0
        %v2780 = vadd.f32 0.0, %v2779
        %2781 = vdwg.mxu0
        %2782 = vmatprep.subr.bf16.mxu0 0
        %2783 = vmatpush1.bf16.msra.mxu0 0
        %2784 = vmatprep.subr.bf16.mxu0 0
        %2785 = vmatpush1.bf16.msra.mxu0 0
        %2786 = vmatprep.subr.bf16.mxu0 0
        %2787 = vmatpush1.bf16.msra.mxu0 0
        %2788 = vmatprep.subr.bf16.mxu0 0
        %2789 = vmatpush1.bf16.msra.mxu0 0
        %2790 = vmatprep.subr.bf16.mxu0 0
        %2791 = vmatpush1.bf16.msra.mxu0 0
        %2792 = vmatprep.subr.bf16.mxu0 0
        %2793 = vmatpush1.bf16.msra.mxu0 0
        %2794 = vmatprep.subr.bf16.mxu0 0
        %2795 = vmatpush1.bf16.msra.mxu0 0
        %2796 = vmatprep.subr.bf16.mxu0 %v2681
        %2797 = vmatpush1.bf16.msra.mxu0 %v2686
        %2798 = vmatprep.subr.bf16.mxu0 0
        %2799 = vmatpush2.bf16.msra.mxu0 0
        %2800 = vmatprep.subr.bf16.mxu0 0
        %2801 = vmatpush2.bf16.msra.mxu0 0
        %2802 = vmatprep.subr.bf16.mxu0 0
        %2803 = vmatpush2.bf16.msra.mxu0 0
        %2804 = vmatprep.subr.bf16.mxu0 0
        %2805 = vmatpush2.bf16.msra.mxu0 0
        %2806 = vmatprep.subr.bf16.mxu0 0
        %2807 = vmatpush2.bf16.msra.mxu0 0
        %2808 = vmatprep.subr.bf16.mxu0 0
        %2809 = vmatpush2.bf16.msra.mxu0 0
        %2810 = vmatprep.subr.bf16.mxu0 0
        %2811 = vmatpush2.bf16.msra.mxu0 0
        %2812 = vmatprep.subr.bf16.mxu0 0
        %2813 = vmatpush2.bf16.msra.mxu0 0
        %2814 = vmatprep.mubr.bf16.mxu0 0
        %2815 = vmatmul.mubr.bf16.gmra.mxu0 %v2694
        %v2816 = vpop.f32.mrf.mxu0
        %v2817 = vadd.f32 0.0, %v2816
        %v2818 = vpop.f32.mrf.mxu0
        %v2819 = vadd.f32 0.0, %v2818
        %v2820 = vpop.f32.mrf.mxu0
        %v2821 = vadd.f32 0.0, %v2820
        %v2822 = vpop.f32.mrf.mxu0
        %v2823 = vadd.f32 0.0, %v2822
        %2824 = vdwg.mxu0
        %v2825 = vadd.f32 %v2650, %v2731
        %v2826 = vadd.f32 %v2651, %v2733
        %v2827 = vadd.f32 %v2652, %v2774
        %v2828 = vadd.f32 %v2653, %v2776
        %v2829 = vadd.f32 %v2654, %v2817
        %v2830 = vadd.f32 %v2655, %v2819
        %v2831 = vadd.f32 %v2656, %v2735
        %v2832 = vadd.f32 %v2657, %v2737
        %v2833 = vadd.f32 %v2658, %v2778
        %v2834 = vadd.f32 %v2659, %v2780
        %v2835 = vadd.f32 %v2660, %v2821
        %v2836 = vadd.f32 %v2661, %v2823
        %s2837 = scalar_lea.vmem [#allocation4], 112
        %v2838 = vld [vmem:[%s2837] sm:$0xf]
        %v2839 = vld [vmem:[%s2837 + $0x4] sm:$0xf]
        %v2842 = vunpack.c.l.b16 %v2838
        %v2843 = vunpack.c.l.b16 %v2839
        %v2844 = vpack.c.b16 %v2843, %v2842
        %2845 = vrot.lane.b32.xlu0 %v1997, 98
        %v2846 = vpop.permute.xlu0 %2845
        %2847 = vrot.lane.b32.xlu0 %v1998, 98
        %v2848 = vpop.permute.xlu0 %2847
        %2849 = vrot.lane.b32.xlu0 %v1999, 98
        %v2850 = vpop.permute.xlu0 %2849
        %2851 = vrot.lane.b32.xlu0 %v2000, 98
        %v2852 = vpop.permute.xlu0 %2851
        %2853 = vrot.lane.b32.xlu0 %v2001, 98
        %v2854 = vpop.permute.xlu0 %2853
        %2855 = vrot.lane.b32.xlu0 %v2002, 98
        %v2856 = vpop.permute.xlu0 %2855
        %v2857 = vsel %vm1191, %v2846, %v2848
        %v2858 = vsel %vm1191, %v2848, %v2850
        %v2859 = vsel %vm1191, %v2850, %v2852
        %v2860 = vsel %vm1191, %v2852, %v2854
        %v2861 = vsel %vm1191, %v2854, %v2856
        %v2869 = vsel %vm300, %v2844, 0
        %2871 = vmatprep.subr.bf16.mxu0 0
        %2872 = vmatpush1.bf16.msra.mxu0 0
        %2873 = vmatprep.subr.bf16.mxu0 0
        %2874 = vmatpush1.bf16.msra.mxu0 0
        %2875 = vmatprep.subr.bf16.mxu0 0
        %2876 = vmatpush1.bf16.msra.mxu0 0
        %2877 = vmatprep.subr.bf16.mxu0 0
        %2878 = vmatpush1.bf16.msra.mxu0 0
        %2879 = vmatprep.subr.bf16.mxu0 0
        %2880 = vmatpush1.bf16.msra.mxu0 0
        %2881 = vmatprep.subr.bf16.mxu0 0
        %2882 = vmatpush1.bf16.msra.mxu0 0
        %2883 = vmatprep.subr.bf16.mxu0 0
        %2884 = vmatpush1.bf16.msra.mxu0 0
        %2885 = vmatprep.subr.bf16.mxu0 %v2858
        %2886 = vmatpush1.bf16.msra.mxu0 %v2857
        %2887 = vmatprep.subr.bf16.mxu0 0
        %2888 = vmatpush2.bf16.msra.mxu0 0
        %2889 = vmatprep.subr.bf16.mxu0 0
        %2890 = vmatpush2.bf16.msra.mxu0 0
        %2891 = vmatprep.subr.bf16.mxu0 0
        %2892 = vmatpush2.bf16.msra.mxu0 0
        %2893 = vmatprep.subr.bf16.mxu0 0
        %2894 = vmatpush2.bf16.msra.mxu0 0
        %2895 = vmatprep.subr.bf16.mxu0 0
        %2896 = vmatpush2.bf16.msra.mxu0 0
        %2897 = vmatprep.subr.bf16.mxu0 0
        %2898 = vmatpush2.bf16.msra.mxu0 0
        %2899 = vmatprep.subr.bf16.mxu0 0
        %2900 = vmatpush2.bf16.msra.mxu0 0
        %2901 = vmatprep.subr.bf16.mxu0 0
        %2902 = vmatpush2.bf16.msra.mxu0 0
        %2903 = vmatprep.mubr.bf16.mxu0 0
        %2904 = vmatmul.mubr.bf16.gmra.mxu0 %v2869
        %v2905 = vpop.f32.mrf.mxu0
        %v2906 = vadd.f32 0.0, %v2905
        %v2907 = vpop.f32.mrf.mxu0
        %v2908 = vadd.f32 0.0, %v2907
        %v2909 = vpop.f32.mrf.mxu0
        %v2910 = vadd.f32 0.0, %v2909
        %v2911 = vpop.f32.mrf.mxu0
        %v2912 = vadd.f32 0.0, %v2911
        %2913 = vdwg.mxu0
        %2914 = vmatprep.subr.bf16.mxu0 0
        %2915 = vmatpush1.bf16.msra.mxu0 0
        %2916 = vmatprep.subr.bf16.mxu0 0
        %2917 = vmatpush1.bf16.msra.mxu0 0
        %2918 = vmatprep.subr.bf16.mxu0 0
        %2919 = vmatpush1.bf16.msra.mxu0 0
        %2920 = vmatprep.subr.bf16.mxu0 0
        %2921 = vmatpush1.bf16.msra.mxu0 0
        %2922 = vmatprep.subr.bf16.mxu0 0
        %2923 = vmatpush1.bf16.msra.mxu0 0
        %2924 = vmatprep.subr.bf16.mxu0 0
        %2925 = vmatpush1.bf16.msra.mxu0 0
        %2926 = vmatprep.subr.bf16.mxu0 0
        %2927 = vmatpush1.bf16.msra.mxu0 0
        %2928 = vmatprep.subr.bf16.mxu0 %v2860
        %2929 = vmatpush1.bf16.msra.mxu0 %v2859
        %2930 = vmatprep.subr.bf16.mxu0 0
        %2931 = vmatpush2.bf16.msra.mxu0 0
        %2932 = vmatprep.subr.bf16.mxu0 0
        %2933 = vmatpush2.bf16.msra.mxu0 0
        %2934 = vmatprep.subr.bf16.mxu0 0
        %2935 = vmatpush2.bf16.msra.mxu0 0
        %2936 = vmatprep.subr.bf16.mxu0 0
        %2937 = vmatpush2.bf16.msra.mxu0 0
        %2938 = vmatprep.subr.bf16.mxu0 0
        %2939 = vmatpush2.bf16.msra.mxu0 0
        %2940 = vmatprep.subr.bf16.mxu0 0
        %2941 = vmatpush2.bf16.msra.mxu0 0
        %2942 = vmatprep.subr.bf16.mxu0 0
        %2943 = vmatpush2.bf16.msra.mxu0 0
        %2944 = vmatprep.subr.bf16.mxu0 0
        %2945 = vmatpush2.bf16.msra.mxu0 0
        %2946 = vmatprep.mubr.bf16.mxu0 0
        %2947 = vmatmul.mubr.bf16.gmra.mxu0 %v2869
        %v2948 = vpop.f32.mrf.mxu0
        %v2949 = vadd.f32 0.0, %v2948
        %v2950 = vpop.f32.mrf.mxu0
        %v2951 = vadd.f32 0.0, %v2950
        %v2952 = vpop.f32.mrf.mxu0
        %v2953 = vadd.f32 0.0, %v2952
        %v2954 = vpop.f32.mrf.mxu0
        %v2955 = vadd.f32 0.0, %v2954
        %2956 = vdwg.mxu0
        %2957 = vmatprep.subr.bf16.mxu0 0
        %2958 = vmatpush1.bf16.msra.mxu0 0
        %2959 = vmatprep.subr.bf16.mxu0 0
        %2960 = vmatpush1.bf16.msra.mxu0 0
        %2961 = vmatprep.subr.bf16.mxu0 0
        %2962 = vmatpush1.bf16.msra.mxu0 0
        %2963 = vmatprep.subr.bf16.mxu0 0
        %2964 = vmatpush1.bf16.msra.mxu0 0
        %2965 = vmatprep.subr.bf16.mxu0 0
        %2966 = vmatpush1.bf16.msra.mxu0 0
        %2967 = vmatprep.subr.bf16.mxu0 0
        %2968 = vmatpush1.bf16.msra.mxu0 0
        %2969 = vmatprep.subr.bf16.mxu0 0
        %2970 = vmatpush1.bf16.msra.mxu0 0
        %2971 = vmatprep.subr.bf16.mxu0 %v2856
        %2972 = vmatpush1.bf16.msra.mxu0 %v2861
        %2973 = vmatprep.subr.bf16.mxu0 0
        %2974 = vmatpush2.bf16.msra.mxu0 0
        %2975 = vmatprep.subr.bf16.mxu0 0
        %2976 = vmatpush2.bf16.msra.mxu0 0
        %2977 = vmatprep.subr.bf16.mxu0 0
        %2978 = vmatpush2.bf16.msra.mxu0 0
        %2979 = vmatprep.subr.bf16.mxu0 0
        %2980 = vmatpush2.bf16.msra.mxu0 0
        %2981 = vmatprep.subr.bf16.mxu0 0
        %2982 = vmatpush2.bf16.msra.mxu0 0
        %2983 = vmatprep.subr.bf16.mxu0 0
        %2984 = vmatpush2.bf16.msra.mxu0 0
        %2985 = vmatprep.subr.bf16.mxu0 0
        %2986 = vmatpush2.bf16.msra.mxu0 0
        %2987 = vmatprep.subr.bf16.mxu0 0
        %2988 = vmatpush2.bf16.msra.mxu0 0
        %2989 = vmatprep.mubr.bf16.mxu0 0
        %2990 = vmatmul.mubr.bf16.gmra.mxu0 %v2869
        %v2991 = vpop.f32.mrf.mxu0
        %v2992 = vadd.f32 0.0, %v2991
        %v2993 = vpop.f32.mrf.mxu0
        %v2994 = vadd.f32 0.0, %v2993
        %v2995 = vpop.f32.mrf.mxu0
        %v2996 = vadd.f32 0.0, %v2995
        %v2997 = vpop.f32.mrf.mxu0
        %v2998 = vadd.f32 0.0, %v2997
        %2999 = vdwg.mxu0
        %v3000 = vadd.f32 %v2825, %v2906
        %v3001 = vadd.f32 %v2826, %v2908
        %v3002 = vadd.f32 %v2827, %v2949
        %v3003 = vadd.f32 %v2828, %v2951
        %v3004 = vadd.f32 %v2829, %v2992
        %v3005 = vadd.f32 %v2830, %v2994
        %v3006 = vadd.f32 %v2831, %v2910
        %v3007 = vadd.f32 %v2832, %v2912
        %v3008 = vadd.f32 %v2833, %v2953
        %v3009 = vadd.f32 %v2834, %v2955
        %v3010 = vadd.f32 %v2835, %v2996
        %v3011 = vadd.f32 %v2836, %v2998
        %s3012 = scalar_lea.vmem [#allocation4], 120
        %v3013 = vld [vmem:[%s3012] sm:$0xf]
        %v3014 = vld [vmem:[%s3012 + $0x4] sm:$0xf]
        %v3017 = vunpack.c.l.b16 %v3013
        %v3018 = vunpack.c.l.b16 %v3014
        %v3019 = vpack.c.b16 %v3018, %v3017
        %3020 = vrot.lane.b32.xlu0 %v1997, 72
        %v3021 = vpop.permute.xlu0 %3020
        %3022 = vrot.lane.b32.xlu0 %v1998, 72
        %v3023 = vpop.permute.xlu0 %3022
        %3024 = vrot.lane.b32.xlu0 %v1999, 72
        %v3025 = vpop.permute.xlu0 %3024
        %3026 = vrot.lane.b32.xlu0 %v2000, 72
        %v3027 = vpop.permute.xlu0 %3026
        %3028 = vrot.lane.b32.xlu0 %v2001, 72
        %v3029 = vpop.permute.xlu0 %3028
        %3030 = vrot.lane.b32.xlu0 %v2002, 72
        %v3031 = vpop.permute.xlu0 %3030
        %v3032 = vsel %vm1397, %v3021, %v3023
        %v3033 = vsel %vm1397, %v3023, %v3025
        %v3034 = vsel %vm1397, %v3025, %v3027
        %v3035 = vsel %vm1397, %v3027, %v3029
        %v3036 = vsel %vm1397, %v3029, %v3031
        %v3044 = vsel %vm300, %v3019, 0
        %3046 = vmatprep.subr.bf16.mxu0 0
        %3047 = vmatpush1.bf16.msra.mxu0 0
        %3048 = vmatprep.subr.bf16.mxu0 0
        %3049 = vmatpush1.bf16.msra.mxu0 0
        %3050 = vmatprep.subr.bf16.mxu0 0
        %3051 = vmatpush1.bf16.msra.mxu0 0
        %3052 = vmatprep.subr.bf16.mxu0 0
        %3053 = vmatpush1.bf16.msra.mxu0 0
        %3054 = vmatprep.subr.bf16.mxu0 0
        %3055 = vmatpush1.bf16.msra.mxu0 0
        %3056 = vmatprep.subr.bf16.mxu0 0
        %3057 = vmatpush1.bf16.msra.mxu0 0
        %3058 = vmatprep.subr.bf16.mxu0 0
        %3059 = vmatpush1.bf16.msra.mxu0 0
        %3060 = vmatprep.subr.bf16.mxu0 %v3033
        %3061 = vmatpush1.bf16.msra.mxu0 %v3032
        %3062 = vmatprep.subr.bf16.mxu0 0
        %3063 = vmatpush2.bf16.msra.mxu0 0
        %3064 = vmatprep.subr.bf16.mxu0 0
        %3065 = vmatpush2.bf16.msra.mxu0 0
        %3066 = vmatprep.subr.bf16.mxu0 0
        %3067 = vmatpush2.bf16.msra.mxu0 0
        %3068 = vmatprep.subr.bf16.mxu0 0
        %3069 = vmatpush2.bf16.msra.mxu0 0
        %3070 = vmatprep.subr.bf16.mxu0 0
        %3071 = vmatpush2.bf16.msra.mxu0 0
        %3072 = vmatprep.subr.bf16.mxu0 0
        %3073 = vmatpush2.bf16.msra.mxu0 0
        %3074 = vmatprep.subr.bf16.mxu0 0
        %3075 = vmatpush2.bf16.msra.mxu0 0
        %3076 = vmatprep.subr.bf16.mxu0 0
        %3077 = vmatpush2.bf16.msra.mxu0 0
        %3078 = vmatprep.mubr.bf16.mxu0 0
        %3079 = vmatmul.mubr.bf16.gmra.mxu0 %v3044
        %v3080 = vpop.f32.mrf.mxu0
        %v3081 = vadd.f32 0.0, %v3080
        %v3082 = vpop.f32.mrf.mxu0
        %v3083 = vadd.f32 0.0, %v3082
        %v3084 = vpop.f32.mrf.mxu0
        %v3085 = vadd.f32 0.0, %v3084
        %v3086 = vpop.f32.mrf.mxu0
        %v3087 = vadd.f32 0.0, %v3086
        %3088 = vdwg.mxu0
        %3089 = vmatprep.subr.bf16.mxu0 0
        %3090 = vmatpush1.bf16.msra.mxu0 0
        %3091 = vmatprep.subr.bf16.mxu0 0
        %3092 = vmatpush1.bf16.msra.mxu0 0
        %3093 = vmatprep.subr.bf16.mxu0 0
        %3094 = vmatpush1.bf16.msra.mxu0 0
        %3095 = vmatprep.subr.bf16.mxu0 0
        %3096 = vmatpush1.bf16.msra.mxu0 0
        %3097 = vmatprep.subr.bf16.mxu0 0
        %3098 = vmatpush1.bf16.msra.mxu0 0
        %3099 = vmatprep.subr.bf16.mxu0 0
        %3100 = vmatpush1.bf16.msra.mxu0 0
        %3101 = vmatprep.subr.bf16.mxu0 0
        %3102 = vmatpush1.bf16.msra.mxu0 0
        %3103 = vmatprep.subr.bf16.mxu0 %v3035
        %3104 = vmatpush1.bf16.msra.mxu0 %v3034
        %3105 = vmatprep.subr.bf16.mxu0 0
        %3106 = vmatpush2.bf16.msra.mxu0 0
        %3107 = vmatprep.subr.bf16.mxu0 0
        %3108 = vmatpush2.bf16.msra.mxu0 0
        %3109 = vmatprep.subr.bf16.mxu0 0
        %3110 = vmatpush2.bf16.msra.mxu0 0
        %3111 = vmatprep.subr.bf16.mxu0 0
        %3112 = vmatpush2.bf16.msra.mxu0 0
        %3113 = vmatprep.subr.bf16.mxu0 0
        %3114 = vmatpush2.bf16.msra.mxu0 0
        %3115 = vmatprep.subr.bf16.mxu0 0
        %3116 = vmatpush2.bf16.msra.mxu0 0
        %3117 = vmatprep.subr.bf16.mxu0 0
        %3118 = vmatpush2.bf16.msra.mxu0 0
        %3119 = vmatprep.subr.bf16.mxu0 0
        %3120 = vmatpush2.bf16.msra.mxu0 0
        %3121 = vmatprep.mubr.bf16.mxu0 0
        %3122 = vmatmul.mubr.bf16.gmra.mxu0 %v3044
        %v3123 = vpop.f32.mrf.mxu0
        %v3124 = vadd.f32 0.0, %v3123
        %v3125 = vpop.f32.mrf.mxu0
        %v3126 = vadd.f32 0.0, %v3125
        %v3127 = vpop.f32.mrf.mxu0
        %v3128 = vadd.f32 0.0, %v3127
        %v3129 = vpop.f32.mrf.mxu0
        %v3130 = vadd.f32 0.0, %v3129
        %3131 = vdwg.mxu0
        %3132 = vmatprep.subr.bf16.mxu0 0
        %3133 = vmatpush1.bf16.msra.mxu0 0
        %3134 = vmatprep.subr.bf16.mxu0 0
        %3135 = vmatpush1.bf16.msra.mxu0 0
        %3136 = vmatprep.subr.bf16.mxu0 0
        %3137 = vmatpush1.bf16.msra.mxu0 0
        %3138 = vmatprep.subr.bf16.mxu0 0
        %3139 = vmatpush1.bf16.msra.mxu0 0
        %3140 = vmatprep.subr.bf16.mxu0 0
        %3141 = vmatpush1.bf16.msra.mxu0 0
        %3142 = vmatprep.subr.bf16.mxu0 0
        %3143 = vmatpush1.bf16.msra.mxu0 0
        %3144 = vmatprep.subr.bf16.mxu0 0
        %3145 = vmatpush1.bf16.msra.mxu0 0
        %3146 = vmatprep.subr.bf16.mxu0 %v3031
        %3147 = vmatpush1.bf16.msra.mxu0 %v3036
        %3148 = vmatprep.subr.bf16.mxu0 0
        %3149 = vmatpush2.bf16.msra.mxu0 0
        %3150 = vmatprep.subr.bf16.mxu0 0
        %3151 = vmatpush2.bf16.msra.mxu0 0
        %3152 = vmatprep.subr.bf16.mxu0 0
        %3153 = vmatpush2.bf16.msra.mxu0 0
        %3154 = vmatprep.subr.bf16.mxu0 0
        %3155 = vmatpush2.bf16.msra.mxu0 0
        %3156 = vmatprep.subr.bf16.mxu0 0
        %3157 = vmatpush2.bf16.msra.mxu0 0
        %3158 = vmatprep.subr.bf16.mxu0 0
        %3159 = vmatpush2.bf16.msra.mxu0 0
        %3160 = vmatprep.subr.bf16.mxu0 0
        %3161 = vmatpush2.bf16.msra.mxu0 0
        %3162 = vmatprep.subr.bf16.mxu0 0
        %3163 = vmatpush2.bf16.msra.mxu0 0
        %3164 = vmatprep.mubr.bf16.mxu0 0
        %3165 = vmatmul.mubr.bf16.gmra.mxu0 %v3044
        %v3166 = vpop.f32.mrf.mxu0
        %v3167 = vadd.f32 0.0, %v3166
        %v3168 = vpop.f32.mrf.mxu0
        %v3169 = vadd.f32 0.0, %v3168
        %v3170 = vpop.f32.mrf.mxu0
        %v3171 = vadd.f32 0.0, %v3170
        %v3172 = vpop.f32.mrf.mxu0
        %v3173 = vadd.f32 0.0, %v3172
        %3174 = vdwg.mxu0
        %v3175 = vadd.f32 %v3000, %v3081
        %v3176 = vadd.f32 %v3001, %v3083
        %v3177 = vadd.f32 %v3002, %v3124
        %v3178 = vadd.f32 %v3003, %v3126
        %v3179 = vadd.f32 %v3004, %v3167
        %v3180 = vadd.f32 %v3005, %v3169
        %v3181 = vadd.f32 %v3006, %v3085
        %v3182 = vadd.f32 %v3007, %v3087
        %v3183 = vadd.f32 %v3008, %v3128
        %v3184 = vadd.f32 %v3009, %v3130
        %v3185 = vadd.f32 %v3010, %v3171
        %v3186 = vadd.f32 %v3011, %v3173
        %s3187 = scalar_lea.vmem [#allocation4], 128
        %v3188 = vld [vmem:[%s3187] sm:$0xf]
        %v3189 = vld [vmem:[%s3187 + $0x4] sm:$0xf]
        %v3192 = vunpack.c.l.b16 %v3188
        %v3193 = vunpack.c.l.b16 %v3189
        %v3194 = vpack.c.b16 %v3193, %v3192
        %3195 = vrot.lane.b32.xlu0 %v1997, 71
        %v3196 = vpop.permute.xlu0 %3195
        %3197 = vrot.lane.b32.xlu0 %v1998, 71
        %v3198 = vpop.permute.xlu0 %3197
        %3199 = vrot.lane.b32.xlu0 %v1999, 71
        %v3200 = vpop.permute.xlu0 %3199
        %3201 = vrot.lane.b32.xlu0 %v2000, 71
        %v3202 = vpop.permute.xlu0 %3201
        %3203 = vrot.lane.b32.xlu0 %v2001, 71
        %v3204 = vpop.permute.xlu0 %3203
        %3205 = vrot.lane.b32.xlu0 %v2002, 71
        %v3206 = vpop.permute.xlu0 %3205
        %v3207 = vsel %vm1576, %v3196, %v3198
        %v3208 = vsel %vm1576, %v3198, %v3200
        %v3209 = vsel %vm1576, %v3200, %v3202
        %v3210 = vsel %vm1576, %v3202, %v3204
        %v3211 = vsel %vm1576, %v3204, %v3206
        %v3219 = vsel %vm300, %v3194, 0
        %3221 = vmatprep.subr.bf16.mxu0 0
        %3222 = vmatpush1.bf16.msra.mxu0 0
        %3223 = vmatprep.subr.bf16.mxu0 0
        %3224 = vmatpush1.bf16.msra.mxu0 0
        %3225 = vmatprep.subr.bf16.mxu0 0
        %3226 = vmatpush1.bf16.msra.mxu0 0
        %3227 = vmatprep.subr.bf16.mxu0 0
        %3228 = vmatpush1.bf16.msra.mxu0 0
        %3229 = vmatprep.subr.bf16.mxu0 0
        %3230 = vmatpush1.bf16.msra.mxu0 0
        %3231 = vmatprep.subr.bf16.mxu0 0
        %3232 = vmatpush1.bf16.msra.mxu0 0
        %3233 = vmatprep.subr.bf16.mxu0 0
        %3234 = vmatpush1.bf16.msra.mxu0 0
        %3235 = vmatprep.subr.bf16.mxu0 %v3208
        %3236 = vmatpush1.bf16.msra.mxu0 %v3207
        %3237 = vmatprep.subr.bf16.mxu0 0
        %3238 = vmatpush2.bf16.msra.mxu0 0
        %3239 = vmatprep.subr.bf16.mxu0 0
        %3240 = vmatpush2.bf16.msra.mxu0 0
        %3241 = vmatprep.subr.bf16.mxu0 0
        %3242 = vmatpush2.bf16.msra.mxu0 0
        %3243 = vmatprep.subr.bf16.mxu0 0
        %3244 = vmatpush2.bf16.msra.mxu0 0
        %3245 = vmatprep.subr.bf16.mxu0 0
        %3246 = vmatpush2.bf16.msra.mxu0 0
        %3247 = vmatprep.subr.bf16.mxu0 0
        %3248 = vmatpush2.bf16.msra.mxu0 0
        %3249 = vmatprep.subr.bf16.mxu0 0
        %3250 = vmatpush2.bf16.msra.mxu0 0
        %3251 = vmatprep.subr.bf16.mxu0 0
        %3252 = vmatpush2.bf16.msra.mxu0 0
        %3253 = vmatprep.mubr.bf16.mxu0 0
        %3254 = vmatmul.mubr.bf16.gmra.mxu0 %v3219
        %v3255 = vpop.f32.mrf.mxu0
        %v3256 = vadd.f32 0.0, %v3255
        %v3257 = vpop.f32.mrf.mxu0
        %v3258 = vadd.f32 0.0, %v3257
        %v3259 = vpop.f32.mrf.mxu0
        %v3260 = vadd.f32 0.0, %v3259
        %v3261 = vpop.f32.mrf.mxu0
        %v3262 = vadd.f32 0.0, %v3261
        %3263 = vdwg.mxu0
        %3264 = vmatprep.subr.bf16.mxu0 0
        %3265 = vmatpush1.bf16.msra.mxu0 0
        %3266 = vmatprep.subr.bf16.mxu0 0
        %3267 = vmatpush1.bf16.msra.mxu0 0
        %3268 = vmatprep.subr.bf16.mxu0 0
        %3269 = vmatpush1.bf16.msra.mxu0 0
        %3270 = vmatprep.subr.bf16.mxu0 0
        %3271 = vmatpush1.bf16.msra.mxu0 0
        %3272 = vmatprep.subr.bf16.mxu0 0
        %3273 = vmatpush1.bf16.msra.mxu0 0
        %3274 = vmatprep.subr.bf16.mxu0 0
        %3275 = vmatpush1.bf16.msra.mxu0 0
        %3276 = vmatprep.subr.bf16.mxu0 0
        %3277 = vmatpush1.bf16.msra.mxu0 0
        %3278 = vmatprep.subr.bf16.mxu0 %v3210
        %3279 = vmatpush1.bf16.msra.mxu0 %v3209
        %3280 = vmatprep.subr.bf16.mxu0 0
        %3281 = vmatpush2.bf16.msra.mxu0 0
        %3282 = vmatprep.subr.bf16.mxu0 0
        %3283 = vmatpush2.bf16.msra.mxu0 0
        %3284 = vmatprep.subr.bf16.mxu0 0
        %3285 = vmatpush2.bf16.msra.mxu0 0
        %3286 = vmatprep.subr.bf16.mxu0 0
        %3287 = vmatpush2.bf16.msra.mxu0 0
        %3288 = vmatprep.subr.bf16.mxu0 0
        %3289 = vmatpush2.bf16.msra.mxu0 0
        %3290 = vmatprep.subr.bf16.mxu0 0
        %3291 = vmatpush2.bf16.msra.mxu0 0
        %3292 = vmatprep.subr.bf16.mxu0 0
        %3293 = vmatpush2.bf16.msra.mxu0 0
        %3294 = vmatprep.subr.bf16.mxu0 0
        %3295 = vmatpush2.bf16.msra.mxu0 0
        %3296 = vmatprep.mubr.bf16.mxu0 0
        %3297 = vmatmul.mubr.bf16.gmra.mxu0 %v3219
        %v3298 = vpop.f32.mrf.mxu0
        %v3299 = vadd.f32 0.0, %v3298
        %v3300 = vpop.f32.mrf.mxu0
        %v3301 = vadd.f32 0.0, %v3300
        %v3302 = vpop.f32.mrf.mxu0
        %v3303 = vadd.f32 0.0, %v3302
        %v3304 = vpop.f32.mrf.mxu0
        %v3305 = vadd.f32 0.0, %v3304
        %3306 = vdwg.mxu0
        %3307 = vmatprep.subr.bf16.mxu0 0
        %3308 = vmatpush1.bf16.msra.mxu0 0
        %3309 = vmatprep.subr.bf16.mxu0 0
        %3310 = vmatpush1.bf16.msra.mxu0 0
        %3311 = vmatprep.subr.bf16.mxu0 0
        %3312 = vmatpush1.bf16.msra.mxu0 0
        %3313 = vmatprep.subr.bf16.mxu0 0
        %3314 = vmatpush1.bf16.msra.mxu0 0
        %3315 = vmatprep.subr.bf16.mxu0 0
        %3316 = vmatpush1.bf16.msra.mxu0 0
        %3317 = vmatprep.subr.bf16.mxu0 0
        %3318 = vmatpush1.bf16.msra.mxu0 0
        %3319 = vmatprep.subr.bf16.mxu0 0
        %3320 = vmatpush1.bf16.msra.mxu0 0
        %3321 = vmatprep.subr.bf16.mxu0 %v3206
        %3322 = vmatpush1.bf16.msra.mxu0 %v3211
        %3323 = vmatprep.subr.bf16.mxu0 0
        %3324 = vmatpush2.bf16.msra.mxu0 0
        %3325 = vmatprep.subr.bf16.mxu0 0
        %3326 = vmatpush2.bf16.msra.mxu0 0
        %3327 = vmatprep.subr.bf16.mxu0 0
        %3328 = vmatpush2.bf16.msra.mxu0 0
        %3329 = vmatprep.subr.bf16.mxu0 0
        %3330 = vmatpush2.bf16.msra.mxu0 0
        %3331 = vmatprep.subr.bf16.mxu0 0
        %3332 = vmatpush2.bf16.msra.mxu0 0
        %3333 = vmatprep.subr.bf16.mxu0 0
        %3334 = vmatpush2.bf16.msra.mxu0 0
        %3335 = vmatprep.subr.bf16.mxu0 0
        %3336 = vmatpush2.bf16.msra.mxu0 0
        %3337 = vmatprep.subr.bf16.mxu0 0
        %3338 = vmatpush2.bf16.msra.mxu0 0
        %3339 = vmatprep.mubr.bf16.mxu0 0
        %3340 = vmatmul.mubr.bf16.gmra.mxu0 %v3219
        %v3341 = vpop.f32.mrf.mxu0
        %v3342 = vadd.f32 0.0, %v3341
        %v3343 = vpop.f32.mrf.mxu0
        %v3344 = vadd.f32 0.0, %v3343
        %v3345 = vpop.f32.mrf.mxu0
        %v3346 = vadd.f32 0.0, %v3345
        %v3347 = vpop.f32.mrf.mxu0
        %v3348 = vadd.f32 0.0, %v3347
        %3349 = vdwg.mxu0
        %v3350 = vadd.f32 %v3175, %v3256
        %v3351 = vadd.f32 %v3176, %v3258
        %v3352 = vadd.f32 %v3177, %v3299
        %v3353 = vadd.f32 %v3178, %v3301
        %v3354 = vadd.f32 %v3179, %v3342
        %v3355 = vadd.f32 %v3180, %v3344
        %v3356 = vadd.f32 %v3181, %v3260
        %v3357 = vadd.f32 %v3182, %v3262
        %v3358 = vadd.f32 %v3183, %v3303
        %v3359 = vadd.f32 %v3184, %v3305
        %v3360 = vadd.f32 %v3185, %v3346
        %v3361 = vadd.f32 %v3186, %v3348
        %s3362 = scalar_lea.vmem [#allocation4], 136
        %v3363 = vld [vmem:[%s3362] sm:$0xf]
        %v3364 = vld [vmem:[%s3362 + $0x4] sm:$0xf]
        %v3367 = vunpack.c.l.b16 %v3363
        %v3368 = vunpack.c.l.b16 %v3364
        %v3369 = vpack.c.b16 %v3368, %v3367
        %3370 = vrot.lane.b32.xlu0 %v1997, 70
        %v3371 = vpop.permute.xlu0 %3370
        %3372 = vrot.lane.b32.xlu0 %v1998, 70
        %v3373 = vpop.permute.xlu0 %3372
        %3374 = vrot.lane.b32.xlu0 %v1999, 70
        %v3375 = vpop.permute.xlu0 %3374
        %3376 = vrot.lane.b32.xlu0 %v2000, 70
        %v3377 = vpop.permute.xlu0 %3376
        %3378 = vrot.lane.b32.xlu0 %v2001, 70
        %v3379 = vpop.permute.xlu0 %3378
        %3380 = vrot.lane.b32.xlu0 %v2002, 70
        %v3381 = vpop.permute.xlu0 %3380
        %v3382 = vsel %vm1755, %v3371, %v3373
        %v3383 = vsel %vm1755, %v3373, %v3375
        %v3384 = vsel %vm1755, %v3375, %v3377
        %v3385 = vsel %vm1755, %v3377, %v3379
        %v3386 = vsel %vm1755, %v3379, %v3381
        %v3394 = vsel %vm300, %v3369, 0
        %3396 = vmatprep.subr.bf16.mxu0 0
        %3397 = vmatpush1.bf16.msra.mxu0 0
        %3398 = vmatprep.subr.bf16.mxu0 0
        %3399 = vmatpush1.bf16.msra.mxu0 0
        %3400 = vmatprep.subr.bf16.mxu0 0
        %3401 = vmatpush1.bf16.msra.mxu0 0
        %3402 = vmatprep.subr.bf16.mxu0 0
        %3403 = vmatpush1.bf16.msra.mxu0 0
        %3404 = vmatprep.subr.bf16.mxu0 0
        %3405 = vmatpush1.bf16.msra.mxu0 0
        %3406 = vmatprep.subr.bf16.mxu0 0
        %3407 = vmatpush1.bf16.msra.mxu0 0
        %3408 = vmatprep.subr.bf16.mxu0 0
        %3409 = vmatpush1.bf16.msra.mxu0 0
        %3410 = vmatprep.subr.bf16.mxu0 %v3383
        %3411 = vmatpush1.bf16.msra.mxu0 %v3382
        %3412 = vmatprep.subr.bf16.mxu0 0
        %3413 = vmatpush2.bf16.msra.mxu0 0
        %3414 = vmatprep.subr.bf16.mxu0 0
        %3415 = vmatpush2.bf16.msra.mxu0 0
        %3416 = vmatprep.subr.bf16.mxu0 0
        %3417 = vmatpush2.bf16.msra.mxu0 0
        %3418 = vmatprep.subr.bf16.mxu0 0
        %3419 = vmatpush2.bf16.msra.mxu0 0
        %3420 = vmatprep.subr.bf16.mxu0 0
        %3421 = vmatpush2.bf16.msra.mxu0 0
        %3422 = vmatprep.subr.bf16.mxu0 0
        %3423 = vmatpush2.bf16.msra.mxu0 0
        %3424 = vmatprep.subr.bf16.mxu0 0
        %3425 = vmatpush2.bf16.msra.mxu0 0
        %3426 = vmatprep.subr.bf16.mxu0 0
        %3427 = vmatpush2.bf16.msra.mxu0 0
        %3428 = vmatprep.mubr.bf16.mxu0 0
        %3429 = vmatmul.mubr.bf16.gmra.mxu0 %v3394
        %v3430 = vpop.f32.mrf.mxu0
        %v3431 = vadd.f32 0.0, %v3430
        %v3432 = vpop.f32.mrf.mxu0
        %v3433 = vadd.f32 0.0, %v3432
        %v3434 = vpop.f32.mrf.mxu0
        %v3435 = vadd.f32 0.0, %v3434
        %v3436 = vpop.f32.mrf.mxu0
        %v3437 = vadd.f32 0.0, %v3436
        %3438 = vdwg.mxu0
        %3439 = vmatprep.subr.bf16.mxu0 0
        %3440 = vmatpush1.bf16.msra.mxu0 0
        %3441 = vmatprep.subr.bf16.mxu0 0
        %3442 = vmatpush1.bf16.msra.mxu0 0
        %3443 = vmatprep.subr.bf16.mxu0 0
        %3444 = vmatpush1.bf16.msra.mxu0 0
        %3445 = vmatprep.subr.bf16.mxu0 0
        %3446 = vmatpush1.bf16.msra.mxu0 0
        %3447 = vmatprep.subr.bf16.mxu0 0
        %3448 = vmatpush1.bf16.msra.mxu0 0
        %3449 = vmatprep.subr.bf16.mxu0 0
        %3450 = vmatpush1.bf16.msra.mxu0 0
        %3451 = vmatprep.subr.bf16.mxu0 0
        %3452 = vmatpush1.bf16.msra.mxu0 0
        %3453 = vmatprep.subr.bf16.mxu0 %v3385
        %3454 = vmatpush1.bf16.msra.mxu0 %v3384
        %3455 = vmatprep.subr.bf16.mxu0 0
        %3456 = vmatpush2.bf16.msra.mxu0 0
        %3457 = vmatprep.subr.bf16.mxu0 0
        %3458 = vmatpush2.bf16.msra.mxu0 0
        %3459 = vmatprep.subr.bf16.mxu0 0
        %3460 = vmatpush2.bf16.msra.mxu0 0
        %3461 = vmatprep.subr.bf16.mxu0 0
        %3462 = vmatpush2.bf16.msra.mxu0 0
        %3463 = vmatprep.subr.bf16.mxu0 0
        %3464 = vmatpush2.bf16.msra.mxu0 0
        %3465 = vmatprep.subr.bf16.mxu0 0
        %3466 = vmatpush2.bf16.msra.mxu0 0
        %3467 = vmatprep.subr.bf16.mxu0 0
        %3468 = vmatpush2.bf16.msra.mxu0 0
        %3469 = vmatprep.subr.bf16.mxu0 0
        %3470 = vmatpush2.bf16.msra.mxu0 0
        %3471 = vmatprep.mubr.bf16.mxu0 0
        %3472 = vmatmul.mubr.bf16.gmra.mxu0 %v3394
        %v3473 = vpop.f32.mrf.mxu0
        %v3474 = vadd.f32 0.0, %v3473
        %v3475 = vpop.f32.mrf.mxu0
        %v3476 = vadd.f32 0.0, %v3475
        %v3477 = vpop.f32.mrf.mxu0
        %v3478 = vadd.f32 0.0, %v3477
        %v3479 = vpop.f32.mrf.mxu0
        %v3480 = vadd.f32 0.0, %v3479
        %3481 = vdwg.mxu0
        %3482 = vmatprep.subr.bf16.mxu0 0
        %3483 = vmatpush1.bf16.msra.mxu0 0
        %3484 = vmatprep.subr.bf16.mxu0 0
        %3485 = vmatpush1.bf16.msra.mxu0 0
        %3486 = vmatprep.subr.bf16.mxu0 0
        %3487 = vmatpush1.bf16.msra.mxu0 0
        %3488 = vmatprep.subr.bf16.mxu0 0
        %3489 = vmatpush1.bf16.msra.mxu0 0
        %3490 = vmatprep.subr.bf16.mxu0 0
        %3491 = vmatpush1.bf16.msra.mxu0 0
        %3492 = vmatprep.subr.bf16.mxu0 0
        %3493 = vmatpush1.bf16.msra.mxu0 0
        %3494 = vmatprep.subr.bf16.mxu0 0
        %3495 = vmatpush1.bf16.msra.mxu0 0
        %3496 = vmatprep.subr.bf16.mxu0 %v3381
        %3497 = vmatpush1.bf16.msra.mxu0 %v3386
        %3498 = vmatprep.subr.bf16.mxu0 0
        %3499 = vmatpush2.bf16.msra.mxu0 0
        %3500 = vmatprep.subr.bf16.mxu0 0
        %3501 = vmatpush2.bf16.msra.mxu0 0
        %3502 = vmatprep.subr.bf16.mxu0 0
        %3503 = vmatpush2.bf16.msra.mxu0 0
        %3504 = vmatprep.subr.bf16.mxu0 0
        %3505 = vmatpush2.bf16.msra.mxu0 0
        %3506 = vmatprep.subr.bf16.mxu0 0
        %3507 = vmatpush2.bf16.msra.mxu0 0
        %3508 = vmatprep.subr.bf16.mxu0 0
        %3509 = vmatpush2.bf16.msra.mxu0 0
        %3510 = vmatprep.subr.bf16.mxu0 0
        %3511 = vmatpush2.bf16.msra.mxu0 0
        %3512 = vmatprep.subr.bf16.mxu0 0
        %3513 = vmatpush2.bf16.msra.mxu0 0
        %3514 = vmatprep.mubr.bf16.mxu0 0
        %3515 = vmatmul.mubr.bf16.gmra.mxu0 %v3394
        %v3516 = vpop.f32.mrf.mxu0
        %v3517 = vadd.f32 0.0, %v3516
        %v3518 = vpop.f32.mrf.mxu0
        %v3519 = vadd.f32 0.0, %v3518
        %v3520 = vpop.f32.mrf.mxu0
        %v3521 = vadd.f32 0.0, %v3520
        %v3522 = vpop.f32.mrf.mxu0
        %v3523 = vadd.f32 0.0, %v3522
        %3524 = vdwg.mxu0
        %v3525 = vadd.f32 %v3350, %v3431
        %v3526 = vadd.f32 %v3351, %v3433
        %v3527 = vadd.f32 %v3352, %v3474
        %v3528 = vadd.f32 %v3353, %v3476
        %v3529 = vadd.f32 %v3354, %v3517
        %v3530 = vadd.f32 %v3355, %v3519
        %v3531 = vadd.f32 %v3356, %v3435
        %v3532 = vadd.f32 %v3357, %v3437
        %v3533 = vadd.f32 %v3358, %v3478
        %v3534 = vadd.f32 %v3359, %v3480
        %v3535 = vadd.f32 %v3360, %v3521
        %v3536 = vadd.f32 %v3361, %v3523
        %v3537 = vmax.f32 %v3525, 0.0
        %v3538 = vmax.f32 %v3526, 0.0
        %v3539 = vmax.f32 %v3527, 0.0
        %v3540 = vmax.f32 %v3528, 0.0
        %v3541 = vmax.f32 %v3529, 0.0
        %v3542 = vmax.f32 %v3530, 0.0
        %v3543 = vmax.f32 %v3531, 0.0
        %v3544 = vmax.f32 %v3532, 0.0
        %v3545 = vmax.f32 %v3533, 0.0
        %v3546 = vmax.f32 %v3534, 0.0
        %v3547 = vmax.f32 %v3535, 0.0
        %v3548 = vmax.f32 %v3536, 0.0
        %s3549 = scalar_lea.vmem [#allocation6], 16
        %v3550 = vld [vmem:[%s3549] sm:$0xff]
        %v3551 = vld [vmem:[%s3549 + $0x8] sm:$0xff]
        %3553 = vset.pattern.permute.xlu0 0
        %3554 = vperm.xlu0 %3553, %v3550
        %v3555 = vpop.permute.xlu0 %3554
        %3558 = vset.pattern.permute.xlu0 0
        %3559 = vperm.xlu0 %3558, %v3551
        %v3560 = vpop.permute.xlu0 %3559
        %v3562 = vmul.f32 %v3537, %v3555
        %v3563 = vmul.f32 %v3538, %v3555
        %v3564 = vmul.f32 %v3539, %v3555
        %v3565 = vmul.f32 %v3540, %v3555
        %v3566 = vmul.f32 %v3541, %v3555
        %v3567 = vmul.f32 %v3542, %v3555
        %v3568 = vmul.f32 %v3543, %v3560
        %v3569 = vmul.f32 %v3544, %v3560
        %v3570 = vmul.f32 %v3545, %v3560
        %v3571 = vmul.f32 %v3546, %v3560
        %v3572 = vmul.f32 %v3547, %v3560
        %v3573 = vmul.f32 %v3548, %v3560
        %s3574 = scalar_lea.vmem %s3, 16
        %v3575 = vld [vmem:[%s3574] sm:$0xff]
        %v3576 = vld [vmem:[%s3574 + $0x8] sm:$0xff]
        %3578 = vset.pattern.permute.xlu0 0
        %3579 = vperm.xlu0 %3578, %v3575
        %v3580 = vpop.permute.xlu0 %3579
        %3583 = vset.pattern.permute.xlu0 0
        %3584 = vperm.xlu0 %3583, %v3576
        %v3585 = vpop.permute.xlu0 %3584
        %v3587 = vadd.f32 %v3562, %v3580
        %v3588 = vadd.f32 %v3563, %v3580
        %v3589 = vadd.f32 %v3564, %v3580
        %v3590 = vadd.f32 %v3565, %v3580
        %v3591 = vadd.f32 %v3566, %v3580
        %v3592 = vadd.f32 %v3567, %v3580
        %v3593 = vadd.f32 %v3568, %v3585
        %v3594 = vadd.f32 %v3569, %v3585
        %v3595 = vadd.f32 %v3570, %v3585
        %v3596 = vadd.f32 %v3571, %v3585
        %v3597 = vadd.f32 %v3572, %v3585
        %v3598 = vadd.f32 %v3573, %v3585
        %3599 = vst [vmem:[#allocation2] sm:$0xff] %v3587
        %3600 = vst [vmem:[#allocation2 + $0x8] sm:$0xff] %v3588
        %3601 = vst [vmem:[#allocation2 + $0x10] sm:$0xff] %v3589
        %3602 = vst [vmem:[#allocation2 + $0x18] sm:$0xff] %v3590
        %3603 = vst [vmem:[#allocation2 + $0x20] sm:$0xff] %v3591
        %vm3604 = vcmask 228352
        %3605 = vst.msk [vmem:[#allocation2 + $0x28] sm:$0xff] %vm3604, %v3592
        %3606 = vst [vmem:[#allocation2 + $0x38] sm:$0xff] %v3593
        %3607 = vst [vmem:[#allocation2 + $0x40] sm:$0xff] %v3594
        %3608 = vst [vmem:[#allocation2 + $0x48] sm:$0xff] %v3595
        %3609 = vst [vmem:[#allocation2 + $0x50] sm:$0xff] %v3596
        %3610 = vst [vmem:[#allocation2 + $0x58] sm:$0xff] %v3597
        %3611 = vst.msk [vmem:[#allocation2 + $0x60] sm:$0xff] %vm3604, %v3598
        %v3612 = vld [vmem:[#allocation2] sm:$0xff]
        %v3613 = vld [vmem:[#allocation2 + $0x8] sm:$0xff]
        %v3614 = vld [vmem:[#allocation2 + $0x10] sm:$0xff]
        %v3615 = vld [vmem:[#allocation2 + $0x18] sm:$0xff]
        %v3616 = vld [vmem:[#allocation2 + $0x20] sm:$0xff]
        %v3617 = vld [vmem:[#allocation2 + $0x38] sm:$0xff]
        %v3618 = vld [vmem:[#allocation2 + $0x40] sm:$0xff]
        %v3619 = vld [vmem:[#allocation2 + $0x48] sm:$0xff]
        %v3620 = vld [vmem:[#allocation2 + $0x50] sm:$0xff]
        %v3621 = vld [vmem:[#allocation2 + $0x58] sm:$0xff]
        %v3622 = vpack.c.bf16 %v3617, %v3612
        %v3623 = vpack.c.bf16 %v3618, %v3613
        %v3624 = vpack.c.bf16 %v3619, %v3614
        %v3625 = vpack.c.bf16 %v3620, %v3615
        %v3626 = vpack.c.bf16 %v3621, %v3616
        %s3627 = scalar_lea.vmem [#allocation4], 144
        %v3628 = vld [vmem:[%s3627] sm:$0xf]
        %v3629 = vld [vmem:[%s3627 + $0x4] sm:$0xf]
        %s3630 = scalar_lea.vmem [#allocation4], 152
        %v3631 = vld [vmem:[%s3630] sm:$0xf]
        %v3632 = vld [vmem:[%s3630 + $0x4] sm:$0xf]
        %v3635 = vunpack.c.l.b16 %v3631
        %v3636 = vunpack.c.l.b16 %v3632
        %v3637 = vpack.c.b16 %v3636, %v3635
        %3643 = vrot.lane.b32.xlu0 %v3622, 127
        %v3644 = vpop.permute.xlu0 %3643
        %3645 = vrot.lane.b32.xlu0 %v3623, 127
        %v3646 = vpop.permute.xlu0 %3645
        %3647 = vrot.lane.b32.xlu0 %v3624, 127
        %v3648 = vpop.permute.xlu0 %3647
        %3649 = vrot.lane.b32.xlu0 %v3625, 127
        %v3650 = vpop.permute.xlu0 %3649
        %3651 = vrot.lane.b32.xlu0 %v3626, 127
        %v3652 = vpop.permute.xlu0 %3651
        %v3653 = vsel %vm362, %v3644, %v3646
        %v3654 = vsel %vm362, %v3646, %v3648
        %v3655 = vsel %vm362, %v3648, %v3650
        %v3656 = vsel %vm362, %v3650, %v3652
        %v3663 = vsel %vm300, %v3637, 0
        %3665 = vmatprep.subr.bf16.mxu0 0
        %3666 = vmatpush1.bf16.msra.mxu0 0
        %3667 = vmatprep.subr.bf16.mxu0 0
        %3668 = vmatpush1.bf16.msra.mxu0 0
        %3669 = vmatprep.subr.bf16.mxu0 0
        %3670 = vmatpush1.bf16.msra.mxu0 0
        %3671 = vmatprep.subr.bf16.mxu0 0
        %3672 = vmatpush1.bf16.msra.mxu0 0
        %3673 = vmatprep.subr.bf16.mxu0 0
        %3674 = vmatpush1.bf16.msra.mxu0 0
        %3675 = vmatprep.subr.bf16.mxu0 0
        %3676 = vmatpush1.bf16.msra.mxu0 0
        %3677 = vmatprep.subr.bf16.mxu0 0
        %3678 = vmatpush1.bf16.msra.mxu0 0
        %3679 = vmatprep.subr.bf16.mxu0 %v3654
        %3680 = vmatpush1.bf16.msra.mxu0 %v3653
        %3681 = vmatprep.subr.bf16.mxu0 0
        %3682 = vmatpush2.bf16.msra.mxu0 0
        %3683 = vmatprep.subr.bf16.mxu0 0
        %3684 = vmatpush2.bf16.msra.mxu0 0
        %3685 = vmatprep.subr.bf16.mxu0 0
        %3686 = vmatpush2.bf16.msra.mxu0 0
        %3687 = vmatprep.subr.bf16.mxu0 0
        %3688 = vmatpush2.bf16.msra.mxu0 0
        %3689 = vmatprep.subr.bf16.mxu0 0
        %3690 = vmatpush2.bf16.msra.mxu0 0
        %3691 = vmatprep.subr.bf16.mxu0 0
        %3692 = vmatpush2.bf16.msra.mxu0 0
        %3693 = vmatprep.subr.bf16.mxu0 0
        %3694 = vmatpush2.bf16.msra.mxu0 0
        %3695 = vmatprep.subr.bf16.mxu0 0
        %3696 = vmatpush2.bf16.msra.mxu0 0
        %3697 = vmatprep.mubr.bf16.mxu0 0
        %3698 = vmatmul.mubr.bf16.gmra.mxu0 %v3663
        %v3699 = vpop.f32.mrf.mxu0
        %v3700 = vadd.f32 0.0, %v3699
        %v3701 = vpop.f32.mrf.mxu0
        %v3702 = vadd.f32 0.0, %v3701
        %v3703 = vpop.f32.mrf.mxu0
        %v3704 = vadd.f32 0.0, %v3703
        %v3705 = vpop.f32.mrf.mxu0
        %v3706 = vadd.f32 0.0, %v3705
        %3707 = vdwg.mxu0
        %3708 = vmatprep.subr.bf16.mxu0 0
        %3709 = vmatpush1.bf16.msra.mxu0 0
        %3710 = vmatprep.subr.bf16.mxu0 0
        %3711 = vmatpush1.bf16.msra.mxu0 0
        %3712 = vmatprep.subr.bf16.mxu0 0
        %3713 = vmatpush1.bf16.msra.mxu0 0
        %3714 = vmatprep.subr.bf16.mxu0 0
        %3715 = vmatpush1.bf16.msra.mxu0 0
        %3716 = vmatprep.subr.bf16.mxu0 0
        %3717 = vmatpush1.bf16.msra.mxu0 0
        %3718 = vmatprep.subr.bf16.mxu0 0
        %3719 = vmatpush1.bf16.msra.mxu0 0
        %3720 = vmatprep.subr.bf16.mxu0 0
        %3721 = vmatpush1.bf16.msra.mxu0 0
        %3722 = vmatprep.subr.bf16.mxu0 %v3656
        %3723 = vmatpush1.bf16.msra.mxu0 %v3655
        %3724 = vmatprep.subr.bf16.mxu0 0
        %3725 = vmatpush2.bf16.msra.mxu0 0
        %3726 = vmatprep.subr.bf16.mxu0 0
        %3727 = vmatpush2.bf16.msra.mxu0 0
        %3728 = vmatprep.subr.bf16.mxu0 0
        %3729 = vmatpush2.bf16.msra.mxu0 0
        %3730 = vmatprep.subr.bf16.mxu0 0
        %3731 = vmatpush2.bf16.msra.mxu0 0
        %3732 = vmatprep.subr.bf16.mxu0 0
        %3733 = vmatpush2.bf16.msra.mxu0 0
        %3734 = vmatprep.subr.bf16.mxu0 0
        %3735 = vmatpush2.bf16.msra.mxu0 0
        %3736 = vmatprep.subr.bf16.mxu0 0
        %3737 = vmatpush2.bf16.msra.mxu0 0
        %3738 = vmatprep.subr.bf16.mxu0 0
        %3739 = vmatpush2.bf16.msra.mxu0 0
        %3740 = vmatprep.mubr.bf16.mxu0 0
        %3741 = vmatmul.mubr.bf16.gmra.mxu0 %v3663
        %v3742 = vpop.f32.mrf.mxu0
        %v3743 = vadd.f32 0.0, %v3742
        %v3744 = vpop.f32.mrf.mxu0
        %v3745 = vadd.f32 0.0, %v3744
        %v3746 = vpop.f32.mrf.mxu0
        %v3747 = vadd.f32 0.0, %v3746
        %v3748 = vpop.f32.mrf.mxu0
        %v3749 = vadd.f32 0.0, %v3748
        %3750 = vdwg.mxu0
        %3751 = vmatprep.subr.bf16.mxu0 0
        %3752 = vmatpush1.bf16.msra.mxu0 0
        %3753 = vmatprep.subr.bf16.mxu0 0
        %3754 = vmatpush1.bf16.msra.mxu0 0
        %3755 = vmatprep.subr.bf16.mxu0 0
        %3756 = vmatpush1.bf16.msra.mxu0 0
        %3757 = vmatprep.subr.bf16.mxu0 0
        %3758 = vmatpush1.bf16.msra.mxu0 0
        %3759 = vmatprep.subr.bf16.mxu0 0
        %3760 = vmatpush1.bf16.msra.mxu0 0
        %3761 = vmatprep.subr.bf16.mxu0 0
        %3762 = vmatpush1.bf16.msra.mxu0 0
        %3763 = vmatprep.subr.bf16.mxu0 0
        %3764 = vmatpush1.bf16.msra.mxu0 0
        %3765 = vmatprep.subr.bf16.mxu0 0
        %3766 = vmatpush1.bf16.msra.mxu0 %v3652
        %3767 = vmatprep.subr.bf16.mxu0 0
        %3768 = vmatpush2.bf16.msra.mxu0 0
        %3769 = vmatprep.subr.bf16.mxu0 0
        %3770 = vmatpush2.bf16.msra.mxu0 0
        %3771 = vmatprep.subr.bf16.mxu0 0
        %3772 = vmatpush2.bf16.msra.mxu0 0
        %3773 = vmatprep.subr.bf16.mxu0 0
        %3774 = vmatpush2.bf16.msra.mxu0 0
        %3775 = vmatprep.subr.bf16.mxu0 0
        %3776 = vmatpush2.bf16.msra.mxu0 0
        %3777 = vmatprep.subr.bf16.mxu0 0
        %3778 = vmatpush2.bf16.msra.mxu0 0
        %3779 = vmatprep.subr.bf16.mxu0 0
        %3780 = vmatpush2.bf16.msra.mxu0 0
        %3781 = vmatprep.subr.bf16.mxu0 0
        %3782 = vmatpush2.bf16.msra.mxu0 0
        %3783 = vmatprep.mubr.bf16.mxu0 0
        %3784 = vmatmul.mubr.bf16.gmra.mxu0 %v3663
        %v3785 = vpop.f32.mrf.mxu0
        %v3786 = vadd.f32 0.0, %v3785
        %v3787 = vpop.f32.mrf.mxu0
        %v3788 = vpop.f32.mrf.mxu0
        %v3789 = vadd.f32 0.0, %v3788
        %v3790 = vpop.f32.mrf.mxu0
        %3791 = vdwg.mxu0
        %v3794 = vunpack.c.l.b16 %v3628
        %v3795 = vunpack.c.l.b16 %v3629
        %v3796 = vpack.c.b16 %v3795, %v3794
        %v3798 = vsel %vm300, %v3796, 0
        %3800 = vmatprep.subr.bf16.mxu0 0
        %3801 = vmatpush1.bf16.msra.mxu0 0
        %3802 = vmatprep.subr.bf16.mxu0 0
        %3803 = vmatpush1.bf16.msra.mxu0 0
        %3804 = vmatprep.subr.bf16.mxu0 0
        %3805 = vmatpush1.bf16.msra.mxu0 0
        %3806 = vmatprep.subr.bf16.mxu0 0
        %3807 = vmatpush1.bf16.msra.mxu0 0
        %3808 = vmatprep.subr.bf16.mxu0 0
        %3809 = vmatpush1.bf16.msra.mxu0 0
        %3810 = vmatprep.subr.bf16.mxu0 0
        %3811 = vmatpush1.bf16.msra.mxu0 0
        %3812 = vmatprep.subr.bf16.mxu0 0
        %3813 = vmatpush1.bf16.msra.mxu0 0
        %3814 = vmatprep.subr.bf16.mxu0 %v3623
        %3815 = vmatpush1.bf16.msra.mxu0 %v3622
        %3816 = vmatprep.subr.bf16.mxu0 0
        %3817 = vmatpush2.bf16.msra.mxu0 0
        %3818 = vmatprep.subr.bf16.mxu0 0
        %3819 = vmatpush2.bf16.msra.mxu0 0
        %3820 = vmatprep.subr.bf16.mxu0 0
        %3821 = vmatpush2.bf16.msra.mxu0 0
        %3822 = vmatprep.subr.bf16.mxu0 0
        %3823 = vmatpush2.bf16.msra.mxu0 0
        %3824 = vmatprep.subr.bf16.mxu0 0
        %3825 = vmatpush2.bf16.msra.mxu0 0
        %3826 = vmatprep.subr.bf16.mxu0 0
        %3827 = vmatpush2.bf16.msra.mxu0 0
        %3828 = vmatprep.subr.bf16.mxu0 0
        %3829 = vmatpush2.bf16.msra.mxu0 0
        %3830 = vmatprep.subr.bf16.mxu0 0
        %3831 = vmatpush2.bf16.msra.mxu0 0
        %3832 = vmatprep.mubr.bf16.mxu0 0
        %3833 = vmatmul.mubr.bf16.gmra.mxu0 %v3798
        %v3834 = vpop.f32.mrf.mxu0
        %v3835 = vadd.f32 %v3700, %v3834
        %v3836 = vpop.f32.mrf.mxu0
        %v3837 = vadd.f32 %v3702, %v3836
        %v3838 = vpop.f32.mrf.mxu0
        %v3839 = vadd.f32 %v3704, %v3838
        %v3840 = vpop.f32.mrf.mxu0
        %v3841 = vadd.f32 %v3706, %v3840
        %3842 = vdwg.mxu0
        %3843 = vmatprep.subr.bf16.mxu0 0
        %3844 = vmatpush1.bf16.msra.mxu0 0
        %3845 = vmatprep.subr.bf16.mxu0 0
        %3846 = vmatpush1.bf16.msra.mxu0 0
        %3847 = vmatprep.subr.bf16.mxu0 0
        %3848 = vmatpush1.bf16.msra.mxu0 0
        %3849 = vmatprep.subr.bf16.mxu0 0
        %3850 = vmatpush1.bf16.msra.mxu0 0
        %3851 = vmatprep.subr.bf16.mxu0 0
        %3852 = vmatpush1.bf16.msra.mxu0 0
        %3853 = vmatprep.subr.bf16.mxu0 0
        %3854 = vmatpush1.bf16.msra.mxu0 0
        %3855 = vmatprep.subr.bf16.mxu0 0
        %3856 = vmatpush1.bf16.msra.mxu0 0
        %3857 = vmatprep.subr.bf16.mxu0 %v3625
        %3858 = vmatpush1.bf16.msra.mxu0 %v3624
        %3859 = vmatprep.subr.bf16.mxu0 0
        %3860 = vmatpush2.bf16.msra.mxu0 0
        %3861 = vmatprep.subr.bf16.mxu0 0
        %3862 = vmatpush2.bf16.msra.mxu0 0
        %3863 = vmatprep.subr.bf16.mxu0 0
        %3864 = vmatpush2.bf16.msra.mxu0 0
        %3865 = vmatprep.subr.bf16.mxu0 0
        %3866 = vmatpush2.bf16.msra.mxu0 0
        %3867 = vmatprep.subr.bf16.mxu0 0
        %3868 = vmatpush2.bf16.msra.mxu0 0
        %3869 = vmatprep.subr.bf16.mxu0 0
        %3870 = vmatpush2.bf16.msra.mxu0 0
        %3871 = vmatprep.subr.bf16.mxu0 0
        %3872 = vmatpush2.bf16.msra.mxu0 0
        %3873 = vmatprep.subr.bf16.mxu0 0
        %3874 = vmatpush2.bf16.msra.mxu0 0
        %3875 = vmatprep.mubr.bf16.mxu0 0
        %3876 = vmatmul.mubr.bf16.gmra.mxu0 %v3798
        %v3877 = vpop.f32.mrf.mxu0
        %v3878 = vadd.f32 %v3743, %v3877
        %v3879 = vpop.f32.mrf.mxu0
        %v3880 = vadd.f32 %v3745, %v3879
        %v3881 = vpop.f32.mrf.mxu0
        %v3882 = vadd.f32 %v3747, %v3881
        %v3883 = vpop.f32.mrf.mxu0
        %v3884 = vadd.f32 %v3749, %v3883
        %3885 = vdwg.mxu0
        %3886 = vmatprep.subr.bf16.mxu0 0
        %3887 = vmatpush1.bf16.msra.mxu0 0
        %3888 = vmatprep.subr.bf16.mxu0 0
        %3889 = vmatpush1.bf16.msra.mxu0 0
        %3890 = vmatprep.subr.bf16.mxu0 0
        %3891 = vmatpush1.bf16.msra.mxu0 0
        %3892 = vmatprep.subr.bf16.mxu0 0
        %3893 = vmatpush1.bf16.msra.mxu0 0
        %3894 = vmatprep.subr.bf16.mxu0 0
        %3895 = vmatpush1.bf16.msra.mxu0 0
        %3896 = vmatprep.subr.bf16.mxu0 0
        %3897 = vmatpush1.bf16.msra.mxu0 0
        %3898 = vmatprep.subr.bf16.mxu0 0
        %3899 = vmatpush1.bf16.msra.mxu0 0
        %3900 = vmatprep.subr.bf16.mxu0 0
        %3901 = vmatpush1.bf16.msra.mxu0 %v3626
        %3902 = vmatprep.subr.bf16.mxu0 0
        %3903 = vmatpush2.bf16.msra.mxu0 0
        %3904 = vmatprep.subr.bf16.mxu0 0
        %3905 = vmatpush2.bf16.msra.mxu0 0
        %3906 = vmatprep.subr.bf16.mxu0 0
        %3907 = vmatpush2.bf16.msra.mxu0 0
        %3908 = vmatprep.subr.bf16.mxu0 0
        %3909 = vmatpush2.bf16.msra.mxu0 0
        %3910 = vmatprep.subr.bf16.mxu0 0
        %3911 = vmatpush2.bf16.msra.mxu0 0
        %3912 = vmatprep.subr.bf16.mxu0 0
        %3913 = vmatpush2.bf16.msra.mxu0 0
        %3914 = vmatprep.subr.bf16.mxu0 0
        %3915 = vmatpush2.bf16.msra.mxu0 0
        %3916 = vmatprep.subr.bf16.mxu0 0
        %3917 = vmatpush2.bf16.msra.mxu0 0
        %3918 = vmatprep.mubr.bf16.mxu0 0
        %3919 = vmatmul.mubr.bf16.gmra.mxu0 %v3798
        %v3920 = vpop.f32.mrf.mxu0
        %v3921 = vadd.f32 %v3786, %v3920
        %v3922 = vpop.f32.mrf.mxu0
        %v3923 = vpop.f32.mrf.mxu0
        %v3924 = vadd.f32 %v3789, %v3923
        %v3925 = vpop.f32.mrf.mxu0
        %3926 = vdwg.mxu0
        %s3927 = scalar_lea.vmem [#allocation4], 160
        %v3928 = vld [vmem:[%s3927] sm:$0xf]
        %v3929 = vld [vmem:[%s3927 + $0x4] sm:$0xf]
        %v3932 = vunpack.c.l.b16 %v3928
        %v3933 = vunpack.c.l.b16 %v3929
        %v3934 = vpack.c.b16 %v3933, %v3932
        %3935 = vrot.lane.b32.xlu0 %v3622, 126
        %v3936 = vpop.permute.xlu0 %3935
        %3937 = vrot.lane.b32.xlu0 %v3623, 126
        %v3938 = vpop.permute.xlu0 %3937
        %3939 = vrot.lane.b32.xlu0 %v3624, 126
        %v3940 = vpop.permute.xlu0 %3939
        %3941 = vrot.lane.b32.xlu0 %v3625, 126
        %v3942 = vpop.permute.xlu0 %3941
        %3943 = vrot.lane.b32.xlu0 %v3626, 126
        %v3944 = vpop.permute.xlu0 %3943
        %v3945 = vsel %vm663, %v3936, %v3938
        %v3946 = vsel %vm663, %v3938, %v3940
        %v3947 = vsel %vm663, %v3940, %v3942
        %v3948 = vsel %vm663, %v3942, %v3944
        %v3955 = vsel %vm300, %v3934, 0
        %3957 = vmatprep.subr.bf16.mxu0 0
        %3958 = vmatpush1.bf16.msra.mxu0 0
        %3959 = vmatprep.subr.bf16.mxu0 0
        %3960 = vmatpush1.bf16.msra.mxu0 0
        %3961 = vmatprep.subr.bf16.mxu0 0
        %3962 = vmatpush1.bf16.msra.mxu0 0
        %3963 = vmatprep.subr.bf16.mxu0 0
        %3964 = vmatpush1.bf16.msra.mxu0 0
        %3965 = vmatprep.subr.bf16.mxu0 0
        %3966 = vmatpush1.bf16.msra.mxu0 0
        %3967 = vmatprep.subr.bf16.mxu0 0
        %3968 = vmatpush1.bf16.msra.mxu0 0
        %3969 = vmatprep.subr.bf16.mxu0 0
        %3970 = vmatpush1.bf16.msra.mxu0 0
        %3971 = vmatprep.subr.bf16.mxu0 %v3946
        %3972 = vmatpush1.bf16.msra.mxu0 %v3945
        %3973 = vmatprep.subr.bf16.mxu0 0
        %3974 = vmatpush2.bf16.msra.mxu0 0
        %3975 = vmatprep.subr.bf16.mxu0 0
        %3976 = vmatpush2.bf16.msra.mxu0 0
        %3977 = vmatprep.subr.bf16.mxu0 0
        %3978 = vmatpush2.bf16.msra.mxu0 0
        %3979 = vmatprep.subr.bf16.mxu0 0
        %3980 = vmatpush2.bf16.msra.mxu0 0
        %3981 = vmatprep.subr.bf16.mxu0 0
        %3982 = vmatpush2.bf16.msra.mxu0 0
        %3983 = vmatprep.subr.bf16.mxu0 0
        %3984 = vmatpush2.bf16.msra.mxu0 0
        %3985 = vmatprep.subr.bf16.mxu0 0
        %3986 = vmatpush2.bf16.msra.mxu0 0
        %3987 = vmatprep.subr.bf16.mxu0 0
        %3988 = vmatpush2.bf16.msra.mxu0 0
        %3989 = vmatprep.mubr.bf16.mxu0 0
        %3990 = vmatmul.mubr.bf16.gmra.mxu0 %v3955
        %v3991 = vpop.f32.mrf.mxu0
        %v3992 = vadd.f32 0.0, %v3991
        %v3993 = vpop.f32.mrf.mxu0
        %v3994 = vadd.f32 0.0, %v3993
        %v3995 = vpop.f32.mrf.mxu0
        %v3996 = vadd.f32 0.0, %v3995
        %v3997 = vpop.f32.mrf.mxu0
        %v3998 = vadd.f32 0.0, %v3997
        %3999 = vdwg.mxu0
        %4000 = vmatprep.subr.bf16.mxu0 0
        %4001 = vmatpush1.bf16.msra.mxu0 0
        %4002 = vmatprep.subr.bf16.mxu0 0
        %4003 = vmatpush1.bf16.msra.mxu0 0
        %4004 = vmatprep.subr.bf16.mxu0 0
        %4005 = vmatpush1.bf16.msra.mxu0 0
        %4006 = vmatprep.subr.bf16.mxu0 0
        %4007 = vmatpush1.bf16.msra.mxu0 0
        %4008 = vmatprep.subr.bf16.mxu0 0
        %4009 = vmatpush1.bf16.msra.mxu0 0
        %4010 = vmatprep.subr.bf16.mxu0 0
        %4011 = vmatpush1.bf16.msra.mxu0 0
        %4012 = vmatprep.subr.bf16.mxu0 0
        %4013 = vmatpush1.bf16.msra.mxu0 0
        %4014 = vmatprep.subr.bf16.mxu0 %v3948
        %4015 = vmatpush1.bf16.msra.mxu0 %v3947
        %4016 = vmatprep.subr.bf16.mxu0 0
        %4017 = vmatpush2.bf16.msra.mxu0 0
        %4018 = vmatprep.subr.bf16.mxu0 0
        %4019 = vmatpush2.bf16.msra.mxu0 0
        %4020 = vmatprep.subr.bf16.mxu0 0
        %4021 = vmatpush2.bf16.msra.mxu0 0
        %4022 = vmatprep.subr.bf16.mxu0 0
        %4023 = vmatpush2.bf16.msra.mxu0 0
        %4024 = vmatprep.subr.bf16.mxu0 0
        %4025 = vmatpush2.bf16.msra.mxu0 0
        %4026 = vmatprep.subr.bf16.mxu0 0
        %4027 = vmatpush2.bf16.msra.mxu0 0
        %4028 = vmatprep.subr.bf16.mxu0 0
        %4029 = vmatpush2.bf16.msra.mxu0 0
        %4030 = vmatprep.subr.bf16.mxu0 0
        %4031 = vmatpush2.bf16.msra.mxu0 0
        %4032 = vmatprep.mubr.bf16.mxu0 0
        %4033 = vmatmul.mubr.bf16.gmra.mxu0 %v3955
        %v4034 = vpop.f32.mrf.mxu0
        %v4035 = vadd.f32 0.0, %v4034
        %v4036 = vpop.f32.mrf.mxu0
        %v4037 = vadd.f32 0.0, %v4036
        %v4038 = vpop.f32.mrf.mxu0
        %v4039 = vadd.f32 0.0, %v4038
        %v4040 = vpop.f32.mrf.mxu0
        %v4041 = vadd.f32 0.0, %v4040
        %4042 = vdwg.mxu0
        %4043 = vmatprep.subr.bf16.mxu0 0
        %4044 = vmatpush1.bf16.msra.mxu0 0
        %4045 = vmatprep.subr.bf16.mxu0 0
        %4046 = vmatpush1.bf16.msra.mxu0 0
        %4047 = vmatprep.subr.bf16.mxu0 0
        %4048 = vmatpush1.bf16.msra.mxu0 0
        %4049 = vmatprep.subr.bf16.mxu0 0
        %4050 = vmatpush1.bf16.msra.mxu0 0
        %4051 = vmatprep.subr.bf16.mxu0 0
        %4052 = vmatpush1.bf16.msra.mxu0 0
        %4053 = vmatprep.subr.bf16.mxu0 0
        %4054 = vmatpush1.bf16.msra.mxu0 0
        %4055 = vmatprep.subr.bf16.mxu0 0
        %4056 = vmatpush1.bf16.msra.mxu0 0
        %4057 = vmatprep.subr.bf16.mxu0 0
        %4058 = vmatpush1.bf16.msra.mxu0 %v3944
        %4059 = vmatprep.subr.bf16.mxu0 0
        %4060 = vmatpush2.bf16.msra.mxu0 0
        %4061 = vmatprep.subr.bf16.mxu0 0
        %4062 = vmatpush2.bf16.msra.mxu0 0
        %4063 = vmatprep.subr.bf16.mxu0 0
        %4064 = vmatpush2.bf16.msra.mxu0 0
        %4065 = vmatprep.subr.bf16.mxu0 0
        %4066 = vmatpush2.bf16.msra.mxu0 0
        %4067 = vmatprep.subr.bf16.mxu0 0
        %4068 = vmatpush2.bf16.msra.mxu0 0
        %4069 = vmatprep.subr.bf16.mxu0 0
        %4070 = vmatpush2.bf16.msra.mxu0 0
        %4071 = vmatprep.subr.bf16.mxu0 0
        %4072 = vmatpush2.bf16.msra.mxu0 0
        %4073 = vmatprep.subr.bf16.mxu0 0
        %4074 = vmatpush2.bf16.msra.mxu0 0
        %4075 = vmatprep.mubr.bf16.mxu0 0
        %4076 = vmatmul.mubr.bf16.gmra.mxu0 %v3955
        %v4077 = vpop.f32.mrf.mxu0
        %v4078 = vadd.f32 0.0, %v4077
        %v4079 = vpop.f32.mrf.mxu0
        %v4080 = vpop.f32.mrf.mxu0
        %v4081 = vadd.f32 0.0, %v4080
        %v4082 = vpop.f32.mrf.mxu0
        %4083 = vdwg.mxu0
        %v4084 = vadd.f32 %v3835, %v3992
        %v4085 = vadd.f32 %v3837, %v3994
        %v4086 = vadd.f32 %v3878, %v4035
        %v4087 = vadd.f32 %v3880, %v4037
        %v4088 = vadd.f32 %v3921, %v4078
        %v4089 = vadd.f32 %v3839, %v3996
        %v4090 = vadd.f32 %v3841, %v3998
        %v4091 = vadd.f32 %v3882, %v4039
        %v4092 = vadd.f32 %v3884, %v4041
        %v4093 = vadd.f32 %v3924, %v4081
        %s4094 = scalar_lea.vmem [#allocation4], 168
        %v4095 = vld [vmem:[%s4094] sm:$0xf]
        %v4096 = vld [vmem:[%s4094 + $0x4] sm:$0xf]
        %v4099 = vunpack.c.l.b16 %v4095
        %v4100 = vunpack.c.l.b16 %v4096
        %v4101 = vpack.c.b16 %v4100, %v4099
        %4102 = vrot.lane.b32.xlu0 %v3622, 100
        %v4103 = vpop.permute.xlu0 %4102
        %4104 = vrot.lane.b32.xlu0 %v3623, 100
        %v4105 = vpop.permute.xlu0 %4104
        %4106 = vrot.lane.b32.xlu0 %v3624, 100
        %v4107 = vpop.permute.xlu0 %4106
        %4108 = vrot.lane.b32.xlu0 %v3625, 100
        %v4109 = vpop.permute.xlu0 %4108
        %4110 = vrot.lane.b32.xlu0 %v3626, 100
        %v4111 = vpop.permute.xlu0 %4110
        %v4112 = vsel %vm839, %v4103, %v4105
        %v4113 = vsel %vm839, %v4105, %v4107
        %v4114 = vsel %vm839, %v4107, %v4109
        %v4115 = vsel %vm839, %v4109, %v4111
        %v4122 = vsel %vm300, %v4101, 0
        %4124 = vmatprep.subr.bf16.mxu0 0
        %4125 = vmatpush1.bf16.msra.mxu0 0
        %4126 = vmatprep.subr.bf16.mxu0 0
        %4127 = vmatpush1.bf16.msra.mxu0 0
        %4128 = vmatprep.subr.bf16.mxu0 0
        %4129 = vmatpush1.bf16.msra.mxu0 0
        %4130 = vmatprep.subr.bf16.mxu0 0
        %4131 = vmatpush1.bf16.msra.mxu0 0
        %4132 = vmatprep.subr.bf16.mxu0 0
        %4133 = vmatpush1.bf16.msra.mxu0 0
        %4134 = vmatprep.subr.bf16.mxu0 0
        %4135 = vmatpush1.bf16.msra.mxu0 0
        %4136 = vmatprep.subr.bf16.mxu0 0
        %4137 = vmatpush1.bf16.msra.mxu0 0
        %4138 = vmatprep.subr.bf16.mxu0 %v4113
        %4139 = vmatpush1.bf16.msra.mxu0 %v4112
        %4140 = vmatprep.subr.bf16.mxu0 0
        %4141 = vmatpush2.bf16.msra.mxu0 0
        %4142 = vmatprep.subr.bf16.mxu0 0
        %4143 = vmatpush2.bf16.msra.mxu0 0
        %4144 = vmatprep.subr.bf16.mxu0 0
        %4145 = vmatpush2.bf16.msra.mxu0 0
        %4146 = vmatprep.subr.bf16.mxu0 0
        %4147 = vmatpush2.bf16.msra.mxu0 0
        %4148 = vmatprep.subr.bf16.mxu0 0
        %4149 = vmatpush2.bf16.msra.mxu0 0
        %4150 = vmatprep.subr.bf16.mxu0 0
        %4151 = vmatpush2.bf16.msra.mxu0 0
        %4152 = vmatprep.subr.bf16.mxu0 0
        %4153 = vmatpush2.bf16.msra.mxu0 0
        %4154 = vmatprep.subr.bf16.mxu0 0
        %4155 = vmatpush2.bf16.msra.mxu0 0
        %4156 = vmatprep.mubr.bf16.mxu0 0
        %4157 = vmatmul.mubr.bf16.gmra.mxu0 %v4122
        %v4158 = vpop.f32.mrf.mxu0
        %v4159 = vadd.f32 0.0, %v4158
        %v4160 = vpop.f32.mrf.mxu0
        %v4161 = vadd.f32 0.0, %v4160
        %v4162 = vpop.f32.mrf.mxu0
        %v4163 = vadd.f32 0.0, %v4162
        %v4164 = vpop.f32.mrf.mxu0
        %v4165 = vadd.f32 0.0, %v4164
        %4166 = vdwg.mxu0
        %4167 = vmatprep.subr.bf16.mxu0 0
        %4168 = vmatpush1.bf16.msra.mxu0 0
        %4169 = vmatprep.subr.bf16.mxu0 0
        %4170 = vmatpush1.bf16.msra.mxu0 0
        %4171 = vmatprep.subr.bf16.mxu0 0
        %4172 = vmatpush1.bf16.msra.mxu0 0
        %4173 = vmatprep.subr.bf16.mxu0 0
        %4174 = vmatpush1.bf16.msra.mxu0 0
        %4175 = vmatprep.subr.bf16.mxu0 0
        %4176 = vmatpush1.bf16.msra.mxu0 0
        %4177 = vmatprep.subr.bf16.mxu0 0
        %4178 = vmatpush1.bf16.msra.mxu0 0
        %4179 = vmatprep.subr.bf16.mxu0 0
        %4180 = vmatpush1.bf16.msra.mxu0 0
        %4181 = vmatprep.subr.bf16.mxu0 %v4115
        %4182 = vmatpush1.bf16.msra.mxu0 %v4114
        %4183 = vmatprep.subr.bf16.mxu0 0
        %4184 = vmatpush2.bf16.msra.mxu0 0
        %4185 = vmatprep.subr.bf16.mxu0 0
        %4186 = vmatpush2.bf16.msra.mxu0 0
        %4187 = vmatprep.subr.bf16.mxu0 0
        %4188 = vmatpush2.bf16.msra.mxu0 0
        %4189 = vmatprep.subr.bf16.mxu0 0
        %4190 = vmatpush2.bf16.msra.mxu0 0
        %4191 = vmatprep.subr.bf16.mxu0 0
        %4192 = vmatpush2.bf16.msra.mxu0 0
        %4193 = vmatprep.subr.bf16.mxu0 0
        %4194 = vmatpush2.bf16.msra.mxu0 0
        %4195 = vmatprep.subr.bf16.mxu0 0
        %4196 = vmatpush2.bf16.msra.mxu0 0
        %4197 = vmatprep.subr.bf16.mxu0 0
        %4198 = vmatpush2.bf16.msra.mxu0 0
        %4199 = vmatprep.mubr.bf16.mxu0 0
        %4200 = vmatmul.mubr.bf16.gmra.mxu0 %v4122
        %v4201 = vpop.f32.mrf.mxu0
        %v4202 = vadd.f32 0.0, %v4201
        %v4203 = vpop.f32.mrf.mxu0
        %v4204 = vadd.f32 0.0, %v4203
        %v4205 = vpop.f32.mrf.mxu0
        %v4206 = vadd.f32 0.0, %v4205
        %v4207 = vpop.f32.mrf.mxu0
        %v4208 = vadd.f32 0.0, %v4207
        %4209 = vdwg.mxu0
        %4210 = vmatprep.subr.bf16.mxu0 0
        %4211 = vmatpush1.bf16.msra.mxu0 0
        %4212 = vmatprep.subr.bf16.mxu0 0
        %4213 = vmatpush1.bf16.msra.mxu0 0
        %4214 = vmatprep.subr.bf16.mxu0 0
        %4215 = vmatpush1.bf16.msra.mxu0 0
        %4216 = vmatprep.subr.bf16.mxu0 0
        %4217 = vmatpush1.bf16.msra.mxu0 0
        %4218 = vmatprep.subr.bf16.mxu0 0
        %4219 = vmatpush1.bf16.msra.mxu0 0
        %4220 = vmatprep.subr.bf16.mxu0 0
        %4221 = vmatpush1.bf16.msra.mxu0 0
        %4222 = vmatprep.subr.bf16.mxu0 0
        %4223 = vmatpush1.bf16.msra.mxu0 0
        %4224 = vmatprep.subr.bf16.mxu0 0
        %4225 = vmatpush1.bf16.msra.mxu0 %v4111
        %4226 = vmatprep.subr.bf16.mxu0 0
        %4227 = vmatpush2.bf16.msra.mxu0 0
        %4228 = vmatprep.subr.bf16.mxu0 0
        %4229 = vmatpush2.bf16.msra.mxu0 0
        %4230 = vmatprep.subr.bf16.mxu0 0
        %4231 = vmatpush2.bf16.msra.mxu0 0
        %4232 = vmatprep.subr.bf16.mxu0 0
        %4233 = vmatpush2.bf16.msra.mxu0 0
        %4234 = vmatprep.subr.bf16.mxu0 0
        %4235 = vmatpush2.bf16.msra.mxu0 0
        %4236 = vmatprep.subr.bf16.mxu0 0
        %4237 = vmatpush2.bf16.msra.mxu0 0
        %4238 = vmatprep.subr.bf16.mxu0 0
        %4239 = vmatpush2.bf16.msra.mxu0 0
        %4240 = vmatprep.subr.bf16.mxu0 0
        %4241 = vmatpush2.bf16.msra.mxu0 0
        %4242 = vmatprep.mubr.bf16.mxu0 0
        %4243 = vmatmul.mubr.bf16.gmra.mxu0 %v4122
        %v4244 = vpop.f32.mrf.mxu0
        %v4245 = vadd.f32 0.0, %v4244
        %v4246 = vpop.f32.mrf.mxu0
        %v4247 = vpop.f32.mrf.mxu0
        %v4248 = vadd.f32 0.0, %v4247
        %v4249 = vpop.f32.mrf.mxu0
        %4250 = vdwg.mxu0
        %v4251 = vadd.f32 %v4084, %v4159
        %v4252 = vadd.f32 %v4085, %v4161
        %v4253 = vadd.f32 %v4086, %v4202
        %v4254 = vadd.f32 %v4087, %v4204
        %v4255 = vadd.f32 %v4088, %v4245
        %v4256 = vadd.f32 %v4089, %v4163
        %v4257 = vadd.f32 %v4090, %v4165
        %v4258 = vadd.f32 %v4091, %v4206
        %v4259 = vadd.f32 %v4092, %v4208
        %v4260 = vadd.f32 %v4093, %v4248
        %s4261 = scalar_lea.vmem [#allocation4], 176
        %v4262 = vld [vmem:[%s4261] sm:$0xf]
        %v4263 = vld [vmem:[%s4261 + $0x4] sm:$0xf]
        %v4266 = vunpack.c.l.b16 %v4262
        %v4267 = vunpack.c.l.b16 %v4263
        %v4268 = vpack.c.b16 %v4267, %v4266
        %4269 = vrot.lane.b32.xlu0 %v3622, 99
        %v4270 = vpop.permute.xlu0 %4269
        %4271 = vrot.lane.b32.xlu0 %v3623, 99
        %v4272 = vpop.permute.xlu0 %4271
        %4273 = vrot.lane.b32.xlu0 %v3624, 99
        %v4274 = vpop.permute.xlu0 %4273
        %4275 = vrot.lane.b32.xlu0 %v3625, 99
        %v4276 = vpop.permute.xlu0 %4275
        %4277 = vrot.lane.b32.xlu0 %v3626, 99
        %v4278 = vpop.permute.xlu0 %4277
        %v4279 = vsel %vm1015, %v4270, %v4272
        %v4280 = vsel %vm1015, %v4272, %v4274
        %v4281 = vsel %vm1015, %v4274, %v4276
        %v4282 = vsel %vm1015, %v4276, %v4278
        %v4289 = vsel %vm300, %v4268, 0
        %4291 = vmatprep.subr.bf16.mxu0 0
        %4292 = vmatpush1.bf16.msra.mxu0 0
        %4293 = vmatprep.subr.bf16.mxu0 0
        %4294 = vmatpush1.bf16.msra.mxu0 0
        %4295 = vmatprep.subr.bf16.mxu0 0
        %4296 = vmatpush1.bf16.msra.mxu0 0
        %4297 = vmatprep.subr.bf16.mxu0 0
        %4298 = vmatpush1.bf16.msra.mxu0 0
        %4299 = vmatprep.subr.bf16.mxu0 0
        %4300 = vmatpush1.bf16.msra.mxu0 0
        %4301 = vmatprep.subr.bf16.mxu0 0
        %4302 = vmatpush1.bf16.msra.mxu0 0
        %4303 = vmatprep.subr.bf16.mxu0 0
        %4304 = vmatpush1.bf16.msra.mxu0 0
        %4305 = vmatprep.subr.bf16.mxu0 %v4280
        %4306 = vmatpush1.bf16.msra.mxu0 %v4279
        %4307 = vmatprep.subr.bf16.mxu0 0
        %4308 = vmatpush2.bf16.msra.mxu0 0
        %4309 = vmatprep.subr.bf16.mxu0 0
        %4310 = vmatpush2.bf16.msra.mxu0 0
        %4311 = vmatprep.subr.bf16.mxu0 0
        %4312 = vmatpush2.bf16.msra.mxu0 0
        %4313 = vmatprep.subr.bf16.mxu0 0
        %4314 = vmatpush2.bf16.msra.mxu0 0
        %4315 = vmatprep.subr.bf16.mxu0 0
        %4316 = vmatpush2.bf16.msra.mxu0 0
        %4317 = vmatprep.subr.bf16.mxu0 0
        %4318 = vmatpush2.bf16.msra.mxu0 0
        %4319 = vmatprep.subr.bf16.mxu0 0
        %4320 = vmatpush2.bf16.msra.mxu0 0
        %4321 = vmatprep.subr.bf16.mxu0 0
        %4322 = vmatpush2.bf16.msra.mxu0 0
        %4323 = vmatprep.mubr.bf16.mxu0 0
        %4324 = vmatmul.mubr.bf16.gmra.mxu0 %v4289
        %v4325 = vpop.f32.mrf.mxu0
        %v4326 = vadd.f32 0.0, %v4325
        %v4327 = vpop.f32.mrf.mxu0
        %v4328 = vadd.f32 0.0, %v4327
        %v4329 = vpop.f32.mrf.mxu0
        %v4330 = vadd.f32 0.0, %v4329
        %v4331 = vpop.f32.mrf.mxu0
        %v4332 = vadd.f32 0.0, %v4331
        %4333 = vdwg.mxu0
        %4334 = vmatprep.subr.bf16.mxu0 0
        %4335 = vmatpush1.bf16.msra.mxu0 0
        %4336 = vmatprep.subr.bf16.mxu0 0
        %4337 = vmatpush1.bf16.msra.mxu0 0
        %4338 = vmatprep.subr.bf16.mxu0 0
        %4339 = vmatpush1.bf16.msra.mxu0 0
        %4340 = vmatprep.subr.bf16.mxu0 0
        %4341 = vmatpush1.bf16.msra.mxu0 0
        %4342 = vmatprep.subr.bf16.mxu0 0
        %4343 = vmatpush1.bf16.msra.mxu0 0
        %4344 = vmatprep.subr.bf16.mxu0 0
        %4345 = vmatpush1.bf16.msra.mxu0 0
        %4346 = vmatprep.subr.bf16.mxu0 0
        %4347 = vmatpush1.bf16.msra.mxu0 0
        %4348 = vmatprep.subr.bf16.mxu0 %v4282
        %4349 = vmatpush1.bf16.msra.mxu0 %v4281
        %4350 = vmatprep.subr.bf16.mxu0 0
        %4351 = vmatpush2.bf16.msra.mxu0 0
        %4352 = vmatprep.subr.bf16.mxu0 0
        %4353 = vmatpush2.bf16.msra.mxu0 0
        %4354 = vmatprep.subr.bf16.mxu0 0
        %4355 = vmatpush2.bf16.msra.mxu0 0
        %4356 = vmatprep.subr.bf16.mxu0 0
        %4357 = vmatpush2.bf16.msra.mxu0 0
        %4358 = vmatprep.subr.bf16.mxu0 0
        %4359 = vmatpush2.bf16.msra.mxu0 0
        %4360 = vmatprep.subr.bf16.mxu0 0
        %4361 = vmatpush2.bf16.msra.mxu0 0
        %4362 = vmatprep.subr.bf16.mxu0 0
        %4363 = vmatpush2.bf16.msra.mxu0 0
        %4364 = vmatprep.subr.bf16.mxu0 0
        %4365 = vmatpush2.bf16.msra.mxu0 0
        %4366 = vmatprep.mubr.bf16.mxu0 0
        %4367 = vmatmul.mubr.bf16.gmra.mxu0 %v4289
        %v4368 = vpop.f32.mrf.mxu0
        %v4369 = vadd.f32 0.0, %v4368
        %v4370 = vpop.f32.mrf.mxu0
        %v4371 = vadd.f32 0.0, %v4370
        %v4372 = vpop.f32.mrf.mxu0
        %v4373 = vadd.f32 0.0, %v4372
        %v4374 = vpop.f32.mrf.mxu0
        %v4375 = vadd.f32 0.0, %v4374
        %4376 = vdwg.mxu0
        %4377 = vmatprep.subr.bf16.mxu0 0
        %4378 = vmatpush1.bf16.msra.mxu0 0
        %4379 = vmatprep.subr.bf16.mxu0 0
        %4380 = vmatpush1.bf16.msra.mxu0 0
        %4381 = vmatprep.subr.bf16.mxu0 0
        %4382 = vmatpush1.bf16.msra.mxu0 0
        %4383 = vmatprep.subr.bf16.mxu0 0
        %4384 = vmatpush1.bf16.msra.mxu0 0
        %4385 = vmatprep.subr.bf16.mxu0 0
        %4386 = vmatpush1.bf16.msra.mxu0 0
        %4387 = vmatprep.subr.bf16.mxu0 0
        %4388 = vmatpush1.bf16.msra.mxu0 0
        %4389 = vmatprep.subr.bf16.mxu0 0
        %4390 = vmatpush1.bf16.msra.mxu0 0
        %4391 = vmatprep.subr.bf16.mxu0 0
        %4392 = vmatpush1.bf16.msra.mxu0 %v4278
        %4393 = vmatprep.subr.bf16.mxu0 0
        %4394 = vmatpush2.bf16.msra.mxu0 0
        %4395 = vmatprep.subr.bf16.mxu0 0
        %4396 = vmatpush2.bf16.msra.mxu0 0
        %4397 = vmatprep.subr.bf16.mxu0 0
        %4398 = vmatpush2.bf16.msra.mxu0 0
        %4399 = vmatprep.subr.bf16.mxu0 0
        %4400 = vmatpush2.bf16.msra.mxu0 0
        %4401 = vmatprep.subr.bf16.mxu0 0
        %4402 = vmatpush2.bf16.msra.mxu0 0
        %4403 = vmatprep.subr.bf16.mxu0 0
        %4404 = vmatpush2.bf16.msra.mxu0 0
        %4405 = vmatprep.subr.bf16.mxu0 0
        %4406 = vmatpush2.bf16.msra.mxu0 0
        %4407 = vmatprep.subr.bf16.mxu0 0
        %4408 = vmatpush2.bf16.msra.mxu0 0
        %4409 = vmatprep.mubr.bf16.mxu0 0
        %4410 = vmatmul.mubr.bf16.gmra.mxu0 %v4289
        %v4411 = vpop.f32.mrf.mxu0
        %v4412 = vadd.f32 0.0, %v4411
        %v4413 = vpop.f32.mrf.mxu0
        %v4414 = vpop.f32.mrf.mxu0
        %v4415 = vadd.f32 0.0, %v4414
        %v4416 = vpop.f32.mrf.mxu0
        %4417 = vdwg.mxu0
        %v4418 = vadd.f32 %v4251, %v4326
        %v4419 = vadd.f32 %v4252, %v4328
        %v4420 = vadd.f32 %v4253, %v4369
        %v4421 = vadd.f32 %v4254, %v4371
        %v4422 = vadd.f32 %v4255, %v4412
        %v4423 = vadd.f32 %v4256, %v4330
        %v4424 = vadd.f32 %v4257, %v4332
        %v4425 = vadd.f32 %v4258, %v4373
        %v4426 = vadd.f32 %v4259, %v4375
        %v4427 = vadd.f32 %v4260, %v4415
        %s4428 = scalar_lea.vmem [#allocation4], 184
        %v4429 = vld [vmem:[%s4428] sm:$0xf]
        %v4430 = vld [vmem:[%s4428 + $0x4] sm:$0xf]
        %v4433 = vunpack.c.l.b16 %v4429
        %v4434 = vunpack.c.l.b16 %v4430
        %v4435 = vpack.c.b16 %v4434, %v4433
        %4436 = vrot.lane.b32.xlu0 %v3622, 98
        %v4437 = vpop.permute.xlu0 %4436
        %4438 = vrot.lane.b32.xlu0 %v3623, 98
        %v4439 = vpop.permute.xlu0 %4438
        %4440 = vrot.lane.b32.xlu0 %v3624, 98
        %v4441 = vpop.permute.xlu0 %4440
        %4442 = vrot.lane.b32.xlu0 %v3625, 98
        %v4443 = vpop.permute.xlu0 %4442
        %4444 = vrot.lane.b32.xlu0 %v3626, 98
        %v4445 = vpop.permute.xlu0 %4444
        %v4446 = vsel %vm1191, %v4437, %v4439
        %v4447 = vsel %vm1191, %v4439, %v4441
        %v4448 = vsel %vm1191, %v4441, %v4443
        %v4449 = vsel %vm1191, %v4443, %v4445
        %v4456 = vsel %vm300, %v4435, 0
        %4458 = vmatprep.subr.bf16.mxu0 0
        %4459 = vmatpush1.bf16.msra.mxu0 0
        %4460 = vmatprep.subr.bf16.mxu0 0
        %4461 = vmatpush1.bf16.msra.mxu0 0
        %4462 = vmatprep.subr.bf16.mxu0 0
        %4463 = vmatpush1.bf16.msra.mxu0 0
        %4464 = vmatprep.subr.bf16.mxu0 0
        %4465 = vmatpush1.bf16.msra.mxu0 0
        %4466 = vmatprep.subr.bf16.mxu0 0
        %4467 = vmatpush1.bf16.msra.mxu0 0
        %4468 = vmatprep.subr.bf16.mxu0 0
        %4469 = vmatpush1.bf16.msra.mxu0 0
        %4470 = vmatprep.subr.bf16.mxu0 0
        %4471 = vmatpush1.bf16.msra.mxu0 0
        %4472 = vmatprep.subr.bf16.mxu0 %v4447
        %4473 = vmatpush1.bf16.msra.mxu0 %v4446
        %4474 = vmatprep.subr.bf16.mxu0 0
        %4475 = vmatpush2.bf16.msra.mxu0 0
        %4476 = vmatprep.subr.bf16.mxu0 0
        %4477 = vmatpush2.bf16.msra.mxu0 0
        %4478 = vmatprep.subr.bf16.mxu0 0
        %4479 = vmatpush2.bf16.msra.mxu0 0
        %4480 = vmatprep.subr.bf16.mxu0 0
        %4481 = vmatpush2.bf16.msra.mxu0 0
        %4482 = vmatprep.subr.bf16.mxu0 0
        %4483 = vmatpush2.bf16.msra.mxu0 0
        %4484 = vmatprep.subr.bf16.mxu0 0
        %4485 = vmatpush2.bf16.msra.mxu0 0
        %4486 = vmatprep.subr.bf16.mxu0 0
        %4487 = vmatpush2.bf16.msra.mxu0 0
        %4488 = vmatprep.subr.bf16.mxu0 0
        %4489 = vmatpush2.bf16.msra.mxu0 0
        %4490 = vmatprep.mubr.bf16.mxu0 0
        %4491 = vmatmul.mubr.bf16.gmra.mxu0 %v4456
        %v4492 = vpop.f32.mrf.mxu0
        %v4493 = vadd.f32 0.0, %v4492
        %v4494 = vpop.f32.mrf.mxu0
        %v4495 = vadd.f32 0.0, %v4494
        %v4496 = vpop.f32.mrf.mxu0
        %v4497 = vadd.f32 0.0, %v4496
        %v4498 = vpop.f32.mrf.mxu0
        %v4499 = vadd.f32 0.0, %v4498
        %4500 = vdwg.mxu0
        %4501 = vmatprep.subr.bf16.mxu0 0
        %4502 = vmatpush1.bf16.msra.mxu0 0
        %4503 = vmatprep.subr.bf16.mxu0 0
        %4504 = vmatpush1.bf16.msra.mxu0 0
        %4505 = vmatprep.subr.bf16.mxu0 0
        %4506 = vmatpush1.bf16.msra.mxu0 0
        %4507 = vmatprep.subr.bf16.mxu0 0
        %4508 = vmatpush1.bf16.msra.mxu0 0
        %4509 = vmatprep.subr.bf16.mxu0 0
        %4510 = vmatpush1.bf16.msra.mxu0 0
        %4511 = vmatprep.subr.bf16.mxu0 0
        %4512 = vmatpush1.bf16.msra.mxu0 0
        %4513 = vmatprep.subr.bf16.mxu0 0
        %4514 = vmatpush1.bf16.msra.mxu0 0
        %4515 = vmatprep.subr.bf16.mxu0 %v4449
        %4516 = vmatpush1.bf16.msra.mxu0 %v4448
        %4517 = vmatprep.subr.bf16.mxu0 0
        %4518 = vmatpush2.bf16.msra.mxu0 0
        %4519 = vmatprep.subr.bf16.mxu0 0
        %4520 = vmatpush2.bf16.msra.mxu0 0
        %4521 = vmatprep.subr.bf16.mxu0 0
        %4522 = vmatpush2.bf16.msra.mxu0 0
        %4523 = vmatprep.subr.bf16.mxu0 0
        %4524 = vmatpush2.bf16.msra.mxu0 0
        %4525 = vmatprep.subr.bf16.mxu0 0
        %4526 = vmatpush2.bf16.msra.mxu0 0
        %4527 = vmatprep.subr.bf16.mxu0 0
        %4528 = vmatpush2.bf16.msra.mxu0 0
        %4529 = vmatprep.subr.bf16.mxu0 0
        %4530 = vmatpush2.bf16.msra.mxu0 0
        %4531 = vmatprep.subr.bf16.mxu0 0
        %4532 = vmatpush2.bf16.msra.mxu0 0
        %4533 = vmatprep.mubr.bf16.mxu0 0
        %4534 = vmatmul.mubr.bf16.gmra.mxu0 %v4456
        %v4535 = vpop.f32.mrf.mxu0
        %v4536 = vadd.f32 0.0, %v4535
        %v4537 = vpop.f32.mrf.mxu0
        %v4538 = vadd.f32 0.0, %v4537
        %v4539 = vpop.f32.mrf.mxu0
        %v4540 = vadd.f32 0.0, %v4539
        %v4541 = vpop.f32.mrf.mxu0
        %v4542 = vadd.f32 0.0, %v4541
        %4543 = vdwg.mxu0
        %4544 = vmatprep.subr.bf16.mxu0 0
        %4545 = vmatpush1.bf16.msra.mxu0 0
        %4546 = vmatprep.subr.bf16.mxu0 0
        %4547 = vmatpush1.bf16.msra.mxu0 0
        %4548 = vmatprep.subr.bf16.mxu0 0
        %4549 = vmatpush1.bf16.msra.mxu0 0
        %4550 = vmatprep.subr.bf16.mxu0 0
        %4551 = vmatpush1.bf16.msra.mxu0 0
        %4552 = vmatprep.subr.bf16.mxu0 0
        %4553 = vmatpush1.bf16.msra.mxu0 0
        %4554 = vmatprep.subr.bf16.mxu0 0
        %4555 = vmatpush1.bf16.msra.mxu0 0
        %4556 = vmatprep.subr.bf16.mxu0 0
        %4557 = vmatpush1.bf16.msra.mxu0 0
        %4558 = vmatprep.subr.bf16.mxu0 0
        %4559 = vmatpush1.bf16.msra.mxu0 %v4445
        %4560 = vmatprep.subr.bf16.mxu0 0
        %4561 = vmatpush2.bf16.msra.mxu0 0
        %4562 = vmatprep.subr.bf16.mxu0 0
        %4563 = vmatpush2.bf16.msra.mxu0 0
        %4564 = vmatprep.subr.bf16.mxu0 0
        %4565 = vmatpush2.bf16.msra.mxu0 0
        %4566 = vmatprep.subr.bf16.mxu0 0
        %4567 = vmatpush2.bf16.msra.mxu0 0
        %4568 = vmatprep.subr.bf16.mxu0 0
        %4569 = vmatpush2.bf16.msra.mxu0 0
        %4570 = vmatprep.subr.bf16.mxu0 0
        %4571 = vmatpush2.bf16.msra.mxu0 0
        %4572 = vmatprep.subr.bf16.mxu0 0
        %4573 = vmatpush2.bf16.msra.mxu0 0
        %4574 = vmatprep.subr.bf16.mxu0 0
        %4575 = vmatpush2.bf16.msra.mxu0 0
        %4576 = vmatprep.mubr.bf16.mxu0 0
        %4577 = vmatmul.mubr.bf16.gmra.mxu0 %v4456
        %v4578 = vpop.f32.mrf.mxu0
        %v4579 = vadd.f32 0.0, %v4578
        %v4580 = vpop.f32.mrf.mxu0
        %v4581 = vpop.f32.mrf.mxu0
        %v4582 = vadd.f32 0.0, %v4581
        %v4583 = vpop.f32.mrf.mxu0
        %4584 = vdwg.mxu0
        %v4585 = vadd.f32 %v4418, %v4493
        %v4586 = vadd.f32 %v4419, %v4495
        %v4587 = vadd.f32 %v4420, %v4536
        %v4588 = vadd.f32 %v4421, %v4538
        %v4589 = vadd.f32 %v4422, %v4579
        %v4590 = vadd.f32 %v4423, %v4497
        %v4591 = vadd.f32 %v4424, %v4499
        %v4592 = vadd.f32 %v4425, %v4540
        %v4593 = vadd.f32 %v4426, %v4542
        %v4594 = vadd.f32 %v4427, %v4582
        %v4595 = vld [vmem:[#allocation2] sm:$0xff]
        %v4596 = vld [vmem:[#allocation2 + $0x8] sm:$0xff]
        %v4597 = vld [vmem:[#allocation2 + $0x10] sm:$0xff]
        %v4598 = vld [vmem:[#allocation2 + $0x18] sm:$0xff]
        %v4599 = vld [vmem:[#allocation2 + $0x20] sm:$0xff]
        %v4600 = vld [vmem:[#allocation2 + $0x28] sm:$0xff]
        %v4601 = vld [vmem:[#allocation2 + $0x38] sm:$0xff]
        %v4602 = vld [vmem:[#allocation2 + $0x40] sm:$0xff]
        %v4603 = vld [vmem:[#allocation2 + $0x48] sm:$0xff]
        %v4604 = vld [vmem:[#allocation2 + $0x50] sm:$0xff]
        %v4605 = vld [vmem:[#allocation2 + $0x58] sm:$0xff]
        %v4606 = vld [vmem:[#allocation2 + $0x60] sm:$0xff]
        %v4607 = vpack.c.bf16 %v4601, %v4595
        %v4608 = vpack.c.bf16 %v4602, %v4596
        %v4609 = vpack.c.bf16 %v4603, %v4597
        %v4610 = vpack.c.bf16 %v4604, %v4598
        %v4611 = vpack.c.bf16 %v4605, %v4599
        %v4612 = vpack.c.bf16 %v4606, %v4600
        %s4613 = scalar_lea.vmem [#allocation4], 192
        %v4614 = vld [vmem:[%s4613] sm:$0xf]
        %v4615 = vld [vmem:[%s4613 + $0x4] sm:$0xf]
        %v4618 = vunpack.c.l.b16 %v4614
        %v4619 = vunpack.c.l.b16 %v4615
        %v4620 = vpack.c.b16 %v4619, %v4618
        %4627 = vrot.lane.b32.xlu0 %v4607, 72
        %v4628 = vpop.permute.xlu0 %4627
        %4629 = vrot.lane.b32.xlu0 %v4608, 72
        %v4630 = vpop.permute.xlu0 %4629
        %4631 = vrot.lane.b32.xlu0 %v4609, 72
        %v4632 = vpop.permute.xlu0 %4631
        %4633 = vrot.lane.b32.xlu0 %v4610, 72
        %v4634 = vpop.permute.xlu0 %4633
        %4635 = vrot.lane.b32.xlu0 %v4611, 72
        %v4636 = vpop.permute.xlu0 %4635
        %4637 = vrot.lane.b32.xlu0 %v4612, 72
        %v4638 = vpop.permute.xlu0 %4637
        %v4639 = vsel %vm1397, %v4628, %v4630
        %v4640 = vsel %vm1397, %v4630, %v4632
        %v4641 = vsel %vm1397, %v4632, %v4634
        %v4642 = vsel %vm1397, %v4634, %v4636
        %v4643 = vsel %vm1397, %v4636, %v4638
        %v4650 = vsel %vm300, %v4620, 0
        %4652 = vmatprep.subr.bf16.mxu0 0
        %4653 = vmatpush1.bf16.msra.mxu0 0
        %4654 = vmatprep.subr.bf16.mxu0 0
        %4655 = vmatpush1.bf16.msra.mxu0 0
        %4656 = vmatprep.subr.bf16.mxu0 0
        %4657 = vmatpush1.bf16.msra.mxu0 0
        %4658 = vmatprep.subr.bf16.mxu0 0
        %4659 = vmatpush1.bf16.msra.mxu0 0
        %4660 = vmatprep.subr.bf16.mxu0 0
        %4661 = vmatpush1.bf16.msra.mxu0 0
        %4662 = vmatprep.subr.bf16.mxu0 0
        %4663 = vmatpush1.bf16.msra.mxu0 0
        %4664 = vmatprep.subr.bf16.mxu0 0
        %4665 = vmatpush1.bf16.msra.mxu0 0
        %4666 = vmatprep.subr.bf16.mxu0 %v4640
        %4667 = vmatpush1.bf16.msra.mxu0 %v4639
        %4668 = vmatprep.subr.bf16.mxu0 0
        %4669 = vmatpush2.bf16.msra.mxu0 0
        %4670 = vmatprep.subr.bf16.mxu0 0
        %4671 = vmatpush2.bf16.msra.mxu0 0
        %4672 = vmatprep.subr.bf16.mxu0 0
        %4673 = vmatpush2.bf16.msra.mxu0 0
        %4674 = vmatprep.subr.bf16.mxu0 0
        %4675 = vmatpush2.bf16.msra.mxu0 0
        %4676 = vmatprep.subr.bf16.mxu0 0
        %4677 = vmatpush2.bf16.msra.mxu0 0
        %4678 = vmatprep.subr.bf16.mxu0 0
        %4679 = vmatpush2.bf16.msra.mxu0 0
        %4680 = vmatprep.subr.bf16.mxu0 0
        %4681 = vmatpush2.bf16.msra.mxu0 0
        %4682 = vmatprep.subr.bf16.mxu0 0
        %4683 = vmatpush2.bf16.msra.mxu0 0
        %4684 = vmatprep.mubr.bf16.mxu0 0
        %4685 = vmatmul.mubr.bf16.gmra.mxu0 %v4650
        %v4686 = vpop.f32.mrf.mxu0
        %v4687 = vadd.f32 0.0, %v4686
        %v4688 = vpop.f32.mrf.mxu0
        %v4689 = vadd.f32 0.0, %v4688
        %v4690 = vpop.f32.mrf.mxu0
        %v4691 = vadd.f32 0.0, %v4690
        %v4692 = vpop.f32.mrf.mxu0
        %v4693 = vadd.f32 0.0, %v4692
        %4694 = vdwg.mxu0
        %4695 = vmatprep.subr.bf16.mxu0 0
        %4696 = vmatpush1.bf16.msra.mxu0 0
        %4697 = vmatprep.subr.bf16.mxu0 0
        %4698 = vmatpush1.bf16.msra.mxu0 0
        %4699 = vmatprep.subr.bf16.mxu0 0
        %4700 = vmatpush1.bf16.msra.mxu0 0
        %4701 = vmatprep.subr.bf16.mxu0 0
        %4702 = vmatpush1.bf16.msra.mxu0 0
        %4703 = vmatprep.subr.bf16.mxu0 0
        %4704 = vmatpush1.bf16.msra.mxu0 0
        %4705 = vmatprep.subr.bf16.mxu0 0
        %4706 = vmatpush1.bf16.msra.mxu0 0
        %4707 = vmatprep.subr.bf16.mxu0 0
        %4708 = vmatpush1.bf16.msra.mxu0 0
        %4709 = vmatprep.subr.bf16.mxu0 %v4642
        %4710 = vmatpush1.bf16.msra.mxu0 %v4641
        %4711 = vmatprep.subr.bf16.mxu0 0
        %4712 = vmatpush2.bf16.msra.mxu0 0
        %4713 = vmatprep.subr.bf16.mxu0 0
        %4714 = vmatpush2.bf16.msra.mxu0 0
        %4715 = vmatprep.subr.bf16.mxu0 0
        %4716 = vmatpush2.bf16.msra.mxu0 0
        %4717 = vmatprep.subr.bf16.mxu0 0
        %4718 = vmatpush2.bf16.msra.mxu0 0
        %4719 = vmatprep.subr.bf16.mxu0 0
        %4720 = vmatpush2.bf16.msra.mxu0 0
        %4721 = vmatprep.subr.bf16.mxu0 0
        %4722 = vmatpush2.bf16.msra.mxu0 0
        %4723 = vmatprep.subr.bf16.mxu0 0
        %4724 = vmatpush2.bf16.msra.mxu0 0
        %4725 = vmatprep.subr.bf16.mxu0 0
        %4726 = vmatpush2.bf16.msra.mxu0 0
        %4727 = vmatprep.mubr.bf16.mxu0 0
        %4728 = vmatmul.mubr.bf16.gmra.mxu0 %v4650
        %v4729 = vpop.f32.mrf.mxu0
        %v4730 = vadd.f32 0.0, %v4729
        %v4731 = vpop.f32.mrf.mxu0
        %v4732 = vadd.f32 0.0, %v4731
        %v4733 = vpop.f32.mrf.mxu0
        %v4734 = vadd.f32 0.0, %v4733
        %v4735 = vpop.f32.mrf.mxu0
        %v4736 = vadd.f32 0.0, %v4735
        %4737 = vdwg.mxu0
        %4738 = vmatprep.subr.bf16.mxu0 0
        %4739 = vmatpush1.bf16.msra.mxu0 0
        %4740 = vmatprep.subr.bf16.mxu0 0
        %4741 = vmatpush1.bf16.msra.mxu0 0
        %4742 = vmatprep.subr.bf16.mxu0 0
        %4743 = vmatpush1.bf16.msra.mxu0 0
        %4744 = vmatprep.subr.bf16.mxu0 0
        %4745 = vmatpush1.bf16.msra.mxu0 0
        %4746 = vmatprep.subr.bf16.mxu0 0
        %4747 = vmatpush1.bf16.msra.mxu0 0
        %4748 = vmatprep.subr.bf16.mxu0 0
        %4749 = vmatpush1.bf16.msra.mxu0 0
        %4750 = vmatprep.subr.bf16.mxu0 0
        %4751 = vmatpush1.bf16.msra.mxu0 0
        %4752 = vmatprep.subr.bf16.mxu0 0
        %4753 = vmatpush1.bf16.msra.mxu0 %v4643
        %4754 = vmatprep.subr.bf16.mxu0 0
        %4755 = vmatpush2.bf16.msra.mxu0 0
        %4756 = vmatprep.subr.bf16.mxu0 0
        %4757 = vmatpush2.bf16.msra.mxu0 0
        %4758 = vmatprep.subr.bf16.mxu0 0
        %4759 = vmatpush2.bf16.msra.mxu0 0
        %4760 = vmatprep.subr.bf16.mxu0 0
        %4761 = vmatpush2.bf16.msra.mxu0 0
        %4762 = vmatprep.subr.bf16.mxu0 0
        %4763 = vmatpush2.bf16.msra.mxu0 0
        %4764 = vmatprep.subr.bf16.mxu0 0
        %4765 = vmatpush2.bf16.msra.mxu0 0
        %4766 = vmatprep.subr.bf16.mxu0 0
        %4767 = vmatpush2.bf16.msra.mxu0 0
        %4768 = vmatprep.subr.bf16.mxu0 0
        %4769 = vmatpush2.bf16.msra.mxu0 0
        %4770 = vmatprep.mubr.bf16.mxu0 0
        %4771 = vmatmul.mubr.bf16.gmra.mxu0 %v4650
        %v4772 = vpop.f32.mrf.mxu0
        %v4773 = vadd.f32 0.0, %v4772
        %v4774 = vpop.f32.mrf.mxu0
        %v4775 = vpop.f32.mrf.mxu0
        %v4776 = vadd.f32 0.0, %v4775
        %v4777 = vpop.f32.mrf.mxu0
        %4778 = vdwg.mxu0
        %v4779 = vadd.f32 %v4585, %v4687
        %v4780 = vadd.f32 %v4586, %v4689
        %v4781 = vadd.f32 %v4587, %v4730
        %v4782 = vadd.f32 %v4588, %v4732
        %v4783 = vadd.f32 %v4589, %v4773
        %v4784 = vadd.f32 %v4590, %v4691
        %v4785 = vadd.f32 %v4591, %v4693
        %v4786 = vadd.f32 %v4592, %v4734
        %v4787 = vadd.f32 %v4593, %v4736
        %v4788 = vadd.f32 %v4594, %v4776
        %s4789 = scalar_lea.vmem [#allocation4], 200
        %v4790 = vld [vmem:[%s4789] sm:$0xf]
        %v4791 = vld [vmem:[%s4789 + $0x4] sm:$0xf]
        %v4794 = vunpack.c.l.b16 %v4790
        %v4795 = vunpack.c.l.b16 %v4791
        %v4796 = vpack.c.b16 %v4795, %v4794
        %4797 = vrot.lane.b32.xlu0 %v4607, 71
        %v4798 = vpop.permute.xlu0 %4797
        %4799 = vrot.lane.b32.xlu0 %v4608, 71
        %v4800 = vpop.permute.xlu0 %4799
        %4801 = vrot.lane.b32.xlu0 %v4609, 71
        %v4802 = vpop.permute.xlu0 %4801
        %4803 = vrot.lane.b32.xlu0 %v4610, 71
        %v4804 = vpop.permute.xlu0 %4803
        %4805 = vrot.lane.b32.xlu0 %v4611, 71
        %v4806 = vpop.permute.xlu0 %4805
        %4807 = vrot.lane.b32.xlu0 %v4612, 71
        %v4808 = vpop.permute.xlu0 %4807
        %v4809 = vsel %vm1576, %v4798, %v4800
        %v4810 = vsel %vm1576, %v4800, %v4802
        %v4811 = vsel %vm1576, %v4802, %v4804
        %v4812 = vsel %vm1576, %v4804, %v4806
        %v4813 = vsel %vm1576, %v4806, %v4808
        %v4820 = vsel %vm300, %v4796, 0
        %4822 = vmatprep.subr.bf16.mxu0 0
        %4823 = vmatpush1.bf16.msra.mxu0 0
        %4824 = vmatprep.subr.bf16.mxu0 0
        %4825 = vmatpush1.bf16.msra.mxu0 0
        %4826 = vmatprep.subr.bf16.mxu0 0
        %4827 = vmatpush1.bf16.msra.mxu0 0
        %4828 = vmatprep.subr.bf16.mxu0 0
        %4829 = vmatpush1.bf16.msra.mxu0 0
        %4830 = vmatprep.subr.bf16.mxu0 0
        %4831 = vmatpush1.bf16.msra.mxu0 0
        %4832 = vmatprep.subr.bf16.mxu0 0
        %4833 = vmatpush1.bf16.msra.mxu0 0
        %4834 = vmatprep.subr.bf16.mxu0 0
        %4835 = vmatpush1.bf16.msra.mxu0 0
        %4836 = vmatprep.subr.bf16.mxu0 %v4810
        %4837 = vmatpush1.bf16.msra.mxu0 %v4809
        %4838 = vmatprep.subr.bf16.mxu0 0
        %4839 = vmatpush2.bf16.msra.mxu0 0
        %4840 = vmatprep.subr.bf16.mxu0 0
        %4841 = vmatpush2.bf16.msra.mxu0 0
        %4842 = vmatprep.subr.bf16.mxu0 0
        %4843 = vmatpush2.bf16.msra.mxu0 0
        %4844 = vmatprep.subr.bf16.mxu0 0
        %4845 = vmatpush2.bf16.msra.mxu0 0
        %4846 = vmatprep.subr.bf16.mxu0 0
        %4847 = vmatpush2.bf16.msra.mxu0 0
        %4848 = vmatprep.subr.bf16.mxu0 0
        %4849 = vmatpush2.bf16.msra.mxu0 0
        %4850 = vmatprep.subr.bf16.mxu0 0
        %4851 = vmatpush2.bf16.msra.mxu0 0
        %4852 = vmatprep.subr.bf16.mxu0 0
        %4853 = vmatpush2.bf16.msra.mxu0 0
        %4854 = vmatprep.mubr.bf16.mxu0 0
        %4855 = vmatmul.mubr.bf16.gmra.mxu0 %v4820
        %v4856 = vpop.f32.mrf.mxu0
        %v4857 = vadd.f32 0.0, %v4856
        %v4858 = vpop.f32.mrf.mxu0
        %v4859 = vadd.f32 0.0, %v4858
        %v4860 = vpop.f32.mrf.mxu0
        %v4861 = vadd.f32 0.0, %v4860
        %v4862 = vpop.f32.mrf.mxu0
        %v4863 = vadd.f32 0.0, %v4862
        %4864 = vdwg.mxu0
        %4865 = vmatprep.subr.bf16.mxu0 0
        %4866 = vmatpush1.bf16.msra.mxu0 0
        %4867 = vmatprep.subr.bf16.mxu0 0
        %4868 = vmatpush1.bf16.msra.mxu0 0
        %4869 = vmatprep.subr.bf16.mxu0 0
        %4870 = vmatpush1.bf16.msra.mxu0 0
        %4871 = vmatprep.subr.bf16.mxu0 0
        %4872 = vmatpush1.bf16.msra.mxu0 0
        %4873 = vmatprep.subr.bf16.mxu0 0
        %4874 = vmatpush1.bf16.msra.mxu0 0
        %4875 = vmatprep.subr.bf16.mxu0 0
        %4876 = vmatpush1.bf16.msra.mxu0 0
        %4877 = vmatprep.subr.bf16.mxu0 0
        %4878 = vmatpush1.bf16.msra.mxu0 0
        %4879 = vmatprep.subr.bf16.mxu0 %v4812
        %4880 = vmatpush1.bf16.msra.mxu0 %v4811
        %4881 = vmatprep.subr.bf16.mxu0 0
        %4882 = vmatpush2.bf16.msra.mxu0 0
        %4883 = vmatprep.subr.bf16.mxu0 0
        %4884 = vmatpush2.bf16.msra.mxu0 0
        %4885 = vmatprep.subr.bf16.mxu0 0
        %4886 = vmatpush2.bf16.msra.mxu0 0
        %4887 = vmatprep.subr.bf16.mxu0 0
        %4888 = vmatpush2.bf16.msra.mxu0 0
        %4889 = vmatprep.subr.bf16.mxu0 0
        %4890 = vmatpush2.bf16.msra.mxu0 0
        %4891 = vmatprep.subr.bf16.mxu0 0
        %4892 = vmatpush2.bf16.msra.mxu0 0
        %4893 = vmatprep.subr.bf16.mxu0 0
        %4894 = vmatpush2.bf16.msra.mxu0 0
        %4895 = vmatprep.subr.bf16.mxu0 0
        %4896 = vmatpush2.bf16.msra.mxu0 0
        %4897 = vmatprep.mubr.bf16.mxu0 0
        %4898 = vmatmul.mubr.bf16.gmra.mxu0 %v4820
        %v4899 = vpop.f32.mrf.mxu0
        %v4900 = vadd.f32 0.0, %v4899
        %v4901 = vpop.f32.mrf.mxu0
        %v4902 = vadd.f32 0.0, %v4901
        %v4903 = vpop.f32.mrf.mxu0
        %v4904 = vadd.f32 0.0, %v4903
        %v4905 = vpop.f32.mrf.mxu0
        %v4906 = vadd.f32 0.0, %v4905
        %4907 = vdwg.mxu0
        %4908 = vmatprep.subr.bf16.mxu0 0
        %4909 = vmatpush1.bf16.msra.mxu0 0
        %4910 = vmatprep.subr.bf16.mxu0 0
        %4911 = vmatpush1.bf16.msra.mxu0 0
        %4912 = vmatprep.subr.bf16.mxu0 0
        %4913 = vmatpush1.bf16.msra.mxu0 0
        %4914 = vmatprep.subr.bf16.mxu0 0
        %4915 = vmatpush1.bf16.msra.mxu0 0
        %4916 = vmatprep.subr.bf16.mxu0 0
        %4917 = vmatpush1.bf16.msra.mxu0 0
        %4918 = vmatprep.subr.bf16.mxu0 0
        %4919 = vmatpush1.bf16.msra.mxu0 0
        %4920 = vmatprep.subr.bf16.mxu0 0
        %4921 = vmatpush1.bf16.msra.mxu0 0
        %4922 = vmatprep.subr.bf16.mxu0 0
        %4923 = vmatpush1.bf16.msra.mxu0 %v4813
        %4924 = vmatprep.subr.bf16.mxu0 0
        %4925 = vmatpush2.bf16.msra.mxu0 0
        %4926 = vmatprep.subr.bf16.mxu0 0
        %4927 = vmatpush2.bf16.msra.mxu0 0
        %4928 = vmatprep.subr.bf16.mxu0 0
        %4929 = vmatpush2.bf16.msra.mxu0 0
        %4930 = vmatprep.subr.bf16.mxu0 0
        %4931 = vmatpush2.bf16.msra.mxu0 0
        %4932 = vmatprep.subr.bf16.mxu0 0
        %4933 = vmatpush2.bf16.msra.mxu0 0
        %4934 = vmatprep.subr.bf16.mxu0 0
        %4935 = vmatpush2.bf16.msra.mxu0 0
        %4936 = vmatprep.subr.bf16.mxu0 0
        %4937 = vmatpush2.bf16.msra.mxu0 0
        %4938 = vmatprep.subr.bf16.mxu0 0
        %4939 = vmatpush2.bf16.msra.mxu0 0
        %4940 = vmatprep.mubr.bf16.mxu0 0
        %4941 = vmatmul.mubr.bf16.gmra.mxu0 %v4820
        %v4942 = vpop.f32.mrf.mxu0
        %v4943 = vadd.f32 0.0, %v4942
        %v4944 = vpop.f32.mrf.mxu0
        %v4945 = vpop.f32.mrf.mxu0
        %v4946 = vadd.f32 0.0, %v4945
        %v4947 = vpop.f32.mrf.mxu0
        %4948 = vdwg.mxu0
        %v4949 = vadd.f32 %v4779, %v4857
        %v4950 = vadd.f32 %v4780, %v4859
        %v4951 = vadd.f32 %v4781, %v4900
        %v4952 = vadd.f32 %v4782, %v4902
        %v4953 = vadd.f32 %v4783, %v4943
        %v4954 = vadd.f32 %v4784, %v4861
        %v4955 = vadd.f32 %v4785, %v4863
        %v4956 = vadd.f32 %v4786, %v4904
        %v4957 = vadd.f32 %v4787, %v4906
        %v4958 = vadd.f32 %v4788, %v4946
        %s4959 = scalar_lea.vmem [#allocation4], 208
        %v4960 = vld [vmem:[%s4959] sm:$0xf]
        %v4961 = vld [vmem:[%s4959 + $0x4] sm:$0xf]
        %v4964 = vunpack.c.l.b16 %v4960
        %v4965 = vunpack.c.l.b16 %v4961
        %v4966 = vpack.c.b16 %v4965, %v4964
        %4967 = vrot.lane.b32.xlu0 %v4607, 70
        %v4968 = vpop.permute.xlu0 %4967
        %4969 = vrot.lane.b32.xlu0 %v4608, 70
        %v4970 = vpop.permute.xlu0 %4969
        %4971 = vrot.lane.b32.xlu0 %v4609, 70
        %v4972 = vpop.permute.xlu0 %4971
        %4973 = vrot.lane.b32.xlu0 %v4610, 70
        %v4974 = vpop.permute.xlu0 %4973
        %4975 = vrot.lane.b32.xlu0 %v4611, 70
        %v4976 = vpop.permute.xlu0 %4975
        %4977 = vrot.lane.b32.xlu0 %v4612, 70
        %v4978 = vpop.permute.xlu0 %4977
        %v4979 = vsel %vm1755, %v4968, %v4970
        %v4980 = vsel %vm1755, %v4970, %v4972
        %v4981 = vsel %vm1755, %v4972, %v4974
        %v4982 = vsel %vm1755, %v4974, %v4976
        %v4983 = vsel %vm1755, %v4976, %v4978
        %v4990 = vsel %vm300, %v4966, 0
        %4992 = vmatprep.subr.bf16.mxu0 0
        %4993 = vmatpush1.bf16.msra.mxu0 0
        %4994 = vmatprep.subr.bf16.mxu0 0
        %4995 = vmatpush1.bf16.msra.mxu0 0
        %4996 = vmatprep.subr.bf16.mxu0 0
        %4997 = vmatpush1.bf16.msra.mxu0 0
        %4998 = vmatprep.subr.bf16.mxu0 0
        %4999 = vmatpush1.bf16.msra.mxu0 0
        %5000 = vmatprep.subr.bf16.mxu0 0
        %5001 = vmatpush1.bf16.msra.mxu0 0
        %5002 = vmatprep.subr.bf16.mxu0 0
        %5003 = vmatpush1.bf16.msra.mxu0 0
        %5004 = vmatprep.subr.bf16.mxu0 0
        %5005 = vmatpush1.bf16.msra.mxu0 0
        %5006 = vmatprep.subr.bf16.mxu0 %v4980
        %5007 = vmatpush1.bf16.msra.mxu0 %v4979
        %5008 = vmatprep.subr.bf16.mxu0 0
        %5009 = vmatpush2.bf16.msra.mxu0 0
        %5010 = vmatprep.subr.bf16.mxu0 0
        %5011 = vmatpush2.bf16.msra.mxu0 0
        %5012 = vmatprep.subr.bf16.mxu0 0
        %5013 = vmatpush2.bf16.msra.mxu0 0
        %5014 = vmatprep.subr.bf16.mxu0 0
        %5015 = vmatpush2.bf16.msra.mxu0 0
        %5016 = vmatprep.subr.bf16.mxu0 0
        %5017 = vmatpush2.bf16.msra.mxu0 0
        %5018 = vmatprep.subr.bf16.mxu0 0
        %5019 = vmatpush2.bf16.msra.mxu0 0
        %5020 = vmatprep.subr.bf16.mxu0 0
        %5021 = vmatpush2.bf16.msra.mxu0 0
        %5022 = vmatprep.subr.bf16.mxu0 0
        %5023 = vmatpush2.bf16.msra.mxu0 0
        %5024 = vmatprep.mubr.bf16.mxu0 0
        %5025 = vmatmul.mubr.bf16.gmra.mxu0 %v4990
        %v5026 = vpop.f32.mrf.mxu0
        %v5027 = vadd.f32 0.0, %v5026
        %v5028 = vpop.f32.mrf.mxu0
        %v5029 = vadd.f32 0.0, %v5028
        %v5030 = vpop.f32.mrf.mxu0
        %v5031 = vadd.f32 0.0, %v5030
        %v5032 = vpop.f32.mrf.mxu0
        %v5033 = vadd.f32 0.0, %v5032
        %5034 = vdwg.mxu0
        %5035 = vmatprep.subr.bf16.mxu0 0
        %5036 = vmatpush1.bf16.msra.mxu0 0
        %5037 = vmatprep.subr.bf16.mxu0 0
        %5038 = vmatpush1.bf16.msra.mxu0 0
        %5039 = vmatprep.subr.bf16.mxu0 0
        %5040 = vmatpush1.bf16.msra.mxu0 0
        %5041 = vmatprep.subr.bf16.mxu0 0
        %5042 = vmatpush1.bf16.msra.mxu0 0
        %5043 = vmatprep.subr.bf16.mxu0 0
        %5044 = vmatpush1.bf16.msra.mxu0 0
        %5045 = vmatprep.subr.bf16.mxu0 0
        %5046 = vmatpush1.bf16.msra.mxu0 0
        %5047 = vmatprep.subr.bf16.mxu0 0
        %5048 = vmatpush1.bf16.msra.mxu0 0
        %5049 = vmatprep.subr.bf16.mxu0 %v4982
        %5050 = vmatpush1.bf16.msra.mxu0 %v4981
        %5051 = vmatprep.subr.bf16.mxu0 0
        %5052 = vmatpush2.bf16.msra.mxu0 0
        %5053 = vmatprep.subr.bf16.mxu0 0
        %5054 = vmatpush2.bf16.msra.mxu0 0
        %5055 = vmatprep.subr.bf16.mxu0 0
        %5056 = vmatpush2.bf16.msra.mxu0 0
        %5057 = vmatprep.subr.bf16.mxu0 0
        %5058 = vmatpush2.bf16.msra.mxu0 0
        %5059 = vmatprep.subr.bf16.mxu0 0
        %5060 = vmatpush2.bf16.msra.mxu0 0
        %5061 = vmatprep.subr.bf16.mxu0 0
        %5062 = vmatpush2.bf16.msra.mxu0 0
        %5063 = vmatprep.subr.bf16.mxu0 0
        %5064 = vmatpush2.bf16.msra.mxu0 0
        %5065 = vmatprep.subr.bf16.mxu0 0
        %5066 = vmatpush2.bf16.msra.mxu0 0
        %5067 = vmatprep.mubr.bf16.mxu0 0
        %5068 = vmatmul.mubr.bf16.gmra.mxu0 %v4990
        %v5069 = vpop.f32.mrf.mxu0
        %v5070 = vadd.f32 0.0, %v5069
        %v5071 = vpop.f32.mrf.mxu0
        %v5072 = vadd.f32 0.0, %v5071
        %v5073 = vpop.f32.mrf.mxu0
        %v5074 = vadd.f32 0.0, %v5073
        %v5075 = vpop.f32.mrf.mxu0
        %v5076 = vadd.f32 0.0, %v5075
        %5077 = vdwg.mxu0
        %5078 = vmatprep.subr.bf16.mxu0 0
        %5079 = vmatpush1.bf16.msra.mxu0 0
        %5080 = vmatprep.subr.bf16.mxu0 0
        %5081 = vmatpush1.bf16.msra.mxu0 0
        %5082 = vmatprep.subr.bf16.mxu0 0
        %5083 = vmatpush1.bf16.msra.mxu0 0
        %5084 = vmatprep.subr.bf16.mxu0 0
        %5085 = vmatpush1.bf16.msra.mxu0 0
        %5086 = vmatprep.subr.bf16.mxu0 0
        %5087 = vmatpush1.bf16.msra.mxu0 0
        %5088 = vmatprep.subr.bf16.mxu0 0
        %5089 = vmatpush1.bf16.msra.mxu0 0
        %5090 = vmatprep.subr.bf16.mxu0 0
        %5091 = vmatpush1.bf16.msra.mxu0 0
        %5092 = vmatprep.subr.bf16.mxu0 0
        %5093 = vmatpush1.bf16.msra.mxu0 %v4983
        %5094 = vmatprep.subr.bf16.mxu0 0
        %5095 = vmatpush2.bf16.msra.mxu0 0
        %5096 = vmatprep.subr.bf16.mxu0 0
        %5097 = vmatpush2.bf16.msra.mxu0 0
        %5098 = vmatprep.subr.bf16.mxu0 0
        %5099 = vmatpush2.bf16.msra.mxu0 0
        %5100 = vmatprep.subr.bf16.mxu0 0
        %5101 = vmatpush2.bf16.msra.mxu0 0
        %5102 = vmatprep.subr.bf16.mxu0 0
        %5103 = vmatpush2.bf16.msra.mxu0 0
        %5104 = vmatprep.subr.bf16.mxu0 0
        %5105 = vmatpush2.bf16.msra.mxu0 0
        %5106 = vmatprep.subr.bf16.mxu0 0
        %5107 = vmatpush2.bf16.msra.mxu0 0
        %5108 = vmatprep.subr.bf16.mxu0 0
        %5109 = vmatpush2.bf16.msra.mxu0 0
        %5110 = vmatprep.mubr.bf16.mxu0 0
        %5111 = vmatmul.mubr.bf16.gmra.mxu0 %v4990
        %v5112 = vpop.f32.mrf.mxu0
        %v5113 = vadd.f32 0.0, %v5112
        %v5114 = vpop.f32.mrf.mxu0
        %v5115 = vpop.f32.mrf.mxu0
        %v5116 = vadd.f32 0.0, %v5115
        %v5117 = vpop.f32.mrf.mxu0
        %5118 = vdwg.mxu0
        %v5119 = vadd.f32 %v4949, %v5027
        %v5120 = vadd.f32 %v4950, %v5029
        %v5121 = vadd.f32 %v4951, %v5070
        %v5122 = vadd.f32 %v4952, %v5072
        %v5123 = vadd.f32 %v4953, %v5113
        %v5124 = vadd.f32 %v4954, %v5031
        %v5125 = vadd.f32 %v4955, %v5033
        %v5126 = vadd.f32 %v4956, %v5074
        %v5127 = vadd.f32 %v4957, %v5076
        %v5128 = vadd.f32 %v4958, %v5116
        %v5129 = vmax.f32 %v5119, 0.0
        %v5130 = vmax.f32 %v5120, 0.0
        %v5131 = vmax.f32 %v5121, 0.0
        %v5132 = vmax.f32 %v5122, 0.0
        %v5133 = vmax.f32 %v5123, 0.0
        %v5134 = vmax.f32 %v5124, 0.0
        %v5135 = vmax.f32 %v5125, 0.0
        %v5136 = vmax.f32 %v5126, 0.0
        %v5137 = vmax.f32 %v5127, 0.0
        %v5138 = vmax.f32 %v5128, 0.0
        %s5139 = scalar_lea.vmem [#allocation6], 32
        %v5140 = vld [vmem:[%s5139] sm:$0xff]
        %v5141 = vld [vmem:[%s5139 + $0x8] sm:$0xff]
        %5143 = vset.pattern.permute.xlu0 0
        %5144 = vperm.xlu0 %5143, %v5140
        %v5145 = vpop.permute.xlu0 %5144
        %5148 = vset.pattern.permute.xlu0 0
        %5149 = vperm.xlu0 %5148, %v5141
        %v5150 = vpop.permute.xlu0 %5149
        %v5152 = vmul.f32 %v5129, %v5145
        %v5153 = vmul.f32 %v5130, %v5145
        %v5154 = vmul.f32 %v5131, %v5145
        %v5155 = vmul.f32 %v5132, %v5145
        %v5156 = vmul.f32 %v5133, %v5145
        %v5157 = vmul.f32 %v5134, %v5150
        %v5158 = vmul.f32 %v5135, %v5150
        %v5159 = vmul.f32 %v5136, %v5150
        %v5160 = vmul.f32 %v5137, %v5150
        %v5161 = vmul.f32 %v5138, %v5150
        %s5162 = scalar_lea.vmem %s3, 32
        %v5163 = vld [vmem:[%s5162] sm:$0xff]
        %v5164 = vld [vmem:[%s5162 + $0x8] sm:$0xff]
        %5166 = vset.pattern.permute.xlu0 0
        %5167 = vperm.xlu0 %5166, %v5163
        %v5168 = vpop.permute.xlu0 %5167
        %5171 = vset.pattern.permute.xlu0 0
        %5172 = vperm.xlu0 %5171, %v5164
        %v5173 = vpop.permute.xlu0 %5172
        %v5175 = vadd.f32 %v5152, %v5168
        %v5176 = vadd.f32 %v5153, %v5168
        %v5177 = vadd.f32 %v5154, %v5168
        %v5178 = vadd.f32 %v5155, %v5168
        %v5179 = vadd.f32 %v5156, %v5168
        %v5180 = vadd.f32 %v5157, %v5173
        %v5181 = vadd.f32 %v5158, %v5173
        %v5182 = vadd.f32 %v5159, %v5173
        %v5183 = vadd.f32 %v5160, %v5173
        %v5184 = vadd.f32 %v5161, %v5173
        %5185 = vst [vmem:[#allocation3] sm:$0xff] %v5175
        %5186 = vst [vmem:[#allocation3 + $0x8] sm:$0xff] %v5176
        %5187 = vst [vmem:[#allocation3 + $0x10] sm:$0xff] %v5177
        %5188 = vst [vmem:[#allocation3 + $0x18] sm:$0xff] %v5178
        %vm5189 = vcmask 801792
        %5190 = vst.msk [vmem:[#allocation3 + $0x20] sm:$0xff] %vm5189, %v5179
        %5191 = vst [vmem:[#allocation3 + $0x38] sm:$0xff] %v5180
        %5192 = vst [vmem:[#allocation3 + $0x40] sm:$0xff] %v5181
        %5193 = vst [vmem:[#allocation3 + $0x48] sm:$0xff] %v5182
        %5194 = vst [vmem:[#allocation3 + $0x50] sm:$0xff] %v5183
        %5195 = vst.msk [vmem:[#allocation3 + $0x58] sm:$0xff] %vm5189, %v5184
        %v5196 = vld [vmem:[#allocation3] sm:$0xff]
        %v5197 = vld [vmem:[#allocation3 + $0x8] sm:$0xff]
        %v5198 = vld [vmem:[#allocation3 + $0x10] sm:$0xff]
        %v5199 = vld [vmem:[#allocation3 + $0x18] sm:$0xff]
        %v5200 = vld [vmem:[#allocation3 + $0x20] sm:$0xff]
        %v5201 = vld [vmem:[#allocation3 + $0x38] sm:$0xff]
        %v5202 = vld [vmem:[#allocation3 + $0x40] sm:$0xff]
        %v5203 = vld [vmem:[#allocation3 + $0x48] sm:$0xff]
        %v5204 = vld [vmem:[#allocation3 + $0x50] sm:$0xff]
        %v5205 = vld [vmem:[#allocation3 + $0x58] sm:$0xff]
        %v5206 = vpack.c.bf16 %v5201, %v5196
        %v5207 = vpack.c.bf16 %v5202, %v5197
        %v5208 = vpack.c.bf16 %v5203, %v5198
        %v5209 = vpack.c.bf16 %v5204, %v5199
        %v5210 = vpack.c.bf16 %v5205, %v5200
        %s5211 = scalar_lea.vmem [#allocation4], 216
        %v5212 = vld [vmem:[%s5211] sm:$0xf]
        %v5213 = vld [vmem:[%s5211 + $0x4] sm:$0xf]
        %s5214 = scalar_lea.vmem [#allocation4], 224
        %v5215 = vld [vmem:[%s5214] sm:$0xf]
        %v5216 = vld [vmem:[%s5214 + $0x4] sm:$0xf]
        %v5219 = vunpack.c.l.b16 %v5215
        %v5220 = vunpack.c.l.b16 %v5216
        %v5221 = vpack.c.b16 %v5220, %v5219
        %5227 = vrot.lane.b32.xlu0 %v5206, 127
        %v5228 = vpop.permute.xlu0 %5227
        %5229 = vrot.lane.b32.xlu0 %v5207, 127
        %v5230 = vpop.permute.xlu0 %5229
        %5231 = vrot.lane.b32.xlu0 %v5208, 127
        %v5232 = vpop.permute.xlu0 %5231
        %5233 = vrot.lane.b32.xlu0 %v5209, 127
        %v5234 = vpop.permute.xlu0 %5233
        %5235 = vrot.lane.b32.xlu0 %v5210, 127
        %v5236 = vpop.permute.xlu0 %5235
        %v5237 = vsel %vm362, %v5228, %v5230
        %v5238 = vsel %vm362, %v5230, %v5232
        %v5239 = vsel %vm362, %v5232, %v5234
        %v5240 = vsel %vm362, %v5234, %v5236
        %v5247 = vsel %vm300, %v5221, 0
        %5249 = vmatprep.subr.bf16.mxu0 0
        %5250 = vmatpush1.bf16.msra.mxu0 0
        %5251 = vmatprep.subr.bf16.mxu0 0
        %5252 = vmatpush1.bf16.msra.mxu0 0
        %5253 = vmatprep.subr.bf16.mxu0 0
        %5254 = vmatpush1.bf16.msra.mxu0 0
        %5255 = vmatprep.subr.bf16.mxu0 0
        %5256 = vmatpush1.bf16.msra.mxu0 0
        %5257 = vmatprep.subr.bf16.mxu0 0
        %5258 = vmatpush1.bf16.msra.mxu0 0
        %5259 = vmatprep.subr.bf16.mxu0 0
        %5260 = vmatpush1.bf16.msra.mxu0 0
        %5261 = vmatprep.subr.bf16.mxu0 0
        %5262 = vmatpush1.bf16.msra.mxu0 0
        %5263 = vmatprep.subr.bf16.mxu0 %v5238
        %5264 = vmatpush1.bf16.msra.mxu0 %v5237
        %5265 = vmatprep.subr.bf16.mxu0 0
        %5266 = vmatpush2.bf16.msra.mxu0 0
        %5267 = vmatprep.subr.bf16.mxu0 0
        %5268 = vmatpush2.bf16.msra.mxu0 0
        %5269 = vmatprep.subr.bf16.mxu0 0
        %5270 = vmatpush2.bf16.msra.mxu0 0
        %5271 = vmatprep.subr.bf16.mxu0 0
        %5272 = vmatpush2.bf16.msra.mxu0 0
        %5273 = vmatprep.subr.bf16.mxu0 0
        %5274 = vmatpush2.bf16.msra.mxu0 0
        %5275 = vmatprep.subr.bf16.mxu0 0
        %5276 = vmatpush2.bf16.msra.mxu0 0
        %5277 = vmatprep.subr.bf16.mxu0 0
        %5278 = vmatpush2.bf16.msra.mxu0 0
        %5279 = vmatprep.subr.bf16.mxu0 0
        %5280 = vmatpush2.bf16.msra.mxu0 0
        %5281 = vmatprep.mubr.bf16.mxu0 0
        %5282 = vmatmul.mubr.bf16.gmra.mxu0 %v5247
        %v5283 = vpop.f32.mrf.mxu0
        %v5284 = vadd.f32 0.0, %v5283
        %v5285 = vpop.f32.mrf.mxu0
        %v5286 = vadd.f32 0.0, %v5285
        %v5287 = vpop.f32.mrf.mxu0
        %v5288 = vadd.f32 0.0, %v5287
        %v5289 = vpop.f32.mrf.mxu0
        %v5290 = vadd.f32 0.0, %v5289
        %5291 = vdwg.mxu0
        %5292 = vmatprep.subr.bf16.mxu0 0
        %5293 = vmatpush1.bf16.msra.mxu0 0
        %5294 = vmatprep.subr.bf16.mxu0 0
        %5295 = vmatpush1.bf16.msra.mxu0 0
        %5296 = vmatprep.subr.bf16.mxu0 0
        %5297 = vmatpush1.bf16.msra.mxu0 0
        %5298 = vmatprep.subr.bf16.mxu0 0
        %5299 = vmatpush1.bf16.msra.mxu0 0
        %5300 = vmatprep.subr.bf16.mxu0 0
        %5301 = vmatpush1.bf16.msra.mxu0 0
        %5302 = vmatprep.subr.bf16.mxu0 0
        %5303 = vmatpush1.bf16.msra.mxu0 0
        %5304 = vmatprep.subr.bf16.mxu0 0
        %5305 = vmatpush1.bf16.msra.mxu0 0
        %5306 = vmatprep.subr.bf16.mxu0 %v5240
        %5307 = vmatpush1.bf16.msra.mxu0 %v5239
        %5308 = vmatprep.subr.bf16.mxu0 0
        %5309 = vmatpush2.bf16.msra.mxu0 0
        %5310 = vmatprep.subr.bf16.mxu0 0
        %5311 = vmatpush2.bf16.msra.mxu0 0
        %5312 = vmatprep.subr.bf16.mxu0 0
        %5313 = vmatpush2.bf16.msra.mxu0 0
        %5314 = vmatprep.subr.bf16.mxu0 0
        %5315 = vmatpush2.bf16.msra.mxu0 0
        %5316 = vmatprep.subr.bf16.mxu0 0
        %5317 = vmatpush2.bf16.msra.mxu0 0
        %5318 = vmatprep.subr.bf16.mxu0 0
        %5319 = vmatpush2.bf16.msra.mxu0 0
        %5320 = vmatprep.subr.bf16.mxu0 0
        %5321 = vmatpush2.bf16.msra.mxu0 0
        %5322 = vmatprep.subr.bf16.mxu0 0
        %5323 = vmatpush2.bf16.msra.mxu0 0
        %5324 = vmatprep.mubr.bf16.mxu0 0
        %5325 = vmatmul.mubr.bf16.gmra.mxu0 %v5247
        %v5326 = vpop.f32.mrf.mxu0
        %v5327 = vadd.f32 0.0, %v5326
        %v5328 = vpop.f32.mrf.mxu0
        %v5329 = vadd.f32 0.0, %v5328
        %v5330 = vpop.f32.mrf.mxu0
        %v5331 = vadd.f32 0.0, %v5330
        %v5332 = vpop.f32.mrf.mxu0
        %v5333 = vadd.f32 0.0, %v5332
        %5334 = vdwg.mxu0
        %5335 = vmatprep.subr.bf16.mxu0 0
        %5336 = vmatpush1.bf16.msra.mxu0 0
        %5337 = vmatprep.subr.bf16.mxu0 0
        %5338 = vmatpush1.bf16.msra.mxu0 0
        %5339 = vmatprep.subr.bf16.mxu0 0
        %5340 = vmatpush1.bf16.msra.mxu0 0
        %5341 = vmatprep.subr.bf16.mxu0 0
        %5342 = vmatpush1.bf16.msra.mxu0 0
        %5343 = vmatprep.subr.bf16.mxu0 0
        %5344 = vmatpush1.bf16.msra.mxu0 0
        %5345 = vmatprep.subr.bf16.mxu0 0
        %5346 = vmatpush1.bf16.msra.mxu0 0
        %5347 = vmatprep.subr.bf16.mxu0 0
        %5348 = vmatpush1.bf16.msra.mxu0 0
        %5349 = vmatprep.subr.bf16.mxu0 0
        %5350 = vmatpush1.bf16.msra.mxu0 %v5236
        %5351 = vmatprep.subr.bf16.mxu0 0
        %5352 = vmatpush2.bf16.msra.mxu0 0
        %5353 = vmatprep.subr.bf16.mxu0 0
        %5354 = vmatpush2.bf16.msra.mxu0 0
        %5355 = vmatprep.subr.bf16.mxu0 0
        %5356 = vmatpush2.bf16.msra.mxu0 0
        %5357 = vmatprep.subr.bf16.mxu0 0
        %5358 = vmatpush2.bf16.msra.mxu0 0
        %5359 = vmatprep.subr.bf16.mxu0 0
        %5360 = vmatpush2.bf16.msra.mxu0 0
        %5361 = vmatprep.subr.bf16.mxu0 0
        %5362 = vmatpush2.bf16.msra.mxu0 0
        %5363 = vmatprep.subr.bf16.mxu0 0
        %5364 = vmatpush2.bf16.msra.mxu0 0
        %5365 = vmatprep.subr.bf16.mxu0 0
        %5366 = vmatpush2.bf16.msra.mxu0 0
        %5367 = vmatprep.mubr.bf16.mxu0 0
        %5368 = vmatmul.mubr.bf16.gmra.mxu0 %v5247
        %v5369 = vpop.f32.mrf.mxu0
        %v5370 = vadd.f32 0.0, %v5369
        %v5371 = vpop.f32.mrf.mxu0
        %v5372 = vpop.f32.mrf.mxu0
        %v5373 = vadd.f32 0.0, %v5372
        %v5374 = vpop.f32.mrf.mxu0
        %5375 = vdwg.mxu0
        %v5378 = vunpack.c.l.b16 %v5212
        %v5379 = vunpack.c.l.b16 %v5213
        %v5380 = vpack.c.b16 %v5379, %v5378
        %v5382 = vsel %vm300, %v5380, 0
        %5384 = vmatprep.subr.bf16.mxu0 0
        %5385 = vmatpush1.bf16.msra.mxu0 0
        %5386 = vmatprep.subr.bf16.mxu0 0
        %5387 = vmatpush1.bf16.msra.mxu0 0
        %5388 = vmatprep.subr.bf16.mxu0 0
        %5389 = vmatpush1.bf16.msra.mxu0 0
        %5390 = vmatprep.subr.bf16.mxu0 0
        %5391 = vmatpush1.bf16.msra.mxu0 0
        %5392 = vmatprep.subr.bf16.mxu0 0
        %5393 = vmatpush1.bf16.msra.mxu0 0
        %5394 = vmatprep.subr.bf16.mxu0 0
        %5395 = vmatpush1.bf16.msra.mxu0 0
        %5396 = vmatprep.subr.bf16.mxu0 0
        %5397 = vmatpush1.bf16.msra.mxu0 0
        %5398 = vmatprep.subr.bf16.mxu0 %v5207
        %5399 = vmatpush1.bf16.msra.mxu0 %v5206
        %5400 = vmatprep.subr.bf16.mxu0 0
        %5401 = vmatpush2.bf16.msra.mxu0 0
        %5402 = vmatprep.subr.bf16.mxu0 0
        %5403 = vmatpush2.bf16.msra.mxu0 0
        %5404 = vmatprep.subr.bf16.mxu0 0
        %5405 = vmatpush2.bf16.msra.mxu0 0
        %5406 = vmatprep.subr.bf16.mxu0 0
        %5407 = vmatpush2.bf16.msra.mxu0 0
        %5408 = vmatprep.subr.bf16.mxu0 0
        %5409 = vmatpush2.bf16.msra.mxu0 0
        %5410 = vmatprep.subr.bf16.mxu0 0
        %5411 = vmatpush2.bf16.msra.mxu0 0
        %5412 = vmatprep.subr.bf16.mxu0 0
        %5413 = vmatpush2.bf16.msra.mxu0 0
        %5414 = vmatprep.subr.bf16.mxu0 0
        %5415 = vmatpush2.bf16.msra.mxu0 0
        %5416 = vmatprep.mubr.bf16.mxu0 0
        %5417 = vmatmul.mubr.bf16.gmra.mxu0 %v5382
        %v5418 = vpop.f32.mrf.mxu0
        %v5419 = vadd.f32 %v5284, %v5418
        %v5420 = vpop.f32.mrf.mxu0
        %v5421 = vadd.f32 %v5286, %v5420
        %v5422 = vpop.f32.mrf.mxu0
        %v5423 = vadd.f32 %v5288, %v5422
        %v5424 = vpop.f32.mrf.mxu0
        %v5425 = vadd.f32 %v5290, %v5424
        %5426 = vdwg.mxu0
        %5427 = vmatprep.subr.bf16.mxu0 0
        %5428 = vmatpush1.bf16.msra.mxu0 0
        %5429 = vmatprep.subr.bf16.mxu0 0
        %5430 = vmatpush1.bf16.msra.mxu0 0
        %5431 = vmatprep.subr.bf16.mxu0 0
        %5432 = vmatpush1.bf16.msra.mxu0 0
        %5433 = vmatprep.subr.bf16.mxu0 0
        %5434 = vmatpush1.bf16.msra.mxu0 0
        %5435 = vmatprep.subr.bf16.mxu0 0
        %5436 = vmatpush1.bf16.msra.mxu0 0
        %5437 = vmatprep.subr.bf16.mxu0 0
        %5438 = vmatpush1.bf16.msra.mxu0 0
        %5439 = vmatprep.subr.bf16.mxu0 0
        %5440 = vmatpush1.bf16.msra.mxu0 0
        %5441 = vmatprep.subr.bf16.mxu0 %v5209
        %5442 = vmatpush1.bf16.msra.mxu0 %v5208
        %5443 = vmatprep.subr.bf16.mxu0 0
        %5444 = vmatpush2.bf16.msra.mxu0 0
        %5445 = vmatprep.subr.bf16.mxu0 0
        %5446 = vmatpush2.bf16.msra.mxu0 0
        %5447 = vmatprep.subr.bf16.mxu0 0
        %5448 = vmatpush2.bf16.msra.mxu0 0
        %5449 = vmatprep.subr.bf16.mxu0 0
        %5450 = vmatpush2.bf16.msra.mxu0 0
        %5451 = vmatprep.subr.bf16.mxu0 0
        %5452 = vmatpush2.bf16.msra.mxu0 0
        %5453 = vmatprep.subr.bf16.mxu0 0
        %5454 = vmatpush2.bf16.msra.mxu0 0
        %5455 = vmatprep.subr.bf16.mxu0 0
        %5456 = vmatpush2.bf16.msra.mxu0 0
        %5457 = vmatprep.subr.bf16.mxu0 0
        %5458 = vmatpush2.bf16.msra.mxu0 0
        %5459 = vmatprep.mubr.bf16.mxu0 0
        %5460 = vmatmul.mubr.bf16.gmra.mxu0 %v5382
        %v5461 = vpop.f32.mrf.mxu0
        %v5462 = vadd.f32 %v5327, %v5461
        %v5463 = vpop.f32.mrf.mxu0
        %v5464 = vadd.f32 %v5329, %v5463
        %v5465 = vpop.f32.mrf.mxu0
        %v5466 = vadd.f32 %v5331, %v5465
        %v5467 = vpop.f32.mrf.mxu0
        %v5468 = vadd.f32 %v5333, %v5467
        %5469 = vdwg.mxu0
        %5470 = vmatprep.subr.bf16.mxu0 0
        %5471 = vmatpush1.bf16.msra.mxu0 0
        %5472 = vmatprep.subr.bf16.mxu0 0
        %5473 = vmatpush1.bf16.msra.mxu0 0
        %5474 = vmatprep.subr.bf16.mxu0 0
        %5475 = vmatpush1.bf16.msra.mxu0 0
        %5476 = vmatprep.subr.bf16.mxu0 0
        %5477 = vmatpush1.bf16.msra.mxu0 0
        %5478 = vmatprep.subr.bf16.mxu0 0
        %5479 = vmatpush1.bf16.msra.mxu0 0
        %5480 = vmatprep.subr.bf16.mxu0 0
        %5481 = vmatpush1.bf16.msra.mxu0 0
        %5482 = vmatprep.subr.bf16.mxu0 0
        %5483 = vmatpush1.bf16.msra.mxu0 0
        %5484 = vmatprep.subr.bf16.mxu0 0
        %5485 = vmatpush1.bf16.msra.mxu0 %v5210
        %5486 = vmatprep.subr.bf16.mxu0 0
        %5487 = vmatpush2.bf16.msra.mxu0 0
        %5488 = vmatprep.subr.bf16.mxu0 0
        %5489 = vmatpush2.bf16.msra.mxu0 0
        %5490 = vmatprep.subr.bf16.mxu0 0
        %5491 = vmatpush2.bf16.msra.mxu0 0
        %5492 = vmatprep.subr.bf16.mxu0 0
        %5493 = vmatpush2.bf16.msra.mxu0 0
        %5494 = vmatprep.subr.bf16.mxu0 0
        %5495 = vmatpush2.bf16.msra.mxu0 0
        %5496 = vmatprep.subr.bf16.mxu0 0
        %5497 = vmatpush2.bf16.msra.mxu0 0
        %5498 = vmatprep.subr.bf16.mxu0 0
        %5499 = vmatpush2.bf16.msra.mxu0 0
        %5500 = vmatprep.subr.bf16.mxu0 0
        %5501 = vmatpush2.bf16.msra.mxu0 0
        %5502 = vmatprep.mubr.bf16.mxu0 0
        %5503 = vmatmul.mubr.bf16.gmra.mxu0 %v5382
        %v5504 = vpop.f32.mrf.mxu0
        %v5505 = vadd.f32 %v5370, %v5504
        %v5506 = vpop.f32.mrf.mxu0
        %v5507 = vpop.f32.mrf.mxu0
        %v5508 = vadd.f32 %v5373, %v5507
        %v5509 = vpop.f32.mrf.mxu0
        %5510 = vdwg.mxu0
        %s5511 = scalar_lea.vmem [#allocation4], 232
        %v5512 = vld [vmem:[%s5511] sm:$0xf]
        %v5513 = vld [vmem:[%s5511 + $0x4] sm:$0xf]
        %v5516 = vunpack.c.l.b16 %v5512
        %v5517 = vunpack.c.l.b16 %v5513
        %v5518 = vpack.c.b16 %v5517, %v5516
        %5519 = vrot.lane.b32.xlu0 %v5206, 126
        %v5520 = vpop.permute.xlu0 %5519
        %5521 = vrot.lane.b32.xlu0 %v5207, 126
        %v5522 = vpop.permute.xlu0 %5521
        %5523 = vrot.lane.b32.xlu0 %v5208, 126
        %v5524 = vpop.permute.xlu0 %5523
        %5525 = vrot.lane.b32.xlu0 %v5209, 126
        %v5526 = vpop.permute.xlu0 %5525
        %5527 = vrot.lane.b32.xlu0 %v5210, 126
        %v5528 = vpop.permute.xlu0 %5527
        %v5529 = vsel %vm663, %v5520, %v5522
        %v5530 = vsel %vm663, %v5522, %v5524
        %v5531 = vsel %vm663, %v5524, %v5526
        %v5532 = vsel %vm663, %v5526, %v5528
        %v5539 = vsel %vm300, %v5518, 0
        %5541 = vmatprep.subr.bf16.mxu0 0
        %5542 = vmatpush1.bf16.msra.mxu0 0
        %5543 = vmatprep.subr.bf16.mxu0 0
        %5544 = vmatpush1.bf16.msra.mxu0 0
        %5545 = vmatprep.subr.bf16.mxu0 0
        %5546 = vmatpush1.bf16.msra.mxu0 0
        %5547 = vmatprep.subr.bf16.mxu0 0
        %5548 = vmatpush1.bf16.msra.mxu0 0
        %5549 = vmatprep.subr.bf16.mxu0 0
        %5550 = vmatpush1.bf16.msra.mxu0 0
        %5551 = vmatprep.subr.bf16.mxu0 0
        %5552 = vmatpush1.bf16.msra.mxu0 0
        %5553 = vmatprep.subr.bf16.mxu0 0
        %5554 = vmatpush1.bf16.msra.mxu0 0
        %5555 = vmatprep.subr.bf16.mxu0 %v5530
        %5556 = vmatpush1.bf16.msra.mxu0 %v5529
        %5557 = vmatprep.subr.bf16.mxu0 0
        %5558 = vmatpush2.bf16.msra.mxu0 0
        %5559 = vmatprep.subr.bf16.mxu0 0
        %5560 = vmatpush2.bf16.msra.mxu0 0
        %5561 = vmatprep.subr.bf16.mxu0 0
        %5562 = vmatpush2.bf16.msra.mxu0 0
        %5563 = vmatprep.subr.bf16.mxu0 0
        %5564 = vmatpush2.bf16.msra.mxu0 0
        %5565 = vmatprep.subr.bf16.mxu0 0
        %5566 = vmatpush2.bf16.msra.mxu0 0
        %5567 = vmatprep.subr.bf16.mxu0 0
        %5568 = vmatpush2.bf16.msra.mxu0 0
        %5569 = vmatprep.subr.bf16.mxu0 0
        %5570 = vmatpush2.bf16.msra.mxu0 0
        %5571 = vmatprep.subr.bf16.mxu0 0
        %5572 = vmatpush2.bf16.msra.mxu0 0
        %5573 = vmatprep.mubr.bf16.mxu0 0
        %5574 = vmatmul.mubr.bf16.gmra.mxu0 %v5539
        %v5575 = vpop.f32.mrf.mxu0
        %v5576 = vadd.f32 0.0, %v5575
        %v5577 = vpop.f32.mrf.mxu0
        %v5578 = vadd.f32 0.0, %v5577
        %v5579 = vpop.f32.mrf.mxu0
        %v5580 = vadd.f32 0.0, %v5579
        %v5581 = vpop.f32.mrf.mxu0
        %v5582 = vadd.f32 0.0, %v5581
        %5583 = vdwg.mxu0
        %5584 = vmatprep.subr.bf16.mxu0 0
        %5585 = vmatpush1.bf16.msra.mxu0 0
        %5586 = vmatprep.subr.bf16.mxu0 0
        %5587 = vmatpush1.bf16.msra.mxu0 0
        %5588 = vmatprep.subr.bf16.mxu0 0
        %5589 = vmatpush1.bf16.msra.mxu0 0
        %5590 = vmatprep.subr.bf16.mxu0 0
        %5591 = vmatpush1.bf16.msra.mxu0 0
        %5592 = vmatprep.subr.bf16.mxu0 0
        %5593 = vmatpush1.bf16.msra.mxu0 0
        %5594 = vmatprep.subr.bf16.mxu0 0
        %5595 = vmatpush1.bf16.msra.mxu0 0
        %5596 = vmatprep.subr.bf16.mxu0 0
        %5597 = vmatpush1.bf16.msra.mxu0 0
        %5598 = vmatprep.subr.bf16.mxu0 %v5532
        %5599 = vmatpush1.bf16.msra.mxu0 %v5531
        %5600 = vmatprep.subr.bf16.mxu0 0
        %5601 = vmatpush2.bf16.msra.mxu0 0
        %5602 = vmatprep.subr.bf16.mxu0 0
        %5603 = vmatpush2.bf16.msra.mxu0 0
        %5604 = vmatprep.subr.bf16.mxu0 0
        %5605 = vmatpush2.bf16.msra.mxu0 0
        %5606 = vmatprep.subr.bf16.mxu0 0
        %5607 = vmatpush2.bf16.msra.mxu0 0
        %5608 = vmatprep.subr.bf16.mxu0 0
        %5609 = vmatpush2.bf16.msra.mxu0 0
        %5610 = vmatprep.subr.bf16.mxu0 0
        %5611 = vmatpush2.bf16.msra.mxu0 0
        %5612 = vmatprep.subr.bf16.mxu0 0
        %5613 = vmatpush2.bf16.msra.mxu0 0
        %5614 = vmatprep.subr.bf16.mxu0 0
        %5615 = vmatpush2.bf16.msra.mxu0 0
        %5616 = vmatprep.mubr.bf16.mxu0 0
        %5617 = vmatmul.mubr.bf16.gmra.mxu0 %v5539
        %v5618 = vpop.f32.mrf.mxu0
        %v5619 = vadd.f32 0.0, %v5618
        %v5620 = vpop.f32.mrf.mxu0
        %v5621 = vadd.f32 0.0, %v5620
        %v5622 = vpop.f32.mrf.mxu0
        %v5623 = vadd.f32 0.0, %v5622
        %v5624 = vpop.f32.mrf.mxu0
        %v5625 = vadd.f32 0.0, %v5624
        %5626 = vdwg.mxu0
        %5627 = vmatprep.subr.bf16.mxu0 0
        %5628 = vmatpush1.bf16.msra.mxu0 0
        %5629 = vmatprep.subr.bf16.mxu0 0
        %5630 = vmatpush1.bf16.msra.mxu0 0
        %5631 = vmatprep.subr.bf16.mxu0 0
        %5632 = vmatpush1.bf16.msra.mxu0 0
        %5633 = vmatprep.subr.bf16.mxu0 0
        %5634 = vmatpush1.bf16.msra.mxu0 0
        %5635 = vmatprep.subr.bf16.mxu0 0
        %5636 = vmatpush1.bf16.msra.mxu0 0
        %5637 = vmatprep.subr.bf16.mxu0 0
        %5638 = vmatpush1.bf16.msra.mxu0 0
        %5639 = vmatprep.subr.bf16.mxu0 0
        %5640 = vmatpush1.bf16.msra.mxu0 0
        %5641 = vmatprep.subr.bf16.mxu0 0
        %5642 = vmatpush1.bf16.msra.mxu0 %v5528
        %5643 = vmatprep.subr.bf16.mxu0 0
        %5644 = vmatpush2.bf16.msra.mxu0 0
        %5645 = vmatprep.subr.bf16.mxu0 0
        %5646 = vmatpush2.bf16.msra.mxu0 0
        %5647 = vmatprep.subr.bf16.mxu0 0
        %5648 = vmatpush2.bf16.msra.mxu0 0
        %5649 = vmatprep.subr.bf16.mxu0 0
        %5650 = vmatpush2.bf16.msra.mxu0 0
        %5651 = vmatprep.subr.bf16.mxu0 0
        %5652 = vmatpush2.bf16.msra.mxu0 0
        %5653 = vmatprep.subr.bf16.mxu0 0
        %5654 = vmatpush2.bf16.msra.mxu0 0
        %5655 = vmatprep.subr.bf16.mxu0 0
        %5656 = vmatpush2.bf16.msra.mxu0 0
        %5657 = vmatprep.subr.bf16.mxu0 0
        %5658 = vmatpush2.bf16.msra.mxu0 0
        %5659 = vmatprep.mubr.bf16.mxu0 0
        %5660 = vmatmul.mubr.bf16.gmra.mxu0 %v5539
        %v5661 = vpop.f32.mrf.mxu0
        %v5662 = vadd.f32 0.0, %v5661
        %v5663 = vpop.f32.mrf.mxu0
        %v5664 = vpop.f32.mrf.mxu0
        %v5665 = vadd.f32 0.0, %v5664
        %v5666 = vpop.f32.mrf.mxu0
        %5667 = vdwg.mxu0
        %v5668 = vadd.f32 %v5419, %v5576
        %v5669 = vadd.f32 %v5421, %v5578
        %v5670 = vadd.f32 %v5462, %v5619
        %v5671 = vadd.f32 %v5464, %v5621
        %v5672 = vadd.f32 %v5505, %v5662
        %v5673 = vadd.f32 %v5423, %v5580
        %v5674 = vadd.f32 %v5425, %v5582
        %v5675 = vadd.f32 %v5466, %v5623
        %v5676 = vadd.f32 %v5468, %v5625
        %v5677 = vadd.f32 %v5508, %v5665
        %s5678 = scalar_lea.vmem [#allocation4], 240
        %v5679 = vld [vmem:[%s5678] sm:$0xf]
        %v5680 = vld [vmem:[%s5678 + $0x4] sm:$0xf]
        %v5683 = vunpack.c.l.b16 %v5679
        %v5684 = vunpack.c.l.b16 %v5680
        %v5685 = vpack.c.b16 %v5684, %v5683
        %5686 = vrot.lane.b32.xlu0 %v5206, 100
        %v5687 = vpop.permute.xlu0 %5686
        %5688 = vrot.lane.b32.xlu0 %v5207, 100
        %v5689 = vpop.permute.xlu0 %5688
        %5690 = vrot.lane.b32.xlu0 %v5208, 100
        %v5691 = vpop.permute.xlu0 %5690
        %5692 = vrot.lane.b32.xlu0 %v5209, 100
        %v5693 = vpop.permute.xlu0 %5692
        %5694 = vrot.lane.b32.xlu0 %v5210, 100
        %v5695 = vpop.permute.xlu0 %5694
        %v5696 = vsel %vm839, %v5687, %v5689
        %v5697 = vsel %vm839, %v5689, %v5691
        %v5698 = vsel %vm839, %v5691, %v5693
        %v5699 = vsel %vm839, %v5693, %v5695
        %v5706 = vsel %vm300, %v5685, 0
        %5708 = vmatprep.subr.bf16.mxu0 0
        %5709 = vmatpush1.bf16.msra.mxu0 0
        %5710 = vmatprep.subr.bf16.mxu0 0
        %5711 = vmatpush1.bf16.msra.mxu0 0
        %5712 = vmatprep.subr.bf16.mxu0 0
        %5713 = vmatpush1.bf16.msra.mxu0 0
        %5714 = vmatprep.subr.bf16.mxu0 0
        %5715 = vmatpush1.bf16.msra.mxu0 0
        %5716 = vmatprep.subr.bf16.mxu0 0
        %5717 = vmatpush1.bf16.msra.mxu0 0
        %5718 = vmatprep.subr.bf16.mxu0 0
        %5719 = vmatpush1.bf16.msra.mxu0 0
        %5720 = vmatprep.subr.bf16.mxu0 0
        %5721 = vmatpush1.bf16.msra.mxu0 0
        %5722 = vmatprep.subr.bf16.mxu0 %v5697
        %5723 = vmatpush1.bf16.msra.mxu0 %v5696
        %5724 = vmatprep.subr.bf16.mxu0 0
        %5725 = vmatpush2.bf16.msra.mxu0 0
        %5726 = vmatprep.subr.bf16.mxu0 0
        %5727 = vmatpush2.bf16.msra.mxu0 0
        %5728 = vmatprep.subr.bf16.mxu0 0
        %5729 = vmatpush2.bf16.msra.mxu0 0
        %5730 = vmatprep.subr.bf16.mxu0 0
        %5731 = vmatpush2.bf16.msra.mxu0 0
        %5732 = vmatprep.subr.bf16.mxu0 0
        %5733 = vmatpush2.bf16.msra.mxu0 0
        %5734 = vmatprep.subr.bf16.mxu0 0
        %5735 = vmatpush2.bf16.msra.mxu0 0
        %5736 = vmatprep.subr.bf16.mxu0 0
        %5737 = vmatpush2.bf16.msra.mxu0 0
        %5738 = vmatprep.subr.bf16.mxu0 0
        %5739 = vmatpush2.bf16.msra.mxu0 0
        %5740 = vmatprep.mubr.bf16.mxu0 0
        %5741 = vmatmul.mubr.bf16.gmra.mxu0 %v5706
        %v5742 = vpop.f32.mrf.mxu0
        %v5743 = vadd.f32 0.0, %v5742
        %v5744 = vpop.f32.mrf.mxu0
        %v5745 = vadd.f32 0.0, %v5744
        %v5746 = vpop.f32.mrf.mxu0
        %v5747 = vadd.f32 0.0, %v5746
        %v5748 = vpop.f32.mrf.mxu0
        %v5749 = vadd.f32 0.0, %v5748
        %5750 = vdwg.mxu0
        %5751 = vmatprep.subr.bf16.mxu0 0
        %5752 = vmatpush1.bf16.msra.mxu0 0
        %5753 = vmatprep.subr.bf16.mxu0 0
        %5754 = vmatpush1.bf16.msra.mxu0 0
        %5755 = vmatprep.subr.bf16.mxu0 0
        %5756 = vmatpush1.bf16.msra.mxu0 0
        %5757 = vmatprep.subr.bf16.mxu0 0
        %5758 = vmatpush1.bf16.msra.mxu0 0
        %5759 = vmatprep.subr.bf16.mxu0 0
        %5760 = vmatpush1.bf16.msra.mxu0 0
        %5761 = vmatprep.subr.bf16.mxu0 0
        %5762 = vmatpush1.bf16.msra.mxu0 0
        %5763 = vmatprep.subr.bf16.mxu0 0
        %5764 = vmatpush1.bf16.msra.mxu0 0
        %5765 = vmatprep.subr.bf16.mxu0 %v5699
        %5766 = vmatpush1.bf16.msra.mxu0 %v5698
        %5767 = vmatprep.subr.bf16.mxu0 0
        %5768 = vmatpush2.bf16.msra.mxu0 0
        %5769 = vmatprep.subr.bf16.mxu0 0
        %5770 = vmatpush2.bf16.msra.mxu0 0
        %5771 = vmatprep.subr.bf16.mxu0 0
        %5772 = vmatpush2.bf16.msra.mxu0 0
        %5773 = vmatprep.subr.bf16.mxu0 0
        %5774 = vmatpush2.bf16.msra.mxu0 0
        %5775 = vmatprep.subr.bf16.mxu0 0
        %5776 = vmatpush2.bf16.msra.mxu0 0
        %5777 = vmatprep.subr.bf16.mxu0 0
        %5778 = vmatpush2.bf16.msra.mxu0 0
        %5779 = vmatprep.subr.bf16.mxu0 0
        %5780 = vmatpush2.bf16.msra.mxu0 0
        %5781 = vmatprep.subr.bf16.mxu0 0
        %5782 = vmatpush2.bf16.msra.mxu0 0
        %5783 = vmatprep.mubr.bf16.mxu0 0
        %5784 = vmatmul.mubr.bf16.gmra.mxu0 %v5706
        %v5785 = vpop.f32.mrf.mxu0
        %v5786 = vadd.f32 0.0, %v5785
        %v5787 = vpop.f32.mrf.mxu0
        %v5788 = vadd.f32 0.0, %v5787
        %v5789 = vpop.f32.mrf.mxu0
        %v5790 = vadd.f32 0.0, %v5789
        %v5791 = vpop.f32.mrf.mxu0
        %v5792 = vadd.f32 0.0, %v5791
        %5793 = vdwg.mxu0
        %5794 = vmatprep.subr.bf16.mxu0 0
        %5795 = vmatpush1.bf16.msra.mxu0 0
        %5796 = vmatprep.subr.bf16.mxu0 0
        %5797 = vmatpush1.bf16.msra.mxu0 0
        %5798 = vmatprep.subr.bf16.mxu0 0
        %5799 = vmatpush1.bf16.msra.mxu0 0
        %5800 = vmatprep.subr.bf16.mxu0 0
        %5801 = vmatpush1.bf16.msra.mxu0 0
        %5802 = vmatprep.subr.bf16.mxu0 0
        %5803 = vmatpush1.bf16.msra.mxu0 0
        %5804 = vmatprep.subr.bf16.mxu0 0
        %5805 = vmatpush1.bf16.msra.mxu0 0
        %5806 = vmatprep.subr.bf16.mxu0 0
        %5807 = vmatpush1.bf16.msra.mxu0 0
        %5808 = vmatprep.subr.bf16.mxu0 0
        %5809 = vmatpush1.bf16.msra.mxu0 %v5695
        %5810 = vmatprep.subr.bf16.mxu0 0
        %5811 = vmatpush2.bf16.msra.mxu0 0
        %5812 = vmatprep.subr.bf16.mxu0 0
        %5813 = vmatpush2.bf16.msra.mxu0 0
        %5814 = vmatprep.subr.bf16.mxu0 0
        %5815 = vmatpush2.bf16.msra.mxu0 0
        %5816 = vmatprep.subr.bf16.mxu0 0
        %5817 = vmatpush2.bf16.msra.mxu0 0
        %5818 = vmatprep.subr.bf16.mxu0 0
        %5819 = vmatpush2.bf16.msra.mxu0 0
        %5820 = vmatprep.subr.bf16.mxu0 0
        %5821 = vmatpush2.bf16.msra.mxu0 0
        %5822 = vmatprep.subr.bf16.mxu0 0
        %5823 = vmatpush2.bf16.msra.mxu0 0
        %5824 = vmatprep.subr.bf16.mxu0 0
        %5825 = vmatpush2.bf16.msra.mxu0 0
        %5826 = vmatprep.mubr.bf16.mxu0 0
        %5827 = vmatmul.mubr.bf16.gmra.mxu0 %v5706
        %v5828 = vpop.f32.mrf.mxu0
        %v5829 = vadd.f32 0.0, %v5828
        %v5830 = vpop.f32.mrf.mxu0
        %v5831 = vpop.f32.mrf.mxu0
        %v5832 = vadd.f32 0.0, %v5831
        %v5833 = vpop.f32.mrf.mxu0
        %5834 = vdwg.mxu0
        %v5835 = vadd.f32 %v5668, %v5743
        %v5836 = vadd.f32 %v5669, %v5745
        %v5837 = vadd.f32 %v5670, %v5786
        %v5838 = vadd.f32 %v5671, %v5788
        %v5839 = vadd.f32 %v5672, %v5829
        %v5840 = vadd.f32 %v5673, %v5747
        %v5841 = vadd.f32 %v5674, %v5749
        %v5842 = vadd.f32 %v5675, %v5790
        %v5843 = vadd.f32 %v5676, %v5792
        %v5844 = vadd.f32 %v5677, %v5832
        %s5845 = scalar_lea.vmem [#allocation4], 248
        %v5846 = vld [vmem:[%s5845] sm:$0xf]
        %v5847 = vld [vmem:[%s5845 + $0x4] sm:$0xf]
        %v5850 = vunpack.c.l.b16 %v5846
        %v5851 = vunpack.c.l.b16 %v5847
        %v5852 = vpack.c.b16 %v5851, %v5850
        %5853 = vrot.lane.b32.xlu0 %v5206, 99
        %v5854 = vpop.permute.xlu0 %5853
        %5855 = vrot.lane.b32.xlu0 %v5207, 99
        %v5856 = vpop.permute.xlu0 %5855
        %5857 = vrot.lane.b32.xlu0 %v5208, 99
        %v5858 = vpop.permute.xlu0 %5857
        %5859 = vrot.lane.b32.xlu0 %v5209, 99
        %v5860 = vpop.permute.xlu0 %5859
        %5861 = vrot.lane.b32.xlu0 %v5210, 99
        %v5862 = vpop.permute.xlu0 %5861
        %v5863 = vsel %vm1015, %v5854, %v5856
        %v5864 = vsel %vm1015, %v5856, %v5858
        %v5865 = vsel %vm1015, %v5858, %v5860
        %v5866 = vsel %vm1015, %v5860, %v5862
        %v5873 = vsel %vm300, %v5852, 0
        %5875 = vmatprep.subr.bf16.mxu0 0
        %5876 = vmatpush1.bf16.msra.mxu0 0
        %5877 = vmatprep.subr.bf16.mxu0 0
        %5878 = vmatpush1.bf16.msra.mxu0 0
        %5879 = vmatprep.subr.bf16.mxu0 0
        %5880 = vmatpush1.bf16.msra.mxu0 0
        %5881 = vmatprep.subr.bf16.mxu0 0
        %5882 = vmatpush1.bf16.msra.mxu0 0
        %5883 = vmatprep.subr.bf16.mxu0 0
        %5884 = vmatpush1.bf16.msra.mxu0 0
        %5885 = vmatprep.subr.bf16.mxu0 0
        %5886 = vmatpush1.bf16.msra.mxu0 0
        %5887 = vmatprep.subr.bf16.mxu0 0
        %5888 = vmatpush1.bf16.msra.mxu0 0
        %5889 = vmatprep.subr.bf16.mxu0 %v5864
        %5890 = vmatpush1.bf16.msra.mxu0 %v5863
        %5891 = vmatprep.subr.bf16.mxu0 0
        %5892 = vmatpush2.bf16.msra.mxu0 0
        %5893 = vmatprep.subr.bf16.mxu0 0
        %5894 = vmatpush2.bf16.msra.mxu0 0
        %5895 = vmatprep.subr.bf16.mxu0 0
        %5896 = vmatpush2.bf16.msra.mxu0 0
        %5897 = vmatprep.subr.bf16.mxu0 0
        %5898 = vmatpush2.bf16.msra.mxu0 0
        %5899 = vmatprep.subr.bf16.mxu0 0
        %5900 = vmatpush2.bf16.msra.mxu0 0
        %5901 = vmatprep.subr.bf16.mxu0 0
        %5902 = vmatpush2.bf16.msra.mxu0 0
        %5903 = vmatprep.subr.bf16.mxu0 0
        %5904 = vmatpush2.bf16.msra.mxu0 0
        %5905 = vmatprep.subr.bf16.mxu0 0
        %5906 = vmatpush2.bf16.msra.mxu0 0
        %5907 = vmatprep.mubr.bf16.mxu0 0
        %5908 = vmatmul.mubr.bf16.gmra.mxu0 %v5873
        %v5909 = vpop.f32.mrf.mxu0
        %v5910 = vadd.f32 0.0, %v5909
        %v5911 = vpop.f32.mrf.mxu0
        %v5912 = vadd.f32 0.0, %v5911
        %v5913 = vpop.f32.mrf.mxu0
        %v5914 = vadd.f32 0.0, %v5913
        %v5915 = vpop.f32.mrf.mxu0
        %v5916 = vadd.f32 0.0, %v5915
        %5917 = vdwg.mxu0
        %5918 = vmatprep.subr.bf16.mxu0 0
        %5919 = vmatpush1.bf16.msra.mxu0 0
        %5920 = vmatprep.subr.bf16.mxu0 0
        %5921 = vmatpush1.bf16.msra.mxu0 0
        %5922 = vmatprep.subr.bf16.mxu0 0
        %5923 = vmatpush1.bf16.msra.mxu0 0
        %5924 = vmatprep.subr.bf16.mxu0 0
        %5925 = vmatpush1.bf16.msra.mxu0 0
        %5926 = vmatprep.subr.bf16.mxu0 0
        %5927 = vmatpush1.bf16.msra.mxu0 0
        %5928 = vmatprep.subr.bf16.mxu0 0
        %5929 = vmatpush1.bf16.msra.mxu0 0
        %5930 = vmatprep.subr.bf16.mxu0 0
        %5931 = vmatpush1.bf16.msra.mxu0 0
        %5932 = vmatprep.subr.bf16.mxu0 %v5866
        %5933 = vmatpush1.bf16.msra.mxu0 %v5865
        %5934 = vmatprep.subr.bf16.mxu0 0
        %5935 = vmatpush2.bf16.msra.mxu0 0
        %5936 = vmatprep.subr.bf16.mxu0 0
        %5937 = vmatpush2.bf16.msra.mxu0 0
        %5938 = vmatprep.subr.bf16.mxu0 0
        %5939 = vmatpush2.bf16.msra.mxu0 0
        %5940 = vmatprep.subr.bf16.mxu0 0
        %5941 = vmatpush2.bf16.msra.mxu0 0
        %5942 = vmatprep.subr.bf16.mxu0 0
        %5943 = vmatpush2.bf16.msra.mxu0 0
        %5944 = vmatprep.subr.bf16.mxu0 0
        %5945 = vmatpush2.bf16.msra.mxu0 0
        %5946 = vmatprep.subr.bf16.mxu0 0
        %5947 = vmatpush2.bf16.msra.mxu0 0
        %5948 = vmatprep.subr.bf16.mxu0 0
        %5949 = vmatpush2.bf16.msra.mxu0 0
        %5950 = vmatprep.mubr.bf16.mxu0 0
        %5951 = vmatmul.mubr.bf16.gmra.mxu0 %v5873
        %v5952 = vpop.f32.mrf.mxu0
        %v5953 = vadd.f32 0.0, %v5952
        %v5954 = vpop.f32.mrf.mxu0
        %v5955 = vadd.f32 0.0, %v5954
        %v5956 = vpop.f32.mrf.mxu0
        %v5957 = vadd.f32 0.0, %v5956
        %v5958 = vpop.f32.mrf.mxu0
        %v5959 = vadd.f32 0.0, %v5958
        %5960 = vdwg.mxu0
        %5961 = vmatprep.subr.bf16.mxu0 0
        %5962 = vmatpush1.bf16.msra.mxu0 0
        %5963 = vmatprep.subr.bf16.mxu0 0
        %5964 = vmatpush1.bf16.msra.mxu0 0
        %5965 = vmatprep.subr.bf16.mxu0 0
        %5966 = vmatpush1.bf16.msra.mxu0 0
        %5967 = vmatprep.subr.bf16.mxu0 0
        %5968 = vmatpush1.bf16.msra.mxu0 0
        %5969 = vmatprep.subr.bf16.mxu0 0
        %5970 = vmatpush1.bf16.msra.mxu0 0
        %5971 = vmatprep.subr.bf16.mxu0 0
        %5972 = vmatpush1.bf16.msra.mxu0 0
        %5973 = vmatprep.subr.bf16.mxu0 0
        %5974 = vmatpush1.bf16.msra.mxu0 0
        %5975 = vmatprep.subr.bf16.mxu0 0
        %5976 = vmatpush1.bf16.msra.mxu0 %v5862
        %5977 = vmatprep.subr.bf16.mxu0 0
        %5978 = vmatpush2.bf16.msra.mxu0 0
        %5979 = vmatprep.subr.bf16.mxu0 0
        %5980 = vmatpush2.bf16.msra.mxu0 0
        %5981 = vmatprep.subr.bf16.mxu0 0
        %5982 = vmatpush2.bf16.msra.mxu0 0
        %5983 = vmatprep.subr.bf16.mxu0 0
        %5984 = vmatpush2.bf16.msra.mxu0 0
        %5985 = vmatprep.subr.bf16.mxu0 0
        %5986 = vmatpush2.bf16.msra.mxu0 0
        %5987 = vmatprep.subr.bf16.mxu0 0
        %5988 = vmatpush2.bf16.msra.mxu0 0
        %5989 = vmatprep.subr.bf16.mxu0 0
        %5990 = vmatpush2.bf16.msra.mxu0 0
        %5991 = vmatprep.subr.bf16.mxu0 0
        %5992 = vmatpush2.bf16.msra.mxu0 0
        %5993 = vmatprep.mubr.bf16.mxu0 0
        %5994 = vmatmul.mubr.bf16.gmra.mxu0 %v5873
        %v5995 = vpop.f32.mrf.mxu0
        %v5996 = vadd.f32 0.0, %v5995
        %v5997 = vpop.f32.mrf.mxu0
        %v5998 = vpop.f32.mrf.mxu0
        %v5999 = vadd.f32 0.0, %v5998
        %v6000 = vpop.f32.mrf.mxu0
        %6001 = vdwg.mxu0
        %v6002 = vadd.f32 %v5835, %v5910
        %v6003 = vadd.f32 %v5836, %v5912
        %v6004 = vadd.f32 %v5837, %v5953
        %v6005 = vadd.f32 %v5838, %v5955
        %v6006 = vadd.f32 %v5839, %v5996
        %v6007 = vadd.f32 %v5840, %v5914
        %v6008 = vadd.f32 %v5841, %v5916
        %v6009 = vadd.f32 %v5842, %v5957
        %v6010 = vadd.f32 %v5843, %v5959
        %v6011 = vadd.f32 %v5844, %v5999
        %s6012 = scalar_lea.vmem [#allocation4], 256
        %v6013 = vld [vmem:[%s6012] sm:$0xf]
        %v6014 = vld [vmem:[%s6012 + $0x4] sm:$0xf]
        %v6017 = vunpack.c.l.b16 %v6013
        %v6018 = vunpack.c.l.b16 %v6014
        %v6019 = vpack.c.b16 %v6018, %v6017
        %6020 = vrot.lane.b32.xlu0 %v5206, 98
        %v6021 = vpop.permute.xlu0 %6020
        %6022 = vrot.lane.b32.xlu0 %v5207, 98
        %v6023 = vpop.permute.xlu0 %6022
        %6024 = vrot.lane.b32.xlu0 %v5208, 98
        %v6025 = vpop.permute.xlu0 %6024
        %6026 = vrot.lane.b32.xlu0 %v5209, 98
        %v6027 = vpop.permute.xlu0 %6026
        %6028 = vrot.lane.b32.xlu0 %v5210, 98
        %v6029 = vpop.permute.xlu0 %6028
        %v6030 = vsel %vm1191, %v6021, %v6023
        %v6031 = vsel %vm1191, %v6023, %v6025
        %v6032 = vsel %vm1191, %v6025, %v6027
        %v6033 = vsel %vm1191, %v6027, %v6029
        %v6040 = vsel %vm300, %v6019, 0
        %6042 = vmatprep.subr.bf16.mxu0 0
        %6043 = vmatpush1.bf16.msra.mxu0 0
        %6044 = vmatprep.subr.bf16.mxu0 0
        %6045 = vmatpush1.bf16.msra.mxu0 0
        %6046 = vmatprep.subr.bf16.mxu0 0
        %6047 = vmatpush1.bf16.msra.mxu0 0
        %6048 = vmatprep.subr.bf16.mxu0 0
        %6049 = vmatpush1.bf16.msra.mxu0 0
        %6050 = vmatprep.subr.bf16.mxu0 0
        %6051 = vmatpush1.bf16.msra.mxu0 0
        %6052 = vmatprep.subr.bf16.mxu0 0
        %6053 = vmatpush1.bf16.msra.mxu0 0
        %6054 = vmatprep.subr.bf16.mxu0 0
        %6055 = vmatpush1.bf16.msra.mxu0 0
        %6056 = vmatprep.subr.bf16.mxu0 %v6031
        %6057 = vmatpush1.bf16.msra.mxu0 %v6030
        %6058 = vmatprep.subr.bf16.mxu0 0
        %6059 = vmatpush2.bf16.msra.mxu0 0
        %6060 = vmatprep.subr.bf16.mxu0 0
        %6061 = vmatpush2.bf16.msra.mxu0 0
        %6062 = vmatprep.subr.bf16.mxu0 0
        %6063 = vmatpush2.bf16.msra.mxu0 0
        %6064 = vmatprep.subr.bf16.mxu0 0
        %6065 = vmatpush2.bf16.msra.mxu0 0
        %6066 = vmatprep.subr.bf16.mxu0 0
        %6067 = vmatpush2.bf16.msra.mxu0 0
        %6068 = vmatprep.subr.bf16.mxu0 0
        %6069 = vmatpush2.bf16.msra.mxu0 0
        %6070 = vmatprep.subr.bf16.mxu0 0
        %6071 = vmatpush2.bf16.msra.mxu0 0
        %6072 = vmatprep.subr.bf16.mxu0 0
        %6073 = vmatpush2.bf16.msra.mxu0 0
        %6074 = vmatprep.mubr.bf16.mxu0 0
        %6075 = vmatmul.mubr.bf16.gmra.mxu0 %v6040
        %v6076 = vpop.f32.mrf.mxu0
        %v6077 = vadd.f32 0.0, %v6076
        %v6078 = vpop.f32.mrf.mxu0
        %v6079 = vadd.f32 0.0, %v6078
        %v6080 = vpop.f32.mrf.mxu0
        %v6081 = vadd.f32 0.0, %v6080
        %v6082 = vpop.f32.mrf.mxu0
        %v6083 = vadd.f32 0.0, %v6082
        %6084 = vdwg.mxu0
        %6085 = vmatprep.subr.bf16.mxu0 0
        %6086 = vmatpush1.bf16.msra.mxu0 0
        %6087 = vmatprep.subr.bf16.mxu0 0
        %6088 = vmatpush1.bf16.msra.mxu0 0
        %6089 = vmatprep.subr.bf16.mxu0 0
        %6090 = vmatpush1.bf16.msra.mxu0 0
        %6091 = vmatprep.subr.bf16.mxu0 0
        %6092 = vmatpush1.bf16.msra.mxu0 0
        %6093 = vmatprep.subr.bf16.mxu0 0
        %6094 = vmatpush1.bf16.msra.mxu0 0
        %6095 = vmatprep.subr.bf16.mxu0 0
        %6096 = vmatpush1.bf16.msra.mxu0 0
        %6097 = vmatprep.subr.bf16.mxu0 0
        %6098 = vmatpush1.bf16.msra.mxu0 0
        %6099 = vmatprep.subr.bf16.mxu0 %v6033
        %6100 = vmatpush1.bf16.msra.mxu0 %v6032
        %6101 = vmatprep.subr.bf16.mxu0 0
        %6102 = vmatpush2.bf16.msra.mxu0 0
        %6103 = vmatprep.subr.bf16.mxu0 0
        %6104 = vmatpush2.bf16.msra.mxu0 0
        %6105 = vmatprep.subr.bf16.mxu0 0
        %6106 = vmatpush2.bf16.msra.mxu0 0
        %6107 = vmatprep.subr.bf16.mxu0 0
        %6108 = vmatpush2.bf16.msra.mxu0 0
        %6109 = vmatprep.subr.bf16.mxu0 0
        %6110 = vmatpush2.bf16.msra.mxu0 0
        %6111 = vmatprep.subr.bf16.mxu0 0
        %6112 = vmatpush2.bf16.msra.mxu0 0
        %6113 = vmatprep.subr.bf16.mxu0 0
        %6114 = vmatpush2.bf16.msra.mxu0 0
        %6115 = vmatprep.subr.bf16.mxu0 0
        %6116 = vmatpush2.bf16.msra.mxu0 0
        %6117 = vmatprep.mubr.bf16.mxu0 0
        %6118 = vmatmul.mubr.bf16.gmra.mxu0 %v6040
        %v6119 = vpop.f32.mrf.mxu0
        %v6120 = vadd.f32 0.0, %v6119
        %v6121 = vpop.f32.mrf.mxu0
        %v6122 = vadd.f32 0.0, %v6121
        %v6123 = vpop.f32.mrf.mxu0
        %v6124 = vadd.f32 0.0, %v6123
        %v6125 = vpop.f32.mrf.mxu0
        %v6126 = vadd.f32 0.0, %v6125
        %6127 = vdwg.mxu0
        %6128 = vmatprep.subr.bf16.mxu0 0
        %6129 = vmatpush1.bf16.msra.mxu0 0
        %6130 = vmatprep.subr.bf16.mxu0 0
        %6131 = vmatpush1.bf16.msra.mxu0 0
        %6132 = vmatprep.subr.bf16.mxu0 0
        %6133 = vmatpush1.bf16.msra.mxu0 0
        %6134 = vmatprep.subr.bf16.mxu0 0
        %6135 = vmatpush1.bf16.msra.mxu0 0
        %6136 = vmatprep.subr.bf16.mxu0 0
        %6137 = vmatpush1.bf16.msra.mxu0 0
        %6138 = vmatprep.subr.bf16.mxu0 0
        %6139 = vmatpush1.bf16.msra.mxu0 0
        %6140 = vmatprep.subr.bf16.mxu0 0
        %6141 = vmatpush1.bf16.msra.mxu0 0
        %6142 = vmatprep.subr.bf16.mxu0 0
        %6143 = vmatpush1.bf16.msra.mxu0 %v6029
        %6144 = vmatprep.subr.bf16.mxu0 0
        %6145 = vmatpush2.bf16.msra.mxu0 0
        %6146 = vmatprep.subr.bf16.mxu0 0
        %6147 = vmatpush2.bf16.msra.mxu0 0
        %6148 = vmatprep.subr.bf16.mxu0 0
        %6149 = vmatpush2.bf16.msra.mxu0 0
        %6150 = vmatprep.subr.bf16.mxu0 0
        %6151 = vmatpush2.bf16.msra.mxu0 0
        %6152 = vmatprep.subr.bf16.mxu0 0
        %6153 = vmatpush2.bf16.msra.mxu0 0
        %6154 = vmatprep.subr.bf16.mxu0 0
        %6155 = vmatpush2.bf16.msra.mxu0 0
        %6156 = vmatprep.subr.bf16.mxu0 0
        %6157 = vmatpush2.bf16.msra.mxu0 0
        %6158 = vmatprep.subr.bf16.mxu0 0
        %6159 = vmatpush2.bf16.msra.mxu0 0
        %6160 = vmatprep.mubr.bf16.mxu0 0
        %6161 = vmatmul.mubr.bf16.gmra.mxu0 %v6040
        %v6162 = vpop.f32.mrf.mxu0
        %v6163 = vadd.f32 0.0, %v6162
        %v6164 = vpop.f32.mrf.mxu0
        %v6165 = vpop.f32.mrf.mxu0
        %v6166 = vadd.f32 0.0, %v6165
        %v6167 = vpop.f32.mrf.mxu0
        %6168 = vdwg.mxu0
        %v6169 = vadd.f32 %v6002, %v6077
        %v6170 = vadd.f32 %v6003, %v6079
        %v6171 = vadd.f32 %v6004, %v6120
        %v6172 = vadd.f32 %v6005, %v6122
        %v6173 = vadd.f32 %v6006, %v6163
        %v6174 = vadd.f32 %v6007, %v6081
        %v6175 = vadd.f32 %v6008, %v6083
        %v6176 = vadd.f32 %v6009, %v6124
        %v6177 = vadd.f32 %v6010, %v6126
        %v6178 = vadd.f32 %v6011, %v6166
        %s6179 = scalar_lea.vmem [#allocation4], 264
        %v6180 = vld [vmem:[%s6179] sm:$0xf]
        %v6181 = vld [vmem:[%s6179 + $0x4] sm:$0xf]
        %v6184 = vunpack.c.l.b16 %v6180
        %v6185 = vunpack.c.l.b16 %v6181
        %v6186 = vpack.c.b16 %v6185, %v6184
        %6187 = vrot.lane.b32.xlu0 %v5206, 72
        %v6188 = vpop.permute.xlu0 %6187
        %6189 = vrot.lane.b32.xlu0 %v5207, 72
        %v6190 = vpop.permute.xlu0 %6189
        %6191 = vrot.lane.b32.xlu0 %v5208, 72
        %v6192 = vpop.permute.xlu0 %6191
        %6193 = vrot.lane.b32.xlu0 %v5209, 72
        %v6194 = vpop.permute.xlu0 %6193
        %6195 = vrot.lane.b32.xlu0 %v5210, 72
        %v6196 = vpop.permute.xlu0 %6195
        %v6197 = vsel %vm1397, %v6188, %v6190
        %v6198 = vsel %vm1397, %v6190, %v6192
        %v6199 = vsel %vm1397, %v6192, %v6194
        %v6200 = vsel %vm1397, %v6194, %v6196
        %v6207 = vsel %vm300, %v6186, 0
        %6209 = vmatprep.subr.bf16.mxu0 0
        %6210 = vmatpush1.bf16.msra.mxu0 0
        %6211 = vmatprep.subr.bf16.mxu0 0
        %6212 = vmatpush1.bf16.msra.mxu0 0
        %6213 = vmatprep.subr.bf16.mxu0 0
        %6214 = vmatpush1.bf16.msra.mxu0 0
        %6215 = vmatprep.subr.bf16.mxu0 0
        %6216 = vmatpush1.bf16.msra.mxu0 0
        %6217 = vmatprep.subr.bf16.mxu0 0
        %6218 = vmatpush1.bf16.msra.mxu0 0
        %6219 = vmatprep.subr.bf16.mxu0 0
        %6220 = vmatpush1.bf16.msra.mxu0 0
        %6221 = vmatprep.subr.bf16.mxu0 0
        %6222 = vmatpush1.bf16.msra.mxu0 0
        %6223 = vmatprep.subr.bf16.mxu0 %v6198
        %6224 = vmatpush1.bf16.msra.mxu0 %v6197
        %6225 = vmatprep.subr.bf16.mxu0 0
        %6226 = vmatpush2.bf16.msra.mxu0 0
        %6227 = vmatprep.subr.bf16.mxu0 0
        %6228 = vmatpush2.bf16.msra.mxu0 0
        %6229 = vmatprep.subr.bf16.mxu0 0
        %6230 = vmatpush2.bf16.msra.mxu0 0
        %6231 = vmatprep.subr.bf16.mxu0 0
        %6232 = vmatpush2.bf16.msra.mxu0 0
        %6233 = vmatprep.subr.bf16.mxu0 0
        %6234 = vmatpush2.bf16.msra.mxu0 0
        %6235 = vmatprep.subr.bf16.mxu0 0
        %6236 = vmatpush2.bf16.msra.mxu0 0
        %6237 = vmatprep.subr.bf16.mxu0 0
        %6238 = vmatpush2.bf16.msra.mxu0 0
        %6239 = vmatprep.subr.bf16.mxu0 0
        %6240 = vmatpush2.bf16.msra.mxu0 0
        %6241 = vmatprep.mubr.bf16.mxu0 0
        %6242 = vmatmul.mubr.bf16.gmra.mxu0 %v6207
        %v6243 = vpop.f32.mrf.mxu0
        %v6244 = vadd.f32 0.0, %v6243
        %v6245 = vpop.f32.mrf.mxu0
        %v6246 = vadd.f32 0.0, %v6245
        %v6247 = vpop.f32.mrf.mxu0
        %v6248 = vadd.f32 0.0, %v6247
        %v6249 = vpop.f32.mrf.mxu0
        %v6250 = vadd.f32 0.0, %v6249
        %6251 = vdwg.mxu0
        %6252 = vmatprep.subr.bf16.mxu0 0
        %6253 = vmatpush1.bf16.msra.mxu0 0
        %6254 = vmatprep.subr.bf16.mxu0 0
        %6255 = vmatpush1.bf16.msra.mxu0 0
        %6256 = vmatprep.subr.bf16.mxu0 0
        %6257 = vmatpush1.bf16.msra.mxu0 0
        %6258 = vmatprep.subr.bf16.mxu0 0
        %6259 = vmatpush1.bf16.msra.mxu0 0
        %6260 = vmatprep.subr.bf16.mxu0 0
        %6261 = vmatpush1.bf16.msra.mxu0 0
        %6262 = vmatprep.subr.bf16.mxu0 0
        %6263 = vmatpush1.bf16.msra.mxu0 0
        %6264 = vmatprep.subr.bf16.mxu0 0
        %6265 = vmatpush1.bf16.msra.mxu0 0
        %6266 = vmatprep.subr.bf16.mxu0 %v6200
        %6267 = vmatpush1.bf16.msra.mxu0 %v6199
        %6268 = vmatprep.subr.bf16.mxu0 0
        %6269 = vmatpush2.bf16.msra.mxu0 0
        %6270 = vmatprep.subr.bf16.mxu0 0
        %6271 = vmatpush2.bf16.msra.mxu0 0
        %6272 = vmatprep.subr.bf16.mxu0 0
        %6273 = vmatpush2.bf16.msra.mxu0 0
        %6274 = vmatprep.subr.bf16.mxu0 0
        %6275 = vmatpush2.bf16.msra.mxu0 0
        %6276 = vmatprep.subr.bf16.mxu0 0
        %6277 = vmatpush2.bf16.msra.mxu0 0
        %6278 = vmatprep.subr.bf16.mxu0 0
        %6279 = vmatpush2.bf16.msra.mxu0 0
        %6280 = vmatprep.subr.bf16.mxu0 0
        %6281 = vmatpush2.bf16.msra.mxu0 0
        %6282 = vmatprep.subr.bf16.mxu0 0
        %6283 = vmatpush2.bf16.msra.mxu0 0
        %6284 = vmatprep.mubr.bf16.mxu0 0
        %6285 = vmatmul.mubr.bf16.gmra.mxu0 %v6207
        %v6286 = vpop.f32.mrf.mxu0
        %v6287 = vadd.f32 0.0, %v6286
        %v6288 = vpop.f32.mrf.mxu0
        %v6289 = vadd.f32 0.0, %v6288
        %v6290 = vpop.f32.mrf.mxu0
        %v6291 = vadd.f32 0.0, %v6290
        %v6292 = vpop.f32.mrf.mxu0
        %v6293 = vadd.f32 0.0, %v6292
        %6294 = vdwg.mxu0
        %6295 = vmatprep.subr.bf16.mxu0 0
        %6296 = vmatpush1.bf16.msra.mxu0 0
        %6297 = vmatprep.subr.bf16.mxu0 0
        %6298 = vmatpush1.bf16.msra.mxu0 0
        %6299 = vmatprep.subr.bf16.mxu0 0
        %6300 = vmatpush1.bf16.msra.mxu0 0
        %6301 = vmatprep.subr.bf16.mxu0 0
        %6302 = vmatpush1.bf16.msra.mxu0 0
        %6303 = vmatprep.subr.bf16.mxu0 0
        %6304 = vmatpush1.bf16.msra.mxu0 0
        %6305 = vmatprep.subr.bf16.mxu0 0
        %6306 = vmatpush1.bf16.msra.mxu0 0
        %6307 = vmatprep.subr.bf16.mxu0 0
        %6308 = vmatpush1.bf16.msra.mxu0 0
        %6309 = vmatprep.subr.bf16.mxu0 0
        %6310 = vmatpush1.bf16.msra.mxu0 %v6196
        %6311 = vmatprep.subr.bf16.mxu0 0
        %6312 = vmatpush2.bf16.msra.mxu0 0
        %6313 = vmatprep.subr.bf16.mxu0 0
        %6314 = vmatpush2.bf16.msra.mxu0 0
        %6315 = vmatprep.subr.bf16.mxu0 0
        %6316 = vmatpush2.bf16.msra.mxu0 0
        %6317 = vmatprep.subr.bf16.mxu0 0
        %6318 = vmatpush2.bf16.msra.mxu0 0
        %6319 = vmatprep.subr.bf16.mxu0 0
        %6320 = vmatpush2.bf16.msra.mxu0 0
        %6321 = vmatprep.subr.bf16.mxu0 0
        %6322 = vmatpush2.bf16.msra.mxu0 0
        %6323 = vmatprep.subr.bf16.mxu0 0
        %6324 = vmatpush2.bf16.msra.mxu0 0
        %6325 = vmatprep.subr.bf16.mxu0 0
        %6326 = vmatpush2.bf16.msra.mxu0 0
        %6327 = vmatprep.mubr.bf16.mxu0 0
        %6328 = vmatmul.mubr.bf16.gmra.mxu0 %v6207
        %v6329 = vpop.f32.mrf.mxu0
        %v6330 = vadd.f32 0.0, %v6329
        %v6331 = vpop.f32.mrf.mxu0
        %v6332 = vpop.f32.mrf.mxu0
        %v6333 = vadd.f32 0.0, %v6332
        %v6334 = vpop.f32.mrf.mxu0
        %6335 = vdwg.mxu0
        %v6336 = vadd.f32 %v6169, %v6244
        %v6337 = vadd.f32 %v6170, %v6246
        %v6338 = vadd.f32 %v6171, %v6287
        %v6339 = vadd.f32 %v6172, %v6289
        %v6340 = vadd.f32 %v6173, %v6330
        %v6341 = vadd.f32 %v6174, %v6248
        %v6342 = vadd.f32 %v6175, %v6250
        %v6343 = vadd.f32 %v6176, %v6291
        %v6344 = vadd.f32 %v6177, %v6293
        %v6345 = vadd.f32 %v6178, %v6333
        %s6346 = scalar_lea.vmem [#allocation4], 272
        %v6347 = vld [vmem:[%s6346] sm:$0xf]
        %v6348 = vld [vmem:[%s6346 + $0x4] sm:$0xf]
        %v6351 = vunpack.c.l.b16 %v6347
        %v6352 = vunpack.c.l.b16 %v6348
        %v6353 = vpack.c.b16 %v6352, %v6351
        %6354 = vrot.lane.b32.xlu0 %v5206, 71
        %v6355 = vpop.permute.xlu0 %6354
        %6356 = vrot.lane.b32.xlu0 %v5207, 71
        %v6357 = vpop.permute.xlu0 %6356
        %6358 = vrot.lane.b32.xlu0 %v5208, 71
        %v6359 = vpop.permute.xlu0 %6358
        %6360 = vrot.lane.b32.xlu0 %v5209, 71
        %v6361 = vpop.permute.xlu0 %6360
        %6362 = vrot.lane.b32.xlu0 %v5210, 71
        %v6363 = vpop.permute.xlu0 %6362
        %v6364 = vsel %vm1576, %v6355, %v6357
        %v6365 = vsel %vm1576, %v6357, %v6359
        %v6366 = vsel %vm1576, %v6359, %v6361
        %v6367 = vsel %vm1576, %v6361, %v6363
        %v6374 = vsel %vm300, %v6353, 0
        %6376 = vmatprep.subr.bf16.mxu0 0
        %6377 = vmatpush1.bf16.msra.mxu0 0
        %6378 = vmatprep.subr.bf16.mxu0 0
        %6379 = vmatpush1.bf16.msra.mxu0 0
        %6380 = vmatprep.subr.bf16.mxu0 0
        %6381 = vmatpush1.bf16.msra.mxu0 0
        %6382 = vmatprep.subr.bf16.mxu0 0
        %6383 = vmatpush1.bf16.msra.mxu0 0
        %6384 = vmatprep.subr.bf16.mxu0 0
        %6385 = vmatpush1.bf16.msra.mxu0 0
        %6386 = vmatprep.subr.bf16.mxu0 0
        %6387 = vmatpush1.bf16.msra.mxu0 0
        %6388 = vmatprep.subr.bf16.mxu0 0
        %6389 = vmatpush1.bf16.msra.mxu0 0
        %6390 = vmatprep.subr.bf16.mxu0 %v6365
        %6391 = vmatpush1.bf16.msra.mxu0 %v6364
        %6392 = vmatprep.subr.bf16.mxu0 0
        %6393 = vmatpush2.bf16.msra.mxu0 0
        %6394 = vmatprep.subr.bf16.mxu0 0
        %6395 = vmatpush2.bf16.msra.mxu0 0
        %6396 = vmatprep.subr.bf16.mxu0 0
        %6397 = vmatpush2.bf16.msra.mxu0 0
        %6398 = vmatprep.subr.bf16.mxu0 0
        %6399 = vmatpush2.bf16.msra.mxu0 0
        %6400 = vmatprep.subr.bf16.mxu0 0
        %6401 = vmatpush2.bf16.msra.mxu0 0
        %6402 = vmatprep.subr.bf16.mxu0 0
        %6403 = vmatpush2.bf16.msra.mxu0 0
        %6404 = vmatprep.subr.bf16.mxu0 0
        %6405 = vmatpush2.bf16.msra.mxu0 0
        %6406 = vmatprep.subr.bf16.mxu0 0
        %6407 = vmatpush2.bf16.msra.mxu0 0
        %6408 = vmatprep.mubr.bf16.mxu0 0
        %6409 = vmatmul.mubr.bf16.gmra.mxu0 %v6374
        %v6410 = vpop.f32.mrf.mxu0
        %v6411 = vadd.f32 0.0, %v6410
        %v6412 = vpop.f32.mrf.mxu0
        %v6413 = vadd.f32 0.0, %v6412
        %v6414 = vpop.f32.mrf.mxu0
        %v6415 = vadd.f32 0.0, %v6414
        %v6416 = vpop.f32.mrf.mxu0
        %v6417 = vadd.f32 0.0, %v6416
        %6418 = vdwg.mxu0
        %6419 = vmatprep.subr.bf16.mxu0 0
        %6420 = vmatpush1.bf16.msra.mxu0 0
        %6421 = vmatprep.subr.bf16.mxu0 0
        %6422 = vmatpush1.bf16.msra.mxu0 0
        %6423 = vmatprep.subr.bf16.mxu0 0
        %6424 = vmatpush1.bf16.msra.mxu0 0
        %6425 = vmatprep.subr.bf16.mxu0 0
        %6426 = vmatpush1.bf16.msra.mxu0 0
        %6427 = vmatprep.subr.bf16.mxu0 0
        %6428 = vmatpush1.bf16.msra.mxu0 0
        %6429 = vmatprep.subr.bf16.mxu0 0
        %6430 = vmatpush1.bf16.msra.mxu0 0
        %6431 = vmatprep.subr.bf16.mxu0 0
        %6432 = vmatpush1.bf16.msra.mxu0 0
        %6433 = vmatprep.subr.bf16.mxu0 %v6367
        %6434 = vmatpush1.bf16.msra.mxu0 %v6366
        %6435 = vmatprep.subr.bf16.mxu0 0
        %6436 = vmatpush2.bf16.msra.mxu0 0
        %6437 = vmatprep.subr.bf16.mxu0 0
        %6438 = vmatpush2.bf16.msra.mxu0 0
        %6439 = vmatprep.subr.bf16.mxu0 0
        %6440 = vmatpush2.bf16.msra.mxu0 0
        %6441 = vmatprep.subr.bf16.mxu0 0
        %6442 = vmatpush2.bf16.msra.mxu0 0
        %6443 = vmatprep.subr.bf16.mxu0 0
        %6444 = vmatpush2.bf16.msra.mxu0 0
        %6445 = vmatprep.subr.bf16.mxu0 0
        %6446 = vmatpush2.bf16.msra.mxu0 0
        %6447 = vmatprep.subr.bf16.mxu0 0
        %6448 = vmatpush2.bf16.msra.mxu0 0
        %6449 = vmatprep.subr.bf16.mxu0 0
        %6450 = vmatpush2.bf16.msra.mxu0 0
        %6451 = vmatprep.mubr.bf16.mxu0 0
        %6452 = vmatmul.mubr.bf16.gmra.mxu0 %v6374
        %v6453 = vpop.f32.mrf.mxu0
        %v6454 = vadd.f32 0.0, %v6453
        %v6455 = vpop.f32.mrf.mxu0
        %v6456 = vadd.f32 0.0, %v6455
        %v6457 = vpop.f32.mrf.mxu0
        %v6458 = vadd.f32 0.0, %v6457
        %v6459 = vpop.f32.mrf.mxu0
        %v6460 = vadd.f32 0.0, %v6459
        %6461 = vdwg.mxu0
        %6462 = vmatprep.subr.bf16.mxu0 0
        %6463 = vmatpush1.bf16.msra.mxu0 0
        %6464 = vmatprep.subr.bf16.mxu0 0
        %6465 = vmatpush1.bf16.msra.mxu0 0
        %6466 = vmatprep.subr.bf16.mxu0 0
        %6467 = vmatpush1.bf16.msra.mxu0 0
        %6468 = vmatprep.subr.bf16.mxu0 0
        %6469 = vmatpush1.bf16.msra.mxu0 0
        %6470 = vmatprep.subr.bf16.mxu0 0
        %6471 = vmatpush1.bf16.msra.mxu0 0
        %6472 = vmatprep.subr.bf16.mxu0 0
        %6473 = vmatpush1.bf16.msra.mxu0 0
        %6474 = vmatprep.subr.bf16.mxu0 0
        %6475 = vmatpush1.bf16.msra.mxu0 0
        %6476 = vmatprep.subr.bf16.mxu0 0
        %6477 = vmatpush1.bf16.msra.mxu0 %v6363
        %6478 = vmatprep.subr.bf16.mxu0 0
        %6479 = vmatpush2.bf16.msra.mxu0 0
        %6480 = vmatprep.subr.bf16.mxu0 0
        %6481 = vmatpush2.bf16.msra.mxu0 0
        %6482 = vmatprep.subr.bf16.mxu0 0
        %6483 = vmatpush2.bf16.msra.mxu0 0
        %6484 = vmatprep.subr.bf16.mxu0 0
        %6485 = vmatpush2.bf16.msra.mxu0 0
        %6486 = vmatprep.subr.bf16.mxu0 0
        %6487 = vmatpush2.bf16.msra.mxu0 0
        %6488 = vmatprep.subr.bf16.mxu0 0
        %6489 = vmatpush2.bf16.msra.mxu0 0
        %6490 = vmatprep.subr.bf16.mxu0 0
        %6491 = vmatpush2.bf16.msra.mxu0 0
        %6492 = vmatprep.subr.bf16.mxu0 0
        %6493 = vmatpush2.bf16.msra.mxu0 0
        %6494 = vmatprep.mubr.bf16.mxu0 0
        %6495 = vmatmul.mubr.bf16.gmra.mxu0 %v6374
        %v6496 = vpop.f32.mrf.mxu0
        %v6497 = vadd.f32 0.0, %v6496
        %v6498 = vpop.f32.mrf.mxu0
        %v6499 = vpop.f32.mrf.mxu0
        %v6500 = vadd.f32 0.0, %v6499
        %v6501 = vpop.f32.mrf.mxu0
        %6502 = vdwg.mxu0
        %v6503 = vadd.f32 %v6336, %v6411
        %v6504 = vadd.f32 %v6337, %v6413
        %v6505 = vadd.f32 %v6338, %v6454
        %v6506 = vadd.f32 %v6339, %v6456
        %v6507 = vadd.f32 %v6340, %v6497
        %v6508 = vadd.f32 %v6341, %v6415
        %v6509 = vadd.f32 %v6342, %v6417
        %v6510 = vadd.f32 %v6343, %v6458
        %v6511 = vadd.f32 %v6344, %v6460
        %v6512 = vadd.f32 %v6345, %v6500
        %s6513 = scalar_lea.vmem [#allocation4], 280
        %v6514 = vld [vmem:[%s6513] sm:$0xf]
        %v6515 = vld [vmem:[%s6513 + $0x4] sm:$0xf]
        %v6518 = vunpack.c.l.b16 %v6514
        %v6519 = vunpack.c.l.b16 %v6515
        %v6520 = vpack.c.b16 %v6519, %v6518
        %6521 = vrot.lane.b32.xlu0 %v5206, 70
        %v6522 = vpop.permute.xlu0 %6521
        %6523 = vrot.lane.b32.xlu0 %v5207, 70
        %v6524 = vpop.permute.xlu0 %6523
        %6525 = vrot.lane.b32.xlu0 %v5208, 70
        %v6526 = vpop.permute.xlu0 %6525
        %6527 = vrot.lane.b32.xlu0 %v5209, 70
        %v6528 = vpop.permute.xlu0 %6527
        %6529 = vrot.lane.b32.xlu0 %v5210, 70
        %v6530 = vpop.permute.xlu0 %6529
        %v6531 = vsel %vm1755, %v6522, %v6524
        %v6532 = vsel %vm1755, %v6524, %v6526
        %v6533 = vsel %vm1755, %v6526, %v6528
        %v6534 = vsel %vm1755, %v6528, %v6530
        %v6541 = vsel %vm300, %v6520, 0
        %6543 = vmatprep.subr.bf16.mxu0 0
        %6544 = vmatpush1.bf16.msra.mxu0 0
        %6545 = vmatprep.subr.bf16.mxu0 0
        %6546 = vmatpush1.bf16.msra.mxu0 0
        %6547 = vmatprep.subr.bf16.mxu0 0
        %6548 = vmatpush1.bf16.msra.mxu0 0
        %6549 = vmatprep.subr.bf16.mxu0 0
        %6550 = vmatpush1.bf16.msra.mxu0 0
        %6551 = vmatprep.subr.bf16.mxu0 0
        %6552 = vmatpush1.bf16.msra.mxu0 0
        %6553 = vmatprep.subr.bf16.mxu0 0
        %6554 = vmatpush1.bf16.msra.mxu0 0
        %6555 = vmatprep.subr.bf16.mxu0 0
        %6556 = vmatpush1.bf16.msra.mxu0 0
        %6557 = vmatprep.subr.bf16.mxu0 %v6532
        %6558 = vmatpush1.bf16.msra.mxu0 %v6531
        %6559 = vmatprep.subr.bf16.mxu0 0
        %6560 = vmatpush2.bf16.msra.mxu0 0
        %6561 = vmatprep.subr.bf16.mxu0 0
        %6562 = vmatpush2.bf16.msra.mxu0 0
        %6563 = vmatprep.subr.bf16.mxu0 0
        %6564 = vmatpush2.bf16.msra.mxu0 0
        %6565 = vmatprep.subr.bf16.mxu0 0
        %6566 = vmatpush2.bf16.msra.mxu0 0
        %6567 = vmatprep.subr.bf16.mxu0 0
        %6568 = vmatpush2.bf16.msra.mxu0 0
        %6569 = vmatprep.subr.bf16.mxu0 0
        %6570 = vmatpush2.bf16.msra.mxu0 0
        %6571 = vmatprep.subr.bf16.mxu0 0
        %6572 = vmatpush2.bf16.msra.mxu0 0
        %6573 = vmatprep.subr.bf16.mxu0 0
        %6574 = vmatpush2.bf16.msra.mxu0 0
        %6575 = vmatprep.mubr.bf16.mxu0 0
        %6576 = vmatmul.mubr.bf16.gmra.mxu0 %v6541
        %v6577 = vpop.f32.mrf.mxu0
        %v6578 = vadd.f32 0.0, %v6577
        %v6579 = vpop.f32.mrf.mxu0
        %v6580 = vadd.f32 0.0, %v6579
        %v6581 = vpop.f32.mrf.mxu0
        %v6582 = vadd.f32 0.0, %v6581
        %v6583 = vpop.f32.mrf.mxu0
        %v6584 = vadd.f32 0.0, %v6583
        %6585 = vdwg.mxu0
        %6586 = vmatprep.subr.bf16.mxu0 0
        %6587 = vmatpush1.bf16.msra.mxu0 0
        %6588 = vmatprep.subr.bf16.mxu0 0
        %6589 = vmatpush1.bf16.msra.mxu0 0
        %6590 = vmatprep.subr.bf16.mxu0 0
        %6591 = vmatpush1.bf16.msra.mxu0 0
        %6592 = vmatprep.subr.bf16.mxu0 0
        %6593 = vmatpush1.bf16.msra.mxu0 0
        %6594 = vmatprep.subr.bf16.mxu0 0
        %6595 = vmatpush1.bf16.msra.mxu0 0
        %6596 = vmatprep.subr.bf16.mxu0 0
        %6597 = vmatpush1.bf16.msra.mxu0 0
        %6598 = vmatprep.subr.bf16.mxu0 0
        %6599 = vmatpush1.bf16.msra.mxu0 0
        %6600 = vmatprep.subr.bf16.mxu0 %v6534
        %6601 = vmatpush1.bf16.msra.mxu0 %v6533
        %6602 = vmatprep.subr.bf16.mxu0 0
        %6603 = vmatpush2.bf16.msra.mxu0 0
        %6604 = vmatprep.subr.bf16.mxu0 0
        %6605 = vmatpush2.bf16.msra.mxu0 0
        %6606 = vmatprep.subr.bf16.mxu0 0
        %6607 = vmatpush2.bf16.msra.mxu0 0
        %6608 = vmatprep.subr.bf16.mxu0 0
        %6609 = vmatpush2.bf16.msra.mxu0 0
        %6610 = vmatprep.subr.bf16.mxu0 0
        %6611 = vmatpush2.bf16.msra.mxu0 0
        %6612 = vmatprep.subr.bf16.mxu0 0
        %6613 = vmatpush2.bf16.msra.mxu0 0
        %6614 = vmatprep.subr.bf16.mxu0 0
        %6615 = vmatpush2.bf16.msra.mxu0 0
        %6616 = vmatprep.subr.bf16.mxu0 0
        %6617 = vmatpush2.bf16.msra.mxu0 0
        %6618 = vmatprep.mubr.bf16.mxu0 0
        %6619 = vmatmul.mubr.bf16.gmra.mxu0 %v6541
        %v6620 = vpop.f32.mrf.mxu0
        %v6621 = vadd.f32 0.0, %v6620
        %v6622 = vpop.f32.mrf.mxu0
        %v6623 = vadd.f32 0.0, %v6622
        %v6624 = vpop.f32.mrf.mxu0
        %v6625 = vadd.f32 0.0, %v6624
        %v6626 = vpop.f32.mrf.mxu0
        %v6627 = vadd.f32 0.0, %v6626
        %6628 = vdwg.mxu0
        %6629 = vmatprep.subr.bf16.mxu0 0
        %6630 = vmatpush1.bf16.msra.mxu0 0
        %6631 = vmatprep.subr.bf16.mxu0 0
        %6632 = vmatpush1.bf16.msra.mxu0 0
        %6633 = vmatprep.subr.bf16.mxu0 0
        %6634 = vmatpush1.bf16.msra.mxu0 0
        %6635 = vmatprep.subr.bf16.mxu0 0
        %6636 = vmatpush1.bf16.msra.mxu0 0
        %6637 = vmatprep.subr.bf16.mxu0 0
        %6638 = vmatpush1.bf16.msra.mxu0 0
        %6639 = vmatprep.subr.bf16.mxu0 0
        %6640 = vmatpush1.bf16.msra.mxu0 0
        %6641 = vmatprep.subr.bf16.mxu0 0
        %6642 = vmatpush1.bf16.msra.mxu0 0
        %6643 = vmatprep.subr.bf16.mxu0 0
        %6644 = vmatpush1.bf16.msra.mxu0 %v6530
        %6645 = vmatprep.subr.bf16.mxu0 0
        %6646 = vmatpush2.bf16.msra.mxu0 0
        %6647 = vmatprep.subr.bf16.mxu0 0
        %6648 = vmatpush2.bf16.msra.mxu0 0
        %6649 = vmatprep.subr.bf16.mxu0 0
        %6650 = vmatpush2.bf16.msra.mxu0 0
        %6651 = vmatprep.subr.bf16.mxu0 0
        %6652 = vmatpush2.bf16.msra.mxu0 0
        %6653 = vmatprep.subr.bf16.mxu0 0
        %6654 = vmatpush2.bf16.msra.mxu0 0
        %6655 = vmatprep.subr.bf16.mxu0 0
        %6656 = vmatpush2.bf16.msra.mxu0 0
        %6657 = vmatprep.subr.bf16.mxu0 0
        %6658 = vmatpush2.bf16.msra.mxu0 0
        %6659 = vmatprep.subr.bf16.mxu0 0
        %6660 = vmatpush2.bf16.msra.mxu0 0
        %6661 = vmatprep.mubr.bf16.mxu0 0
        %6662 = vmatmul.mubr.bf16.gmra.mxu0 %v6541
        %v6663 = vpop.f32.mrf.mxu0
        %v6664 = vadd.f32 0.0, %v6663
        %v6665 = vpop.f32.mrf.mxu0
        %v6666 = vpop.f32.mrf.mxu0
        %v6667 = vadd.f32 0.0, %v6666
        %v6668 = vpop.f32.mrf.mxu0
        %6669 = vdwg.mxu0
        %v6670 = vadd.f32 %v6503, %v6578
        %v6671 = vadd.f32 %v6504, %v6580
        %v6672 = vadd.f32 %v6505, %v6621
        %v6673 = vadd.f32 %v6506, %v6623
        %v6674 = vadd.f32 %v6507, %v6664
        %v6675 = vadd.f32 %v6508, %v6582
        %v6676 = vadd.f32 %v6509, %v6584
        %v6677 = vadd.f32 %v6510, %v6625
        %v6678 = vadd.f32 %v6511, %v6627
        %v6679 = vadd.f32 %v6512, %v6667
        %v6680 = vmax.f32 %v6670, 0.0
        %v6681 = vmax.f32 %v6671, 0.0
        %v6682 = vmax.f32 %v6672, 0.0
        %v6683 = vmax.f32 %v6673, 0.0
        %v6684 = vmax.f32 %v6674, 0.0
        %v6685 = vmax.f32 %v6675, 0.0
        %v6686 = vmax.f32 %v6676, 0.0
        %v6687 = vmax.f32 %v6677, 0.0
        %v6688 = vmax.f32 %v6678, 0.0
        %v6689 = vmax.f32 %v6679, 0.0
        %s6690 = scalar_lea.vmem [#allocation6], 48
        %v6691 = vld [vmem:[%s6690] sm:$0xff]
        %v6692 = vld [vmem:[%s6690 + $0x8] sm:$0xff]
        %6694 = vset.pattern.permute.xlu0 0
        %6695 = vperm.xlu0 %6694, %v6691
        %v6696 = vpop.permute.xlu0 %6695
        %6699 = vset.pattern.permute.xlu0 0
        %6700 = vperm.xlu0 %6699, %v6692
        %v6701 = vpop.permute.xlu0 %6700
        %v6703 = vmul.f32 %v6680, %v6696
        %v6704 = vmul.f32 %v6681, %v6696
        %v6705 = vmul.f32 %v6682, %v6696
        %v6706 = vmul.f32 %v6683, %v6696
        %v6707 = vmul.f32 %v6684, %v6696
        %v6708 = vmul.f32 %v6685, %v6701
        %v6709 = vmul.f32 %v6686, %v6701
        %v6710 = vmul.f32 %v6687, %v6701
        %v6711 = vmul.f32 %v6688, %v6701
        %v6712 = vmul.f32 %v6689, %v6701
        %s6713 = scalar_lea.vmem %s3, 48
        %v6714 = vld [vmem:[%s6713] sm:$0xff]
        %v6715 = vld [vmem:[%s6713 + $0x8] sm:$0xff]
        %6717 = vset.pattern.permute.xlu0 0
        %6718 = vperm.xlu0 %6717, %v6714
        %v6719 = vpop.permute.xlu0 %6718
        %6722 = vset.pattern.permute.xlu0 0
        %6723 = vperm.xlu0 %6722, %v6715
        %v6724 = vpop.permute.xlu0 %6723
        %v6726 = vadd.f32 %v6703, %v6719
        %v6727 = vadd.f32 %v6704, %v6719
        %v6728 = vadd.f32 %v6705, %v6719
        %v6729 = vadd.f32 %v6706, %v6719
        %v6730 = vadd.f32 %v6707, %v6719
        %v6731 = vadd.f32 %v6708, %v6724
        %v6732 = vadd.f32 %v6709, %v6724
        %v6733 = vadd.f32 %v6710, %v6724
        %v6734 = vadd.f32 %v6711, %v6724
        %v6735 = vadd.f32 %v6712, %v6724
        %6746 = vrot.lane.b32.xlu0 %v6726, 127
        %v6747 = vpop.permute.xlu0 %6746
        %6748 = vrot.lane.b32.xlu0 %v6727, 127
        %v6749 = vpop.permute.xlu0 %6748
        %6750 = vrot.lane.b32.xlu0 %v6728, 127
        %v6751 = vpop.permute.xlu0 %6750
        %6752 = vrot.lane.b32.xlu0 %v6729, 127
        %v6753 = vpop.permute.xlu0 %6752
        %6754 = vrot.lane.b32.xlu0 %v6730, 127
        %v6755 = vpop.permute.xlu0 %6754
        %6756 = vrot.lane.b32.xlu0 %v6731, 127
        %v6757 = vpop.permute.xlu0 %6756
        %6758 = vrot.lane.b32.xlu0 %v6732, 127
        %v6759 = vpop.permute.xlu0 %6758
        %6760 = vrot.lane.b32.xlu0 %v6733, 127
        %v6761 = vpop.permute.xlu0 %6760
        %6762 = vrot.lane.b32.xlu0 %v6734, 127
        %v6763 = vpop.permute.xlu0 %6762
        %6764 = vrot.lane.b32.xlu0 %v6735, 127
        %v6765 = vpop.permute.xlu0 %6764
        %vm6766 = vcmask 1039360
        %v6767 = vsel %vm6766, %v6747, %v6749
        %v6768 = vsel %vm6766, %v6749, %v6751
        %v6769 = vsel %vm6766, %v6751, %v6753
        %v6770 = vsel %vm6766, %v6753, %v6755
        %v6771 = vsel %vm6766, %v6757, %v6759
        %v6772 = vsel %vm6766, %v6759, %v6761
        %v6773 = vsel %vm6766, %v6761, %v6763
        %v6774 = vsel %vm6766, %v6763, %v6765
        %v6785 = vmax.f32 %v6726, %v6767
        %v6786 = vmax.f32 %v6727, %v6768
        %v6787 = vmax.f32 %v6728, %v6769
        %v6788 = vmax.f32 %v6729, %v6770
        %v6789 = vmax.f32 %v6730, %v6755
        %v6790 = vmax.f32 %v6731, %v6771
        %v6791 = vmax.f32 %v6732, %v6772
        %v6792 = vmax.f32 %v6733, %v6773
        %v6793 = vmax.f32 %v6734, %v6774
        %v6794 = vmax.f32 %v6735, %v6765
        %6805 = vrot.lane.b32.xlu0 %v6785, 100
        %v6806 = vpop.permute.xlu0 %6805
        %6807 = vrot.lane.b32.xlu0 %v6786, 100
        %v6808 = vpop.permute.xlu0 %6807
        %6809 = vrot.lane.b32.xlu0 %v6787, 100
        %v6810 = vpop.permute.xlu0 %6809
        %6811 = vrot.lane.b32.xlu0 %v6788, 100
        %v6812 = vpop.permute.xlu0 %6811
        %6813 = vrot.lane.b32.xlu0 %v6789, 100
        %v6814 = vpop.permute.xlu0 %6813
        %6815 = vrot.lane.b32.xlu0 %v6790, 100
        %v6816 = vpop.permute.xlu0 %6815
        %6817 = vrot.lane.b32.xlu0 %v6791, 100
        %v6818 = vpop.permute.xlu0 %6817
        %6819 = vrot.lane.b32.xlu0 %v6792, 100
        %v6820 = vpop.permute.xlu0 %6819
        %6821 = vrot.lane.b32.xlu0 %v6793, 100
        %v6822 = vpop.permute.xlu0 %6821
        %6823 = vrot.lane.b32.xlu0 %v6794, 100
        %v6824 = vpop.permute.xlu0 %6823
        %vm6825 = vcmask 818176
        %v6826 = vsel %vm6825, %v6806, %v6808
        %v6827 = vsel %vm6825, %v6808, %v6810
        %v6828 = vsel %vm6825, %v6810, %v6812
        %v6829 = vsel %vm6825, %v6812, %v6814
        %v6830 = vsel %vm6825, %v6816, %v6818
        %v6831 = vsel %vm6825, %v6818, %v6820
        %v6832 = vsel %vm6825, %v6820, %v6822
        %v6833 = vsel %vm6825, %v6822, %v6824
        %v6844 = vmax.f32 %v6785, %v6826
        %v6845 = vmax.f32 %v6786, %v6827
        %v6846 = vmax.f32 %v6787, %v6828
        %v6847 = vmax.f32 %v6788, %v6829
        %v6848 = vmax.f32 %v6789, %v6814
        %v6849 = vmax.f32 %v6790, %v6830
        %v6850 = vmax.f32 %v6791, %v6831
        %v6851 = vmax.f32 %v6792, %v6832
        %v6852 = vmax.f32 %v6793, %v6833
        %v6853 = vmax.f32 %v6794, %v6824
        %v6854 = vpack.c.bf16 %v6849, %v6844
        %v6855 = vpack.c.bf16 %v6850, %v6845
        %v6856 = vpack.c.bf16 %v6851, %v6846
        %v6857 = vpack.c.bf16 %v6852, %v6847
        %v6858 = vpack.c.bf16 %v6853, %v6848
        %v6859 = vld [vmem:[#allocation8] sm:$0xf]
        %v6860 = vld [vmem:[#allocation8 + $0x4] sm:$0xf]
        %v6861 = vld [vmem:[#allocation8 + $0x8] sm:$0xf]
        %v6862 = vld [vmem:[#allocation8 + $0xc] sm:$0xf]
        %v6863 = vld [vmem:[#allocation8 + $0x10] sm:$0xf]
        %v6864 = vld [vmem:[#allocation8 + $0x14] sm:$0xf]
        %v6865 = vld [vmem:[#allocation8 + $0x18] sm:$0xf]
        %v6866 = vld [vmem:[#allocation8 + $0x1c] sm:$0xf]
        %v6867 = vld [vmem:[#allocation8 + $0x20] sm:$0xf]
        %v6868 = vld [vmem:[#allocation8 + $0x24] sm:$0xf]
        %v6869 = vld [vmem:[#allocation8 + $0x28] sm:$0xf]
        %v6870 = vld [vmem:[#allocation8 + $0x2c] sm:$0xf]
        %v6871 = vld [vmem:[#allocation8 + $0x30] sm:$0xf]
        %v6872 = vld [vmem:[#allocation8 + $0x34] sm:$0xf]
        %v6873 = vld [vmem:[#allocation8 + $0x38] sm:$0xf]
        %v6874 = vld [vmem:[#allocation8 + $0x3c] sm:$0xf]
        %v6875 = vld [vmem:[#allocation8 + $0x40] sm:$0xf]
        %v6876 = vld [vmem:[#allocation8 + $0x44] sm:$0xf]
        %v6877 = vld [vmem:[#allocation8 + $0x48] sm:$0xf]
        %v6878 = vld [vmem:[#allocation8 + $0x4c] sm:$0xf]
        %v6879 = vld [vmem:[#allocation8 + $0x50] sm:$0xf]
        %v6880 = vld [vmem:[#allocation8 + $0x54] sm:$0xf]
        %v6881 = vld [vmem:[#allocation8 + $0x58] sm:$0xf]
        %v6882 = vld [vmem:[#allocation8 + $0x5c] sm:$0xf]
        %v6883 = vld [vmem:[#allocation8 + $0x60] sm:$0xf]
        %v6884 = vld [vmem:[#allocation8 + $0x64] sm:$0xf]
        %v6885 = vld [vmem:[#allocation8 + $0x68] sm:$0xf]
        %v6886 = vld [vmem:[#allocation8 + $0x6c] sm:$0xf]
        %v6887 = vld [vmem:[#allocation8 + $0x70] sm:$0xf]
        %v6888 = vld [vmem:[#allocation8 + $0x74] sm:$0xf]
        %v6889 = vld [vmem:[#allocation8 + $0x78] sm:$0xf]
        %v6890 = vld [vmem:[#allocation8 + $0x7c] sm:$0xf]
        %v6891 = vld [vmem:[#allocation8 + $0x80] sm:$0xf]
        %v6892 = vld [vmem:[#allocation8 + $0x84] sm:$0xf]
        %v6893 = vld [vmem:[#allocation8 + $0x88] sm:$0xf]
        %v6894 = vld [vmem:[#allocation8 + $0x8c] sm:$0xf]
        %v6895 = vld [vmem:[#allocation8 + $0x90] sm:$0xf]
        %v6896 = vld [vmem:[#allocation8 + $0x94] sm:$0xf]
        %v6897 = vld [vmem:[#allocation8 + $0x98] sm:$0xf]
        %v6898 = vld [vmem:[#allocation8 + $0x9c] sm:$0xf]
        %v6899 = vld [vmem:[#allocation8 + $0xa0] sm:$0xf]
        %v6900 = vld [vmem:[#allocation8 + $0xa4] sm:$0xf]
        %v6901 = vld [vmem:[#allocation8 + $0xa8] sm:$0xf]
        %v6902 = vld [vmem:[#allocation8 + $0xac] sm:$0xf]
        %v6903 = vld [vmem:[#allocation8 + $0xb0] sm:$0xf]
        %v6904 = vld [vmem:[#allocation8 + $0xb4] sm:$0xf]
        %v6905 = vld [vmem:[#allocation8 + $0xb8] sm:$0xf]
        %v6906 = vld [vmem:[#allocation8 + $0xbc] sm:$0xf]
        %v6907 = vld [vmem:[#allocation8 + $0xc0] sm:$0xf]
        %v6908 = vld [vmem:[#allocation8 + $0xc4] sm:$0xf]
        %v6909 = vld [vmem:[#allocation8 + $0xc8] sm:$0xf]
        %v6910 = vld [vmem:[#allocation8 + $0xcc] sm:$0xf]
        %v6911 = vld [vmem:[#allocation8 + $0xd0] sm:$0xf]
        %v6912 = vld [vmem:[#allocation8 + $0xd4] sm:$0xf]
        %v6913 = vld [vmem:[#allocation8 + $0xd8] sm:$0xf]
        %v6914 = vld [vmem:[#allocation8 + $0xdc] sm:$0xf]
        %v6915 = vld [vmem:[#allocation8 + $0xe0] sm:$0xf]
        %v6916 = vld [vmem:[#allocation8 + $0xe4] sm:$0xf]
        %v6917 = vld [vmem:[#allocation8 + $0xe8] sm:$0xf]
        %v6918 = vld [vmem:[#allocation8 + $0xec] sm:$0xf]
        %v6919 = vld [vmem:[#allocation8 + $0xf0] sm:$0xf]
        %v6920 = vld [vmem:[#allocation8 + $0xf4] sm:$0xf]
        %v6921 = vld [vmem:[#allocation8 + $0xf8] sm:$0xf]
        %v6922 = vld [vmem:[#allocation8 + $0xfc] sm:$0xf]
        %v6923 = vld [vmem:[#allocation8 + $0x100] sm:$0xf]
        %v6924 = vld [vmem:[#allocation8 + $0x104] sm:$0x3]
        %v6991 = vunpack.c.l.b16 %v6859
        %v6992 = vunpack.c.l.b16 %v6860
        %v6993 = vunpack.c.l.b16 %v6861
        %v6994 = vunpack.c.l.b16 %v6862
        %v6995 = vunpack.c.l.b16 %v6863
        %v6996 = vunpack.c.l.b16 %v6864
        %v6997 = vunpack.c.l.b16 %v6865
        %v6998 = vunpack.c.l.b16 %v6866
        %v6999 = vunpack.c.l.b16 %v6867
        %v7000 = vunpack.c.l.b16 %v6868
        %v7001 = vunpack.c.l.b16 %v6869
        %v7002 = vunpack.c.l.b16 %v6870
        %v7003 = vunpack.c.l.b16 %v6871
        %v7004 = vunpack.c.l.b16 %v6872
        %v7005 = vunpack.c.l.b16 %v6873
        %v7006 = vunpack.c.l.b16 %v6874
        %v7007 = vunpack.c.l.b16 %v6875
        %v7008 = vunpack.c.l.b16 %v6876
        %v7009 = vunpack.c.l.b16 %v6877
        %v7010 = vunpack.c.l.b16 %v6878
        %v7011 = vunpack.c.l.b16 %v6879
        %v7012 = vunpack.c.l.b16 %v6880
        %v7013 = vunpack.c.l.b16 %v6881
        %v7014 = vunpack.c.l.b16 %v6882
        %v7015 = vunpack.c.l.b16 %v6883
        %v7016 = vunpack.c.l.b16 %v6884
        %v7017 = vunpack.c.l.b16 %v6885
        %v7018 = vunpack.c.l.b16 %v6886
        %v7019 = vunpack.c.l.b16 %v6887
        %v7020 = vunpack.c.l.b16 %v6888
        %v7021 = vunpack.c.l.b16 %v6889
        %v7022 = vunpack.c.l.b16 %v6890
        %v7023 = vunpack.c.l.b16 %v6891
        %v7024 = vunpack.c.l.b16 %v6892
        %v7025 = vunpack.c.l.b16 %v6893
        %v7026 = vunpack.c.l.b16 %v6894
        %v7027 = vunpack.c.l.b16 %v6895
        %v7028 = vunpack.c.l.b16 %v6896
        %v7029 = vunpack.c.l.b16 %v6897
        %v7030 = vunpack.c.l.b16 %v6898
        %v7031 = vunpack.c.l.b16 %v6899
        %v7032 = vunpack.c.l.b16 %v6900
        %v7033 = vunpack.c.l.b16 %v6901
        %v7034 = vunpack.c.l.b16 %v6902
        %v7035 = vunpack.c.l.b16 %v6903
        %v7036 = vunpack.c.l.b16 %v6904
        %v7037 = vunpack.c.l.b16 %v6905
        %v7038 = vunpack.c.l.b16 %v6906
        %v7039 = vunpack.c.l.b16 %v6907
        %v7040 = vunpack.c.l.b16 %v6908
        %v7041 = vunpack.c.l.b16 %v6909
        %v7042 = vunpack.c.l.b16 %v6910
        %v7043 = vunpack.c.l.b16 %v6911
        %v7044 = vunpack.c.l.b16 %v6912
        %v7045 = vunpack.c.l.b16 %v6913
        %v7046 = vunpack.c.l.b16 %v6914
        %v7047 = vunpack.c.l.b16 %v6915
        %v7048 = vunpack.c.l.b16 %v6916
        %v7049 = vunpack.c.l.b16 %v6917
        %v7050 = vunpack.c.l.b16 %v6918
        %v7051 = vunpack.c.l.b16 %v6919
        %v7052 = vunpack.c.l.b16 %v6920
        %v7053 = vunpack.c.l.b16 %v6921
        %v7054 = vunpack.c.l.b16 %v6922
        %v7055 = vunpack.c.l.b16 %v6923
        %v7056 = vunpack.c.l.b16 %v6924
        %v7057 = vpack.c.b16 %v6992, %v6991
        %v7058 = vpack.c.b16 %v6994, %v6993
        %v7059 = vpack.c.b16 %v6996, %v6995
        %v7060 = vpack.c.b16 %v6998, %v6997
        %v7061 = vpack.c.b16 %v7000, %v6999
        %v7062 = vpack.c.b16 %v7002, %v7001
        %v7063 = vpack.c.b16 %v7004, %v7003
        %v7064 = vpack.c.b16 %v7006, %v7005
        %v7065 = vpack.c.b16 %v7008, %v7007
        %v7066 = vpack.c.b16 %v7010, %v7009
        %v7067 = vpack.c.b16 %v7012, %v7011
        %v7068 = vpack.c.b16 %v7014, %v7013
        %v7069 = vpack.c.b16 %v7016, %v7015
        %v7070 = vpack.c.b16 %v7018, %v7017
        %v7071 = vpack.c.b16 %v7020, %v7019
        %v7072 = vpack.c.b16 %v7022, %v7021
        %v7073 = vpack.c.b16 %v7024, %v7023
        %v7074 = vpack.c.b16 %v7026, %v7025
        %v7075 = vpack.c.b16 %v7028, %v7027
        %v7076 = vpack.c.b16 %v7030, %v7029
        %v7077 = vpack.c.b16 %v7032, %v7031
        %v7078 = vpack.c.b16 %v7034, %v7033
        %v7079 = vpack.c.b16 %v7036, %v7035
        %v7080 = vpack.c.b16 %v7038, %v7037
        %v7081 = vpack.c.b16 %v7040, %v7039
        %v7082 = vpack.c.b16 %v7042, %v7041
        %v7083 = vpack.c.b16 %v7044, %v7043
        %v7084 = vpack.c.b16 %v7046, %v7045
        %v7085 = vpack.c.b16 %v7048, %v7047
        %v7086 = vpack.c.b16 %v7050, %v7049
        %v7087 = vpack.c.b16 %v7052, %v7051
        %v7088 = vpack.c.b16 %v7054, %v7053
        %v7089 = vpack.c.b16 %v7056, %v7055
        %vm7122 = vcmask 89088
        %v7124 = vsel %vm7122, %v6858, 0
        %vm7126 = vcmask 1044480
        %vm7127 = vcmask 1045504
        %v7128 = vsel %vm7126, 4294967295, 65535
        %v7129 = vsel %vm7127, %v7128, 0
        %v7131 = vand.u32 %v7089, %v7129
        %7133 = vmatprep.subr.bf16.mxu0 0
        %7134 = vmatpush1.bf16.msra.mxu0 %v7064
        %7135 = vmatprep.subr.bf16.mxu0 0
        %7136 = vmatpush1.bf16.msra.mxu0 %v7063
        %7137 = vmatprep.subr.bf16.mxu0 0
        %7138 = vmatpush1.bf16.msra.mxu0 %v7062
        %7139 = vmatprep.subr.bf16.mxu0 0
        %7140 = vmatpush1.bf16.msra.mxu0 %v7061
        %7141 = vmatprep.subr.bf16.mxu0 0
        %7142 = vmatpush1.bf16.msra.mxu0 %v7060
        %7143 = vmatprep.subr.bf16.mxu0 0
        %7144 = vmatpush1.bf16.msra.mxu0 %v7059
        %7145 = vmatprep.subr.bf16.mxu0 0
        %7146 = vmatpush1.bf16.msra.mxu0 %v7058
        %7147 = vmatprep.subr.bf16.mxu0 0
        %7148 = vmatpush1.bf16.msra.mxu0 %v7057
        %7149 = vmatprep.subr.bf16.mxu0 0
        %7150 = vmatpush2.bf16.msra.mxu0 %v7072
        %7151 = vmatprep.subr.bf16.mxu0 0
        %7152 = vmatpush2.bf16.msra.mxu0 %v7071
        %7153 = vmatprep.subr.bf16.mxu0 0
        %7154 = vmatpush2.bf16.msra.mxu0 %v7070
        %7155 = vmatprep.subr.bf16.mxu0 0
        %7156 = vmatpush2.bf16.msra.mxu0 %v7069
        %7157 = vmatprep.subr.bf16.mxu0 0
        %7158 = vmatpush2.bf16.msra.mxu0 %v7068
        %7159 = vmatprep.subr.bf16.mxu0 0
        %7160 = vmatpush2.bf16.msra.mxu0 %v7067
        %7161 = vmatprep.subr.bf16.mxu0 0
        %7162 = vmatpush2.bf16.msra.mxu0 %v7066
        %7163 = vmatprep.subr.bf16.mxu0 0
        %7164 = vmatpush2.bf16.msra.mxu0 %v7065
        %7165 = vmatprep.mubr.bf16.mxu0 %v6855
        %7166 = vmatmul.mubr.bf16.gmra.mxu0 %v6854
        %v7167 = vpop.f32.mrf.mxu0
        %v7168 = vadd.f32 0.0, %v7167
        %v7169 = vpop.f32.mrf.mxu0
        %v7170 = vpop.f32.mrf.mxu0
        %v7171 = vadd.f32 0.0, %v7170
        %v7172 = vpop.f32.mrf.mxu0
        %7173 = vdwg.mxu0
        %7174 = vmatprep.subr.bf16.mxu0 0
        %7175 = vmatpush1.bf16.msra.mxu0 %v7080
        %7176 = vmatprep.subr.bf16.mxu0 0
        %7177 = vmatpush1.bf16.msra.mxu0 %v7079
        %7178 = vmatprep.subr.bf16.mxu0 0
        %7179 = vmatpush1.bf16.msra.mxu0 %v7078
        %7180 = vmatprep.subr.bf16.mxu0 0
        %7181 = vmatpush1.bf16.msra.mxu0 %v7077
        %7182 = vmatprep.subr.bf16.mxu0 0
        %7183 = vmatpush1.bf16.msra.mxu0 %v7076
        %7184 = vmatprep.subr.bf16.mxu0 0
        %7185 = vmatpush1.bf16.msra.mxu0 %v7075
        %7186 = vmatprep.subr.bf16.mxu0 0
        %7187 = vmatpush1.bf16.msra.mxu0 %v7074
        %7188 = vmatprep.subr.bf16.mxu0 0
        %7189 = vmatpush1.bf16.msra.mxu0 %v7073
        %7190 = vmatprep.subr.bf16.mxu0 0
        %7191 = vmatpush2.bf16.msra.mxu0 %v7088
        %7192 = vmatprep.subr.bf16.mxu0 0
        %7193 = vmatpush2.bf16.msra.mxu0 %v7087
        %7194 = vmatprep.subr.bf16.mxu0 0
        %7195 = vmatpush2.bf16.msra.mxu0 %v7086
        %7196 = vmatprep.subr.bf16.mxu0 0
        %7197 = vmatpush2.bf16.msra.mxu0 %v7085
        %7198 = vmatprep.subr.bf16.mxu0 0
        %7199 = vmatpush2.bf16.msra.mxu0 %v7084
        %7200 = vmatprep.subr.bf16.mxu0 0
        %7201 = vmatpush2.bf16.msra.mxu0 %v7083
        %7202 = vmatprep.subr.bf16.mxu0 0
        %7203 = vmatpush2.bf16.msra.mxu0 %v7082
        %7204 = vmatprep.subr.bf16.mxu0 0
        %7205 = vmatpush2.bf16.msra.mxu0 %v7081
        %7206 = vmatprep.mubr.bf16.mxu0 %v6857
        %7207 = vmatmul.mubr.bf16.gmra.mxu0 %v6856
        %v7208 = vpop.f32.mrf.mxu0
        %v7209 = vadd.f32 %v7168, %v7208
        %v7210 = vpop.f32.mrf.mxu0
        %v7211 = vpop.f32.mrf.mxu0
        %v7212 = vadd.f32 %v7171, %v7211
        %v7213 = vpop.f32.mrf.mxu0
        %7214 = vdwg.mxu0
        %7215 = vmatprep.subr.bf16.mxu0 0
        %7216 = vmatpush1.bf16.msra.mxu0 0
        %7217 = vmatprep.subr.bf16.mxu0 0
        %7218 = vmatpush1.bf16.msra.mxu0 0
        %7219 = vmatprep.subr.bf16.mxu0 0
        %7220 = vmatpush1.bf16.msra.mxu0 0
        %7221 = vmatprep.subr.bf16.mxu0 0
        %7222 = vmatpush1.bf16.msra.mxu0 0
        %7223 = vmatprep.subr.bf16.mxu0 0
        %7224 = vmatpush1.bf16.msra.mxu0 0
        %7225 = vmatprep.subr.bf16.mxu0 0
        %7226 = vmatpush1.bf16.msra.mxu0 0
        %7227 = vmatprep.subr.bf16.mxu0 0
        %7228 = vmatpush1.bf16.msra.mxu0 0
        %7229 = vmatprep.subr.bf16.mxu0 0
        %7230 = vmatpush1.bf16.msra.mxu0 %v7131
        %7231 = vmatprep.subr.bf16.mxu0 0
        %7232 = vmatpush2.bf16.msra.mxu0 0
        %7233 = vmatprep.subr.bf16.mxu0 0
        %7234 = vmatpush2.bf16.msra.mxu0 0
        %7235 = vmatprep.subr.bf16.mxu0 0
        %7236 = vmatpush2.bf16.msra.mxu0 0
        %7237 = vmatprep.subr.bf16.mxu0 0
        %7238 = vmatpush2.bf16.msra.mxu0 0
        %7239 = vmatprep.subr.bf16.mxu0 0
        %7240 = vmatpush2.bf16.msra.mxu0 0
        %7241 = vmatprep.subr.bf16.mxu0 0
        %7242 = vmatpush2.bf16.msra.mxu0 0
        %7243 = vmatprep.subr.bf16.mxu0 0
        %7244 = vmatpush2.bf16.msra.mxu0 0
        %7245 = vmatprep.subr.bf16.mxu0 0
        %7246 = vmatpush2.bf16.msra.mxu0 0
        %7247 = vmatprep.mubr.bf16.mxu0 0
        %7248 = vmatmul.mubr.bf16.gmra.mxu0 %v7124
        %v7249 = vpop.f32.mrf.mxu0
        %v7250 = vadd.f32 %v7209, %v7249
        %v7251 = vpop.f32.mrf.mxu0
        %v7252 = vpop.f32.mrf.mxu0
        %v7253 = vadd.f32 %v7212, %v7252
        %v7254 = vpop.f32.mrf.mxu0
        %7255 = vdwg.mxu0
        %7256 = vst [vmem:[#allocation2] sm:$0xff] %v7250
        %7257 = vst [vmem:[#allocation2 + $0x38] sm:$0xff] %v7253
        %v7258 = vld [vmem:[#allocation2] sm:$0xff]
        %v7259 = vld [vmem:[#allocation2 + $0x38] sm:$0xff]
        %v7260 = vpack.c.bf16 %v7259, %v7258
        %s7261 = scalar_lea.vmem [#allocation4], 288
        %v7262 = vld [vmem:[%s7261] sm:$0xf]
        %v7263 = vld [vmem:[%s7261 + $0x4] sm:$0xf]
        %s7264 = scalar_lea.vmem [#allocation4], 296
        %v7265 = vld [vmem:[%s7264] sm:$0xf]
        %v7266 = vld [vmem:[%s7264 + $0x4] sm:$0xf]
        %v7269 = vunpack.c.l.b16 %v7265
        %v7270 = vunpack.c.l.b16 %v7266
        %v7271 = vpack.c.b16 %v7270, %v7269
        %7273 = vrot.lane.b32.xlu0 %v7260, 127
        %v7274 = vpop.permute.xlu0 %7273
        %v7277 = vsel %vm300, %v7271, 0
        %7279 = vmatprep.subr.bf16.mxu0 0
        %7280 = vmatpush1.bf16.msra.mxu0 0
        %7281 = vmatprep.subr.bf16.mxu0 0
        %7282 = vmatpush1.bf16.msra.mxu0 0
        %7283 = vmatprep.subr.bf16.mxu0 0
        %7284 = vmatpush1.bf16.msra.mxu0 0
        %7285 = vmatprep.subr.bf16.mxu0 0
        %7286 = vmatpush1.bf16.msra.mxu0 0
        %7287 = vmatprep.subr.bf16.mxu0 0
        %7288 = vmatpush1.bf16.msra.mxu0 0
        %7289 = vmatprep.subr.bf16.mxu0 0
        %7290 = vmatpush1.bf16.msra.mxu0 0
        %7291 = vmatprep.subr.bf16.mxu0 0
        %7292 = vmatpush1.bf16.msra.mxu0 0
        %7293 = vmatprep.subr.bf16.mxu0 0
        %7294 = vmatpush1.bf16.msra.mxu0 %v7274
        %7295 = vmatprep.subr.bf16.mxu0 0
        %7296 = vmatpush2.bf16.msra.mxu0 0
        %7297 = vmatprep.subr.bf16.mxu0 0
        %7298 = vmatpush2.bf16.msra.mxu0 0
        %7299 = vmatprep.subr.bf16.mxu0 0
        %7300 = vmatpush2.bf16.msra.mxu0 0
        %7301 = vmatprep.subr.bf16.mxu0 0
        %7302 = vmatpush2.bf16.msra.mxu0 0
        %7303 = vmatprep.subr.bf16.mxu0 0
        %7304 = vmatpush2.bf16.msra.mxu0 0
        %7305 = vmatprep.subr.bf16.mxu0 0
        %7306 = vmatpush2.bf16.msra.mxu0 0
        %7307 = vmatprep.subr.bf16.mxu0 0
        %7308 = vmatpush2.bf16.msra.mxu0 0
        %7309 = vmatprep.subr.bf16.mxu0 0
        %7310 = vmatpush2.bf16.msra.mxu0 0
        %7311 = vmatprep.mubr.bf16.mxu0 0
        %7312 = vmatmul.mubr.bf16.gmra.mxu0 %v7277
        %v7313 = vpop.f32.mrf.mxu0
        %v7314 = vadd.f32 0.0, %v7313
        %v7315 = vpop.f32.mrf.mxu0
        %v7316 = vpop.f32.mrf.mxu0
        %v7317 = vadd.f32 0.0, %v7316
        %v7318 = vpop.f32.mrf.mxu0
        %7319 = vdwg.mxu0
        %v7322 = vunpack.c.l.b16 %v7262
        %v7323 = vunpack.c.l.b16 %v7263
        %v7324 = vpack.c.b16 %v7323, %v7322
        %v7326 = vsel %vm300, %v7324, 0
        %7328 = vmatprep.subr.bf16.mxu0 0
        %7329 = vmatpush1.bf16.msra.mxu0 0
        %7330 = vmatprep.subr.bf16.mxu0 0
        %7331 = vmatpush1.bf16.msra.mxu0 0
        %7332 = vmatprep.subr.bf16.mxu0 0
        %7333 = vmatpush1.bf16.msra.mxu0 0
        %7334 = vmatprep.subr.bf16.mxu0 0
        %7335 = vmatpush1.bf16.msra.mxu0 0
        %7336 = vmatprep.subr.bf16.mxu0 0
        %7337 = vmatpush1.bf16.msra.mxu0 0
        %7338 = vmatprep.subr.bf16.mxu0 0
        %7339 = vmatpush1.bf16.msra.mxu0 0
        %7340 = vmatprep.subr.bf16.mxu0 0
        %7341 = vmatpush1.bf16.msra.mxu0 0
        %7342 = vmatprep.subr.bf16.mxu0 0
        %7343 = vmatpush1.bf16.msra.mxu0 %v7260
        %7344 = vmatprep.subr.bf16.mxu0 0
        %7345 = vmatpush2.bf16.msra.mxu0 0
        %7346 = vmatprep.subr.bf16.mxu0 0
        %7347 = vmatpush2.bf16.msra.mxu0 0
        %7348 = vmatprep.subr.bf16.mxu0 0
        %7349 = vmatpush2.bf16.msra.mxu0 0
        %7350 = vmatprep.subr.bf16.mxu0 0
        %7351 = vmatpush2.bf16.msra.mxu0 0
        %7352 = vmatprep.subr.bf16.mxu0 0
        %7353 = vmatpush2.bf16.msra.mxu0 0
        %7354 = vmatprep.subr.bf16.mxu0 0
        %7355 = vmatpush2.bf16.msra.mxu0 0
        %7356 = vmatprep.subr.bf16.mxu0 0
        %7357 = vmatpush2.bf16.msra.mxu0 0
        %7358 = vmatprep.subr.bf16.mxu0 0
        %7359 = vmatpush2.bf16.msra.mxu0 0
        %7360 = vmatprep.mubr.bf16.mxu0 0
        %7361 = vmatmul.mubr.bf16.gmra.mxu0 %v7326
        %v7362 = vpop.f32.mrf.mxu0
        %v7363 = vadd.f32 %v7314, %v7362
        %v7364 = vpop.f32.mrf.mxu0
        %v7365 = vpop.f32.mrf.mxu0
        %v7366 = vadd.f32 %v7317, %v7365
        %v7367 = vpop.f32.mrf.mxu0
        %7368 = vdwg.mxu0
        %s7369 = scalar_lea.vmem [#allocation4], 304
        %v7370 = vld [vmem:[%s7369] sm:$0xf]
        %v7371 = vld [vmem:[%s7369 + $0x4] sm:$0xf]
        %v7374 = vunpack.c.l.b16 %v7370
        %v7375 = vunpack.c.l.b16 %v7371
        %v7376 = vpack.c.b16 %v7375, %v7374
        %7377 = vrot.lane.b32.xlu0 %v7260, 126
        %v7378 = vpop.permute.xlu0 %7377
        %v7381 = vsel %vm300, %v7376, 0
        %7383 = vmatprep.subr.bf16.mxu0 0
        %7384 = vmatpush1.bf16.msra.mxu0 0
        %7385 = vmatprep.subr.bf16.mxu0 0
        %7386 = vmatpush1.bf16.msra.mxu0 0
        %7387 = vmatprep.subr.bf16.mxu0 0
        %7388 = vmatpush1.bf16.msra.mxu0 0
        %7389 = vmatprep.subr.bf16.mxu0 0
        %7390 = vmatpush1.bf16.msra.mxu0 0
        %7391 = vmatprep.subr.bf16.mxu0 0
        %7392 = vmatpush1.bf16.msra.mxu0 0
        %7393 = vmatprep.subr.bf16.mxu0 0
        %7394 = vmatpush1.bf16.msra.mxu0 0
        %7395 = vmatprep.subr.bf16.mxu0 0
        %7396 = vmatpush1.bf16.msra.mxu0 0
        %7397 = vmatprep.subr.bf16.mxu0 0
        %7398 = vmatpush1.bf16.msra.mxu0 %v7378
        %7399 = vmatprep.subr.bf16.mxu0 0
        %7400 = vmatpush2.bf16.msra.mxu0 0
        %7401 = vmatprep.subr.bf16.mxu0 0
        %7402 = vmatpush2.bf16.msra.mxu0 0
        %7403 = vmatprep.subr.bf16.mxu0 0
        %7404 = vmatpush2.bf16.msra.mxu0 0
        %7405 = vmatprep.subr.bf16.mxu0 0
        %7406 = vmatpush2.bf16.msra.mxu0 0
        %7407 = vmatprep.subr.bf16.mxu0 0
        %7408 = vmatpush2.bf16.msra.mxu0 0
        %7409 = vmatprep.subr.bf16.mxu0 0
        %7410 = vmatpush2.bf16.msra.mxu0 0
        %7411 = vmatprep.subr.bf16.mxu0 0
        %7412 = vmatpush2.bf16.msra.mxu0 0
        %7413 = vmatprep.subr.bf16.mxu0 0
        %7414 = vmatpush2.bf16.msra.mxu0 0
        %7415 = vmatprep.mubr.bf16.mxu0 0
        %7416 = vmatmul.mubr.bf16.gmra.mxu0 %v7381
        %v7417 = vpop.f32.mrf.mxu0
        %v7418 = vadd.f32 0.0, %v7417
        %v7419 = vpop.f32.mrf.mxu0
        %v7420 = vpop.f32.mrf.mxu0
        %v7421 = vadd.f32 0.0, %v7420
        %v7422 = vpop.f32.mrf.mxu0
        %7423 = vdwg.mxu0
        %v7424 = vadd.f32 %v7363, %v7418
        %v7425 = vadd.f32 %v7366, %v7421
        %s7426 = scalar_lea.vmem [#allocation4], 312
        %v7427 = vld [vmem:[%s7426] sm:$0xf]
        %v7428 = vld [vmem:[%s7426 + $0x4] sm:$0xf]
        %v7431 = vunpack.c.l.b16 %v7427
        %v7432 = vunpack.c.l.b16 %v7428
        %v7433 = vpack.c.b16 %v7432, %v7431
        %7434 = vrot.lane.b32.xlu0 %v7260, 118
        %v7435 = vpop.permute.xlu0 %7434
        %v7438 = vsel %vm300, %v7433, 0
        %7440 = vmatprep.subr.bf16.mxu0 0
        %7441 = vmatpush1.bf16.msra.mxu0 0
        %7442 = vmatprep.subr.bf16.mxu0 0
        %7443 = vmatpush1.bf16.msra.mxu0 0
        %7444 = vmatprep.subr.bf16.mxu0 0
        %7445 = vmatpush1.bf16.msra.mxu0 0
        %7446 = vmatprep.subr.bf16.mxu0 0
        %7447 = vmatpush1.bf16.msra.mxu0 0
        %7448 = vmatprep.subr.bf16.mxu0 0
        %7449 = vmatpush1.bf16.msra.mxu0 0
        %7450 = vmatprep.subr.bf16.mxu0 0
        %7451 = vmatpush1.bf16.msra.mxu0 0
        %7452 = vmatprep.subr.bf16.mxu0 0
        %7453 = vmatpush1.bf16.msra.mxu0 0
        %7454 = vmatprep.subr.bf16.mxu0 0
        %7455 = vmatpush1.bf16.msra.mxu0 %v7435
        %7456 = vmatprep.subr.bf16.mxu0 0
        %7457 = vmatpush2.bf16.msra.mxu0 0
        %7458 = vmatprep.subr.bf16.mxu0 0
        %7459 = vmatpush2.bf16.msra.mxu0 0
        %7460 = vmatprep.subr.bf16.mxu0 0
        %7461 = vmatpush2.bf16.msra.mxu0 0
        %7462 = vmatprep.subr.bf16.mxu0 0
        %7463 = vmatpush2.bf16.msra.mxu0 0
        %7464 = vmatprep.subr.bf16.mxu0 0
        %7465 = vmatpush2.bf16.msra.mxu0 0
        %7466 = vmatprep.subr.bf16.mxu0 0
        %7467 = vmatpush2.bf16.msra.mxu0 0
        %7468 = vmatprep.subr.bf16.mxu0 0
        %7469 = vmatpush2.bf16.msra.mxu0 0
        %7470 = vmatprep.subr.bf16.mxu0 0
        %7471 = vmatpush2.bf16.msra.mxu0 0
        %7472 = vmatprep.mubr.bf16.mxu0 0
        %7473 = vmatmul.mubr.bf16.gmra.mxu0 %v7438
        %v7474 = vpop.f32.mrf.mxu0
        %v7475 = vadd.f32 0.0, %v7474
        %v7476 = vpop.f32.mrf.mxu0
        %v7477 = vpop.f32.mrf.mxu0
        %v7478 = vadd.f32 0.0, %v7477
        %v7479 = vpop.f32.mrf.mxu0
        %7480 = vdwg.mxu0
        %v7481 = vadd.f32 %v7424, %v7475
        %v7482 = vadd.f32 %v7425, %v7478
        %s7483 = scalar_lea.vmem [#allocation4], 320
        %v7484 = vld [vmem:[%s7483] sm:$0xf]
        %v7485 = vld [vmem:[%s7483 + $0x4] sm:$0xf]
        %v7488 = vunpack.c.l.b16 %v7484
        %v7489 = vunpack.c.l.b16 %v7485
        %v7490 = vpack.c.b16 %v7489, %v7488
        %7491 = vrot.lane.b32.xlu0 %v7260, 117
        %v7492 = vpop.permute.xlu0 %7491
        %v7495 = vsel %vm300, %v7490, 0
        %7497 = vmatprep.subr.bf16.mxu0 0
        %7498 = vmatpush1.bf16.msra.mxu0 0
        %7499 = vmatprep.subr.bf16.mxu0 0
        %7500 = vmatpush1.bf16.msra.mxu0 0
        %7501 = vmatprep.subr.bf16.mxu0 0
        %7502 = vmatpush1.bf16.msra.mxu0 0
        %7503 = vmatprep.subr.bf16.mxu0 0
        %7504 = vmatpush1.bf16.msra.mxu0 0
        %7505 = vmatprep.subr.bf16.mxu0 0
        %7506 = vmatpush1.bf16.msra.mxu0 0
        %7507 = vmatprep.subr.bf16.mxu0 0
        %7508 = vmatpush1.bf16.msra.mxu0 0
        %7509 = vmatprep.subr.bf16.mxu0 0
        %7510 = vmatpush1.bf16.msra.mxu0 0
        %7511 = vmatprep.subr.bf16.mxu0 0
        %7512 = vmatpush1.bf16.msra.mxu0 %v7492
        %7513 = vmatprep.subr.bf16.mxu0 0
        %7514 = vmatpush2.bf16.msra.mxu0 0
        %7515 = vmatprep.subr.bf16.mxu0 0
        %7516 = vmatpush2.bf16.msra.mxu0 0
        %7517 = vmatprep.subr.bf16.mxu0 0
        %7518 = vmatpush2.bf16.msra.mxu0 0
        %7519 = vmatprep.subr.bf16.mxu0 0
        %7520 = vmatpush2.bf16.msra.mxu0 0
        %7521 = vmatprep.subr.bf16.mxu0 0
        %7522 = vmatpush2.bf16.msra.mxu0 0
        %7523 = vmatprep.subr.bf16.mxu0 0
        %7524 = vmatpush2.bf16.msra.mxu0 0
        %7525 = vmatprep.subr.bf16.mxu0 0
        %7526 = vmatpush2.bf16.msra.mxu0 0
        %7527 = vmatprep.subr.bf16.mxu0 0
        %7528 = vmatpush2.bf16.msra.mxu0 0
        %7529 = vmatprep.mubr.bf16.mxu0 0
        %7530 = vmatmul.mubr.bf16.gmra.mxu0 %v7495
        %v7531 = vpop.f32.mrf.mxu0
        %v7532 = vadd.f32 0.0, %v7531
        %v7533 = vpop.f32.mrf.mxu0
        %v7534 = vpop.f32.mrf.mxu0
        %v7535 = vadd.f32 0.0, %v7534
        %v7536 = vpop.f32.mrf.mxu0
        %7537 = vdwg.mxu0
        %v7538 = vadd.f32 %v7481, %v7532
        %v7539 = vadd.f32 %v7482, %v7535
        %s7540 = scalar_lea.vmem [#allocation4], 328
        %v7541 = vld [vmem:[%s7540] sm:$0xf]
        %v7542 = vld [vmem:[%s7540 + $0x4] sm:$0xf]
        %v7545 = vunpack.c.l.b16 %v7541
        %v7546 = vunpack.c.l.b16 %v7542
        %v7547 = vpack.c.b16 %v7546, %v7545
        %7548 = vrot.lane.b32.xlu0 %v7260, 116
        %v7549 = vpop.permute.xlu0 %7548
        %v7552 = vsel %vm300, %v7547, 0
        %7554 = vmatprep.subr.bf16.mxu0 0
        %7555 = vmatpush1.bf16.msra.mxu0 0
        %7556 = vmatprep.subr.bf16.mxu0 0
        %7557 = vmatpush1.bf16.msra.mxu0 0
        %7558 = vmatprep.subr.bf16.mxu0 0
        %7559 = vmatpush1.bf16.msra.mxu0 0
        %7560 = vmatprep.subr.bf16.mxu0 0
        %7561 = vmatpush1.bf16.msra.mxu0 0
        %7562 = vmatprep.subr.bf16.mxu0 0
        %7563 = vmatpush1.bf16.msra.mxu0 0
        %7564 = vmatprep.subr.bf16.mxu0 0
        %7565 = vmatpush1.bf16.msra.mxu0 0
        %7566 = vmatprep.subr.bf16.mxu0 0
        %7567 = vmatpush1.bf16.msra.mxu0 0
        %7568 = vmatprep.subr.bf16.mxu0 0
        %7569 = vmatpush1.bf16.msra.mxu0 %v7549
        %7570 = vmatprep.subr.bf16.mxu0 0
        %7571 = vmatpush2.bf16.msra.mxu0 0
        %7572 = vmatprep.subr.bf16.mxu0 0
        %7573 = vmatpush2.bf16.msra.mxu0 0
        %7574 = vmatprep.subr.bf16.mxu0 0
        %7575 = vmatpush2.bf16.msra.mxu0 0
        %7576 = vmatprep.subr.bf16.mxu0 0
        %7577 = vmatpush2.bf16.msra.mxu0 0
        %7578 = vmatprep.subr.bf16.mxu0 0
        %7579 = vmatpush2.bf16.msra.mxu0 0
        %7580 = vmatprep.subr.bf16.mxu0 0
        %7581 = vmatpush2.bf16.msra.mxu0 0
        %7582 = vmatprep.subr.bf16.mxu0 0
        %7583 = vmatpush2.bf16.msra.mxu0 0
        %7584 = vmatprep.subr.bf16.mxu0 0
        %7585 = vmatpush2.bf16.msra.mxu0 0
        %7586 = vmatprep.mubr.bf16.mxu0 0
        %7587 = vmatmul.mubr.bf16.gmra.mxu0 %v7552
        %v7588 = vpop.f32.mrf.mxu0
        %v7589 = vadd.f32 0.0, %v7588
        %v7590 = vpop.f32.mrf.mxu0
        %v7591 = vpop.f32.mrf.mxu0
        %v7592 = vadd.f32 0.0, %v7591
        %v7593 = vpop.f32.mrf.mxu0
        %7594 = vdwg.mxu0
        %v7595 = vadd.f32 %v7538, %v7589
        %v7596 = vadd.f32 %v7539, %v7592
        %s7597 = scalar_lea.vmem [#allocation4], 336
        %v7598 = vld [vmem:[%s7597] sm:$0xf]
        %v7599 = vld [vmem:[%s7597 + $0x4] sm:$0xf]
        %v7602 = vunpack.c.l.b16 %v7598
        %v7603 = vunpack.c.l.b16 %v7599
        %v7604 = vpack.c.b16 %v7603, %v7602
        %7605 = vrot.lane.b32.xlu0 %v7260, 108
        %v7606 = vpop.permute.xlu0 %7605
        %v7609 = vsel %vm300, %v7604, 0
        %7611 = vmatprep.subr.bf16.mxu0 0
        %7612 = vmatpush1.bf16.msra.mxu0 0
        %7613 = vmatprep.subr.bf16.mxu0 0
        %7614 = vmatpush1.bf16.msra.mxu0 0
        %7615 = vmatprep.subr.bf16.mxu0 0
        %7616 = vmatpush1.bf16.msra.mxu0 0
        %7617 = vmatprep.subr.bf16.mxu0 0
        %7618 = vmatpush1.bf16.msra.mxu0 0
        %7619 = vmatprep.subr.bf16.mxu0 0
        %7620 = vmatpush1.bf16.msra.mxu0 0
        %7621 = vmatprep.subr.bf16.mxu0 0
        %7622 = vmatpush1.bf16.msra.mxu0 0
        %7623 = vmatprep.subr.bf16.mxu0 0
        %7624 = vmatpush1.bf16.msra.mxu0 0
        %7625 = vmatprep.subr.bf16.mxu0 0
        %7626 = vmatpush1.bf16.msra.mxu0 %v7606
        %7627 = vmatprep.subr.bf16.mxu0 0
        %7628 = vmatpush2.bf16.msra.mxu0 0
        %7629 = vmatprep.subr.bf16.mxu0 0
        %7630 = vmatpush2.bf16.msra.mxu0 0
        %7631 = vmatprep.subr.bf16.mxu0 0
        %7632 = vmatpush2.bf16.msra.mxu0 0
        %7633 = vmatprep.subr.bf16.mxu0 0
        %7634 = vmatpush2.bf16.msra.mxu0 0
        %7635 = vmatprep.subr.bf16.mxu0 0
        %7636 = vmatpush2.bf16.msra.mxu0 0
        %7637 = vmatprep.subr.bf16.mxu0 0
        %7638 = vmatpush2.bf16.msra.mxu0 0
        %7639 = vmatprep.subr.bf16.mxu0 0
        %7640 = vmatpush2.bf16.msra.mxu0 0
        %7641 = vmatprep.subr.bf16.mxu0 0
        %7642 = vmatpush2.bf16.msra.mxu0 0
        %7643 = vmatprep.mubr.bf16.mxu0 0
        %7644 = vmatmul.mubr.bf16.gmra.mxu0 %v7609
        %v7645 = vpop.f32.mrf.mxu0
        %v7646 = vadd.f32 0.0, %v7645
        %v7647 = vpop.f32.mrf.mxu0
        %v7648 = vpop.f32.mrf.mxu0
        %v7649 = vadd.f32 0.0, %v7648
        %v7650 = vpop.f32.mrf.mxu0
        %7651 = vdwg.mxu0
        %v7652 = vadd.f32 %v7595, %v7646
        %v7653 = vadd.f32 %v7596, %v7649
        %s7654 = scalar_lea.vmem [#allocation4], 344
        %v7655 = vld [vmem:[%s7654] sm:$0xf]
        %v7656 = vld [vmem:[%s7654 + $0x4] sm:$0xf]
        %v7659 = vunpack.c.l.b16 %v7655
        %v7660 = vunpack.c.l.b16 %v7656
        %v7661 = vpack.c.b16 %v7660, %v7659
        %7662 = vrot.lane.b32.xlu0 %v7260, 107
        %v7663 = vpop.permute.xlu0 %7662
        %v7666 = vsel %vm300, %v7661, 0
        %7668 = vmatprep.subr.bf16.mxu0 0
        %7669 = vmatpush1.bf16.msra.mxu0 0
        %7670 = vmatprep.subr.bf16.mxu0 0
        %7671 = vmatpush1.bf16.msra.mxu0 0
        %7672 = vmatprep.subr.bf16.mxu0 0
        %7673 = vmatpush1.bf16.msra.mxu0 0
        %7674 = vmatprep.subr.bf16.mxu0 0
        %7675 = vmatpush1.bf16.msra.mxu0 0
        %7676 = vmatprep.subr.bf16.mxu0 0
        %7677 = vmatpush1.bf16.msra.mxu0 0
        %7678 = vmatprep.subr.bf16.mxu0 0
        %7679 = vmatpush1.bf16.msra.mxu0 0
        %7680 = vmatprep.subr.bf16.mxu0 0
        %7681 = vmatpush1.bf16.msra.mxu0 0
        %7682 = vmatprep.subr.bf16.mxu0 0
        %7683 = vmatpush1.bf16.msra.mxu0 %v7663
        %7684 = vmatprep.subr.bf16.mxu0 0
        %7685 = vmatpush2.bf16.msra.mxu0 0
        %7686 = vmatprep.subr.bf16.mxu0 0
        %7687 = vmatpush2.bf16.msra.mxu0 0
        %7688 = vmatprep.subr.bf16.mxu0 0
        %7689 = vmatpush2.bf16.msra.mxu0 0
        %7690 = vmatprep.subr.bf16.mxu0 0
        %7691 = vmatpush2.bf16.msra.mxu0 0
        %7692 = vmatprep.subr.bf16.mxu0 0
        %7693 = vmatpush2.bf16.msra.mxu0 0
        %7694 = vmatprep.subr.bf16.mxu0 0
        %7695 = vmatpush2.bf16.msra.mxu0 0
        %7696 = vmatprep.subr.bf16.mxu0 0
        %7697 = vmatpush2.bf16.msra.mxu0 0
        %7698 = vmatprep.subr.bf16.mxu0 0
        %7699 = vmatpush2.bf16.msra.mxu0 0
        %7700 = vmatprep.mubr.bf16.mxu0 0
        %7701 = vmatmul.mubr.bf16.gmra.mxu0 %v7666
        %v7702 = vpop.f32.mrf.mxu0
        %v7703 = vadd.f32 0.0, %v7702
        %v7704 = vpop.f32.mrf.mxu0
        %v7705 = vpop.f32.mrf.mxu0
        %v7706 = vadd.f32 0.0, %v7705
        %v7707 = vpop.f32.mrf.mxu0
        %7708 = vdwg.mxu0
        %v7709 = vadd.f32 %v7652, %v7703
        %v7710 = vadd.f32 %v7653, %v7706
        %s7711 = scalar_lea.vmem [#allocation4], 352
        %v7712 = vld [vmem:[%s7711] sm:$0xf]
        %v7713 = vld [vmem:[%s7711 + $0x4] sm:$0xf]
        %v7716 = vunpack.c.l.b16 %v7712
        %v7717 = vunpack.c.l.b16 %v7713
        %v7718 = vpack.c.b16 %v7717, %v7716
        %7719 = vrot.lane.b32.xlu0 %v7260, 106
        %v7720 = vpop.permute.xlu0 %7719
        %v7723 = vsel %vm300, %v7718, 0
        %7725 = vmatprep.subr.bf16.mxu0 0
        %7726 = vmatpush1.bf16.msra.mxu0 0
        %7727 = vmatprep.subr.bf16.mxu0 0
        %7728 = vmatpush1.bf16.msra.mxu0 0
        %7729 = vmatprep.subr.bf16.mxu0 0
        %7730 = vmatpush1.bf16.msra.mxu0 0
        %7731 = vmatprep.subr.bf16.mxu0 0
        %7732 = vmatpush1.bf16.msra.mxu0 0
        %7733 = vmatprep.subr.bf16.mxu0 0
        %7734 = vmatpush1.bf16.msra.mxu0 0
        %7735 = vmatprep.subr.bf16.mxu0 0
        %7736 = vmatpush1.bf16.msra.mxu0 0
        %7737 = vmatprep.subr.bf16.mxu0 0
        %7738 = vmatpush1.bf16.msra.mxu0 0
        %7739 = vmatprep.subr.bf16.mxu0 0
        %7740 = vmatpush1.bf16.msra.mxu0 %v7720
        %7741 = vmatprep.subr.bf16.mxu0 0
        %7742 = vmatpush2.bf16.msra.mxu0 0
        %7743 = vmatprep.subr.bf16.mxu0 0
        %7744 = vmatpush2.bf16.msra.mxu0 0
        %7745 = vmatprep.subr.bf16.mxu0 0
        %7746 = vmatpush2.bf16.msra.mxu0 0
        %7747 = vmatprep.subr.bf16.mxu0 0
        %7748 = vmatpush2.bf16.msra.mxu0 0
        %7749 = vmatprep.subr.bf16.mxu0 0
        %7750 = vmatpush2.bf16.msra.mxu0 0
        %7751 = vmatprep.subr.bf16.mxu0 0
        %7752 = vmatpush2.bf16.msra.mxu0 0
        %7753 = vmatprep.subr.bf16.mxu0 0
        %7754 = vmatpush2.bf16.msra.mxu0 0
        %7755 = vmatprep.subr.bf16.mxu0 0
        %7756 = vmatpush2.bf16.msra.mxu0 0
        %7757 = vmatprep.mubr.bf16.mxu0 0
        %7758 = vmatmul.mubr.bf16.gmra.mxu0 %v7723
        %v7759 = vpop.f32.mrf.mxu0
        %v7760 = vadd.f32 0.0, %v7759
        %v7761 = vpop.f32.mrf.mxu0
        %v7762 = vpop.f32.mrf.mxu0
        %v7763 = vadd.f32 0.0, %v7762
        %v7764 = vpop.f32.mrf.mxu0
        %7765 = vdwg.mxu0
        %v7766 = vadd.f32 %v7709, %v7760
        %v7767 = vadd.f32 %v7710, %v7763
        %v7768 = vmax.f32 %v7766, 0.0
        %v7769 = vmax.f32 %v7767, 0.0
        %s7770 = scalar_lea.vmem [#allocation6], 64
        %v7771 = vld [vmem:[%s7770] sm:$0xff]
        %v7772 = vld [vmem:[%s7770 + $0x8] sm:$0xff]
        %7774 = vset.pattern.permute.xlu0 0
        %7775 = vperm.xlu0 %7774, %v7771
        %v7776 = vpop.permute.xlu0 %7775
        %7779 = vset.pattern.permute.xlu0 0
        %7780 = vperm.xlu0 %7779, %v7772
        %v7781 = vpop.permute.xlu0 %7780
        %v7783 = vmul.f32 %v7768, %v7776
        %v7784 = vmul.f32 %v7769, %v7781
        %s7785 = scalar_lea.vmem %s3, 64
        %v7786 = vld [vmem:[%s7785] sm:$0xff]
        %v7787 = vld [vmem:[%s7785 + $0x8] sm:$0xff]
        %7789 = vset.pattern.permute.xlu0 0
        %7790 = vperm.xlu0 %7789, %v7786
        %v7791 = vpop.permute.xlu0 %7790
        %7794 = vset.pattern.permute.xlu0 0
        %7795 = vperm.xlu0 %7794, %v7787
        %v7796 = vpop.permute.xlu0 %7795
        %v7798 = vadd.f32 %v7783, %v7791
        %v7799 = vadd.f32 %v7784, %v7796
        %vm7800 = vcmask 637952
        %7801 = vst.msk [vmem:[#allocation3] sm:$0xff] %vm7800, %v7798
        %7802 = vst.msk [vmem:[#allocation3 + $0x38] sm:$0xff] %vm7800, %v7799
        %v7803 = vld [vmem:[#allocation3] sm:$0xff]
        %v7804 = vld [vmem:[#allocation3 + $0x38] sm:$0xff]
        %v7805 = vpack.c.bf16 %v7804, %v7803
        %s7806 = scalar_lea.vmem [#allocation4], 360
        %v7807 = vld [vmem:[%s7806] sm:$0xf]
        %v7808 = vld [vmem:[%s7806 + $0x4] sm:$0xf]
        %s7809 = scalar_lea.vmem [#allocation4], 368
        %v7810 = vld [vmem:[%s7809] sm:$0xf]
        %v7811 = vld [vmem:[%s7809 + $0x4] sm:$0xf]
        %v7814 = vunpack.c.l.b16 %v7810
        %v7815 = vunpack.c.l.b16 %v7811
        %v7816 = vpack.c.b16 %v7815, %v7814
        %7818 = vrot.lane.b32.xlu0 %v7805, 127
        %v7819 = vpop.permute.xlu0 %7818
        %v7822 = vsel %vm300, %v7816, 0
        %7824 = vmatprep.subr.bf16.mxu0 0
        %7825 = vmatpush1.bf16.msra.mxu0 0
        %7826 = vmatprep.subr.bf16.mxu0 0
        %7827 = vmatpush1.bf16.msra.mxu0 0
        %7828 = vmatprep.subr.bf16.mxu0 0
        %7829 = vmatpush1.bf16.msra.mxu0 0
        %7830 = vmatprep.subr.bf16.mxu0 0
        %7831 = vmatpush1.bf16.msra.mxu0 0
        %7832 = vmatprep.subr.bf16.mxu0 0
        %7833 = vmatpush1.bf16.msra.mxu0 0
        %7834 = vmatprep.subr.bf16.mxu0 0
        %7835 = vmatpush1.bf16.msra.mxu0 0
        %7836 = vmatprep.subr.bf16.mxu0 0
        %7837 = vmatpush1.bf16.msra.mxu0 0
        %7838 = vmatprep.subr.bf16.mxu0 0
        %7839 = vmatpush1.bf16.msra.mxu0 %v7819
        %7840 = vmatprep.subr.bf16.mxu0 0
        %7841 = vmatpush2.bf16.msra.mxu0 0
        %7842 = vmatprep.subr.bf16.mxu0 0
        %7843 = vmatpush2.bf16.msra.mxu0 0
        %7844 = vmatprep.subr.bf16.mxu0 0
        %7845 = vmatpush2.bf16.msra.mxu0 0
        %7846 = vmatprep.subr.bf16.mxu0 0
        %7847 = vmatpush2.bf16.msra.mxu0 0
        %7848 = vmatprep.subr.bf16.mxu0 0
        %7849 = vmatpush2.bf16.msra.mxu0 0
        %7850 = vmatprep.subr.bf16.mxu0 0
        %7851 = vmatpush2.bf16.msra.mxu0 0
        %7852 = vmatprep.subr.bf16.mxu0 0
        %7853 = vmatpush2.bf16.msra.mxu0 0
        %7854 = vmatprep.subr.bf16.mxu0 0
        %7855 = vmatpush2.bf16.msra.mxu0 0
        %7856 = vmatprep.mubr.bf16.mxu0 0
        %7857 = vmatmul.mubr.bf16.gmra.mxu0 %v7822
        %v7858 = vpop.f32.mrf.mxu0
        %v7859 = vadd.f32 0.0, %v7858
        %v7860 = vpop.f32.mrf.mxu0
        %v7861 = vpop.f32.mrf.mxu0
        %v7862 = vadd.f32 0.0, %v7861
        %v7863 = vpop.f32.mrf.mxu0
        %7864 = vdwg.mxu0
        %v7867 = vunpack.c.l.b16 %v7807
        %v7868 = vunpack.c.l.b16 %v7808
        %v7869 = vpack.c.b16 %v7868, %v7867
        %v7871 = vsel %vm300, %v7869, 0
        %7873 = vmatprep.subr.bf16.mxu0 0
        %7874 = vmatpush1.bf16.msra.mxu0 0
        %7875 = vmatprep.subr.bf16.mxu0 0
        %7876 = vmatpush1.bf16.msra.mxu0 0
        %7877 = vmatprep.subr.bf16.mxu0 0
        %7878 = vmatpush1.bf16.msra.mxu0 0
        %7879 = vmatprep.subr.bf16.mxu0 0
        %7880 = vmatpush1.bf16.msra.mxu0 0
        %7881 = vmatprep.subr.bf16.mxu0 0
        %7882 = vmatpush1.bf16.msra.mxu0 0
        %7883 = vmatprep.subr.bf16.mxu0 0
        %7884 = vmatpush1.bf16.msra.mxu0 0
        %7885 = vmatprep.subr.bf16.mxu0 0
        %7886 = vmatpush1.bf16.msra.mxu0 0
        %7887 = vmatprep.subr.bf16.mxu0 0
        %7888 = vmatpush1.bf16.msra.mxu0 %v7805
        %7889 = vmatprep.subr.bf16.mxu0 0
        %7890 = vmatpush2.bf16.msra.mxu0 0
        %7891 = vmatprep.subr.bf16.mxu0 0
        %7892 = vmatpush2.bf16.msra.mxu0 0
        %7893 = vmatprep.subr.bf16.mxu0 0
        %7894 = vmatpush2.bf16.msra.mxu0 0
        %7895 = vmatprep.subr.bf16.mxu0 0
        %7896 = vmatpush2.bf16.msra.mxu0 0
        %7897 = vmatprep.subr.bf16.mxu0 0
        %7898 = vmatpush2.bf16.msra.mxu0 0
        %7899 = vmatprep.subr.bf16.mxu0 0
        %7900 = vmatpush2.bf16.msra.mxu0 0
        %7901 = vmatprep.subr.bf16.mxu0 0
        %7902 = vmatpush2.bf16.msra.mxu0 0
        %7903 = vmatprep.subr.bf16.mxu0 0
        %7904 = vmatpush2.bf16.msra.mxu0 0
        %7905 = vmatprep.mubr.bf16.mxu0 0
        %7906 = vmatmul.mubr.bf16.gmra.mxu0 %v7871
        %v7907 = vpop.f32.mrf.mxu0
        %v7908 = vadd.f32 %v7859, %v7907
        %v7909 = vpop.f32.mrf.mxu0
        %v7910 = vpop.f32.mrf.mxu0
        %v7911 = vadd.f32 %v7862, %v7910
        %v7912 = vpop.f32.mrf.mxu0
        %7913 = vdwg.mxu0
        %s7914 = scalar_lea.vmem [#allocation4], 376
        %v7915 = vld [vmem:[%s7914] sm:$0xf]
        %v7916 = vld [vmem:[%s7914 + $0x4] sm:$0xf]
        %v7919 = vunpack.c.l.b16 %v7915
        %v7920 = vunpack.c.l.b16 %v7916
        %v7921 = vpack.c.b16 %v7920, %v7919
        %7922 = vrot.lane.b32.xlu0 %v7805, 126
        %v7923 = vpop.permute.xlu0 %7922
        %v7926 = vsel %vm300, %v7921, 0
        %7928 = vmatprep.subr.bf16.mxu0 0
        %7929 = vmatpush1.bf16.msra.mxu0 0
        %7930 = vmatprep.subr.bf16.mxu0 0
        %7931 = vmatpush1.bf16.msra.mxu0 0
        %7932 = vmatprep.subr.bf16.mxu0 0
        %7933 = vmatpush1.bf16.msra.mxu0 0
        %7934 = vmatprep.subr.bf16.mxu0 0
        %7935 = vmatpush1.bf16.msra.mxu0 0
        %7936 = vmatprep.subr.bf16.mxu0 0
        %7937 = vmatpush1.bf16.msra.mxu0 0
        %7938 = vmatprep.subr.bf16.mxu0 0
        %7939 = vmatpush1.bf16.msra.mxu0 0
        %7940 = vmatprep.subr.bf16.mxu0 0
        %7941 = vmatpush1.bf16.msra.mxu0 0
        %7942 = vmatprep.subr.bf16.mxu0 0
        %7943 = vmatpush1.bf16.msra.mxu0 %v7923
        %7944 = vmatprep.subr.bf16.mxu0 0
        %7945 = vmatpush2.bf16.msra.mxu0 0
        %7946 = vmatprep.subr.bf16.mxu0 0
        %7947 = vmatpush2.bf16.msra.mxu0 0
        %7948 = vmatprep.subr.bf16.mxu0 0
        %7949 = vmatpush2.bf16.msra.mxu0 0
        %7950 = vmatprep.subr.bf16.mxu0 0
        %7951 = vmatpush2.bf16.msra.mxu0 0
        %7952 = vmatprep.subr.bf16.mxu0 0
        %7953 = vmatpush2.bf16.msra.mxu0 0
        %7954 = vmatprep.subr.bf16.mxu0 0
        %7955 = vmatpush2.bf16.msra.mxu0 0
        %7956 = vmatprep.subr.bf16.mxu0 0
        %7957 = vmatpush2.bf16.msra.mxu0 0
        %7958 = vmatprep.subr.bf16.mxu0 0
        %7959 = vmatpush2.bf16.msra.mxu0 0
        %7960 = vmatprep.mubr.bf16.mxu0 0
        %7961 = vmatmul.mubr.bf16.gmra.mxu0 %v7926
        %v7962 = vpop.f32.mrf.mxu0
        %v7963 = vadd.f32 0.0, %v7962
        %v7964 = vpop.f32.mrf.mxu0
        %v7965 = vpop.f32.mrf.mxu0
        %v7966 = vadd.f32 0.0, %v7965
        %v7967 = vpop.f32.mrf.mxu0
        %7968 = vdwg.mxu0
        %v7969 = vadd.f32 %v7908, %v7963
        %v7970 = vadd.f32 %v7911, %v7966
        %s7971 = scalar_lea.vmem [#allocation4], 384
        %v7972 = vld [vmem:[%s7971] sm:$0xf]
        %v7973 = vld [vmem:[%s7971 + $0x4] sm:$0xf]
        %v7976 = vunpack.c.l.b16 %v7972
        %v7977 = vunpack.c.l.b16 %v7973
        %v7978 = vpack.c.b16 %v7977, %v7976
        %7979 = vrot.lane.b32.xlu0 %v7805, 118
        %v7980 = vpop.permute.xlu0 %7979
        %v7983 = vsel %vm300, %v7978, 0
        %7985 = vmatprep.subr.bf16.mxu0 0
        %7986 = vmatpush1.bf16.msra.mxu0 0
        %7987 = vmatprep.subr.bf16.mxu0 0
        %7988 = vmatpush1.bf16.msra.mxu0 0
        %7989 = vmatprep.subr.bf16.mxu0 0
        %7990 = vmatpush1.bf16.msra.mxu0 0
        %7991 = vmatprep.subr.bf16.mxu0 0
        %7992 = vmatpush1.bf16.msra.mxu0 0
        %7993 = vmatprep.subr.bf16.mxu0 0
        %7994 = vmatpush1.bf16.msra.mxu0 0
        %7995 = vmatprep.subr.bf16.mxu0 0
        %7996 = vmatpush1.bf16.msra.mxu0 0
        %7997 = vmatprep.subr.bf16.mxu0 0
        %7998 = vmatpush1.bf16.msra.mxu0 0
        %7999 = vmatprep.subr.bf16.mxu0 0
        %8000 = vmatpush1.bf16.msra.mxu0 %v7980
        %8001 = vmatprep.subr.bf16.mxu0 0
        %8002 = vmatpush2.bf16.msra.mxu0 0
        %8003 = vmatprep.subr.bf16.mxu0 0
        %8004 = vmatpush2.bf16.msra.mxu0 0
        %8005 = vmatprep.subr.bf16.mxu0 0
        %8006 = vmatpush2.bf16.msra.mxu0 0
        %8007 = vmatprep.subr.bf16.mxu0 0
        %8008 = vmatpush2.bf16.msra.mxu0 0
        %8009 = vmatprep.subr.bf16.mxu0 0
        %8010 = vmatpush2.bf16.msra.mxu0 0
        %8011 = vmatprep.subr.bf16.mxu0 0
        %8012 = vmatpush2.bf16.msra.mxu0 0
        %8013 = vmatprep.subr.bf16.mxu0 0
        %8014 = vmatpush2.bf16.msra.mxu0 0
        %8015 = vmatprep.subr.bf16.mxu0 0
        %8016 = vmatpush2.bf16.msra.mxu0 0
        %8017 = vmatprep.mubr.bf16.mxu0 0
        %8018 = vmatmul.mubr.bf16.gmra.mxu0 %v7983
        %v8019 = vpop.f32.mrf.mxu0
        %v8020 = vadd.f32 0.0, %v8019
        %v8021 = vpop.f32.mrf.mxu0
        %v8022 = vpop.f32.mrf.mxu0
        %v8023 = vadd.f32 0.0, %v8022
        %v8024 = vpop.f32.mrf.mxu0
        %8025 = vdwg.mxu0
        %v8026 = vadd.f32 %v7969, %v8020
        %v8027 = vadd.f32 %v7970, %v8023
        %s8028 = scalar_lea.vmem [#allocation4], 392
        %v8029 = vld [vmem:[%s8028] sm:$0xf]
        %v8030 = vld [vmem:[%s8028 + $0x4] sm:$0xf]
        %v8033 = vunpack.c.l.b16 %v8029
        %v8034 = vunpack.c.l.b16 %v8030
        %v8035 = vpack.c.b16 %v8034, %v8033
        %8036 = vrot.lane.b32.xlu0 %v7805, 117
        %v8037 = vpop.permute.xlu0 %8036
        %v8040 = vsel %vm300, %v8035, 0
        %8042 = vmatprep.subr.bf16.mxu0 0
        %8043 = vmatpush1.bf16.msra.mxu0 0
        %8044 = vmatprep.subr.bf16.mxu0 0
        %8045 = vmatpush1.bf16.msra.mxu0 0
        %8046 = vmatprep.subr.bf16.mxu0 0
        %8047 = vmatpush1.bf16.msra.mxu0 0
        %8048 = vmatprep.subr.bf16.mxu0 0
        %8049 = vmatpush1.bf16.msra.mxu0 0
        %8050 = vmatprep.subr.bf16.mxu0 0
        %8051 = vmatpush1.bf16.msra.mxu0 0
        %8052 = vmatprep.subr.bf16.mxu0 0
        %8053 = vmatpush1.bf16.msra.mxu0 0
        %8054 = vmatprep.subr.bf16.mxu0 0
        %8055 = vmatpush1.bf16.msra.mxu0 0
        %8056 = vmatprep.subr.bf16.mxu0 0
        %8057 = vmatpush1.bf16.msra.mxu0 %v8037
        %8058 = vmatprep.subr.bf16.mxu0 0
        %8059 = vmatpush2.bf16.msra.mxu0 0
        %8060 = vmatprep.subr.bf16.mxu0 0
        %8061 = vmatpush2.bf16.msra.mxu0 0
        %8062 = vmatprep.subr.bf16.mxu0 0
        %8063 = vmatpush2.bf16.msra.mxu0 0
        %8064 = vmatprep.subr.bf16.mxu0 0
        %8065 = vmatpush2.bf16.msra.mxu0 0
        %8066 = vmatprep.subr.bf16.mxu0 0
        %8067 = vmatpush2.bf16.msra.mxu0 0
        %8068 = vmatprep.subr.bf16.mxu0 0
        %8069 = vmatpush2.bf16.msra.mxu0 0
        %8070 = vmatprep.subr.bf16.mxu0 0
        %8071 = vmatpush2.bf16.msra.mxu0 0
        %8072 = vmatprep.subr.bf16.mxu0 0
        %8073 = vmatpush2.bf16.msra.mxu0 0
        %8074 = vmatprep.mubr.bf16.mxu0 0
        %8075 = vmatmul.mubr.bf16.gmra.mxu0 %v8040
        %v8076 = vpop.f32.mrf.mxu0
        %v8077 = vadd.f32 0.0, %v8076
        %v8078 = vpop.f32.mrf.mxu0
        %v8079 = vpop.f32.mrf.mxu0
        %v8080 = vadd.f32 0.0, %v8079
        %v8081 = vpop.f32.mrf.mxu0
        %8082 = vdwg.mxu0
        %v8083 = vadd.f32 %v8026, %v8077
        %v8084 = vadd.f32 %v8027, %v8080
        %s8085 = scalar_lea.vmem [#allocation4], 400
        %v8086 = vld [vmem:[%s8085] sm:$0xf]
        %v8087 = vld [vmem:[%s8085 + $0x4] sm:$0xf]
        %v8090 = vunpack.c.l.b16 %v8086
        %v8091 = vunpack.c.l.b16 %v8087
        %v8092 = vpack.c.b16 %v8091, %v8090
        %8093 = vrot.lane.b32.xlu0 %v7805, 116
        %v8094 = vpop.permute.xlu0 %8093
        %v8097 = vsel %vm300, %v8092, 0
        %8099 = vmatprep.subr.bf16.mxu0 0
        %8100 = vmatpush1.bf16.msra.mxu0 0
        %8101 = vmatprep.subr.bf16.mxu0 0
        %8102 = vmatpush1.bf16.msra.mxu0 0
        %8103 = vmatprep.subr.bf16.mxu0 0
        %8104 = vmatpush1.bf16.msra.mxu0 0
        %8105 = vmatprep.subr.bf16.mxu0 0
        %8106 = vmatpush1.bf16.msra.mxu0 0
        %8107 = vmatprep.subr.bf16.mxu0 0
        %8108 = vmatpush1.bf16.msra.mxu0 0
        %8109 = vmatprep.subr.bf16.mxu0 0
        %8110 = vmatpush1.bf16.msra.mxu0 0
        %8111 = vmatprep.subr.bf16.mxu0 0
        %8112 = vmatpush1.bf16.msra.mxu0 0
        %8113 = vmatprep.subr.bf16.mxu0 0
        %8114 = vmatpush1.bf16.msra.mxu0 %v8094
        %8115 = vmatprep.subr.bf16.mxu0 0
        %8116 = vmatpush2.bf16.msra.mxu0 0
        %8117 = vmatprep.subr.bf16.mxu0 0
        %8118 = vmatpush2.bf16.msra.mxu0 0
        %8119 = vmatprep.subr.bf16.mxu0 0
        %8120 = vmatpush2.bf16.msra.mxu0 0
        %8121 = vmatprep.subr.bf16.mxu0 0
        %8122 = vmatpush2.bf16.msra.mxu0 0
        %8123 = vmatprep.subr.bf16.mxu0 0
        %8124 = vmatpush2.bf16.msra.mxu0 0
        %8125 = vmatprep.subr.bf16.mxu0 0
        %8126 = vmatpush2.bf16.msra.mxu0 0
        %8127 = vmatprep.subr.bf16.mxu0 0
        %8128 = vmatpush2.bf16.msra.mxu0 0
        %8129 = vmatprep.subr.bf16.mxu0 0
        %8130 = vmatpush2.bf16.msra.mxu0 0
        %8131 = vmatprep.mubr.bf16.mxu0 0
        %8132 = vmatmul.mubr.bf16.gmra.mxu0 %v8097
        %v8133 = vpop.f32.mrf.mxu0
        %v8134 = vadd.f32 0.0, %v8133
        %v8135 = vpop.f32.mrf.mxu0
        %v8136 = vpop.f32.mrf.mxu0
        %v8137 = vadd.f32 0.0, %v8136
        %v8138 = vpop.f32.mrf.mxu0
        %8139 = vdwg.mxu0
        %v8140 = vadd.f32 %v8083, %v8134
        %v8141 = vadd.f32 %v8084, %v8137
        %s8142 = scalar_lea.vmem [#allocation4], 408
        %v8143 = vld [vmem:[%s8142] sm:$0xf]
        %v8144 = vld [vmem:[%s8142 + $0x4] sm:$0xf]
        %v8147 = vunpack.c.l.b16 %v8143
        %v8148 = vunpack.c.l.b16 %v8144
        %v8149 = vpack.c.b16 %v8148, %v8147
        %8150 = vrot.lane.b32.xlu0 %v7805, 108
        %v8151 = vpop.permute.xlu0 %8150
        %v8154 = vsel %vm300, %v8149, 0
        %8156 = vmatprep.subr.bf16.mxu0 0
        %8157 = vmatpush1.bf16.msra.mxu0 0
        %8158 = vmatprep.subr.bf16.mxu0 0
        %8159 = vmatpush1.bf16.msra.mxu0 0
        %8160 = vmatprep.subr.bf16.mxu0 0
        %8161 = vmatpush1.bf16.msra.mxu0 0
        %8162 = vmatprep.subr.bf16.mxu0 0
        %8163 = vmatpush1.bf16.msra.mxu0 0
        %8164 = vmatprep.subr.bf16.mxu0 0
        %8165 = vmatpush1.bf16.msra.mxu0 0
        %8166 = vmatprep.subr.bf16.mxu0 0
        %8167 = vmatpush1.bf16.msra.mxu0 0
        %8168 = vmatprep.subr.bf16.mxu0 0
        %8169 = vmatpush1.bf16.msra.mxu0 0
        %8170 = vmatprep.subr.bf16.mxu0 0
        %8171 = vmatpush1.bf16.msra.mxu0 %v8151
        %8172 = vmatprep.subr.bf16.mxu0 0
        %8173 = vmatpush2.bf16.msra.mxu0 0
        %8174 = vmatprep.subr.bf16.mxu0 0
        %8175 = vmatpush2.bf16.msra.mxu0 0
        %8176 = vmatprep.subr.bf16.mxu0 0
        %8177 = vmatpush2.bf16.msra.mxu0 0
        %8178 = vmatprep.subr.bf16.mxu0 0
        %8179 = vmatpush2.bf16.msra.mxu0 0
        %8180 = vmatprep.subr.bf16.mxu0 0
        %8181 = vmatpush2.bf16.msra.mxu0 0
        %8182 = vmatprep.subr.bf16.mxu0 0
        %8183 = vmatpush2.bf16.msra.mxu0 0
        %8184 = vmatprep.subr.bf16.mxu0 0
        %8185 = vmatpush2.bf16.msra.mxu0 0
        %8186 = vmatprep.subr.bf16.mxu0 0
        %8187 = vmatpush2.bf16.msra.mxu0 0
        %8188 = vmatprep.mubr.bf16.mxu0 0
        %8189 = vmatmul.mubr.bf16.gmra.mxu0 %v8154
        %v8190 = vpop.f32.mrf.mxu0
        %v8191 = vadd.f32 0.0, %v8190
        %v8192 = vpop.f32.mrf.mxu0
        %v8193 = vpop.f32.mrf.mxu0
        %v8194 = vadd.f32 0.0, %v8193
        %v8195 = vpop.f32.mrf.mxu0
        %8196 = vdwg.mxu0
        %v8197 = vadd.f32 %v8140, %v8191
        %v8198 = vadd.f32 %v8141, %v8194
        %s8199 = scalar_lea.vmem [#allocation4], 416
        %v8200 = vld [vmem:[%s8199] sm:$0xf]
        %v8201 = vld [vmem:[%s8199 + $0x4] sm:$0xf]
        %v8204 = vunpack.c.l.b16 %v8200
        %v8205 = vunpack.c.l.b16 %v8201
        %v8206 = vpack.c.b16 %v8205, %v8204
        %8207 = vrot.lane.b32.xlu0 %v7805, 107
        %v8208 = vpop.permute.xlu0 %8207
        %v8211 = vsel %vm300, %v8206, 0
        %8213 = vmatprep.subr.bf16.mxu0 0
        %8214 = vmatpush1.bf16.msra.mxu0 0
        %8215 = vmatprep.subr.bf16.mxu0 0
        %8216 = vmatpush1.bf16.msra.mxu0 0
        %8217 = vmatprep.subr.bf16.mxu0 0
        %8218 = vmatpush1.bf16.msra.mxu0 0
        %8219 = vmatprep.subr.bf16.mxu0 0
        %8220 = vmatpush1.bf16.msra.mxu0 0
        %8221 = vmatprep.subr.bf16.mxu0 0
        %8222 = vmatpush1.bf16.msra.mxu0 0
        %8223 = vmatprep.subr.bf16.mxu0 0
        %8224 = vmatpush1.bf16.msra.mxu0 0
        %8225 = vmatprep.subr.bf16.mxu0 0
        %8226 = vmatpush1.bf16.msra.mxu0 0
        %8227 = vmatprep.subr.bf16.mxu0 0
        %8228 = vmatpush1.bf16.msra.mxu0 %v8208
        %8229 = vmatprep.subr.bf16.mxu0 0
        %8230 = vmatpush2.bf16.msra.mxu0 0
        %8231 = vmatprep.subr.bf16.mxu0 0
        %8232 = vmatpush2.bf16.msra.mxu0 0
        %8233 = vmatprep.subr.bf16.mxu0 0
        %8234 = vmatpush2.bf16.msra.mxu0 0
        %8235 = vmatprep.subr.bf16.mxu0 0
        %8236 = vmatpush2.bf16.msra.mxu0 0
        %8237 = vmatprep.subr.bf16.mxu0 0
        %8238 = vmatpush2.bf16.msra.mxu0 0
        %8239 = vmatprep.subr.bf16.mxu0 0
        %8240 = vmatpush2.bf16.msra.mxu0 0
        %8241 = vmatprep.subr.bf16.mxu0 0
        %8242 = vmatpush2.bf16.msra.mxu0 0
        %8243 = vmatprep.subr.bf16.mxu0 0
        %8244 = vmatpush2.bf16.msra.mxu0 0
        %8245 = vmatprep.mubr.bf16.mxu0 0
        %8246 = vmatmul.mubr.bf16.gmra.mxu0 %v8211
        %v8247 = vpop.f32.mrf.mxu0
        %v8248 = vadd.f32 0.0, %v8247
        %v8249 = vpop.f32.mrf.mxu0
        %v8250 = vpop.f32.mrf.mxu0
        %v8251 = vadd.f32 0.0, %v8250
        %v8252 = vpop.f32.mrf.mxu0
        %8253 = vdwg.mxu0
        %v8254 = vadd.f32 %v8197, %v8248
        %v8255 = vadd.f32 %v8198, %v8251
        %s8256 = scalar_lea.vmem [#allocation4], 424
        %v8257 = vld [vmem:[%s8256] sm:$0xf]
        %v8258 = vld [vmem:[%s8256 + $0x4] sm:$0xf]
        %v8261 = vunpack.c.l.b16 %v8257
        %v8262 = vunpack.c.l.b16 %v8258
        %v8263 = vpack.c.b16 %v8262, %v8261
        %8264 = vrot.lane.b32.xlu0 %v7805, 106
        %v8265 = vpop.permute.xlu0 %8264
        %v8268 = vsel %vm300, %v8263, 0
        %8270 = vmatprep.subr.bf16.mxu0 0
        %8271 = vmatpush1.bf16.msra.mxu0 0
        %8272 = vmatprep.subr.bf16.mxu0 0
        %8273 = vmatpush1.bf16.msra.mxu0 0
        %8274 = vmatprep.subr.bf16.mxu0 0
        %8275 = vmatpush1.bf16.msra.mxu0 0
        %8276 = vmatprep.subr.bf16.mxu0 0
        %8277 = vmatpush1.bf16.msra.mxu0 0
        %8278 = vmatprep.subr.bf16.mxu0 0
        %8279 = vmatpush1.bf16.msra.mxu0 0
        %8280 = vmatprep.subr.bf16.mxu0 0
        %8281 = vmatpush1.bf16.msra.mxu0 0
        %8282 = vmatprep.subr.bf16.mxu0 0
        %8283 = vmatpush1.bf16.msra.mxu0 0
        %8284 = vmatprep.subr.bf16.mxu0 0
        %8285 = vmatpush1.bf16.msra.mxu0 %v8265
        %8286 = vmatprep.subr.bf16.mxu0 0
        %8287 = vmatpush2.bf16.msra.mxu0 0
        %8288 = vmatprep.subr.bf16.mxu0 0
        %8289 = vmatpush2.bf16.msra.mxu0 0
        %8290 = vmatprep.subr.bf16.mxu0 0
        %8291 = vmatpush2.bf16.msra.mxu0 0
        %8292 = vmatprep.subr.bf16.mxu0 0
        %8293 = vmatpush2.bf16.msra.mxu0 0
        %8294 = vmatprep.subr.bf16.mxu0 0
        %8295 = vmatpush2.bf16.msra.mxu0 0
        %8296 = vmatprep.subr.bf16.mxu0 0
        %8297 = vmatpush2.bf16.msra.mxu0 0
        %8298 = vmatprep.subr.bf16.mxu0 0
        %8299 = vmatpush2.bf16.msra.mxu0 0
        %8300 = vmatprep.subr.bf16.mxu0 0
        %8301 = vmatpush2.bf16.msra.mxu0 0
        %8302 = vmatprep.mubr.bf16.mxu0 0
        %8303 = vmatmul.mubr.bf16.gmra.mxu0 %v8268
        %v8304 = vpop.f32.mrf.mxu0
        %v8305 = vadd.f32 0.0, %v8304
        %v8306 = vpop.f32.mrf.mxu0
        %v8307 = vpop.f32.mrf.mxu0
        %v8308 = vadd.f32 0.0, %v8307
        %v8309 = vpop.f32.mrf.mxu0
        %8310 = vdwg.mxu0
        %v8311 = vadd.f32 %v8254, %v8305
        %v8312 = vadd.f32 %v8255, %v8308
        %v8313 = vmax.f32 %v8311, 0.0
        %v8314 = vmax.f32 %v8312, 0.0
        %s8315 = scalar_lea.vmem [#allocation6], 80
        %v8316 = vld [vmem:[%s8315] sm:$0xff]
        %v8317 = vld [vmem:[%s8315 + $0x8] sm:$0xff]
        %8319 = vset.pattern.permute.xlu0 0
        %8320 = vperm.xlu0 %8319, %v8316
        %v8321 = vpop.permute.xlu0 %8320
        %8324 = vset.pattern.permute.xlu0 0
        %8325 = vperm.xlu0 %8324, %v8317
        %v8326 = vpop.permute.xlu0 %8325
        %v8328 = vmul.f32 %v8313, %v8321
        %v8329 = vmul.f32 %v8314, %v8326
        %s8330 = scalar_lea.vmem %s3, 80
        %v8331 = vld [vmem:[%s8330] sm:$0xff]
        %v8332 = vld [vmem:[%s8330 + $0x8] sm:$0xff]
        %8334 = vset.pattern.permute.xlu0 0
        %8335 = vperm.xlu0 %8334, %v8331
        %v8336 = vpop.permute.xlu0 %8335
        %8339 = vset.pattern.permute.xlu0 0
        %8340 = vperm.xlu0 %8339, %v8332
        %v8341 = vpop.permute.xlu0 %8340
        %v8343 = vadd.f32 %v8328, %v8336
        %v8344 = vadd.f32 %v8329, %v8341
        %vm8345 = vcmask 457728
        %8346 = vst.msk [vmem:[#allocation2] sm:$0xff] %vm8345, %v8343
        %8347 = vst.msk [vmem:[#allocation2 + $0x38] sm:$0xff] %vm8345, %v8344
        %v8348 = vld [vmem:[#allocation2] sm:$0xff]
        %v8349 = vld [vmem:[#allocation2 + $0x38] sm:$0xff]
        %v8350 = vpack.c.bf16 %v8349, %v8348
        %s8351 = scalar_lea.vmem [#allocation4], 432
        %v8352 = vld [vmem:[%s8351] sm:$0xf]
        %v8353 = vld [vmem:[%s8351 + $0x4] sm:$0xf]
        %s8354 = scalar_lea.vmem [#allocation4], 440
        %v8355 = vld [vmem:[%s8354] sm:$0xf]
        %v8356 = vld [vmem:[%s8354 + $0x4] sm:$0xf]
        %v8359 = vunpack.c.l.b16 %v8355
        %v8360 = vunpack.c.l.b16 %v8356
        %v8361 = vpack.c.b16 %v8360, %v8359
        %8363 = vrot.lane.b32.xlu0 %v8350, 127
        %v8364 = vpop.permute.xlu0 %8363
        %v8367 = vsel %vm300, %v8361, 0
        %8369 = vmatprep.subr.bf16.mxu0 0
        %8370 = vmatpush1.bf16.msra.mxu0 0
        %8371 = vmatprep.subr.bf16.mxu0 0
        %8372 = vmatpush1.bf16.msra.mxu0 0
        %8373 = vmatprep.subr.bf16.mxu0 0
        %8374 = vmatpush1.bf16.msra.mxu0 0
        %8375 = vmatprep.subr.bf16.mxu0 0
        %8376 = vmatpush1.bf16.msra.mxu0 0
        %8377 = vmatprep.subr.bf16.mxu0 0
        %8378 = vmatpush1.bf16.msra.mxu0 0
        %8379 = vmatprep.subr.bf16.mxu0 0
        %8380 = vmatpush1.bf16.msra.mxu0 0
        %8381 = vmatprep.subr.bf16.mxu0 0
        %8382 = vmatpush1.bf16.msra.mxu0 0
        %8383 = vmatprep.subr.bf16.mxu0 0
        %8384 = vmatpush1.bf16.msra.mxu0 %v8364
        %8385 = vmatprep.subr.bf16.mxu0 0
        %8386 = vmatpush2.bf16.msra.mxu0 0
        %8387 = vmatprep.subr.bf16.mxu0 0
        %8388 = vmatpush2.bf16.msra.mxu0 0
        %8389 = vmatprep.subr.bf16.mxu0 0
        %8390 = vmatpush2.bf16.msra.mxu0 0
        %8391 = vmatprep.subr.bf16.mxu0 0
        %8392 = vmatpush2.bf16.msra.mxu0 0
        %8393 = vmatprep.subr.bf16.mxu0 0
        %8394 = vmatpush2.bf16.msra.mxu0 0
        %8395 = vmatprep.subr.bf16.mxu0 0
        %8396 = vmatpush2.bf16.msra.mxu0 0
        %8397 = vmatprep.subr.bf16.mxu0 0
        %8398 = vmatpush2.bf16.msra.mxu0 0
        %8399 = vmatprep.subr.bf16.mxu0 0
        %8400 = vmatpush2.bf16.msra.mxu0 0
        %8401 = vmatprep.mubr.bf16.mxu0 0
        %8402 = vmatmul.mubr.bf16.gmra.mxu0 %v8367
        %v8403 = vpop.f32.mrf.mxu0
        %v8404 = vadd.f32 0.0, %v8403
        %v8405 = vpop.f32.mrf.mxu0
        %v8406 = vpop.f32.mrf.mxu0
        %v8407 = vadd.f32 0.0, %v8406
        %v8408 = vpop.f32.mrf.mxu0
        %8409 = vdwg.mxu0
        %v8412 = vunpack.c.l.b16 %v8352
        %v8413 = vunpack.c.l.b16 %v8353
        %v8414 = vpack.c.b16 %v8413, %v8412
        %v8416 = vsel %vm300, %v8414, 0
        %8418 = vmatprep.subr.bf16.mxu0 0
        %8419 = vmatpush1.bf16.msra.mxu0 0
        %8420 = vmatprep.subr.bf16.mxu0 0
        %8421 = vmatpush1.bf16.msra.mxu0 0
        %8422 = vmatprep.subr.bf16.mxu0 0
        %8423 = vmatpush1.bf16.msra.mxu0 0
        %8424 = vmatprep.subr.bf16.mxu0 0
        %8425 = vmatpush1.bf16.msra.mxu0 0
        %8426 = vmatprep.subr.bf16.mxu0 0
        %8427 = vmatpush1.bf16.msra.mxu0 0
        %8428 = vmatprep.subr.bf16.mxu0 0
        %8429 = vmatpush1.bf16.msra.mxu0 0
        %8430 = vmatprep.subr.bf16.mxu0 0
        %8431 = vmatpush1.bf16.msra.mxu0 0
        %8432 = vmatprep.subr.bf16.mxu0 0
        %8433 = vmatpush1.bf16.msra.mxu0 %v8350
        %8434 = vmatprep.subr.bf16.mxu0 0
        %8435 = vmatpush2.bf16.msra.mxu0 0
        %8436 = vmatprep.subr.bf16.mxu0 0
        %8437 = vmatpush2.bf16.msra.mxu0 0
        %8438 = vmatprep.subr.bf16.mxu0 0
        %8439 = vmatpush2.bf16.msra.mxu0 0
        %8440 = vmatprep.subr.bf16.mxu0 0
        %8441 = vmatpush2.bf16.msra.mxu0 0
        %8442 = vmatprep.subr.bf16.mxu0 0
        %8443 = vmatpush2.bf16.msra.mxu0 0
        %8444 = vmatprep.subr.bf16.mxu0 0
        %8445 = vmatpush2.bf16.msra.mxu0 0
        %8446 = vmatprep.subr.bf16.mxu0 0
        %8447 = vmatpush2.bf16.msra.mxu0 0
        %8448 = vmatprep.subr.bf16.mxu0 0
        %8449 = vmatpush2.bf16.msra.mxu0 0
        %8450 = vmatprep.mubr.bf16.mxu0 0
        %8451 = vmatmul.mubr.bf16.gmra.mxu0 %v8416
        %v8452 = vpop.f32.mrf.mxu0
        %v8453 = vadd.f32 %v8404, %v8452
        %v8454 = vpop.f32.mrf.mxu0
        %v8455 = vpop.f32.mrf.mxu0
        %v8456 = vadd.f32 %v8407, %v8455
        %v8457 = vpop.f32.mrf.mxu0
        %8458 = vdwg.mxu0
        %s8459 = scalar_lea.vmem [#allocation4], 448
        %v8460 = vld [vmem:[%s8459] sm:$0xf]
        %v8461 = vld [vmem:[%s8459 + $0x4] sm:$0xf]
        %v8464 = vunpack.c.l.b16 %v8460
        %v8465 = vunpack.c.l.b16 %v8461
        %v8466 = vpack.c.b16 %v8465, %v8464
        %8467 = vrot.lane.b32.xlu0 %v8350, 126
        %v8468 = vpop.permute.xlu0 %8467
        %v8471 = vsel %vm300, %v8466, 0
        %8473 = vmatprep.subr.bf16.mxu0 0
        %8474 = vmatpush1.bf16.msra.mxu0 0
        %8475 = vmatprep.subr.bf16.mxu0 0
        %8476 = vmatpush1.bf16.msra.mxu0 0
        %8477 = vmatprep.subr.bf16.mxu0 0
        %8478 = vmatpush1.bf16.msra.mxu0 0
        %8479 = vmatprep.subr.bf16.mxu0 0
        %8480 = vmatpush1.bf16.msra.mxu0 0
        %8481 = vmatprep.subr.bf16.mxu0 0
        %8482 = vmatpush1.bf16.msra.mxu0 0
        %8483 = vmatprep.subr.bf16.mxu0 0
        %8484 = vmatpush1.bf16.msra.mxu0 0
        %8485 = vmatprep.subr.bf16.mxu0 0
        %8486 = vmatpush1.bf16.msra.mxu0 0
        %8487 = vmatprep.subr.bf16.mxu0 0
        %8488 = vmatpush1.bf16.msra.mxu0 %v8468
        %8489 = vmatprep.subr.bf16.mxu0 0
        %8490 = vmatpush2.bf16.msra.mxu0 0
        %8491 = vmatprep.subr.bf16.mxu0 0
        %8492 = vmatpush2.bf16.msra.mxu0 0
        %8493 = vmatprep.subr.bf16.mxu0 0
        %8494 = vmatpush2.bf16.msra.mxu0 0
        %8495 = vmatprep.subr.bf16.mxu0 0
        %8496 = vmatpush2.bf16.msra.mxu0 0
        %8497 = vmatprep.subr.bf16.mxu0 0
        %8498 = vmatpush2.bf16.msra.mxu0 0
        %8499 = vmatprep.subr.bf16.mxu0 0
        %8500 = vmatpush2.bf16.msra.mxu0 0
        %8501 = vmatprep.subr.bf16.mxu0 0
        %8502 = vmatpush2.bf16.msra.mxu0 0
        %8503 = vmatprep.subr.bf16.mxu0 0
        %8504 = vmatpush2.bf16.msra.mxu0 0
        %8505 = vmatprep.mubr.bf16.mxu0 0
        %8506 = vmatmul.mubr.bf16.gmra.mxu0 %v8471
        %v8507 = vpop.f32.mrf.mxu0
        %v8508 = vadd.f32 0.0, %v8507
        %v8509 = vpop.f32.mrf.mxu0
        %v8510 = vpop.f32.mrf.mxu0
        %v8511 = vadd.f32 0.0, %v8510
        %v8512 = vpop.f32.mrf.mxu0
        %8513 = vdwg.mxu0
        %v8514 = vadd.f32 %v8453, %v8508
        %v8515 = vadd.f32 %v8456, %v8511
        %s8516 = scalar_lea.vmem [#allocation4], 456
        %v8517 = vld [vmem:[%s8516] sm:$0xf]
        %v8518 = vld [vmem:[%s8516 + $0x4] sm:$0xf]
        %v8521 = vunpack.c.l.b16 %v8517
        %v8522 = vunpack.c.l.b16 %v8518
        %v8523 = vpack.c.b16 %v8522, %v8521
        %8524 = vrot.lane.b32.xlu0 %v8350, 118
        %v8525 = vpop.permute.xlu0 %8524
        %v8528 = vsel %vm300, %v8523, 0
        %8530 = vmatprep.subr.bf16.mxu0 0
        %8531 = vmatpush1.bf16.msra.mxu0 0
        %8532 = vmatprep.subr.bf16.mxu0 0
        %8533 = vmatpush1.bf16.msra.mxu0 0
        %8534 = vmatprep.subr.bf16.mxu0 0
        %8535 = vmatpush1.bf16.msra.mxu0 0
        %8536 = vmatprep.subr.bf16.mxu0 0
        %8537 = vmatpush1.bf16.msra.mxu0 0
        %8538 = vmatprep.subr.bf16.mxu0 0
        %8539 = vmatpush1.bf16.msra.mxu0 0
        %8540 = vmatprep.subr.bf16.mxu0 0
        %8541 = vmatpush1.bf16.msra.mxu0 0
        %8542 = vmatprep.subr.bf16.mxu0 0
        %8543 = vmatpush1.bf16.msra.mxu0 0
        %8544 = vmatprep.subr.bf16.mxu0 0
        %8545 = vmatpush1.bf16.msra.mxu0 %v8525
        %8546 = vmatprep.subr.bf16.mxu0 0
        %8547 = vmatpush2.bf16.msra.mxu0 0
        %8548 = vmatprep.subr.bf16.mxu0 0
        %8549 = vmatpush2.bf16.msra.mxu0 0
        %8550 = vmatprep.subr.bf16.mxu0 0
        %8551 = vmatpush2.bf16.msra.mxu0 0
        %8552 = vmatprep.subr.bf16.mxu0 0
        %8553 = vmatpush2.bf16.msra.mxu0 0
        %8554 = vmatprep.subr.bf16.mxu0 0
        %8555 = vmatpush2.bf16.msra.mxu0 0
        %8556 = vmatprep.subr.bf16.mxu0 0
        %8557 = vmatpush2.bf16.msra.mxu0 0
        %8558 = vmatprep.subr.bf16.mxu0 0
        %8559 = vmatpush2.bf16.msra.mxu0 0
        %8560 = vmatprep.subr.bf16.mxu0 0
        %8561 = vmatpush2.bf16.msra.mxu0 0
        %8562 = vmatprep.mubr.bf16.mxu0 0
        %8563 = vmatmul.mubr.bf16.gmra.mxu0 %v8528
        %v8564 = vpop.f32.mrf.mxu0
        %v8565 = vadd.f32 0.0, %v8564
        %v8566 = vpop.f32.mrf.mxu0
        %v8567 = vpop.f32.mrf.mxu0
        %v8568 = vadd.f32 0.0, %v8567
        %v8569 = vpop.f32.mrf.mxu0
        %8570 = vdwg.mxu0
        %v8571 = vadd.f32 %v8514, %v8565
        %v8572 = vadd.f32 %v8515, %v8568
        %s8573 = scalar_lea.vmem [#allocation4], 464
        %v8574 = vld [vmem:[%s8573] sm:$0xf]
        %v8575 = vld [vmem:[%s8573 + $0x4] sm:$0xf]
        %v8578 = vunpack.c.l.b16 %v8574
        %v8579 = vunpack.c.l.b16 %v8575
        %v8580 = vpack.c.b16 %v8579, %v8578
        %8581 = vrot.lane.b32.xlu0 %v8350, 117
        %v8582 = vpop.permute.xlu0 %8581
        %v8585 = vsel %vm300, %v8580, 0
        %8587 = vmatprep.subr.bf16.mxu0 0
        %8588 = vmatpush1.bf16.msra.mxu0 0
        %8589 = vmatprep.subr.bf16.mxu0 0
        %8590 = vmatpush1.bf16.msra.mxu0 0
        %8591 = vmatprep.subr.bf16.mxu0 0
        %8592 = vmatpush1.bf16.msra.mxu0 0
        %8593 = vmatprep.subr.bf16.mxu0 0
        %8594 = vmatpush1.bf16.msra.mxu0 0
        %8595 = vmatprep.subr.bf16.mxu0 0
        %8596 = vmatpush1.bf16.msra.mxu0 0
        %8597 = vmatprep.subr.bf16.mxu0 0
        %8598 = vmatpush1.bf16.msra.mxu0 0
        %8599 = vmatprep.subr.bf16.mxu0 0
        %8600 = vmatpush1.bf16.msra.mxu0 0
        %8601 = vmatprep.subr.bf16.mxu0 0
        %8602 = vmatpush1.bf16.msra.mxu0 %v8582
        %8603 = vmatprep.subr.bf16.mxu0 0
        %8604 = vmatpush2.bf16.msra.mxu0 0
        %8605 = vmatprep.subr.bf16.mxu0 0
        %8606 = vmatpush2.bf16.msra.mxu0 0
        %8607 = vmatprep.subr.bf16.mxu0 0
        %8608 = vmatpush2.bf16.msra.mxu0 0
        %8609 = vmatprep.subr.bf16.mxu0 0
        %8610 = vmatpush2.bf16.msra.mxu0 0
        %8611 = vmatprep.subr.bf16.mxu0 0
        %8612 = vmatpush2.bf16.msra.mxu0 0
        %8613 = vmatprep.subr.bf16.mxu0 0
        %8614 = vmatpush2.bf16.msra.mxu0 0
        %8615 = vmatprep.subr.bf16.mxu0 0
        %8616 = vmatpush2.bf16.msra.mxu0 0
        %8617 = vmatprep.subr.bf16.mxu0 0
        %8618 = vmatpush2.bf16.msra.mxu0 0
        %8619 = vmatprep.mubr.bf16.mxu0 0
        %8620 = vmatmul.mubr.bf16.gmra.mxu0 %v8585
        %v8621 = vpop.f32.mrf.mxu0
        %v8622 = vadd.f32 0.0, %v8621
        %v8623 = vpop.f32.mrf.mxu0
        %v8624 = vpop.f32.mrf.mxu0
        %v8625 = vadd.f32 0.0, %v8624
        %v8626 = vpop.f32.mrf.mxu0
        %8627 = vdwg.mxu0
        %v8628 = vadd.f32 %v8571, %v8622
        %v8629 = vadd.f32 %v8572, %v8625
        %s8630 = scalar_lea.vmem [#allocation4], 472
        %v8631 = vld [vmem:[%s8630] sm:$0xf]
        %v8632 = vld [vmem:[%s8630 + $0x4] sm:$0xf]
        %v8635 = vunpack.c.l.b16 %v8631
        %v8636 = vunpack.c.l.b16 %v8632
        %v8637 = vpack.c.b16 %v8636, %v8635
        %8638 = vrot.lane.b32.xlu0 %v8350, 116
        %v8639 = vpop.permute.xlu0 %8638
        %v8642 = vsel %vm300, %v8637, 0
        %8644 = vmatprep.subr.bf16.mxu0 0
        %8645 = vmatpush1.bf16.msra.mxu0 0
        %8646 = vmatprep.subr.bf16.mxu0 0
        %8647 = vmatpush1.bf16.msra.mxu0 0
        %8648 = vmatprep.subr.bf16.mxu0 0
        %8649 = vmatpush1.bf16.msra.mxu0 0
        %8650 = vmatprep.subr.bf16.mxu0 0
        %8651 = vmatpush1.bf16.msra.mxu0 0
        %8652 = vmatprep.subr.bf16.mxu0 0
        %8653 = vmatpush1.bf16.msra.mxu0 0
        %8654 = vmatprep.subr.bf16.mxu0 0
        %8655 = vmatpush1.bf16.msra.mxu0 0
        %8656 = vmatprep.subr.bf16.mxu0 0
        %8657 = vmatpush1.bf16.msra.mxu0 0
        %8658 = vmatprep.subr.bf16.mxu0 0
        %8659 = vmatpush1.bf16.msra.mxu0 %v8639
        %8660 = vmatprep.subr.bf16.mxu0 0
        %8661 = vmatpush2.bf16.msra.mxu0 0
        %8662 = vmatprep.subr.bf16.mxu0 0
        %8663 = vmatpush2.bf16.msra.mxu0 0
        %8664 = vmatprep.subr.bf16.mxu0 0
        %8665 = vmatpush2.bf16.msra.mxu0 0
        %8666 = vmatprep.subr.bf16.mxu0 0
        %8667 = vmatpush2.bf16.msra.mxu0 0
        %8668 = vmatprep.subr.bf16.mxu0 0
        %8669 = vmatpush2.bf16.msra.mxu0 0
        %8670 = vmatprep.subr.bf16.mxu0 0
        %8671 = vmatpush2.bf16.msra.mxu0 0
        %8672 = vmatprep.subr.bf16.mxu0 0
        %8673 = vmatpush2.bf16.msra.mxu0 0
        %8674 = vmatprep.subr.bf16.mxu0 0
        %8675 = vmatpush2.bf16.msra.mxu0 0
        %8676 = vmatprep.mubr.bf16.mxu0 0
        %8677 = vmatmul.mubr.bf16.gmra.mxu0 %v8642
        %v8678 = vpop.f32.mrf.mxu0
        %v8679 = vadd.f32 0.0, %v8678
        %v8680 = vpop.f32.mrf.mxu0
        %v8681 = vpop.f32.mrf.mxu0
        %v8682 = vadd.f32 0.0, %v8681
        %v8683 = vpop.f32.mrf.mxu0
        %8684 = vdwg.mxu0
        %v8685 = vadd.f32 %v8628, %v8679
        %v8686 = vadd.f32 %v8629, %v8682
        %s8687 = scalar_lea.vmem [#allocation4], 480
        %v8688 = vld [vmem:[%s8687] sm:$0xf]
        %v8689 = vld [vmem:[%s8687 + $0x4] sm:$0xf]
        %v8692 = vunpack.c.l.b16 %v8688
        %v8693 = vunpack.c.l.b16 %v8689
        %v8694 = vpack.c.b16 %v8693, %v8692
        %8695 = vrot.lane.b32.xlu0 %v8350, 108
        %v8696 = vpop.permute.xlu0 %8695
        %v8699 = vsel %vm300, %v8694, 0
        %8701 = vmatprep.subr.bf16.mxu0 0
        %8702 = vmatpush1.bf16.msra.mxu0 0
        %8703 = vmatprep.subr.bf16.mxu0 0
        %8704 = vmatpush1.bf16.msra.mxu0 0
        %8705 = vmatprep.subr.bf16.mxu0 0
        %8706 = vmatpush1.bf16.msra.mxu0 0
        %8707 = vmatprep.subr.bf16.mxu0 0
        %8708 = vmatpush1.bf16.msra.mxu0 0
        %8709 = vmatprep.subr.bf16.mxu0 0
        %8710 = vmatpush1.bf16.msra.mxu0 0
        %8711 = vmatprep.subr.bf16.mxu0 0
        %8712 = vmatpush1.bf16.msra.mxu0 0
        %8713 = vmatprep.subr.bf16.mxu0 0
        %8714 = vmatpush1.bf16.msra.mxu0 0
        %8715 = vmatprep.subr.bf16.mxu0 0
        %8716 = vmatpush1.bf16.msra.mxu0 %v8696
        %8717 = vmatprep.subr.bf16.mxu0 0
        %8718 = vmatpush2.bf16.msra.mxu0 0
        %8719 = vmatprep.subr.bf16.mxu0 0
        %8720 = vmatpush2.bf16.msra.mxu0 0
        %8721 = vmatprep.subr.bf16.mxu0 0
        %8722 = vmatpush2.bf16.msra.mxu0 0
        %8723 = vmatprep.subr.bf16.mxu0 0
        %8724 = vmatpush2.bf16.msra.mxu0 0
        %8725 = vmatprep.subr.bf16.mxu0 0
        %8726 = vmatpush2.bf16.msra.mxu0 0
        %8727 = vmatprep.subr.bf16.mxu0 0
        %8728 = vmatpush2.bf16.msra.mxu0 0
        %8729 = vmatprep.subr.bf16.mxu0 0
        %8730 = vmatpush2.bf16.msra.mxu0 0
        %8731 = vmatprep.subr.bf16.mxu0 0
        %8732 = vmatpush2.bf16.msra.mxu0 0
        %8733 = vmatprep.mubr.bf16.mxu0 0
        %8734 = vmatmul.mubr.bf16.gmra.mxu0 %v8699
        %v8735 = vpop.f32.mrf.mxu0
        %v8736 = vadd.f32 0.0, %v8735
        %v8737 = vpop.f32.mrf.mxu0
        %v8738 = vpop.f32.mrf.mxu0
        %v8739 = vadd.f32 0.0, %v8738
        %v8740 = vpop.f32.mrf.mxu0
        %8741 = vdwg.mxu0
        %v8742 = vadd.f32 %v8685, %v8736
        %v8743 = vadd.f32 %v8686, %v8739
        %s8744 = scalar_lea.vmem [#allocation4], 488
        %v8745 = vld [vmem:[%s8744] sm:$0xf]
        %v8746 = vld [vmem:[%s8744 + $0x4] sm:$0xf]
        %v8749 = vunpack.c.l.b16 %v8745
        %v8750 = vunpack.c.l.b16 %v8746
        %v8751 = vpack.c.b16 %v8750, %v8749
        %8752 = vrot.lane.b32.xlu0 %v8350, 107
        %v8753 = vpop.permute.xlu0 %8752
        %v8756 = vsel %vm300, %v8751, 0
        %8758 = vmatprep.subr.bf16.mxu0 0
        %8759 = vmatpush1.bf16.msra.mxu0 0
        %8760 = vmatprep.subr.bf16.mxu0 0
        %8761 = vmatpush1.bf16.msra.mxu0 0
        %8762 = vmatprep.subr.bf16.mxu0 0
        %8763 = vmatpush1.bf16.msra.mxu0 0
        %8764 = vmatprep.subr.bf16.mxu0 0
        %8765 = vmatpush1.bf16.msra.mxu0 0
        %8766 = vmatprep.subr.bf16.mxu0 0
        %8767 = vmatpush1.bf16.msra.mxu0 0
        %8768 = vmatprep.subr.bf16.mxu0 0
        %8769 = vmatpush1.bf16.msra.mxu0 0
        %8770 = vmatprep.subr.bf16.mxu0 0
        %8771 = vmatpush1.bf16.msra.mxu0 0
        %8772 = vmatprep.subr.bf16.mxu0 0
        %8773 = vmatpush1.bf16.msra.mxu0 %v8753
        %8774 = vmatprep.subr.bf16.mxu0 0
        %8775 = vmatpush2.bf16.msra.mxu0 0
        %8776 = vmatprep.subr.bf16.mxu0 0
        %8777 = vmatpush2.bf16.msra.mxu0 0
        %8778 = vmatprep.subr.bf16.mxu0 0
        %8779 = vmatpush2.bf16.msra.mxu0 0
        %8780 = vmatprep.subr.bf16.mxu0 0
        %8781 = vmatpush2.bf16.msra.mxu0 0
        %8782 = vmatprep.subr.bf16.mxu0 0
        %8783 = vmatpush2.bf16.msra.mxu0 0
        %8784 = vmatprep.subr.bf16.mxu0 0
        %8785 = vmatpush2.bf16.msra.mxu0 0
        %8786 = vmatprep.subr.bf16.mxu0 0
        %8787 = vmatpush2.bf16.msra.mxu0 0
        %8788 = vmatprep.subr.bf16.mxu0 0
        %8789 = vmatpush2.bf16.msra.mxu0 0
        %8790 = vmatprep.mubr.bf16.mxu0 0
        %8791 = vmatmul.mubr.bf16.gmra.mxu0 %v8756
        %v8792 = vpop.f32.mrf.mxu0
        %v8793 = vadd.f32 0.0, %v8792
        %v8794 = vpop.f32.mrf.mxu0
        %v8795 = vpop.f32.mrf.mxu0
        %v8796 = vadd.f32 0.0, %v8795
        %v8797 = vpop.f32.mrf.mxu0
        %8798 = vdwg.mxu0
        %v8799 = vadd.f32 %v8742, %v8793
        %v8800 = vadd.f32 %v8743, %v8796
        %s8801 = scalar_lea.vmem [#allocation4], 496
        %v8802 = vld [vmem:[%s8801] sm:$0xf]
        %v8803 = vld [vmem:[%s8801 + $0x4] sm:$0xf]
        %v8806 = vunpack.c.l.b16 %v8802
        %v8807 = vunpack.c.l.b16 %v8803
        %v8808 = vpack.c.b16 %v8807, %v8806
        %8809 = vrot.lane.b32.xlu0 %v8350, 106
        %v8810 = vpop.permute.xlu0 %8809
        %v8813 = vsel %vm300, %v8808, 0
        %8815 = vmatprep.subr.bf16.mxu0 0
        %8816 = vmatpush1.bf16.msra.mxu0 0
        %8817 = vmatprep.subr.bf16.mxu0 0
        %8818 = vmatpush1.bf16.msra.mxu0 0
        %8819 = vmatprep.subr.bf16.mxu0 0
        %8820 = vmatpush1.bf16.msra.mxu0 0
        %8821 = vmatprep.subr.bf16.mxu0 0
        %8822 = vmatpush1.bf16.msra.mxu0 0
        %8823 = vmatprep.subr.bf16.mxu0 0
        %8824 = vmatpush1.bf16.msra.mxu0 0
        %8825 = vmatprep.subr.bf16.mxu0 0
        %8826 = vmatpush1.bf16.msra.mxu0 0
        %8827 = vmatprep.subr.bf16.mxu0 0
        %8828 = vmatpush1.bf16.msra.mxu0 0
        %8829 = vmatprep.subr.bf16.mxu0 0
        %8830 = vmatpush1.bf16.msra.mxu0 %v8810
        %8831 = vmatprep.subr.bf16.mxu0 0
        %8832 = vmatpush2.bf16.msra.mxu0 0
        %8833 = vmatprep.subr.bf16.mxu0 0
        %8834 = vmatpush2.bf16.msra.mxu0 0
        %8835 = vmatprep.subr.bf16.mxu0 0
        %8836 = vmatpush2.bf16.msra.mxu0 0
        %8837 = vmatprep.subr.bf16.mxu0 0
        %8838 = vmatpush2.bf16.msra.mxu0 0
        %8839 = vmatprep.subr.bf16.mxu0 0
        %8840 = vmatpush2.bf16.msra.mxu0 0
        %8841 = vmatprep.subr.bf16.mxu0 0
        %8842 = vmatpush2.bf16.msra.mxu0 0
        %8843 = vmatprep.subr.bf16.mxu0 0
        %8844 = vmatpush2.bf16.msra.mxu0 0
        %8845 = vmatprep.subr.bf16.mxu0 0
        %8846 = vmatpush2.bf16.msra.mxu0 0
        %8847 = vmatprep.mubr.bf16.mxu0 0
        %8848 = vmatmul.mubr.bf16.gmra.mxu0 %v8813
        %v8849 = vpop.f32.mrf.mxu0
        %v8850 = vadd.f32 0.0, %v8849
        %v8851 = vpop.f32.mrf.mxu0
        %v8852 = vpop.f32.mrf.mxu0
        %v8853 = vadd.f32 0.0, %v8852
        %v8854 = vpop.f32.mrf.mxu0
        %8855 = vdwg.mxu0
        %v8856 = vadd.f32 %v8799, %v8850
        %v8857 = vadd.f32 %v8800, %v8853
        %v8858 = vmax.f32 %v8856, 0.0
        %v8859 = vmax.f32 %v8857, 0.0
        %s8860 = scalar_lea.vmem [#allocation6], 96
        %v8861 = vld [vmem:[%s8860] sm:$0xff]
        %v8862 = vld [vmem:[%s8860 + $0x8] sm:$0xff]
        %8864 = vset.pattern.permute.xlu0 0
        %8865 = vperm.xlu0 %8864, %v8861
        %v8866 = vpop.permute.xlu0 %8865
        %8869 = vset.pattern.permute.xlu0 0
        %8870 = vperm.xlu0 %8869, %v8862
        %v8871 = vpop.permute.xlu0 %8870
        %v8873 = vmul.f32 %v8858, %v8866
        %v8874 = vmul.f32 %v8859, %v8871
        %s8875 = scalar_lea.vmem %s3, 96
        %v8876 = vld [vmem:[%s8875] sm:$0xff]
        %v8877 = vld [vmem:[%s8875 + $0x8] sm:$0xff]
        %8879 = vset.pattern.permute.xlu0 0
        %8880 = vperm.xlu0 %8879, %v8876
        %v8881 = vpop.permute.xlu0 %8880
        %8884 = vset.pattern.permute.xlu0 0
        %8885 = vperm.xlu0 %8884, %v8877
        %v8886 = vpop.permute.xlu0 %8885
        %v8888 = vadd.f32 %v8873, %v8881
        %v8889 = vadd.f32 %v8874, %v8886
        %vm8890 = vcmask 277504
        %8891 = vst.msk [vmem:[#allocation3] sm:$0xff] %vm8890, %v8888
        %8892 = vst.msk [vmem:[#allocation3 + $0x38] sm:$0xff] %vm8890, %v8889
        %v8893 = vld [vmem:[#allocation3] sm:$0xff]
        %v8894 = vld [vmem:[#allocation3 + $0x38] sm:$0xff]
        %8897 = vrot.lane.b32.xlu0 %v8893, 118
        %v8898 = vpop.permute.xlu0 %8897
        %8899 = vrot.lane.b32.xlu0 %v8894, 118
        %v8900 = vpop.permute.xlu0 %8899
        %v8903 = vadd.f32 %v8893, %v8898
        %v8904 = vadd.f32 %v8894, %v8900
        %8905 = vrot.lane.b32.xlu0 %v8893, 108
        %v8906 = vpop.permute.xlu0 %8905
        %8907 = vrot.lane.b32.xlu0 %v8894, 108
        %v8908 = vpop.permute.xlu0 %8907
        %v8911 = vadd.f32 %v8903, %v8906
        %v8912 = vadd.f32 %v8904, %v8908
        %8913 = vrot.lane.b32.xlu0 %v8893, 98
        %v8914 = vpop.permute.xlu0 %8913
        %8915 = vrot.lane.b32.xlu0 %v8894, 98
        %v8916 = vpop.permute.xlu0 %8915
        %v8919 = vadd.f32 %v8911, %v8914
        %v8920 = vadd.f32 %v8912, %v8916
        %vm8921 = vcmask 31744
        %v8922 = vsel %vm8921, %v8919, 0.0
        %8923 = vadd.xlane.f32.xlu0 %v8922
        %v8924 = vpop.xlane.xlu0 %8923
        %v8925 = vsel %vm8921, %v8920, 0.0
        %8926 = vadd.xlane.f32.xlu0 %v8925
        %v8927 = vpop.xlane.xlu0 %8926
        %v8928 = vmul.f32 %v8924, 0.0625
        %v8929 = vmul.f32 %v8927, 0.0625
        %v8930 = vld [vmem:[%s4] sm:$0xff]
        %v8931 = vld [vmem:[%s4 + $0x8] sm:$0xff]
        %v8933 = vsel %vm300, %v8930, 0
        %v8936 = vsel %vm300, %v8931, 0
        %8938 = vmatprep.subr.mxu0 0.0
        %8939 = vmatpush1.msra.mxu0 0.0
        %8940 = vmatprep.subr.mxu0 0.0
        %8941 = vmatpush1.msra.mxu0 0.0
        %8942 = vmatprep.subr.mxu0 0.0
        %8943 = vmatpush1.msra.mxu0 0.0
        %8944 = vmatprep.subr.mxu0 0.0
        %8945 = vmatpush1.msra.mxu0 0.0
        %8946 = vmatprep.subr.mxu0 0.0
        %8947 = vmatpush1.msra.mxu0 0.0
        %8948 = vmatprep.subr.mxu0 0.0
        %8949 = vmatpush1.msra.mxu0 0.0
        %8950 = vmatprep.subr.mxu0 0.0
        %8951 = vmatpush1.msra.mxu0 0.0
        %8952 = vmatprep.subr.mxu0 0.0
        %8953 = vmatpush1.msra.mxu0 0.0
        %8954 = vmatprep.subr.mxu0 0.0
        %8955 = vmatpush1.msra.mxu0 0.0
        %8956 = vmatprep.subr.mxu0 0.0
        %8957 = vmatpush1.msra.mxu0 0.0
        %8958 = vmatprep.subr.mxu0 0.0
        %8959 = vmatpush1.msra.mxu0 0.0
        %8960 = vmatprep.subr.mxu0 0.0
        %8961 = vmatpush1.msra.mxu0 0.0
        %8962 = vmatprep.subr.mxu0 0.0
        %8963 = vmatpush1.msra.mxu0 0.0
        %8964 = vmatprep.subr.mxu0 0.0
        %8965 = vmatpush1.msra.mxu0 0.0
        %8966 = vmatprep.subr.mxu0 0.0
        %8967 = vmatpush1.msra.mxu0 %v8929
        %8968 = vmatprep.subr.mxu0 0.0
        %8969 = vmatpush1.msra.mxu0 %v8928
        %8970 = vmatprep.subr.mxu0 0.0
        %8971 = vmatpush2.msra.mxu0 0.0
        %8972 = vmatprep.subr.mxu0 0.0
        %8973 = vmatpush2.msra.mxu0 0.0
        %8974 = vmatprep.subr.mxu0 0.0
        %8975 = vmatpush2.msra.mxu0 0.0
        %8976 = vmatprep.subr.mxu0 0.0
        %8977 = vmatpush2.msra.mxu0 0.0
        %8978 = vmatprep.subr.mxu0 0.0
        %8979 = vmatpush2.msra.mxu0 0.0
        %8980 = vmatprep.subr.mxu0 0.0
        %8981 = vmatpush2.msra.mxu0 0.0
        %8982 = vmatprep.subr.mxu0 0.0
        %8983 = vmatpush2.msra.mxu0 0.0
        %8984 = vmatprep.subr.mxu0 0.0
        %8985 = vmatpush2.msra.mxu0 0.0
        %8986 = vmatprep.subr.mxu0 0.0
        %8987 = vmatpush2.msra.mxu0 0.0
        %8988 = vmatprep.subr.mxu0 0.0
        %8989 = vmatpush2.msra.mxu0 0.0
        %8990 = vmatprep.subr.mxu0 0.0
        %8991 = vmatpush2.msra.mxu0 0.0
        %8992 = vmatprep.subr.mxu0 0.0
        %8993 = vmatpush2.msra.mxu0 0.0
        %8994 = vmatprep.subr.mxu0 0.0
        %8995 = vmatpush2.msra.mxu0 0.0
        %8996 = vmatprep.subr.mxu0 0.0
        %8997 = vmatpush2.msra.mxu0 0.0
        %8998 = vmatprep.subr.mxu0 0.0
        %8999 = vmatpush2.msra.mxu0 0.0
        %9000 = vmatprep.subr.mxu0 0.0
        %9001 = vmatpush2.msra.mxu0 0.0
        %9002 = vmatprep.mubr.f32.mxu0 0.0
        %9003 = vmatmul.mubr.f32.gmra.mxu0 %v8933
        %v9004 = vpop.f32.mrf.mxu0
        %v9005 = vadd.f32 0.0, %v9004
        %v9006 = vpop.f32.mrf.mxu0
        %9007 = vmatprep.mubr.f32.mxu0 0.0
        %9008 = vmatmul.mubr.f32.gmra.mxu0 %v8936
        %v9009 = vpop.f32.mrf.mxu0
        %v9010 = vadd.f32 0.0, %v9009
        %v9011 = vpop.f32.mrf.mxu0
        %9012 = vdwg.mxu0
        %v9013 = vlaneseq
        %v9014 = vshrl.u32 %v9013, 7
        %v9015 = vadd.s32 %v9014, 8
        %vm9016 = vcmp.lt.s32.totalorder %v9014, 10
        %vm9017 = vcmp.lt.s32.totalorder %v9015, 10
        %v9018 = vsel %vm9016, %v9005, -1e+30
        %v9019 = vsel %vm9017, %v9010, -1e+30
        %v9020 = vmax.f32 %v9018, %v9019
        %v9022 = vrot.slane %v9020, 4
        %v9024 = vmax.f32 %v9020, %v9022
        %v9026 = vrot.slane %v9024, 2
        %v9028 = vmax.f32 %v9024, %v9026
        %v9030 = vrot.slane %v9028, 1
        %v9032 = vmax.f32 %v9028, %v9030
        %v9033 = vlaneseq
        %v9034 = vshrl.u32 %v9033, 7
        %v9035 = vsub.s32 0, %v9034
        %v9036 = vrot.slane %v9032, %v9035
        %v9037 = vsub.f32 %v9018, %v9036
        %v9038 = vsub.f32 %v9019, %v9036
        %v9039 = vmul.f32 %v9037, 1.442695
        %v9040 = vpow.pop %v9039
        %v9041 = vmul.f32 %v9038, 1.442695
        %v9042 = vpow.pop %v9041
        %v9043 = vsel %vm9016, %v9040, 0.0
        %v9044 = vsel %vm9017, %v9042, 0.0
        %v9045 = vadd.f32 %v9043, %v9044
        %v9047 = vrot.slane %v9045, 4
        %v9049 = vadd.f32 %v9045, %v9047
        %v9051 = vrot.slane %v9049, 2
        %v9053 = vadd.f32 %v9049, %v9051
        %v9055 = vrot.slane %v9053, 1
        %v9057 = vadd.f32 %v9053, %v9055
        %v9058 = vlog2.pop %v9057
        %v9059 = vmul.f32 %v9058, 0.6931472
        %v9060 = vlaneseq
        %v9061 = vshrl.u32 %v9060, 7
        %v9062 = vsub.s32 0, %v9061
        %v9063 = vrot.slane %v9059, %v9062
        %v9064 = vsub.f32 %v9037, %v9063
        %v9065 = vsub.f32 %v9038, %v9063
        %vm9066 = vcmask 7168
        %9067 = vst.msk [vmem:[%s292] sm:$0xff] %vm9066, %v9064
        %9068 = vst.msk [vmem:[%s292 + $0x8] sm:$0xff] %vm9066, %v9065
        %p9069 = scmp.lt.s32.totalorder %s19, 1
        %s9070 = scalar_select %p9069, %s19, 1
        %s9071 = smul.addr %s9070, 2
        %s9072 = smul.addr %s9071, 8
        %s9073 = scalar_lea.vmem %s6, %s9072
        // Predicated region
        $region57: #{_lambda_.1} parent=43 // pred_check
          %p9074 = pneg %p168
        $region58: #{_lambda_.1} parent=43 // pred_check_branch
          %9076 = sbr.rel (%p9074) target = $region60
        $region59: #{_lambda_.1} parent=43 // pred_region
          _
        $region60: #{_lambda_.1} parent=43 // pred_fallthru
          _
      $region44: #{_lambda_.1} parent=5 // pred_fallthru
        _
      %p9077 = scmp.le.s32.totalorder 2, %s14
      // Predicated region
      $region61: #{_lambda_.1} parent=5 // pred_check
        %p9078 = pneg %p9077
      $region62: #{_lambda_.1} parent=5 // pred_check_branch
        %9080 = sbr.rel (%p9078) target = $region64
      $region63: #{_lambda_.1} parent=5 // pred_region
        %s9081 = ssub.s32 %s14, 2
        // Predicated region
        $region65: #{_lambda_.1} parent=63 // pred_check
          %p9082 = pneg %p174
        $region66: #{_lambda_.1} parent=63 // pred_check_branch
          %9084 = sbr.rel (%p9082) target = $region68
        $region67: #{_lambda_.1} parent=63 // pred_region
          %p9085 = scmp.lt.s32.totalorder %s20, 1
          %s9086 = scalar_select %p9085, %s20, 1
          %s9087 = smul.addr %s9086, 2
          %s9088 = smul.addr %s9087, 8
          %s9089 = scalar_lea.vmem %s6, %s9088
        $region68: #{_lambda_.1} parent=63 // pred_fallthru
          _
      $region64: #{_lambda_.1} parent=5 // pred_fallthru
        _
    $region6: #{_lambda_.1} parent=1 // loop_footer
      %s18 = sadd.s32 1, %s14
    $region7: #{_lambda_.1} parent=1 // loop_footer_branch
      %13 = sbr.rel target = $region3
    $region8: #{_lambda_.1} parent=1 // loop_exit
      _
    %9090 = vsyncpa [#allocation5], 1
    %s9091 = scalar_lea.sflag [#allocation5], 1
    %9092 = vsyncpa %s9091, 1
    %9093 = vsyncpa [#allocation7], 1

</llo_original>
